<compile_context>
chip_gen: v7x
topology: tpu7x:2x2x1
jax: 0.10.0
libtpu: 0.0.40
codegen_flags: <defaults>
</compile_context>

<pallas_src>
import jax
import jax.numpy as jnp
from jax.experimental import pallas as pl
from jax.experimental.pallas import tpu as pltpu

_EPS = 1e-5


def _vmem_budget_bytes():
    """Generation-aware scoped-VMEM budget (v5e/v6e: 128 MiB, v7x: 64 MiB)."""
    cap = 64 * 1024 * 1024
    try:
        info = pltpu.get_tpu_info()
        cap = int(getattr(info, "vmem_capacity_bytes", cap)) or cap
    except Exception:
        pass
    return min(cap * 3 // 4, 100 * 1024 * 1024)


def _est_vmem_bytes(H, W, C, P, TH):
    """Rough per-step VMEM usage: pipelined blocks + in-kernel live values."""
    f32, bf16 = 4, 2
    inp = 2 * (H + 4) * (W + 4) * C * f32             # double-buffered input block
    wts = 2 * 9 * (C + P) * P * bf16                   # double-buffered bf16 weights
    out = 2 * TH * W * P * f32                         # double-buffered output block
    win = (TH + 4) * (W + 4) * C * f32                 # loaded input window
    slab = (TH + 2) * (W + 2) * 3 * max(C, P) * bf16   # one kh im2col slab
    mid = 3 * (TH + 2) * (W + 2) * P * f32             # acc1 / out1 / mask temps
    tail = 2 * TH * W * P * f32 + TH * W * C * f32     # acc2+out2 / identity
    return inp + wts + out + win + slab + mid + tail


def _pick_row_tile(H, W, C, P, budget):
    """Largest divisor of H (preferring multiples of 8) whose footprint fits."""
    divs = [t for t in range(H, 0, -1) if H % t == 0]
    pref = [t for t in divs if t % 8 == 0 or t == H]
    for t in pref + divs:
        if _est_vmem_bytes(H, W, C, P, t) <= budget:
            return t
    return 1


def _li_block_kernel(x_ref, w1_ref, s1_ref, b1_ref, w2_ref, s2_ref, b2_ref,
                     o_ref):
    # x_ref : (1, H+4, W+4, C)  one batch element, zero-padded by 2 in H and W
    # w1_ref: (3, 3*C, P)       conv1 weights, per-kh im2col layout (kw, cin)-major
    # w2_ref: (3, 3*P, P)       conv2 weights
    # s*/b* : (1, P)            folded inference-BN scale / bias (f32)
    # o_ref : (1, TH, W, P)     one row tile of the output
    TH = o_ref.shape[1]
    W = o_ref.shape[2]
    P = o_ref.shape[3]
    C = x_ref.shape[3]
    H = x_ref.shape[1] - 4

    r = pl.program_id(1)
    row0 = pl.multiple_of(r * TH, TH)

    # Window in padded coordinates: padded rows [row0, row0+TH+4), all W+4 cols,
    # i.e. original rows [row0-2, row0+TH+2) and original cols [-2, W+2).
    xw = x_ref[0, pl.ds(row0, TH + 4), :, :]                 # (TH+4, W+4, C)

    # ---- conv1 (+BN1+ReLU) on a (TH+2, W+2) grid (1-row/1-col halo so conv2
    #      can be evaluated on the TH x W interior without any concat/pad).
    # Three kh-accumulated matmuls, K = 3*C each; slabs cast to bf16 at the
    # MXU boundary (f32 accumulation via preferred_element_type).
    acc1 = jnp.zeros((TH + 2, W + 2, P), jnp.float32)
    for kh in range(3):
        slab = jnp.concatenate(
            [xw[kh:kh + TH + 2, kw:kw + W + 2, :] for kw in range(3)],
            axis=-1).astype(jnp.bfloat16)                    # (TH+2, W+2, 3*C)
        acc1 = acc1 + jnp.dot(slab, w1_ref[kh],
                              preferred_element_type=jnp.float32)
    out1 = jnp.maximum(acc1 * s1_ref[0] + b1_ref[0], 0.0)    # (TH+2, W+2, P) f32

    # conv2's zero padding applies to out1: halo rows/cols that fall outside the
    # image must be exactly zero, not "conv1 of padded zeros + BN + ReLU".
    i = jax.lax.broadcasted_iota(jnp.int32, (TH + 2, W + 2, 1), 0)
    j = jax.lax.broadcasted_iota(jnp.int32, (TH + 2, W + 2, 1), 1)
    orig_row = row0 - 1 + i                                  # out1 row i -> orig row
    valid = (orig_row >= 0) & (orig_row < H) & (j >= 1) & (j <= W)
    out1 = jnp.where(valid, out1, 0.0)
    out1_b = out1.astype(jnp.bfloat16)

    # ---- conv2 (+BN2) on the TH x W interior, same 3-way kh split.
    acc2 = jnp.zeros((TH, W, P), jnp.float32)
    for kh in range(3):
        slab = jnp.concatenate(
            [out1_b[kh:kh + TH, kw:kw + W, :] for kw in range(3)],
            axis=-1)                                         # (TH, W, 3*P) bf16
        acc2 = acc2 + jnp.dot(slab, w2_ref[kh],
                              preferred_element_type=jnp.float32)
    out2 = acc2 * s2_ref[0] + b2_ref[0]                      # (TH, W, P) f32

    # ---- residual add + final ReLU (downsample is None: identity = x).
    # Original rows [row0, row0+TH) / cols [0, W) == window [2:TH+2, 2:W+2).
    identity = xw[2:TH + 2, 2:W + 2, :].astype(jnp.float32)
    o_ref[0] = jnp.maximum(out2 + identity, 0.0).astype(o_ref.dtype)


def li_block_forward(x_nchw, params):
    """LIBlock forward. x_nchw: (B, C, H, W) float32 -> (B, P, H, W)."""
    x = jnp.transpose(x_nchw, (0, 2, 3, 1)).astype(jnp.float32)   # NHWC
    B, H, W, C = x.shape
    P = params["conv2_w"].shape[0]

    budget = _vmem_budget_bytes()
    TH = _pick_row_tile(H, W, C, P, budget)

    # Single wrapper pad: 2-row + 2-col zero halo (1 for conv1 + 1 for conv2),
    # so the kernel needs no concat/scratch to build either halo.
    xh = jnp.pad(x, ((0, 0), (2, 2), (2, 2), (0, 0)))

    def conv_w(w_oihw):
        # (O, I, 3, 3) -> (3, 3*I, O): per-kh im2col layout, (kw, cin)-major
        # rows, pre-cast to bf16 for the MXU (halves weight DMA / residency).
        o, i = w_oihw.shape[0], w_oihw.shape[1]
        return jnp.transpose(w_oihw, (2, 3, 1, 0)).reshape(3, 3 * i, o) \
                  .astype(jnp.bfloat16)

    w1 = conv_w(params["conv1_w"])          # (3, 3*C, P)
    w2 = conv_w(params["conv2_w"])          # (3, 3*P, P)

    def bn_affine(gamma, beta, mean, var):  # folded inference BN, kept f32
        scale = gamma / jnp.sqrt(var + _EPS)
        return scale.reshape(1, -1), (beta - mean * scale).reshape(1, -1)

    s1, b1 = bn_affine(params["bn1_gamma"], params["bn1_beta"],
                       params["bn1_mean"], params["bn1_var"])
    s2, b2 = bn_affine(params["bn2_gamma"], params["bn2_beta"],
                       params["bn2_mean"], params["bn2_var"])

    out_nhwc = pl.pallas_call(
        _li_block_kernel,
        out_shape=jax.ShapeDtypeStruct((B, H, W, P), jnp.float32),
        grid_spec=pltpu.PrefetchScalarGridSpec(
            num_scalar_prefetch=0,
            grid=(B, H // TH),
            in_specs=[
                # Full (padded) image per batch element; block index ignores r
                # so it is fetched once per b and stays resident across row tiles.
                pl.BlockSpec((1, H + 4, W + 4, C), lambda b, r: (b, 0, 0, 0)),
                pl.BlockSpec((3, 3 * C, P), lambda b, r: (0, 0, 0)),
                pl.BlockSpec((1, P), lambda b, r: (0, 0)),
                pl.BlockSpec((1, P), lambda b, r: (0, 0)),
                pl.BlockSpec((3, 3 * P, P), lambda b, r: (0, 0, 0)),
                pl.BlockSpec((1, P), lambda b, r: (0, 0)),
                pl.BlockSpec((1, P), lambda b, r: (0, 0)),
            ],
            out_specs=pl.BlockSpec((1, TH, W, P), lambda b, r: (b, r, 0, 0)),
        ),
        compiler_params=pltpu.CompilerParams(
            # Batch axis shards across cores; row tiles of one batch element
            # stay on one core (input is resident per b -> no duplicate DMA).
            dimension_semantics=("parallel", "arbitrary"),
            vmem_limit_bytes=int(budget)),
    )(xh, w1, s1, b1, w2, s2, b2)

    return jnp.transpose(out_nhwc, (0, 3, 1, 2))      # back to NCHW


def _reference(x_nchw, params):
    """Pure-JAX reference (NCHW, mirrors the PyTorch forward, f32-exact)."""
    def conv(x, w):
        return jax.lax.conv_general_dilated(
            x, w, window_strides=(1, 1), padding=((1, 1), (1, 1)),
            dimension_numbers=("NCHW", "OIHW", "NCHW"),
            precision=jax.lax.Precision.HIGHEST)

    def bn(x, g, b, m, v):
        g, b, m, v = (a.reshape(1, -1, 1, 1) for a in (g, b, m, v))
        return (x - m) / jnp.sqrt(v + _EPS) * g + b

    out = conv(x_nchw, params["conv1_w"])
    out = jnp.maximum(bn(out, params["bn1_gamma"], params["bn1_beta"],
                         params["bn1_mean"], params["bn1_var"]), 0.0)
    out = conv(out, params["conv2_w"])
    out = bn(out, params["bn2_gamma"], params["bn2_beta"],
             params["bn2_mean"], params["bn2_var"])
    out = jnp.maximum(out + x_nchw, 0.0)  # downsample is None, identity = x
    return out


if __name__ == "__main__":
    B, C, H, W = 2, 4, 16, 16   # in_channels == planes, stride 1, no downsample
    P = C

    key = jax.random.PRNGKey(0)
    ks = jax.random.split(key, 12)

    x = jax.random.normal(ks[0], (B, C, H, W), jnp.float32)

    params = {
        "conv1_w": 0.1 * jax.random.normal(ks[1], (P, C, 3, 3), jnp.float32),
        "conv2_w": 0.1 * jax.random.normal(ks[2], (P, P, 3, 3), jnp.float32),
        "bn1_gamma": jax.random.uniform(ks[3], (P,), jnp.float32, 0.5, 1.5),
        "bn1_beta": 0.1 * jax.random.normal(ks[4], (P,), jnp.float32),
        "bn1_mean": 0.1 * jax.random.normal(ks[5], (P,), jnp.float32),
        "bn1_var": jax.random.uniform(ks[6], (P,), jnp.float32, 0.5, 1.5),
        "bn2_gamma": jax.random.uniform(ks[7], (P,), jnp.float32, 0.5, 1.5),
        "bn2_beta": 0.1 * jax.random.normal(ks[8], (P,), jnp.float32),
        "bn2_mean": 0.1 * jax.random.normal(ks[9], (P,), jnp.float32),
        "bn2_var": jax.random.uniform(ks[10], (P,), jnp.float32, 0.5, 1.5),
    }

    fwd = jax.jit(li_block_forward)
    out = jax.block_until_ready(fwd(x, params))
    ref = jax.block_until_ready(_reference(x, params))

    assert out.shape == (B, P, H, W), out.shape
    # bf16-multiply / f32-accumulate MXU path vs. an f32-HIGHEST reference:
    # tolerance set accordingly.
    assert jnp.allclose(out, ref, atol=3e-2, rtol=3e-2), (
        float(jnp.max(jnp.abs(out - ref))))

    print("KERNEL_OK")
</pallas_src>

<mosaic_0001>
module attributes {stable_mosaic.version = 11 : i64} {
  func.func @_li_block_kernel(%arg0: i32, %arg1: i32, %arg2: memref<1x20x20x4xf32, #tpu.memory_space<vmem>>, %arg3: memref<3x12x4xbf16, #tpu.memory_space<vmem>>, %arg4: memref<1x4xf32, #tpu.memory_space<vmem>>, %arg5: memref<1x4xf32, #tpu.memory_space<vmem>>, %arg6: memref<3x12x4xbf16, #tpu.memory_space<vmem>>, %arg7: memref<1x4xf32, #tpu.memory_space<vmem>>, %arg8: memref<1x4xf32, #tpu.memory_space<vmem>>, %arg9: memref<1x16x16x4xf32, #tpu.memory_space<vmem>>) attributes {dimension_semantics = [#tpu.dimension_semantics<parallel>, #tpu.dimension_semantics<arbitrary>], iteration_bounds = array<i64: 2, 1>, scalar_prefetch = 0 : i64, scratch_operands = 0 : i64, tpu.core_type = #tpu.core_type<tc>, window_params = [{transform_indices = @transform_0, window_bounds = array<i64: 1, 20, 20, 4>}, {pipeline_mode = #tpu.pipeline_mode<synchronous>, transform_indices = @transform_1, window_bounds = array<i64: 3, 12, 4>}, {pipeline_mode = #tpu.pipeline_mode<synchronous>, transform_indices = @transform_2, window_bounds = array<i64: 1, 4>}, {pipeline_mode = #tpu.pipeline_mode<synchronous>, transform_indices = @transform_3, window_bounds = array<i64: 1, 4>}, {pipeline_mode = #tpu.pipeline_mode<synchronous>, transform_indices = @transform_4, window_bounds = array<i64: 3, 12, 4>}, {pipeline_mode = #tpu.pipeline_mode<synchronous>, transform_indices = @transform_5, window_bounds = array<i64: 1, 4>}, {pipeline_mode = #tpu.pipeline_mode<synchronous>, transform_indices = @transform_6, window_bounds = array<i64: 1, 4>}, {transform_indices = @transform_7, window_bounds = array<i64: 1, 16, 16, 4>}]} {
    %c16_i32 = arith.constant 16 : i32
    %0 = arith.muli %arg1, %c16_i32 : i32
    %1 = tpu.assume_multiple %0, 16 : i32
    %c0 = arith.constant 0 : index
    %2 = arith.index_cast %1 : i32 to index
    %c0_0 = arith.constant 0 : index
    %c0_1 = arith.constant 0 : index
    %3 = vector.load %arg2[%c0, %2, %c0_0, %c0_1] : memref<1x20x20x4xf32, #tpu.memory_space<vmem>>, vector<1x20x20x4xf32>
    %4 = vector.shape_cast %3 : vector<1x20x20x4xf32> to vector<20x20x4xf32>
    %cst = arith.constant 0.000000e+00 : f32
    %5 = vector.broadcast %cst : f32 to vector<18x18x4xf32>
    %6 = vector.extract_strided_slice %4 {offsets = [0, 0, 0], sizes = [18, 18, 4], strides = [1, 1, 1]} : vector<20x20x4xf32> to vector<18x18x4xf32>
    %7 = vector.extract_strided_slice %4 {offsets = [0, 1, 0], sizes = [18, 18, 4], strides = [1, 1, 1]} : vector<20x20x4xf32> to vector<18x18x4xf32>
    %8 = vector.extract_strided_slice %4 {offsets = [0, 2, 0], sizes = [18, 18, 4], strides = [1, 1, 1]} : vector<20x20x4xf32> to vector<18x18x4xf32>
    %9 = tpu.concatenate %6, %7, %8 in 2 : vector<18x18x4xf32>, vector<18x18x4xf32>, vector<18x18x4xf32> -> vector<18x18x12xf32>
    %10 = arith.truncf %9 : vector<18x18x12xf32> to vector<18x18x12xbf16>
    %c0_2 = arith.constant 0 : index
    %c0_3 = arith.constant 0 : index
    %c0_4 = arith.constant 0 : index
    %11 = vector.load %arg3[%c0_2, %c0_3, %c0_4] : memref<3x12x4xbf16, #tpu.memory_space<vmem>>, vector<1x12x4xbf16>
    %12 = vector.shape_cast %11 : vector<1x12x4xbf16> to vector<12x4xbf16>
    %cst_5 = arith.constant dense<0.000000e+00> : vector<18x18x4xf32>
    %13 = tpu.matmul %10, %12, %cst_5 {dimension_numbers = #tpu.dot_dimension_numbers<[2], [0], [0, 1], [1], [0, 0, 0, 1, 1, 1], [], []>} : vector<18x18x12xbf16>, vector<12x4xbf16>, vector<18x18x4xf32> -> vector<18x18x4xf32>
    %14 = arith.addf %5, %13 : vector<18x18x4xf32>
    %15 = vector.extract_strided_slice %4 {offsets = [1, 0, 0], sizes = [18, 18, 4], strides = [1, 1, 1]} : vector<20x20x4xf32> to vector<18x18x4xf32>
    %16 = vector.extract_strided_slice %4 {offsets = [1, 1, 0], sizes = [18, 18, 4], strides = [1, 1, 1]} : vector<20x20x4xf32> to vector<18x18x4xf32>
    %17 = vector.extract_strided_slice %4 {offsets = [1, 2, 0], sizes = [18, 18, 4], strides = [1, 1, 1]} : vector<20x20x4xf32> to vector<18x18x4xf32>
    %18 = tpu.concatenate %15, %16, %17 in 2 : vector<18x18x4xf32>, vector<18x18x4xf32>, vector<18x18x4xf32> -> vector<18x18x12xf32>
    %19 = arith.truncf %18 : vector<18x18x12xf32> to vector<18x18x12xbf16>
    %c1 = arith.constant 1 : index
    %c0_6 = arith.constant 0 : index
    %c0_7 = arith.constant 0 : index
    %20 = vector.load %arg3[%c1, %c0_6, %c0_7] : memref<3x12x4xbf16, #tpu.memory_space<vmem>>, vector<1x12x4xbf16>
    %21 = vector.shape_cast %20 : vector<1x12x4xbf16> to vector<12x4xbf16>
    %cst_8 = arith.constant dense<0.000000e+00> : vector<18x18x4xf32>
    %22 = tpu.matmul %19, %21, %cst_8 {dimension_numbers = #tpu.dot_dimension_numbers<[2], [0], [0, 1], [1], [0, 0, 0, 1, 1, 1], [], []>} : vector<18x18x12xbf16>, vector<12x4xbf16>, vector<18x18x4xf32> -> vector<18x18x4xf32>
    %23 = arith.addf %14, %22 : vector<18x18x4xf32>
    %24 = vector.extract_strided_slice %4 {offsets = [2, 0, 0], sizes = [18, 18, 4], strides = [1, 1, 1]} : vector<20x20x4xf32> to vector<18x18x4xf32>
    %25 = vector.extract_strided_slice %4 {offsets = [2, 1, 0], sizes = [18, 18, 4], strides = [1, 1, 1]} : vector<20x20x4xf32> to vector<18x18x4xf32>
    %26 = vector.extract_strided_slice %4 {offsets = [2, 2, 0], sizes = [18, 18, 4], strides = [1, 1, 1]} : vector<20x20x4xf32> to vector<18x18x4xf32>
    %27 = tpu.concatenate %24, %25, %26 in 2 : vector<18x18x4xf32>, vector<18x18x4xf32>, vector<18x18x4xf32> -> vector<18x18x12xf32>
    %28 = arith.truncf %27 : vector<18x18x12xf32> to vector<18x18x12xbf16>
    %c2 = arith.constant 2 : index
    %c0_9 = arith.constant 0 : index
    %c0_10 = arith.constant 0 : index
    %29 = vector.load %arg3[%c2, %c0_9, %c0_10] : memref<3x12x4xbf16, #tpu.memory_space<vmem>>, vector<1x12x4xbf16>
    %30 = vector.shape_cast %29 : vector<1x12x4xbf16> to vector<12x4xbf16>
    %cst_11 = arith.constant dense<0.000000e+00> : vector<18x18x4xf32>
    %31 = tpu.matmul %28, %30, %cst_11 {dimension_numbers = #tpu.dot_dimension_numbers<[2], [0], [0, 1], [1], [0, 0, 0, 1, 1, 1], [], []>} : vector<18x18x12xbf16>, vector<12x4xbf16>, vector<18x18x4xf32> -> vector<18x18x4xf32>
    %32 = arith.addf %23, %31 : vector<18x18x4xf32>
    %c0_12 = arith.constant 0 : index
    %c0_13 = arith.constant 0 : index
    %33 = vector.load %arg4[%c0_12, %c0_13] : memref<1x4xf32, #tpu.memory_space<vmem>>, vector<1x4xf32>
    %34 = vector.shape_cast %33 : vector<1x4xf32> to vector<4xf32>
    %35 = vector.shape_cast %34 : vector<4xf32> to vector<1x1x4xf32>
    %36 = vector.broadcast %35 : vector<1x1x4xf32> to vector<18x18x4xf32>
    %37 = arith.mulf %32, %36 : vector<18x18x4xf32>
    %c0_14 = arith.constant 0 : index
    %c0_15 = arith.constant 0 : index
    %38 = vector.load %arg5[%c0_14, %c0_15] : memref<1x4xf32, #tpu.memory_space<vmem>>, vector<1x4xf32>
    %39 = vector.shape_cast %38 : vector<1x4xf32> to vector<4xf32>
    %40 = vector.shape_cast %39 : vector<4xf32> to vector<1x1x4xf32>
    %41 = vector.broadcast %40 : vector<1x1x4xf32> to vector<18x18x4xf32>
    %42 = arith.addf %37, %41 : vector<18x18x4xf32>
    %cst_16 = arith.constant 0.000000e+00 : f32
    %43 = vector.broadcast %cst_16 : f32 to vector<18x18x4xf32>
    %44 = arith.maximumf %42, %43 : vector<18x18x4xf32>
    %45 = tpu.iota {dimensions = array<i32: 0>} : vector<18x18x1xi32>
    %46 = tpu.iota {dimensions = array<i32: 1>} : vector<18x18x1xi32>
    %c1_i32 = arith.constant 1 : i32
    %47 = arith.subi %1, %c1_i32 : i32
    %48 = vector.broadcast %47 : i32 to vector<18x18x1xi32>
    %49 = arith.addi %48, %45 : vector<18x18x1xi32>
    %c0_i32 = arith.constant 0 : i32
    %50 = vector.broadcast %c0_i32 : i32 to vector<18x18x1xi32>
    %51 = arith.cmpi sge, %49, %50 : vector<18x18x1xi32>
    %c16_i32_17 = arith.constant 16 : i32
    %52 = vector.broadcast %c16_i32_17 : i32 to vector<18x18x1xi32>
    %53 = arith.cmpi slt, %49, %52 : vector<18x18x1xi32>
    %54 = arith.andi %51, %53 : vector<18x18x1xi1>
    %c1_i32_18 = arith.constant 1 : i32
    %55 = vector.broadcast %c1_i32_18 : i32 to vector<18x18x1xi32>
    %56 = arith.cmpi sge, %46, %55 : vector<18x18x1xi32>
    %57 = arith.andi %54, %56 : vector<18x18x1xi1>
    %c16_i32_19 = arith.constant 16 : i32
    %58 = vector.broadcast %c16_i32_19 : i32 to vector<18x18x1xi32>
    %59 = arith.cmpi sle, %46, %58 : vector<18x18x1xi32>
    %60 = arith.andi %57, %59 : vector<18x18x1xi1>
    %cst_20 = arith.constant 0.000000e+00 : f32
    %61 = vector.shape_cast %60 : vector<18x18x1xi1> to vector<18x18x1xi1>
    %62 = vector.broadcast %61 : vector<18x18x1xi1> to vector<18x18x4xi1>
    %63 = vector.broadcast %cst_20 : f32 to vector<18x18x4xf32>
    %64 = arith.select %62, %44, %63 : vector<18x18x4xi1>, vector<18x18x4xf32>
    %65 = arith.truncf %64 : vector<18x18x4xf32> to vector<18x18x4xbf16>
    %cst_21 = arith.constant 0.000000e+00 : f32
    %66 = vector.broadcast %cst_21 : f32 to vector<16x16x4xf32>
    %67 = vector.extract_strided_slice %65 {offsets = [0, 0, 0], sizes = [16, 16, 4], strides = [1, 1, 1]} : vector<18x18x4xbf16> to vector<16x16x4xbf16>
    %68 = vector.extract_strided_slice %65 {offsets = [0, 1, 0], sizes = [16, 16, 4], strides = [1, 1, 1]} : vector<18x18x4xbf16> to vector<16x16x4xbf16>
    %69 = vector.extract_strided_slice %65 {offsets = [0, 2, 0], sizes = [16, 16, 4], strides = [1, 1, 1]} : vector<18x18x4xbf16> to vector<16x16x4xbf16>
    %70 = tpu.concatenate %67, %68, %69 in 2 : vector<16x16x4xbf16>, vector<16x16x4xbf16>, vector<16x16x4xbf16> -> vector<16x16x12xbf16>
    %c0_22 = arith.constant 0 : index
    %c0_23 = arith.constant 0 : index
    %c0_24 = arith.constant 0 : index
    %71 = vector.load %arg6[%c0_22, %c0_23, %c0_24] : memref<3x12x4xbf16, #tpu.memory_space<vmem>>, vector<1x12x4xbf16>
    %72 = vector.shape_cast %71 : vector<1x12x4xbf16> to vector<12x4xbf16>
    %cst_25 = arith.constant dense<0.000000e+00> : vector<16x16x4xf32>
    %73 = tpu.matmul %70, %72, %cst_25 {dimension_numbers = #tpu.dot_dimension_numbers<[2], [0], [0, 1], [1], [0, 0, 0, 1, 1, 1], [], []>} : vector<16x16x12xbf16>, vector<12x4xbf16>, vector<16x16x4xf32> -> vector<16x16x4xf32>
    %74 = arith.addf %66, %73 : vector<16x16x4xf32>
    %75 = vector.extract_strided_slice %65 {offsets = [1, 0, 0], sizes = [16, 16, 4], strides = [1, 1, 1]} : vector<18x18x4xbf16> to vector<16x16x4xbf16>
    %76 = vector.extract_strided_slice %65 {offsets = [1, 1, 0], sizes = [16, 16, 4], strides = [1, 1, 1]} : vector<18x18x4xbf16> to vector<16x16x4xbf16>
    %77 = vector.extract_strided_slice %65 {offsets = [1, 2, 0], sizes = [16, 16, 4], strides = [1, 1, 1]} : vector<18x18x4xbf16> to vector<16x16x4xbf16>
    %78 = tpu.concatenate %75, %76, %77 in 2 : vector<16x16x4xbf16>, vector<16x16x4xbf16>, vector<16x16x4xbf16> -> vector<16x16x12xbf16>
    %c1_26 = arith.constant 1 : index
    %c0_27 = arith.constant 0 : index
    %c0_28 = arith.constant 0 : index
    %79 = vector.load %arg6[%c1_26, %c0_27, %c0_28] : memref<3x12x4xbf16, #tpu.memory_space<vmem>>, vector<1x12x4xbf16>
    %80 = vector.shape_cast %79 : vector<1x12x4xbf16> to vector<12x4xbf16>
    %cst_29 = arith.constant dense<0.000000e+00> : vector<16x16x4xf32>
    %81 = tpu.matmul %78, %80, %cst_29 {dimension_numbers = #tpu.dot_dimension_numbers<[2], [0], [0, 1], [1], [0, 0, 0, 1, 1, 1], [], []>} : vector<16x16x12xbf16>, vector<12x4xbf16>, vector<16x16x4xf32> -> vector<16x16x4xf32>
    %82 = arith.addf %74, %81 : vector<16x16x4xf32>
    %83 = vector.extract_strided_slice %65 {offsets = [2, 0, 0], sizes = [16, 16, 4], strides = [1, 1, 1]} : vector<18x18x4xbf16> to vector<16x16x4xbf16>
    %84 = vector.extract_strided_slice %65 {offsets = [2, 1, 0], sizes = [16, 16, 4], strides = [1, 1, 1]} : vector<18x18x4xbf16> to vector<16x16x4xbf16>
    %85 = vector.extract_strided_slice %65 {offsets = [2, 2, 0], sizes = [16, 16, 4], strides = [1, 1, 1]} : vector<18x18x4xbf16> to vector<16x16x4xbf16>
    %86 = tpu.concatenate %83, %84, %85 in 2 : vector<16x16x4xbf16>, vector<16x16x4xbf16>, vector<16x16x4xbf16> -> vector<16x16x12xbf16>
    %c2_30 = arith.constant 2 : index
    %c0_31 = arith.constant 0 : index
    %c0_32 = arith.constant 0 : index
    %87 = vector.load %arg6[%c2_30, %c0_31, %c0_32] : memref<3x12x4xbf16, #tpu.memory_space<vmem>>, vector<1x12x4xbf16>
    %88 = vector.shape_cast %87 : vector<1x12x4xbf16> to vector<12x4xbf16>
    %cst_33 = arith.constant dense<0.000000e+00> : vector<16x16x4xf32>
    %89 = tpu.matmul %86, %88, %cst_33 {dimension_numbers = #tpu.dot_dimension_numbers<[2], [0], [0, 1], [1], [0, 0, 0, 1, 1, 1], [], []>} : vector<16x16x12xbf16>, vector<12x4xbf16>, vector<16x16x4xf32> -> vector<16x16x4xf32>
    %90 = arith.addf %82, %89 : vector<16x16x4xf32>
    %c0_34 = arith.constant 0 : index
    %c0_35 = arith.constant 0 : index
    %91 = vector.load %arg7[%c0_34, %c0_35] : memref<1x4xf32, #tpu.memory_space<vmem>>, vector<1x4xf32>
    %92 = vector.shape_cast %91 : vector<1x4xf32> to vector<4xf32>
    %93 = vector.shape_cast %92 : vector<4xf32> to vector<1x1x4xf32>
    %94 = vector.broadcast %93 : vector<1x1x4xf32> to vector<16x16x4xf32>
    %95 = arith.mulf %90, %94 : vector<16x16x4xf32>
    %c0_36 = arith.constant 0 : index
    %c0_37 = arith.constant 0 : index
    %96 = vector.load %arg8[%c0_36, %c0_37] : memref<1x4xf32, #tpu.memory_space<vmem>>, vector<1x4xf32>
    %97 = vector.shape_cast %96 : vector<1x4xf32> to vector<4xf32>
    %98 = vector.shape_cast %97 : vector<4xf32> to vector<1x1x4xf32>
    %99 = vector.broadcast %98 : vector<1x1x4xf32> to vector<16x16x4xf32>
    %100 = arith.addf %95, %99 : vector<16x16x4xf32>
    %101 = vector.extract_strided_slice %4 {offsets = [2, 2, 0], sizes = [16, 16, 4], strides = [1, 1, 1]} : vector<20x20x4xf32> to vector<16x16x4xf32>
    %102 = arith.addf %100, %101 : vector<16x16x4xf32>
    %cst_38 = arith.constant 0.000000e+00 : f32
    %103 = vector.broadcast %cst_38 : f32 to vector<16x16x4xf32>
    %104 = arith.maximumf %102, %103 : vector<16x16x4xf32>
    %c0_39 = arith.constant 0 : index
    %c0_40 = arith.constant 0 : index
    %c0_41 = arith.constant 0 : index
    %c0_42 = arith.constant 0 : index
    %105 = vector.load %arg9[%c0_39, %c0_40, %c0_41, %c0_42] : memref<1x16x16x4xf32, #tpu.memory_space<vmem>>, vector<1x16x16x4xf32>
    %106 = vector.shape_cast %105 : vector<1x16x16x4xf32> to vector<16x16x4xf32>
    %107 = vector.shape_cast %104 : vector<16x16x4xf32> to vector<1x16x16x4xf32>
    tpu.vector_store %arg9[%c0_39, %c0_40, %c0_41, %c0_42], %107 {strides = array<i32>} : memref<1x16x16x4xf32, #tpu.memory_space<vmem>>, vector<1x16x16x4xf32>,
    return
  }
  func.func @transform_0(%arg0: i32, %arg1: i32) -> (i32, i32, i32, i32) {
    %c0_i32 = arith.constant 0 : i32
    %c0_i32_0 = arith.constant 0 : i32
    %c0_i32_1 = arith.constant 0 : i32
    %c0_i32_2 = arith.constant 0 : i32
    return %arg0, %c0_i32, %c0_i32_0, %c0_i32_1 : i32, i32, i32, i32
  }
  func.func @transform_1(%arg0: i32, %arg1: i32) -> (i32, i32, i32) {
    %c0_i32 = arith.constant 0 : i32
    %c0_i32_0 = arith.constant 0 : i32
    %c0_i32_1 = arith.constant 0 : i32
    %c0_i32_2 = arith.constant 0 : i32
    return %c0_i32, %c0_i32_0, %c0_i32_1 : i32, i32, i32
  }
  func.func @transform_2(%arg0: i32, %arg1: i32) -> (i32, i32) {
    %c0_i32 = arith.constant 0 : i32
    %c0_i32_0 = arith.constant 0 : i32
    %c0_i32_1 = arith.constant 0 : i32
    return %c0_i32, %c0_i32_0 : i32, i32
  }
  func.func @transform_3(%arg0: i32, %arg1: i32) -> (i32, i32) {
    %c0_i32 = arith.constant 0 : i32
    %c0_i32_0 = arith.constant 0 : i32
    %c0_i32_1 = arith.constant 0 : i32
    return %c0_i32, %c0_i32_0 : i32, i32
  }
  func.func @transform_4(%arg0: i32, %arg1: i32) -> (i32, i32, i32) {
    %c0_i32 = arith.constant 0 : i32
    %c0_i32_0 = arith.constant 0 : i32
    %c0_i32_1 = arith.constant 0 : i32
    %c0_i32_2 = arith.constant 0 : i32
    return %c0_i32, %c0_i32_0, %c0_i32_1 : i32, i32, i32
  }
  func.func @transform_5(%arg0: i32, %arg1: i32) -> (i32, i32) {
    %c0_i32 = arith.constant 0 : i32
    %c0_i32_0 = arith.constant 0 : i32
    %c0_i32_1 = arith.constant 0 : i32
    return %c0_i32, %c0_i32_0 : i32, i32
  }
  func.func @transform_6(%arg0: i32, %arg1: i32) -> (i32, i32) {
    %c0_i32 = arith.constant 0 : i32
    %c0_i32_0 = arith.constant 0 : i32
    %c0_i32_1 = arith.constant 0 : i32
    return %c0_i32, %c0_i32_0 : i32, i32
  }
  func.func @transform_7(%arg0: i32, %arg1: i32) -> (i32, i32, i32, i32) {
    %c0_i32 = arith.constant 0 : i32
    %c0_i32_0 = arith.constant 0 : i32
    %c0_i32_1 = arith.constant 0 : i32
    return %arg0, %arg1, %c0_i32, %c0_i32_0 : i32, i32, i32, i32
  }
}

</mosaic_0001>

<llo_original>
// kernel: li_block_forward.1
$region0: #{li_block_forward.1}
  #allocation0 [shape = 'u32[]', space=smem, size = 0x4, offset = 0x4, fixed_abs, tag = 'smem constant byte address 0x4 - core index']
  #allocation1 [shape = 'u32[144,128]{1,0:T(1,128)}', space=vmem, size = 0x12000, scoped, tag = 'internal scratch']
  %s0 = inlined_call_operand.vmem [shape: f32[2,20,20,4], index: 0, kind: input, shape index: {}]
  %s1 = inlined_call_operand.vmem [shape: bf16[3,12,4], index: 1, kind: input, shape index: {}]
  %s2 = inlined_call_operand.vmem [shape: f32[1,4], index: 2, kind: input, shape index: {}]
  %s3 = inlined_call_operand.vmem [shape: f32[1,4], index: 3, kind: input, shape index: {}]
  %s4 = inlined_call_operand.vmem [shape: bf16[3,12,4], index: 4, kind: input, shape index: {}]
  %s5 = inlined_call_operand.vmem [shape: f32[1,4], index: 5, kind: input, shape index: {}]
  %s6 = inlined_call_operand.vmem [shape: f32[1,4], index: 6, kind: input, shape index: {}]
  %s7 = inlined_call_operand.vmem [shape: f32[2,16,16,4], index: 7, kind: output, shape index: {}]
  %s8 = sld [smem:[#allocation0]]
  $region61: #{li_block_forward.1} parent=0
    _
  %s10 = ssub.s32 1, %s8
  %s11 = scalar_select 0, %s10, %s8
  loop: start=0, step=1, limit=4
  $region2: #{li_block_forward.1} parent=0 // loop_pre_header
    _
  $region3: #{li_block_forward.1} parent=0 // loop_header
    %s13 = sphi 0, %s17
    %p14 = scmp.ge.s32.totalorder %s13, 4
    %s20 = sphi 0, %s32
    %s21 = sphi 0, %s28
    %s22 = sphi 0, %s20
    %s23 = sphi 0, %s21
    %s24 = sphi 0, %s22
    %s25 = sphi 0, %s23
    %s35 = sphi 0, %s37
    %s38 = sphi 0, %s35
    %s39 = sphi 0, %s38
    %s55 = sphi 0, %s39
    %s59 = sphi 0, %s59
    %s61 = sphi 0, %s59
    %s62 = sphi 0, %s61
    %s76 = sphi 0, %s62
    %s80 = sphi 0, %s80
    %s82 = sphi 0, %s80
    %s83 = sphi 0, %s82
    %s97 = sphi 0, %s83
    %s101 = sphi 0, %s101
    %s103 = sphi 0, %s101
    %s104 = sphi 0, %s103
    %s118 = sphi 0, %s104
    %s122 = sphi 0, %s122
    %s124 = sphi 0, %s122
    %s125 = sphi 0, %s124
    %s139 = sphi 0, %s125
    %s143 = sphi 0, %s143
    %s145 = sphi 0, %s143
    %s146 = sphi 0, %s145
    %s160 = sphi 0, %s146
    %s164 = sphi 0, %s164
    %s166 = sphi 0, %s164
    %s167 = sphi 0, %s166
    %s181 = sphi 0, %s167
    %s189 = sphi 0, %s191
    %s192 = sphi 0, %s189
    %s193 = sphi 0, %s192
    %s209 = sphi 0, %s193
  $region4: #{li_block_forward.1} parent=0 // loop_header_branch
    %16 = sbr.rel (%p14) target = $region8
  $region5: #{li_block_forward.1} parent=0 // loop_body
    %s18 = ssub.s32 %s13, 1
    %s19 = ssub.s32 %s13, 2
    %s26 = sadd.s32 1, %s21
    %p27 = scmp.ge.s32.totalorder %s26, 1
    %s28 = scalar_select %p27, 0, %s26
    %s29 = sadd.s32 1, %s20
    %s30 = scalar_select %p27, %s29, %s20
    %p31 = scmp.ge.s32.totalorder %s30, 2
    %s32 = scalar_select %p31, 0, %s30
    %s33 = ssub.s32 %s20, %s32
    %p34 = scmp.eq.s32.totalorder %s33, 0
    %s36 = sadd.s32 %s35, 1
    %s37 = scalar_select %p34, %s35, %s36
    %p40 = pneg %p34
    %p41 = scmp.eq.s32.totalorder %s13, 1
    %p42 = por %p40, %p41
    %p43 = scmp.ne.s32.totalorder %s35, %s38
    %p44 = scmp.eq.s32.totalorder %s13, 0
    %p45 = por %p43, %p44
    %p46 = scmp.ne.s32.totalorder %s35, %s38
    %p47 = scmp.eq.s32.totalorder %s18, 1
    %p48 = por %p46, %p47
    %p49 = scmp.ne.s32.totalorder %s38, %s39
    %p50 = scmp.eq.s32.totalorder %s18, 0
    %p51 = por %p49, %p50
    %p52 = scmp.ne.s32.totalorder %s38, %s39
    %p53 = scmp.eq.s32.totalorder %s19, 1
    %p54 = por %p52, %p53
    %p56 = scmp.ne.s32.totalorder %s39, %s55
    %p57 = scmp.eq.s32.totalorder %s19, 0
    %p58 = por %p56, %p57
    %s60 = sadd.s32 %s59, 1
    %p63 = scmp.eq.s32.totalorder %s13, 1
    %p64 = scmp.ne.s32.totalorder %s59, %s61
    %p65 = scmp.eq.s32.totalorder %s13, 0
    %p66 = por %p64, %p65
    %p67 = scmp.ne.s32.totalorder %s59, %s61
    %p68 = scmp.eq.s32.totalorder %s18, 1
    %p69 = por %p67, %p68
    %p70 = scmp.ne.s32.totalorder %s61, %s62
    %p71 = scmp.eq.s32.totalorder %s18, 0
    %p72 = por %p70, %p71
    %p73 = scmp.ne.s32.totalorder %s61, %s62
    %p74 = scmp.eq.s32.totalorder %s19, 1
    %p75 = por %p73, %p74
    %p77 = scmp.ne.s32.totalorder %s62, %s76
    %p78 = scmp.eq.s32.totalorder %s19, 0
    %p79 = por %p77, %p78
    %s81 = sadd.s32 %s80, 1
    %p84 = scmp.eq.s32.totalorder %s13, 1
    %p85 = scmp.ne.s32.totalorder %s80, %s82
    %p86 = scmp.eq.s32.totalorder %s13, 0
    %p87 = por %p85, %p86
    %p88 = scmp.ne.s32.totalorder %s80, %s82
    %p89 = scmp.eq.s32.totalorder %s18, 1
    %p90 = por %p88, %p89
    %p91 = scmp.ne.s32.totalorder %s82, %s83
    %p92 = scmp.eq.s32.totalorder %s18, 0
    %p93 = por %p91, %p92
    %p94 = scmp.ne.s32.totalorder %s82, %s83
    %p95 = scmp.eq.s32.totalorder %s19, 1
    %p96 = por %p94, %p95
    %p98 = scmp.ne.s32.totalorder %s83, %s97
    %p99 = scmp.eq.s32.totalorder %s19, 0
    %p100 = por %p98, %p99
    %s102 = sadd.s32 %s101, 1
    %p105 = scmp.eq.s32.totalorder %s13, 1
    %p106 = scmp.ne.s32.totalorder %s101, %s103
    %p107 = scmp.eq.s32.totalorder %s13, 0
    %p108 = por %p106, %p107
    %p109 = scmp.ne.s32.totalorder %s101, %s103
    %p110 = scmp.eq.s32.totalorder %s18, 1
    %p111 = por %p109, %p110
    %p112 = scmp.ne.s32.totalorder %s103, %s104
    %p113 = scmp.eq.s32.totalorder %s18, 0
    %p114 = por %p112, %p113
    %p115 = scmp.ne.s32.totalorder %s103, %s104
    %p116 = scmp.eq.s32.totalorder %s19, 1
    %p117 = por %p115, %p116
    %p119 = scmp.ne.s32.totalorder %s104, %s118
    %p120 = scmp.eq.s32.totalorder %s19, 0
    %p121 = por %p119, %p120
    %s123 = sadd.s32 %s122, 1
    %p126 = scmp.eq.s32.totalorder %s13, 1
    %p127 = scmp.ne.s32.totalorder %s122, %s124
    %p128 = scmp.eq.s32.totalorder %s13, 0
    %p129 = por %p127, %p128
    %p130 = scmp.ne.s32.totalorder %s122, %s124
    %p131 = scmp.eq.s32.totalorder %s18, 1
    %p132 = por %p130, %p131
    %p133 = scmp.ne.s32.totalorder %s124, %s125
    %p134 = scmp.eq.s32.totalorder %s18, 0
    %p135 = por %p133, %p134
    %p136 = scmp.ne.s32.totalorder %s124, %s125
    %p137 = scmp.eq.s32.totalorder %s19, 1
    %p138 = por %p136, %p137
    %p140 = scmp.ne.s32.totalorder %s125, %s139
    %p141 = scmp.eq.s32.totalorder %s19, 0
    %p142 = por %p140, %p141
    %s144 = sadd.s32 %s143, 1
    %p147 = scmp.eq.s32.totalorder %s13, 1
    %p148 = scmp.ne.s32.totalorder %s143, %s145
    %p149 = scmp.eq.s32.totalorder %s13, 0
    %p150 = por %p148, %p149
    %p151 = scmp.ne.s32.totalorder %s143, %s145
    %p152 = scmp.eq.s32.totalorder %s18, 1
    %p153 = por %p151, %p152
    %p154 = scmp.ne.s32.totalorder %s145, %s146
    %p155 = scmp.eq.s32.totalorder %s18, 0
    %p156 = por %p154, %p155
    %p157 = scmp.ne.s32.totalorder %s145, %s146
    %p158 = scmp.eq.s32.totalorder %s19, 1
    %p159 = por %p157, %p158
    %p161 = scmp.ne.s32.totalorder %s146, %s160
    %p162 = scmp.eq.s32.totalorder %s19, 0
    %p163 = por %p161, %p162
    %s165 = sadd.s32 %s164, 1
    %p168 = scmp.eq.s32.totalorder %s13, 1
    %p169 = scmp.ne.s32.totalorder %s164, %s166
    %p170 = scmp.eq.s32.totalorder %s13, 0
    %p171 = por %p169, %p170
    %p172 = scmp.ne.s32.totalorder %s164, %s166
    %p173 = scmp.eq.s32.totalorder %s18, 1
    %p174 = por %p172, %p173
    %p175 = scmp.ne.s32.totalorder %s166, %s167
    %p176 = scmp.eq.s32.totalorder %s18, 0
    %p177 = por %p175, %p176
    %p178 = scmp.ne.s32.totalorder %s166, %s167
    %p179 = scmp.eq.s32.totalorder %s19, 1
    %p180 = por %p178, %p179
    %p182 = scmp.ne.s32.totalorder %s167, %s181
    %p183 = scmp.eq.s32.totalorder %s19, 0
    %p184 = por %p182, %p183
    %s185 = ssub.s32 %s20, %s32
    %s186 = ssub.s32 %s21, %s28
    %s187 = sor.u32 %s185, %s186
    %p188 = scmp.eq.s32.totalorder %s187, 0
    %s190 = sadd.s32 %s189, 1
    %s191 = scalar_select %p188, %s189, %s190
    %p194 = pneg %p188
    %p195 = scmp.eq.s32.totalorder %s13, 1
    %p196 = por %p194, %p195
    %p197 = scmp.ne.s32.totalorder %s189, %s192
    %p198 = scmp.eq.s32.totalorder %s13, 0
    %p199 = por %p197, %p198
    %p200 = scmp.ne.s32.totalorder %s189, %s192
    %p201 = scmp.eq.s32.totalorder %s18, 1
    %p202 = por %p200, %p201
    %p203 = scmp.ne.s32.totalorder %s192, %s193
    %p204 = scmp.eq.s32.totalorder %s18, 0
    %p205 = por %p203, %p204
    %p206 = scmp.ne.s32.totalorder %s192, %s193
    %p207 = scmp.eq.s32.totalorder %s19, 1
    %p208 = por %p206, %p207
    %p210 = scmp.ne.s32.totalorder %s193, %s209
    %p211 = scmp.eq.s32.totalorder %s19, 0
    %p212 = por %p210, %p211
    %p213 = scmp.le.s32.totalorder 1, %s13
    %p214 = scmp.lt.s32.totalorder %s13, 3
    %p215 = pnand %p213, %p214
    %p216 = pneg %p215
    // Predicated region
    $region9: #{li_block_forward.1} parent=5 // pred_check
      _
    $region10: #{li_block_forward.1} parent=5 // pred_check_branch
      %218 = sbr.rel (%p215) target = $region12
    $region11: #{li_block_forward.1} parent=5 // pred_region
      %s219 = ssub.s32 %s13, 1
      // Predicated region
      $region13: #{li_block_forward.1} parent=11 // pred_check
        %p220 = pneg %p72
      $region14: #{li_block_forward.1} parent=11 // pred_check_branch
        %222 = sbr.rel (%p220) target = $region16
      $region15: #{li_block_forward.1} parent=11 // pred_region
        _
      $region16: #{li_block_forward.1} parent=11 // pred_fallthru
        _
      // Predicated region
      $region17: #{li_block_forward.1} parent=11 // pred_check
        %p223 = pneg %p93
      $region18: #{li_block_forward.1} parent=11 // pred_check_branch
        %225 = sbr.rel (%p223) target = $region20
      $region19: #{li_block_forward.1} parent=11 // pred_region
        _
      $region20: #{li_block_forward.1} parent=11 // pred_fallthru
        _
      // Predicated region
      $region21: #{li_block_forward.1} parent=11 // pred_check
        %p226 = pneg %p114
      $region22: #{li_block_forward.1} parent=11 // pred_check_branch
        %228 = sbr.rel (%p226) target = $region24
      $region23: #{li_block_forward.1} parent=11 // pred_region
        _
      $region24: #{li_block_forward.1} parent=11 // pred_fallthru
        _
      // Predicated region
      $region25: #{li_block_forward.1} parent=11 // pred_check
        %p229 = pneg %p135
      $region26: #{li_block_forward.1} parent=11 // pred_check_branch
        %231 = sbr.rel (%p229) target = $region28
      $region27: #{li_block_forward.1} parent=11 // pred_region
        _
      $region28: #{li_block_forward.1} parent=11 // pred_fallthru
        _
      // Predicated region
      $region29: #{li_block_forward.1} parent=11 // pred_check
        %p232 = pneg %p156
      $region30: #{li_block_forward.1} parent=11 // pred_check_branch
        %234 = sbr.rel (%p232) target = $region32
      $region31: #{li_block_forward.1} parent=11 // pred_region
        _
      $region32: #{li_block_forward.1} parent=11 // pred_fallthru
        _
      // Predicated region
      $region33: #{li_block_forward.1} parent=11 // pred_check
        %p235 = pneg %p177
      $region34: #{li_block_forward.1} parent=11 // pred_check_branch
        %237 = sbr.rel (%p235) target = $region36
      $region35: #{li_block_forward.1} parent=11 // pred_region
        _
      $region36: #{li_block_forward.1} parent=11 // pred_fallthru
        _
    $region12: #{li_block_forward.1} parent=5 // pred_fallthru
      _
    %p238 = scmp.lt.s32.totalorder %s13, 2
    // Predicated region
    $region37: #{li_block_forward.1} parent=5 // pred_check
      %p239 = pneg %p238
    $region38: #{li_block_forward.1} parent=5 // pred_check_branch
      %241 = sbr.rel (%p239) target = $region40
    $region39: #{li_block_forward.1} parent=5 // pred_region
      // Predicated region
      $region41: #{li_block_forward.1} parent=39 // pred_check
        %p242 = pneg %p45
      $region42: #{li_block_forward.1} parent=39 // pred_check_branch
        %244 = sbr.rel (%p242) target = $region44
      $region43: #{li_block_forward.1} parent=39 // pred_region
        %p245 = scmp.lt.s32.totalorder %s20, 1
        %s246 = scalar_select %p245, %s20, 1
        %s247 = smul.addr %s246, 60
        %s248 = smul.addr %s247, 8
        %s249 = scalar_lea.vmem %s0, %s248
      $region44: #{li_block_forward.1} parent=39 // pred_fallthru
        _
    $region40: #{li_block_forward.1} parent=5 // pred_fallthru
      _
    %p250 = scmp.le.s32.totalorder 1, %s13
    %p251 = scmp.lt.s32.totalorder %s13, 3
    %p252 = pnand %p250, %p251
    %p253 = pneg %p252
    // Predicated region
    $region45: #{li_block_forward.1} parent=5 // pred_check
      _
    $region46: #{li_block_forward.1} parent=5 // pred_check_branch
      %255 = sbr.rel (%p252) target = $region48
    $region47: #{li_block_forward.1} parent=5 // pred_region
      %s256 = ssub.s32 %s13, 1
      %p257 = scmp.lt.s32.totalorder %s22, 1
      %s258 = scalar_select %p257, %s22, 1
      %s259 = smul.addr %s258, 60
      %s260 = smul.addr %s259, 8
      %s261 = scalar_lea.vmem %s0, %s260
      %p262 = pneg %p51
      %p263 = pneg %p48
      %p264 = pneg %p72
      %p265 = pneg %p69
      %p266 = pneg %p93
      %p267 = pneg %p90
      %p268 = pneg %p114
      %p269 = pneg %p111
      %p270 = pneg %p135
      %p271 = pneg %p132
      %p272 = pneg %p156
      %p273 = pneg %p153
      %p274 = pneg %p177
      %p275 = pneg %p174
      %p276 = pneg %p205
      %p277 = pneg %p202
      %s278 = smul.u32 16, %s23
      %p279 = scmp.lt.s32.totalorder %s22, 1
      %s280 = scalar_select %p279, %s22, 1
      %p281 = scmp.lt.s32.totalorder %s278, 15
      %s282 = scalar_select %p281, %s278, 15
      %s283 = smul.addr %s282, 2
      %s284 = smul.addr %s280, 32
      %s285 = sadd.s32 %s283, %s284
      %s286 = smul.addr %s285, 8
      %s287 = scalar_lea.vmem %s7, %s286
      %p288 = scmp.lt.s32.totalorder %s22, 1
      %s289 = scalar_select %p288, %s22, 1
      %s290 = smul.addr %s289, 60
      %s291 = smul.addr %s290, 8
      %s292 = scalar_lea.vmem %s0, %s291
      %s293 = smul.u32 16, %s23
      %p294 = scmp.lt.s32.totalorder %s22, 1
      %s295 = scalar_select %p294, %s22, 1
      %p296 = scmp.lt.s32.totalorder %s293, 15
      %s297 = scalar_select %p296, %s293, 15
      %s298 = smul.addr %s297, 2
      %s299 = smul.addr %s295, 32
      %s300 = sadd.s32 %s298, %s299
      %s301 = smul.addr %s300, 8
      %s302 = scalar_lea.vmem %s7, %s301
      %s303 = smul.u32 16, %s23
      %s305 = smul.u32 %s23, 16
      %s306 = smul.u32 %s305, 24
      %s307 = scalar_lea.vmem %s292, %s306
      %v308 = vld [vmem:[%s307] sm:$0xff]
      %v309 = vld [vmem:[%s307 + $0x8] sm:$0xff]
      %v310 = vld [vmem:[%s307 + $0x10] sm:$0xf]
      %v311 = vld [vmem:[%s307 + $0x18] sm:$0xff]
      %v312 = vld [vmem:[%s307 + $0x20] sm:$0xff]
      %v313 = vld [vmem:[%s307 + $0x28] sm:$0xf]
      %v314 = vld [vmem:[%s307 + $0x30] sm:$0xff]
      %v315 = vld [vmem:[%s307 + $0x38] sm:$0xff]
      %v316 = vld [vmem:[%s307 + $0x40] sm:$0xf]
      %v317 = vld [vmem:[%s307 + $0x48] sm:$0xff]
      %v318 = vld [vmem:[%s307 + $0x50] sm:$0xff]
      %v319 = vld [vmem:[%s307 + $0x58] sm:$0xf]
      %v320 = vld [vmem:[%s307 + $0x60] sm:$0xff]
      %v321 = vld [vmem:[%s307 + $0x68] sm:$0xff]
      %v322 = vld [vmem:[%s307 + $0x70] sm:$0xf]
      %v323 = vld [vmem:[%s307 + $0x78] sm:$0xff]
      %v324 = vld [vmem:[%s307 + $0x80] sm:$0xff]
      %v325 = vld [vmem:[%s307 + $0x88] sm:$0xf]
      %v326 = vld [vmem:[%s307 + $0x90] sm:$0xff]
      %v327 = vld [vmem:[%s307 + $0x98] sm:$0xff]
      %v328 = vld [vmem:[%s307 + $0xa0] sm:$0xf]
      %v329 = vld [vmem:[%s307 + $0xa8] sm:$0xff]
      %v330 = vld [vmem:[%s307 + $0xb0] sm:$0xff]
      %v331 = vld [vmem:[%s307 + $0xb8] sm:$0xf]
      %v332 = vld [vmem:[%s307 + $0xc0] sm:$0xff]
      %v333 = vld [vmem:[%s307 + $0xc8] sm:$0xff]
      %v334 = vld [vmem:[%s307 + $0xd0] sm:$0xf]
      %v335 = vld [vmem:[%s307 + $0xd8] sm:$0xff]
      %v336 = vld [vmem:[%s307 + $0xe0] sm:$0xff]
      %v337 = vld [vmem:[%s307 + $0xe8] sm:$0xf]
      %v338 = vld [vmem:[%s307 + $0xf0] sm:$0xff]
      %v339 = vld [vmem:[%s307 + $0xf8] sm:$0xff]
      %v340 = vld [vmem:[%s307 + $0x100] sm:$0xf]
      %v341 = vld [vmem:[%s307 + $0x108] sm:$0xff]
      %v342 = vld [vmem:[%s307 + $0x110] sm:$0xff]
      %v343 = vld [vmem:[%s307 + $0x118] sm:$0xf]
      %v344 = vld [vmem:[%s307 + $0x120] sm:$0xff]
      %v345 = vld [vmem:[%s307 + $0x128] sm:$0xff]
      %v346 = vld [vmem:[%s307 + $0x130] sm:$0xf]
      %v347 = vld [vmem:[%s307 + $0x138] sm:$0xff]
      %v348 = vld [vmem:[%s307 + $0x140] sm:$0xff]
      %v349 = vld [vmem:[%s307 + $0x148] sm:$0xf]
      %v350 = vld [vmem:[%s307 + $0x150] sm:$0xff]
      %v351 = vld [vmem:[%s307 + $0x158] sm:$0xff]
      %v352 = vld [vmem:[%s307 + $0x160] sm:$0xf]
      %v353 = vld [vmem:[%s307 + $0x168] sm:$0xff]
      %v354 = vld [vmem:[%s307 + $0x170] sm:$0xff]
      %v355 = vld [vmem:[%s307 + $0x178] sm:$0xf]
      %v356 = vld [vmem:[%s307 + $0x180] sm:$0xff]
      %v357 = vld [vmem:[%s307 + $0x188] sm:$0xff]
      %v358 = vld [vmem:[%s307 + $0x190] sm:$0xf]
      %v359 = vld [vmem:[%s307 + $0x198] sm:$0xff]
      %v360 = vld [vmem:[%s307 + $0x1a0] sm:$0xff]
      %v361 = vld [vmem:[%s307 + $0x1a8] sm:$0xf]
      %v362 = vld [vmem:[%s307 + $0x1b0] sm:$0xff]
      %v363 = vld [vmem:[%s307 + $0x1b8] sm:$0xff]
      %v364 = vld [vmem:[%s307 + $0x1c0] sm:$0xf]
      %v365 = vld [vmem:[%s307 + $0x1c8] sm:$0xff]
      %v366 = vld [vmem:[%s307 + $0x1d0] sm:$0xff]
      %v367 = vld [vmem:[%s307 + $0x1d8] sm:$0xf]
      %vm422 = vcmask 1046528
      %v423 = vrot.slane %v308, 1
      %v424 = vrot.slane %v309, 1
      %v425 = vsel %vm422, %v423, %v424
      %v426 = vrot.slane %v310, 1
      %v427 = vsel %vm422, %v424, %v426
      %v428 = vrot.slane %v311, 1
      %v429 = vrot.slane %v312, 1
      %v430 = vsel %vm422, %v428, %v429
      %v431 = vrot.slane %v313, 1
      %v432 = vsel %vm422, %v429, %v431
      %v433 = vrot.slane %v314, 1
      %v434 = vrot.slane %v315, 1
      %v435 = vsel %vm422, %v433, %v434
      %v436 = vrot.slane %v316, 1
      %v437 = vsel %vm422, %v434, %v436
      %v438 = vrot.slane %v317, 1
      %v439 = vrot.slane %v318, 1
      %v440 = vsel %vm422, %v438, %v439
      %v441 = vrot.slane %v319, 1
      %v442 = vsel %vm422, %v439, %v441
      %v443 = vrot.slane %v320, 1
      %v444 = vrot.slane %v321, 1
      %v445 = vsel %vm422, %v443, %v444
      %v446 = vrot.slane %v322, 1
      %v447 = vsel %vm422, %v444, %v446
      %v448 = vrot.slane %v323, 1
      %v449 = vrot.slane %v324, 1
      %v450 = vsel %vm422, %v448, %v449
      %v451 = vrot.slane %v325, 1
      %v452 = vsel %vm422, %v449, %v451
      %v453 = vrot.slane %v326, 1
      %v454 = vrot.slane %v327, 1
      %v455 = vsel %vm422, %v453, %v454
      %v456 = vrot.slane %v328, 1
      %v457 = vsel %vm422, %v454, %v456
      %v458 = vrot.slane %v329, 1
      %v459 = vrot.slane %v330, 1
      %v460 = vsel %vm422, %v458, %v459
      %v461 = vrot.slane %v331, 1
      %v462 = vsel %vm422, %v459, %v461
      %v463 = vrot.slane %v332, 1
      %v464 = vrot.slane %v333, 1
      %v465 = vsel %vm422, %v463, %v464
      %v466 = vrot.slane %v334, 1
      %v467 = vsel %vm422, %v464, %v466
      %v468 = vrot.slane %v335, 1
      %v469 = vrot.slane %v336, 1
      %v470 = vsel %vm422, %v468, %v469
      %v471 = vrot.slane %v337, 1
      %v472 = vsel %vm422, %v469, %v471
      %v473 = vrot.slane %v338, 1
      %v474 = vrot.slane %v339, 1
      %v475 = vsel %vm422, %v473, %v474
      %v476 = vrot.slane %v340, 1
      %v477 = vsel %vm422, %v474, %v476
      %v478 = vrot.slane %v341, 1
      %v479 = vrot.slane %v342, 1
      %v480 = vsel %vm422, %v478, %v479
      %v481 = vrot.slane %v343, 1
      %v482 = vsel %vm422, %v479, %v481
      %v483 = vrot.slane %v344, 1
      %v484 = vrot.slane %v345, 1
      %v485 = vsel %vm422, %v483, %v484
      %v486 = vrot.slane %v346, 1
      %v487 = vsel %vm422, %v484, %v486
      %v488 = vrot.slane %v347, 1
      %v489 = vrot.slane %v348, 1
      %v490 = vsel %vm422, %v488, %v489
      %v491 = vrot.slane %v349, 1
      %v492 = vsel %vm422, %v489, %v491
      %v493 = vrot.slane %v350, 1
      %v494 = vrot.slane %v351, 1
      %v495 = vsel %vm422, %v493, %v494
      %v496 = vrot.slane %v352, 1
      %v497 = vsel %vm422, %v494, %v496
      %v498 = vrot.slane %v353, 1
      %v499 = vrot.slane %v354, 1
      %v500 = vsel %vm422, %v498, %v499
      %v501 = vrot.slane %v355, 1
      %v502 = vsel %vm422, %v499, %v501
      %v503 = vrot.slane %v356, 1
      %v504 = vrot.slane %v357, 1
      %v505 = vsel %vm422, %v503, %v504
      %v506 = vrot.slane %v358, 1
      %v507 = vsel %vm422, %v504, %v506
      %v508 = vrot.slane %v359, 1
      %v509 = vrot.slane %v360, 1
      %v510 = vsel %vm422, %v508, %v509
      %v511 = vrot.slane %v361, 1
      %v512 = vsel %vm422, %v509, %v511
      %513 = vrot.lane.b32.xlu0 %v425, 4
      %v514 = vpop.permute.xlu0 %513
      %515 = vrot.lane.b32.xlu0 %v427, 4
      %v516 = vpop.permute.xlu0 %515
      %517 = vrot.lane.b32.xlu0 %v426, 4
      %v518 = vpop.permute.xlu0 %517
      %519 = vrot.lane.b32.xlu0 %v430, 4
      %v520 = vpop.permute.xlu0 %519
      %521 = vrot.lane.b32.xlu0 %v432, 4
      %v522 = vpop.permute.xlu0 %521
      %523 = vrot.lane.b32.xlu0 %v431, 4
      %v524 = vpop.permute.xlu0 %523
      %525 = vrot.lane.b32.xlu0 %v435, 4
      %v526 = vpop.permute.xlu0 %525
      %527 = vrot.lane.b32.xlu0 %v437, 4
      %v528 = vpop.permute.xlu0 %527
      %529 = vrot.lane.b32.xlu0 %v436, 4
      %v530 = vpop.permute.xlu0 %529
      %531 = vrot.lane.b32.xlu0 %v440, 4
      %v532 = vpop.permute.xlu0 %531
      %533 = vrot.lane.b32.xlu0 %v442, 4
      %v534 = vpop.permute.xlu0 %533
      %535 = vrot.lane.b32.xlu0 %v441, 4
      %v536 = vpop.permute.xlu0 %535
      %537 = vrot.lane.b32.xlu0 %v445, 4
      %v538 = vpop.permute.xlu0 %537
      %539 = vrot.lane.b32.xlu0 %v447, 4
      %v540 = vpop.permute.xlu0 %539
      %541 = vrot.lane.b32.xlu0 %v446, 4
      %v542 = vpop.permute.xlu0 %541
      %543 = vrot.lane.b32.xlu0 %v450, 4
      %v544 = vpop.permute.xlu0 %543
      %545 = vrot.lane.b32.xlu0 %v452, 4
      %v546 = vpop.permute.xlu0 %545
      %547 = vrot.lane.b32.xlu0 %v451, 4
      %v548 = vpop.permute.xlu0 %547
      %549 = vrot.lane.b32.xlu0 %v455, 4
      %v550 = vpop.permute.xlu0 %549
      %551 = vrot.lane.b32.xlu0 %v457, 4
      %v552 = vpop.permute.xlu0 %551
      %553 = vrot.lane.b32.xlu0 %v456, 4
      %v554 = vpop.permute.xlu0 %553
      %555 = vrot.lane.b32.xlu0 %v460, 4
      %v556 = vpop.permute.xlu0 %555
      %557 = vrot.lane.b32.xlu0 %v462, 4
      %v558 = vpop.permute.xlu0 %557
      %559 = vrot.lane.b32.xlu0 %v461, 4
      %v560 = vpop.permute.xlu0 %559
      %561 = vrot.lane.b32.xlu0 %v465, 4
      %v562 = vpop.permute.xlu0 %561
      %563 = vrot.lane.b32.xlu0 %v467, 4
      %v564 = vpop.permute.xlu0 %563
      %565 = vrot.lane.b32.xlu0 %v466, 4
      %v566 = vpop.permute.xlu0 %565
      %567 = vrot.lane.b32.xlu0 %v470, 4
      %v568 = vpop.permute.xlu0 %567
      %569 = vrot.lane.b32.xlu0 %v472, 4
      %v570 = vpop.permute.xlu0 %569
      %571 = vrot.lane.b32.xlu0 %v471, 4
      %v572 = vpop.permute.xlu0 %571
      %573 = vrot.lane.b32.xlu0 %v475, 4
      %v574 = vpop.permute.xlu0 %573
      %575 = vrot.lane.b32.xlu0 %v477, 4
      %v576 = vpop.permute.xlu0 %575
      %577 = vrot.lane.b32.xlu0 %v476, 4
      %v578 = vpop.permute.xlu0 %577
      %579 = vrot.lane.b32.xlu0 %v480, 4
      %v580 = vpop.permute.xlu0 %579
      %581 = vrot.lane.b32.xlu0 %v482, 4
      %v582 = vpop.permute.xlu0 %581
      %583 = vrot.lane.b32.xlu0 %v481, 4
      %v584 = vpop.permute.xlu0 %583
      %585 = vrot.lane.b32.xlu0 %v485, 4
      %v586 = vpop.permute.xlu0 %585
      %587 = vrot.lane.b32.xlu0 %v487, 4
      %v588 = vpop.permute.xlu0 %587
      %589 = vrot.lane.b32.xlu0 %v486, 4
      %v590 = vpop.permute.xlu0 %589
      %591 = vrot.lane.b32.xlu0 %v490, 4
      %v592 = vpop.permute.xlu0 %591
      %593 = vrot.lane.b32.xlu0 %v492, 4
      %v594 = vpop.permute.xlu0 %593
      %595 = vrot.lane.b32.xlu0 %v491, 4
      %v596 = vpop.permute.xlu0 %595
      %597 = vrot.lane.b32.xlu0 %v495, 4
      %v598 = vpop.permute.xlu0 %597
      %599 = vrot.lane.b32.xlu0 %v497, 4
      %v600 = vpop.permute.xlu0 %599
      %601 = vrot.lane.b32.xlu0 %v496, 4
      %v602 = vpop.permute.xlu0 %601
      %603 = vrot.lane.b32.xlu0 %v500, 4
      %v604 = vpop.permute.xlu0 %603
      %605 = vrot.lane.b32.xlu0 %v502, 4
      %v606 = vpop.permute.xlu0 %605
      %607 = vrot.lane.b32.xlu0 %v501, 4
      %v608 = vpop.permute.xlu0 %607
      %609 = vrot.lane.b32.xlu0 %v505, 4
      %v610 = vpop.permute.xlu0 %609
      %611 = vrot.lane.b32.xlu0 %v507, 4
      %v612 = vpop.permute.xlu0 %611
      %613 = vrot.lane.b32.xlu0 %v506, 4
      %v614 = vpop.permute.xlu0 %613
      %615 = vrot.lane.b32.xlu0 %v510, 4
      %v616 = vpop.permute.xlu0 %615
      %617 = vrot.lane.b32.xlu0 %v512, 4
      %v618 = vpop.permute.xlu0 %617
      %619 = vrot.lane.b32.xlu0 %v511, 4
      %v620 = vpop.permute.xlu0 %619
      %vm675 = vcmask 1045504
      %v676 = vrot.slane %v308, 2
      %v677 = vrot.slane %v309, 2
      %v678 = vsel %vm675, %v676, %v677
      %v679 = vrot.slane %v310, 2
      %v680 = vsel %vm675, %v677, %v679
      %v681 = vrot.slane %v311, 2
      %v682 = vrot.slane %v312, 2
      %v683 = vsel %vm675, %v681, %v682
      %v684 = vrot.slane %v313, 2
      %v685 = vsel %vm675, %v682, %v684
      %v686 = vrot.slane %v314, 2
      %v687 = vrot.slane %v315, 2
      %v688 = vsel %vm675, %v686, %v687
      %v689 = vrot.slane %v316, 2
      %v690 = vsel %vm675, %v687, %v689
      %v691 = vrot.slane %v317, 2
      %v692 = vrot.slane %v318, 2
      %v693 = vsel %vm675, %v691, %v692
      %v694 = vrot.slane %v319, 2
      %v695 = vsel %vm675, %v692, %v694
      %v696 = vrot.slane %v320, 2
      %v697 = vrot.slane %v321, 2
      %v698 = vsel %vm675, %v696, %v697
      %v699 = vrot.slane %v322, 2
      %v700 = vsel %vm675, %v697, %v699
      %v701 = vrot.slane %v323, 2
      %v702 = vrot.slane %v324, 2
      %v703 = vsel %vm675, %v701, %v702
      %v704 = vrot.slane %v325, 2
      %v705 = vsel %vm675, %v702, %v704
      %v706 = vrot.slane %v326, 2
      %v707 = vrot.slane %v327, 2
      %v708 = vsel %vm675, %v706, %v707
      %v709 = vrot.slane %v328, 2
      %v710 = vsel %vm675, %v707, %v709
      %v711 = vrot.slane %v329, 2
      %v712 = vrot.slane %v330, 2
      %v713 = vsel %vm675, %v711, %v712
      %v714 = vrot.slane %v331, 2
      %v715 = vsel %vm675, %v712, %v714
      %v716 = vrot.slane %v332, 2
      %v717 = vrot.slane %v333, 2
      %v718 = vsel %vm675, %v716, %v717
      %v719 = vrot.slane %v334, 2
      %v720 = vsel %vm675, %v717, %v719
      %v721 = vrot.slane %v335, 2
      %v722 = vrot.slane %v336, 2
      %v723 = vsel %vm675, %v721, %v722
      %v724 = vrot.slane %v337, 2
      %v725 = vsel %vm675, %v722, %v724
      %v726 = vrot.slane %v338, 2
      %v727 = vrot.slane %v339, 2
      %v728 = vsel %vm675, %v726, %v727
      %v729 = vrot.slane %v340, 2
      %v730 = vsel %vm675, %v727, %v729
      %v731 = vrot.slane %v341, 2
      %v732 = vrot.slane %v342, 2
      %v733 = vsel %vm675, %v731, %v732
      %v734 = vrot.slane %v343, 2
      %v735 = vsel %vm675, %v732, %v734
      %v736 = vrot.slane %v344, 2
      %v737 = vrot.slane %v345, 2
      %v738 = vsel %vm675, %v736, %v737
      %v739 = vrot.slane %v346, 2
      %v740 = vsel %vm675, %v737, %v739
      %v741 = vrot.slane %v347, 2
      %v742 = vrot.slane %v348, 2
      %v743 = vsel %vm675, %v741, %v742
      %v744 = vrot.slane %v349, 2
      %v745 = vsel %vm675, %v742, %v744
      %v746 = vrot.slane %v350, 2
      %v747 = vrot.slane %v351, 2
      %v748 = vsel %vm675, %v746, %v747
      %v749 = vrot.slane %v352, 2
      %v750 = vsel %vm675, %v747, %v749
      %v751 = vrot.slane %v353, 2
      %v752 = vrot.slane %v354, 2
      %v753 = vsel %vm675, %v751, %v752
      %v754 = vrot.slane %v355, 2
      %v755 = vsel %vm675, %v752, %v754
      %v756 = vrot.slane %v356, 2
      %v757 = vrot.slane %v357, 2
      %v758 = vsel %vm675, %v756, %v757
      %v759 = vrot.slane %v358, 2
      %v760 = vsel %vm675, %v757, %v759
      %v761 = vrot.slane %v359, 2
      %v762 = vrot.slane %v360, 2
      %v763 = vsel %vm675, %v761, %v762
      %v764 = vrot.slane %v361, 2
      %v765 = vsel %vm675, %v762, %v764
      %766 = vrot.lane.b32.xlu0 %v678, 8
      %v767 = vpop.permute.xlu0 %766
      %768 = vrot.lane.b32.xlu0 %v680, 8
      %v769 = vpop.permute.xlu0 %768
      %770 = vrot.lane.b32.xlu0 %v679, 8
      %v771 = vpop.permute.xlu0 %770
      %772 = vrot.lane.b32.xlu0 %v683, 8
      %v773 = vpop.permute.xlu0 %772
      %774 = vrot.lane.b32.xlu0 %v685, 8
      %v775 = vpop.permute.xlu0 %774
      %776 = vrot.lane.b32.xlu0 %v684, 8
      %v777 = vpop.permute.xlu0 %776
      %778 = vrot.lane.b32.xlu0 %v688, 8
      %v779 = vpop.permute.xlu0 %778
      %780 = vrot.lane.b32.xlu0 %v690, 8
      %v781 = vpop.permute.xlu0 %780
      %782 = vrot.lane.b32.xlu0 %v689, 8
      %v783 = vpop.permute.xlu0 %782
      %784 = vrot.lane.b32.xlu0 %v693, 8
      %v785 = vpop.permute.xlu0 %784
      %786 = vrot.lane.b32.xlu0 %v695, 8
      %v787 = vpop.permute.xlu0 %786
      %788 = vrot.lane.b32.xlu0 %v694, 8
      %v789 = vpop.permute.xlu0 %788
      %790 = vrot.lane.b32.xlu0 %v698, 8
      %v791 = vpop.permute.xlu0 %790
      %792 = vrot.lane.b32.xlu0 %v700, 8
      %v793 = vpop.permute.xlu0 %792
      %794 = vrot.lane.b32.xlu0 %v699, 8
      %v795 = vpop.permute.xlu0 %794
      %796 = vrot.lane.b32.xlu0 %v703, 8
      %v797 = vpop.permute.xlu0 %796
      %798 = vrot.lane.b32.xlu0 %v705, 8
      %v799 = vpop.permute.xlu0 %798
      %800 = vrot.lane.b32.xlu0 %v704, 8
      %v801 = vpop.permute.xlu0 %800
      %802 = vrot.lane.b32.xlu0 %v708, 8
      %v803 = vpop.permute.xlu0 %802
      %804 = vrot.lane.b32.xlu0 %v710, 8
      %v805 = vpop.permute.xlu0 %804
      %806 = vrot.lane.b32.xlu0 %v709, 8
      %v807 = vpop.permute.xlu0 %806
      %808 = vrot.lane.b32.xlu0 %v713, 8
      %v809 = vpop.permute.xlu0 %808
      %810 = vrot.lane.b32.xlu0 %v715, 8
      %v811 = vpop.permute.xlu0 %810
      %812 = vrot.lane.b32.xlu0 %v714, 8
      %v813 = vpop.permute.xlu0 %812
      %814 = vrot.lane.b32.xlu0 %v718, 8
      %v815 = vpop.permute.xlu0 %814
      %816 = vrot.lane.b32.xlu0 %v720, 8
      %v817 = vpop.permute.xlu0 %816
      %818 = vrot.lane.b32.xlu0 %v719, 8
      %v819 = vpop.permute.xlu0 %818
      %820 = vrot.lane.b32.xlu0 %v723, 8
      %v821 = vpop.permute.xlu0 %820
      %822 = vrot.lane.b32.xlu0 %v725, 8
      %v823 = vpop.permute.xlu0 %822
      %824 = vrot.lane.b32.xlu0 %v724, 8
      %v825 = vpop.permute.xlu0 %824
      %826 = vrot.lane.b32.xlu0 %v728, 8
      %v827 = vpop.permute.xlu0 %826
      %828 = vrot.lane.b32.xlu0 %v730, 8
      %v829 = vpop.permute.xlu0 %828
      %830 = vrot.lane.b32.xlu0 %v729, 8
      %v831 = vpop.permute.xlu0 %830
      %832 = vrot.lane.b32.xlu0 %v733, 8
      %v833 = vpop.permute.xlu0 %832
      %834 = vrot.lane.b32.xlu0 %v735, 8
      %v835 = vpop.permute.xlu0 %834
      %836 = vrot.lane.b32.xlu0 %v734, 8
      %v837 = vpop.permute.xlu0 %836
      %838 = vrot.lane.b32.xlu0 %v738, 8
      %v839 = vpop.permute.xlu0 %838
      %840 = vrot.lane.b32.xlu0 %v740, 8
      %v841 = vpop.permute.xlu0 %840
      %842 = vrot.lane.b32.xlu0 %v739, 8
      %v843 = vpop.permute.xlu0 %842
      %844 = vrot.lane.b32.xlu0 %v743, 8
      %v845 = vpop.permute.xlu0 %844
      %846 = vrot.lane.b32.xlu0 %v745, 8
      %v847 = vpop.permute.xlu0 %846
      %848 = vrot.lane.b32.xlu0 %v744, 8
      %v849 = vpop.permute.xlu0 %848
      %850 = vrot.lane.b32.xlu0 %v748, 8
      %v851 = vpop.permute.xlu0 %850
      %852 = vrot.lane.b32.xlu0 %v750, 8
      %v853 = vpop.permute.xlu0 %852
      %854 = vrot.lane.b32.xlu0 %v749, 8
      %v855 = vpop.permute.xlu0 %854
      %856 = vrot.lane.b32.xlu0 %v753, 8
      %v857 = vpop.permute.xlu0 %856
      %858 = vrot.lane.b32.xlu0 %v755, 8
      %v859 = vpop.permute.xlu0 %858
      %860 = vrot.lane.b32.xlu0 %v754, 8
      %v861 = vpop.permute.xlu0 %860
      %862 = vrot.lane.b32.xlu0 %v758, 8
      %v863 = vpop.permute.xlu0 %862
      %864 = vrot.lane.b32.xlu0 %v760, 8
      %v865 = vpop.permute.xlu0 %864
      %866 = vrot.lane.b32.xlu0 %v759, 8
      %v867 = vpop.permute.xlu0 %866
      %868 = vrot.lane.b32.xlu0 %v763, 8
      %v869 = vpop.permute.xlu0 %868
      %870 = vrot.lane.b32.xlu0 %v765, 8
      %v871 = vpop.permute.xlu0 %870
      %872 = vrot.lane.b32.xlu0 %v764, 8
      %v873 = vpop.permute.xlu0 %872
      %vm928 = vcmask 31744
      %v929 = vsel %vm928, %v308, %v514
      %v930 = vsel %vm928, %v309, %v516
      %v931 = vsel %vm928, %v310, %v518
      %v932 = vsel %vm928, %v311, %v520
      %v933 = vsel %vm928, %v312, %v522
      %v934 = vsel %vm928, %v313, %v524
      %v935 = vsel %vm928, %v314, %v526
      %v936 = vsel %vm928, %v315, %v528
      %v937 = vsel %vm928, %v316, %v530
      %v938 = vsel %vm928, %v317, %v532
      %v939 = vsel %vm928, %v318, %v534
      %v940 = vsel %vm928, %v319, %v536
      %v941 = vsel %vm928, %v320, %v538
      %v942 = vsel %vm928, %v321, %v540
      %v943 = vsel %vm928, %v322, %v542
      %v944 = vsel %vm928, %v323, %v544
      %v945 = vsel %vm928, %v324, %v546
      %v946 = vsel %vm928, %v325, %v548
      %v947 = vsel %vm928, %v326, %v550
      %v948 = vsel %vm928, %v327, %v552
      %v949 = vsel %vm928, %v328, %v554
      %v950 = vsel %vm928, %v329, %v556
      %v951 = vsel %vm928, %v330, %v558
      %v952 = vsel %vm928, %v331, %v560
      %v953 = vsel %vm928, %v332, %v562
      %v954 = vsel %vm928, %v333, %v564
      %v955 = vsel %vm928, %v334, %v566
      %v956 = vsel %vm928, %v335, %v568
      %v957 = vsel %vm928, %v336, %v570
      %v958 = vsel %vm928, %v337, %v572
      %v959 = vsel %vm928, %v338, %v574
      %v960 = vsel %vm928, %v339, %v576
      %v961 = vsel %vm928, %v340, %v578
      %v962 = vsel %vm928, %v341, %v580
      %v963 = vsel %vm928, %v342, %v582
      %v964 = vsel %vm928, %v343, %v584
      %v965 = vsel %vm928, %v344, %v586
      %v966 = vsel %vm928, %v345, %v588
      %v967 = vsel %vm928, %v346, %v590
      %v968 = vsel %vm928, %v347, %v592
      %v969 = vsel %vm928, %v348, %v594
      %v970 = vsel %vm928, %v349, %v596
      %v971 = vsel %vm928, %v350, %v598
      %v972 = vsel %vm928, %v351, %v600
      %v973 = vsel %vm928, %v352, %v602
      %v974 = vsel %vm928, %v353, %v604
      %v975 = vsel %vm928, %v354, %v606
      %v976 = vsel %vm928, %v355, %v608
      %v977 = vsel %vm928, %v356, %v610
      %v978 = vsel %vm928, %v357, %v612
      %v979 = vsel %vm928, %v358, %v614
      %v980 = vsel %vm928, %v359, %v616
      %v981 = vsel %vm928, %v360, %v618
      %v982 = vsel %vm928, %v361, %v620
      %vm983 = vcmask 64512
      %v984 = vsel %vm983, %v929, %v767
      %v985 = vsel %vm983, %v930, %v769
      %v986 = vsel %vm983, %v931, %v771
      %v987 = vsel %vm983, %v932, %v773
      %v988 = vsel %vm983, %v933, %v775
      %v989 = vsel %vm983, %v934, %v777
      %v990 = vsel %vm983, %v935, %v779
      %v991 = vsel %vm983, %v936, %v781
      %v992 = vsel %vm983, %v937, %v783
      %v993 = vsel %vm983, %v938, %v785
      %v994 = vsel %vm983, %v939, %v787
      %v995 = vsel %vm983, %v940, %v789
      %v996 = vsel %vm983, %v941, %v791
      %v997 = vsel %vm983, %v942, %v793
      %v998 = vsel %vm983, %v943, %v795
      %v999 = vsel %vm983, %v944, %v797
      %v1000 = vsel %vm983, %v945, %v799
      %v1001 = vsel %vm983, %v946, %v801
      %v1002 = vsel %vm983, %v947, %v803
      %v1003 = vsel %vm983, %v948, %v805
      %v1004 = vsel %vm983, %v949, %v807
      %v1005 = vsel %vm983, %v950, %v809
      %v1006 = vsel %vm983, %v951, %v811
      %v1007 = vsel %vm983, %v952, %v813
      %v1008 = vsel %vm983, %v953, %v815
      %v1009 = vsel %vm983, %v954, %v817
      %v1010 = vsel %vm983, %v955, %v819
      %v1011 = vsel %vm983, %v956, %v821
      %v1012 = vsel %vm983, %v957, %v823
      %v1013 = vsel %vm983, %v958, %v825
      %v1014 = vsel %vm983, %v959, %v827
      %v1015 = vsel %vm983, %v960, %v829
      %v1016 = vsel %vm983, %v961, %v831
      %v1017 = vsel %vm983, %v962, %v833
      %v1018 = vsel %vm983, %v963, %v835
      %v1019 = vsel %vm983, %v964, %v837
      %v1020 = vsel %vm983, %v965, %v839
      %v1021 = vsel %vm983, %v966, %v841
      %v1022 = vsel %vm983, %v967, %v843
      %v1023 = vsel %vm983, %v968, %v845
      %v1024 = vsel %vm983, %v969, %v847
      %v1025 = vsel %vm983, %v970, %v849
      %v1026 = vsel %vm983, %v971, %v851
      %v1027 = vsel %vm983, %v972, %v853
      %v1028 = vsel %vm983, %v973, %v855
      %v1029 = vsel %vm983, %v974, %v857
      %v1030 = vsel %vm983, %v975, %v859
      %v1031 = vsel %vm983, %v976, %v861
      %v1032 = vsel %vm983, %v977, %v863
      %v1033 = vsel %vm983, %v978, %v865
      %v1034 = vsel %vm983, %v979, %v867
      %v1035 = vsel %vm983, %v980, %v869
      %v1036 = vsel %vm983, %v981, %v871
      %v1037 = vsel %vm983, %v982, %v873
      %v1038 = vpack.c.bf16 %v985, %v984
      %v1039 = vpack.c.bf16 %v986, %v986
      %v1040 = vpack.c.bf16 %v988, %v987
      %v1041 = vpack.c.bf16 %v989, %v989
      %v1042 = vpack.c.bf16 %v991, %v990
      %v1043 = vpack.c.bf16 %v992, %v992
      %v1044 = vpack.c.bf16 %v994, %v993
      %v1045 = vpack.c.bf16 %v995, %v995
      %v1046 = vpack.c.bf16 %v997, %v996
      %v1047 = vpack.c.bf16 %v998, %v998
      %v1048 = vpack.c.bf16 %v1000, %v999
      %v1049 = vpack.c.bf16 %v1001, %v1001
      %v1050 = vpack.c.bf16 %v1003, %v1002
      %v1051 = vpack.c.bf16 %v1004, %v1004
      %v1052 = vpack.c.bf16 %v1006, %v1005
      %v1053 = vpack.c.bf16 %v1007, %v1007
      %v1054 = vpack.c.bf16 %v1009, %v1008
      %v1055 = vpack.c.bf16 %v1010, %v1010
      %v1056 = vpack.c.bf16 %v1012, %v1011
      %v1057 = vpack.c.bf16 %v1013, %v1013
      %v1058 = vpack.c.bf16 %v1015, %v1014
      %v1059 = vpack.c.bf16 %v1016, %v1016
      %v1060 = vpack.c.bf16 %v1018, %v1017
      %v1061 = vpack.c.bf16 %v1019, %v1019
      %v1062 = vpack.c.bf16 %v1021, %v1020
      %v1063 = vpack.c.bf16 %v1022, %v1022
      %v1064 = vpack.c.bf16 %v1024, %v1023
      %v1065 = vpack.c.bf16 %v1025, %v1025
      %v1066 = vpack.c.bf16 %v1027, %v1026
      %v1067 = vpack.c.bf16 %v1028, %v1028
      %v1068 = vpack.c.bf16 %v1030, %v1029
      %v1069 = vpack.c.bf16 %v1031, %v1031
      %v1070 = vpack.c.bf16 %v1033, %v1032
      %v1071 = vpack.c.bf16 %v1034, %v1034
      %v1072 = vpack.c.bf16 %v1036, %v1035
      %v1073 = vpack.c.bf16 %v1037, %v1037
      %v1074 = vld [vmem:[%s1] sm:$0xf]
      %v1075 = vld [vmem:[%s1 + $0x4] sm:$0x3]
      %v1079 = vrot.slane %v362, 1
      %v1080 = vrot.slane %v363, 1
      %v1081 = vsel %vm422, %v1079, %v1080
      %v1082 = vrot.slane %v364, 1
      %v1083 = vsel %vm422, %v1080, %v1082
      %1084 = vrot.lane.b32.xlu0 %v1081, 4
      %v1085 = vpop.permute.xlu0 %1084
      %1086 = vrot.lane.b32.xlu0 %v1083, 4
      %v1087 = vpop.permute.xlu0 %1086
      %1088 = vrot.lane.b32.xlu0 %v1082, 4
      %v1089 = vpop.permute.xlu0 %1088
      %v1093 = vrot.slane %v362, 2
      %v1094 = vrot.slane %v363, 2
      %v1095 = vsel %vm675, %v1093, %v1094
      %v1096 = vrot.slane %v364, 2
      %v1097 = vsel %vm675, %v1094, %v1096
      %1098 = vrot.lane.b32.xlu0 %v1095, 8
      %v1099 = vpop.permute.xlu0 %1098
      %1100 = vrot.lane.b32.xlu0 %v1097, 8
      %v1101 = vpop.permute.xlu0 %1100
      %1102 = vrot.lane.b32.xlu0 %v1096, 8
      %v1103 = vpop.permute.xlu0 %1102
      %v1107 = vsel %vm928, %v362, %v1085
      %v1108 = vsel %vm928, %v363, %v1087
      %v1109 = vsel %vm928, %v364, %v1089
      %v1110 = vsel %vm983, %v1107, %v1099
      %v1111 = vsel %vm983, %v1108, %v1101
      %v1112 = vsel %vm983, %v1109, %v1103
      %v1113 = vpack.c.bf16 %v1111, %v1110
      %v1114 = vpack.c.bf16 %v1112, %v1112
      %s1115 = scalar_lea.vmem %s1, 8
      %v1116 = vld [vmem:[%s1115] sm:$0xf]
      %v1117 = vld [vmem:[%s1115 + $0x4] sm:$0x3]
      %v1154 = vcombine.high %v1040, %v1040
      %v1156 = vunpack.c.l.s4 1966171168
      %v1157 = vunpack.c.0.s8 %v1156
      %v1158 = vlaneseq
      %v1159 = vshrl.u32 %v1158, 7
      %v1160 = vsub.s32 %v1157, %v1159
      %v1161 = vrot.slane %v1040, %v1160
      %v1163 = vunpack.c.l.s4 1966171168
      %v1164 = vunpack.c.0.s8 %v1163
      %v1165 = vlaneseq
      %v1166 = vshrl.u32 %v1165, 7
      %v1167 = vsub.s32 %v1164, %v1166
      %v1168 = vrot.slane %v1154, %v1167
      %v1169 = vcombine.high %v1161, %v1161
      %v1170 = vcombine.high %v1168, %v1168
      %v1172 = vunpack.c.l.s4 1966171168
      %v1173 = vunpack.c.0.s8 %v1172
      %v1174 = vlaneseq
      %v1175 = vshrl.u32 %v1174, 7
      %v1176 = vsub.s32 %v1173, %v1175
      %v1177 = vrot.slane %v1161, %v1176
      %v1179 = vunpack.c.l.s4 1966171168
      %v1180 = vunpack.c.0.s8 %v1179
      %v1181 = vlaneseq
      %v1182 = vshrl.u32 %v1181, 7
      %v1183 = vsub.s32 %v1180, %v1182
      %v1184 = vrot.slane %v1168, %v1183
      %v1186 = vunpack.c.l.s4 1966171168
      %v1187 = vunpack.c.0.s8 %v1186
      %v1188 = vlaneseq
      %v1189 = vshrl.u32 %v1188, 7
      %v1190 = vsub.s32 %v1187, %v1189
      %v1191 = vrot.slane %v1169, %v1190
      %v1193 = vunpack.c.l.s4 1966171168
      %v1194 = vunpack.c.0.s8 %v1193
      %v1195 = vlaneseq
      %v1196 = vshrl.u32 %v1195, 7
      %v1197 = vsub.s32 %v1194, %v1196
      %v1198 = vrot.slane %v1170, %v1197
      %v1199 = vcombine.high %v1177, %v1177
      %v1200 = vcombine.high %v1184, %v1184
      %v1201 = vcombine.high %v1191, %v1191
      %v1202 = vcombine.high %v1198, %v1198
      %v1204 = vunpack.c.l.s4 1966171168
      %v1205 = vunpack.c.0.s8 %v1204
      %v1206 = vlaneseq
      %v1207 = vshrl.u32 %v1206, 7
      %v1208 = vsub.s32 %v1205, %v1207
      %v1209 = vrot.slane %v1041, %v1208
      %v1211 = vunpack.c.l.s4 1966171168
      %v1212 = vunpack.c.0.s8 %v1211
      %v1213 = vlaneseq
      %v1214 = vshrl.u32 %v1213, 7
      %v1215 = vsub.s32 %v1212, %v1214
      %v1216 = vrot.slane %v1209, %v1215
      %v1217 = vcombine.high %v1042, %v1042
      %v1219 = vunpack.c.l.s4 1966171168
      %v1220 = vunpack.c.0.s8 %v1219
      %v1221 = vlaneseq
      %v1222 = vshrl.u32 %v1221, 7
      %v1223 = vsub.s32 %v1220, %v1222
      %v1224 = vrot.slane %v1042, %v1223
      %v1226 = vunpack.c.l.s4 1966171168
      %v1227 = vunpack.c.0.s8 %v1226
      %v1228 = vlaneseq
      %v1229 = vshrl.u32 %v1228, 7
      %v1230 = vsub.s32 %v1227, %v1229
      %v1231 = vrot.slane %v1217, %v1230
      %v1232 = vcombine.high %v1224, %v1224
      %v1233 = vcombine.high %v1231, %v1231
      %v1235 = vunpack.c.l.s4 1966171168
      %v1236 = vunpack.c.0.s8 %v1235
      %v1237 = vlaneseq
      %v1238 = vshrl.u32 %v1237, 7
      %v1239 = vsub.s32 %v1236, %v1238
      %v1240 = vrot.slane %v1224, %v1239
      %v1242 = vunpack.c.l.s4 1966171168
      %v1243 = vunpack.c.0.s8 %v1242
      %v1244 = vlaneseq
      %v1245 = vshrl.u32 %v1244, 7
      %v1246 = vsub.s32 %v1243, %v1245
      %v1247 = vrot.slane %v1231, %v1246
      %v1249 = vunpack.c.l.s4 1966171168
      %v1250 = vunpack.c.0.s8 %v1249
      %v1251 = vlaneseq
      %v1252 = vshrl.u32 %v1251, 7
      %v1253 = vsub.s32 %v1250, %v1252
      %v1254 = vrot.slane %v1232, %v1253
      %v1256 = vunpack.c.l.s4 1966171168
      %v1257 = vunpack.c.0.s8 %v1256
      %v1258 = vlaneseq
      %v1259 = vshrl.u32 %v1258, 7
      %v1260 = vsub.s32 %v1257, %v1259
      %v1261 = vrot.slane %v1233, %v1260
      %v1262 = vcombine.high %v1240, %v1240
      %v1263 = vcombine.high %v1247, %v1247
      %v1264 = vcombine.high %v1254, %v1254
      %v1265 = vcombine.high %v1261, %v1261
      %v1267 = vunpack.c.l.s4 1966171168
      %v1268 = vunpack.c.0.s8 %v1267
      %v1269 = vlaneseq
      %v1270 = vshrl.u32 %v1269, 7
      %v1271 = vsub.s32 %v1268, %v1270
      %v1272 = vrot.slane %v1043, %v1271
      %v1274 = vunpack.c.l.s4 1966171168
      %v1275 = vunpack.c.0.s8 %v1274
      %v1276 = vlaneseq
      %v1277 = vshrl.u32 %v1276, 7
      %v1278 = vsub.s32 %v1275, %v1277
      %v1279 = vrot.slane %v1272, %v1278
      %v1280 = vcombine.high %v1044, %v1044
      %v1282 = vunpack.c.l.s4 1966171168
      %v1283 = vunpack.c.0.s8 %v1282
      %v1284 = vlaneseq
      %v1285 = vshrl.u32 %v1284, 7
      %v1286 = vsub.s32 %v1283, %v1285
      %v1287 = vrot.slane %v1044, %v1286
      %v1289 = vunpack.c.l.s4 1966171168
      %v1290 = vunpack.c.0.s8 %v1289
      %v1291 = vlaneseq
      %v1292 = vshrl.u32 %v1291, 7
      %v1293 = vsub.s32 %v1290, %v1292
      %v1294 = vrot.slane %v1280, %v1293
      %v1295 = vcombine.high %v1287, %v1287
      %v1296 = vcombine.high %v1294, %v1294
      %v1298 = vunpack.c.l.s4 1966171168
      %v1299 = vunpack.c.0.s8 %v1298
      %v1300 = vlaneseq
      %v1301 = vshrl.u32 %v1300, 7
      %v1302 = vsub.s32 %v1299, %v1301
      %v1303 = vrot.slane %v1287, %v1302
      %v1305 = vunpack.c.l.s4 1966171168
      %v1306 = vunpack.c.0.s8 %v1305
      %v1307 = vlaneseq
      %v1308 = vshrl.u32 %v1307, 7
      %v1309 = vsub.s32 %v1306, %v1308
      %v1310 = vrot.slane %v1294, %v1309
      %v1312 = vunpack.c.l.s4 1966171168
      %v1313 = vunpack.c.0.s8 %v1312
      %v1314 = vlaneseq
      %v1315 = vshrl.u32 %v1314, 7
      %v1316 = vsub.s32 %v1313, %v1315
      %v1317 = vrot.slane %v1295, %v1316
      %v1319 = vunpack.c.l.s4 1966171168
      %v1320 = vunpack.c.0.s8 %v1319
      %v1321 = vlaneseq
      %v1322 = vshrl.u32 %v1321, 7
      %v1323 = vsub.s32 %v1320, %v1322
      %v1324 = vrot.slane %v1296, %v1323
      %v1325 = vcombine.high %v1303, %v1303
      %v1326 = vcombine.high %v1310, %v1310
      %v1327 = vcombine.high %v1317, %v1317
      %v1328 = vcombine.high %v1324, %v1324
      %v1330 = vunpack.c.l.s4 1966171168
      %v1331 = vunpack.c.0.s8 %v1330
      %v1332 = vlaneseq
      %v1333 = vshrl.u32 %v1332, 7
      %v1334 = vsub.s32 %v1331, %v1333
      %v1335 = vrot.slane %v1045, %v1334
      %v1337 = vunpack.c.l.s4 1966171168
      %v1338 = vunpack.c.0.s8 %v1337
      %v1339 = vlaneseq
      %v1340 = vshrl.u32 %v1339, 7
      %v1341 = vsub.s32 %v1338, %v1340
      %v1342 = vrot.slane %v1335, %v1341
      %v1343 = vcombine.high %v1046, %v1046
      %v1345 = vunpack.c.l.s4 1966171168
      %v1346 = vunpack.c.0.s8 %v1345
      %v1347 = vlaneseq
      %v1348 = vshrl.u32 %v1347, 7
      %v1349 = vsub.s32 %v1346, %v1348
      %v1350 = vrot.slane %v1046, %v1349
      %v1352 = vunpack.c.l.s4 1966171168
      %v1353 = vunpack.c.0.s8 %v1352
      %v1354 = vlaneseq
      %v1355 = vshrl.u32 %v1354, 7
      %v1356 = vsub.s32 %v1353, %v1355
      %v1357 = vrot.slane %v1343, %v1356
      %v1358 = vcombine.high %v1350, %v1350
      %v1359 = vcombine.high %v1357, %v1357
      %v1361 = vunpack.c.l.s4 1966171168
      %v1362 = vunpack.c.0.s8 %v1361
      %v1363 = vlaneseq
      %v1364 = vshrl.u32 %v1363, 7
      %v1365 = vsub.s32 %v1362, %v1364
      %v1366 = vrot.slane %v1350, %v1365
      %v1368 = vunpack.c.l.s4 1966171168
      %v1369 = vunpack.c.0.s8 %v1368
      %v1370 = vlaneseq
      %v1371 = vshrl.u32 %v1370, 7
      %v1372 = vsub.s32 %v1369, %v1371
      %v1373 = vrot.slane %v1357, %v1372
      %v1375 = vunpack.c.l.s4 1966171168
      %v1376 = vunpack.c.0.s8 %v1375
      %v1377 = vlaneseq
      %v1378 = vshrl.u32 %v1377, 7
      %v1379 = vsub.s32 %v1376, %v1378
      %v1380 = vrot.slane %v1358, %v1379
      %v1382 = vunpack.c.l.s4 1966171168
      %v1383 = vunpack.c.0.s8 %v1382
      %v1384 = vlaneseq
      %v1385 = vshrl.u32 %v1384, 7
      %v1386 = vsub.s32 %v1383, %v1385
      %v1387 = vrot.slane %v1359, %v1386
      %v1388 = vcombine.high %v1366, %v1366
      %v1389 = vcombine.high %v1373, %v1373
      %v1390 = vcombine.high %v1380, %v1380
      %v1391 = vcombine.high %v1387, %v1387
      %v1393 = vunpack.c.l.s4 1966171168
      %v1394 = vunpack.c.0.s8 %v1393
      %v1395 = vlaneseq
      %v1396 = vshrl.u32 %v1395, 7
      %v1397 = vsub.s32 %v1394, %v1396
      %v1398 = vrot.slane %v1047, %v1397
      %v1400 = vunpack.c.l.s4 1966171168
      %v1401 = vunpack.c.0.s8 %v1400
      %v1402 = vlaneseq
      %v1403 = vshrl.u32 %v1402, 7
      %v1404 = vsub.s32 %v1401, %v1403
      %v1405 = vrot.slane %v1398, %v1404
      %v1406 = vcombine.high %v1048, %v1048
      %v1408 = vunpack.c.l.s4 1966171168
      %v1409 = vunpack.c.0.s8 %v1408
      %v1410 = vlaneseq
      %v1411 = vshrl.u32 %v1410, 7
      %v1412 = vsub.s32 %v1409, %v1411
      %v1413 = vrot.slane %v1048, %v1412
      %v1415 = vunpack.c.l.s4 1966171168
      %v1416 = vunpack.c.0.s8 %v1415
      %v1417 = vlaneseq
      %v1418 = vshrl.u32 %v1417, 7
      %v1419 = vsub.s32 %v1416, %v1418
      %v1420 = vrot.slane %v1406, %v1419
      %v1421 = vcombine.high %v1413, %v1413
      %v1422 = vcombine.high %v1420, %v1420
      %v1424 = vunpack.c.l.s4 1966171168
      %v1425 = vunpack.c.0.s8 %v1424
      %v1426 = vlaneseq
      %v1427 = vshrl.u32 %v1426, 7
      %v1428 = vsub.s32 %v1425, %v1427
      %v1429 = vrot.slane %v1413, %v1428
      %v1431 = vunpack.c.l.s4 1966171168
      %v1432 = vunpack.c.0.s8 %v1431
      %v1433 = vlaneseq
      %v1434 = vshrl.u32 %v1433, 7
      %v1435 = vsub.s32 %v1432, %v1434
      %v1436 = vrot.slane %v1420, %v1435
      %v1438 = vunpack.c.l.s4 1966171168
      %v1439 = vunpack.c.0.s8 %v1438
      %v1440 = vlaneseq
      %v1441 = vshrl.u32 %v1440, 7
      %v1442 = vsub.s32 %v1439, %v1441
      %v1443 = vrot.slane %v1421, %v1442
      %v1445 = vunpack.c.l.s4 1966171168
      %v1446 = vunpack.c.0.s8 %v1445
      %v1447 = vlaneseq
      %v1448 = vshrl.u32 %v1447, 7
      %v1449 = vsub.s32 %v1446, %v1448
      %v1450 = vrot.slane %v1422, %v1449
      %v1451 = vcombine.high %v1429, %v1429
      %v1452 = vcombine.high %v1436, %v1436
      %v1453 = vcombine.high %v1443, %v1443
      %v1454 = vcombine.high %v1450, %v1450
      %v1456 = vunpack.c.l.s4 1966171168
      %v1457 = vunpack.c.0.s8 %v1456
      %v1458 = vlaneseq
      %v1459 = vshrl.u32 %v1458, 7
      %v1460 = vsub.s32 %v1457, %v1459
      %v1461 = vrot.slane %v1049, %v1460
      %v1463 = vunpack.c.l.s4 1966171168
      %v1464 = vunpack.c.0.s8 %v1463
      %v1465 = vlaneseq
      %v1466 = vshrl.u32 %v1465, 7
      %v1467 = vsub.s32 %v1464, %v1466
      %v1468 = vrot.slane %v1461, %v1467
      %v1469 = vcombine.high %v1050, %v1050
      %v1471 = vunpack.c.l.s4 1966171168
      %v1472 = vunpack.c.0.s8 %v1471
      %v1473 = vlaneseq
      %v1474 = vshrl.u32 %v1473, 7
      %v1475 = vsub.s32 %v1472, %v1474
      %v1476 = vrot.slane %v1050, %v1475
      %v1478 = vunpack.c.l.s4 1966171168
      %v1479 = vunpack.c.0.s8 %v1478
      %v1480 = vlaneseq
      %v1481 = vshrl.u32 %v1480, 7
      %v1482 = vsub.s32 %v1479, %v1481
      %v1483 = vrot.slane %v1469, %v1482
      %v1484 = vcombine.high %v1476, %v1476
      %v1485 = vcombine.high %v1483, %v1483
      %v1487 = vunpack.c.l.s4 1966171168
      %v1488 = vunpack.c.0.s8 %v1487
      %v1489 = vlaneseq
      %v1490 = vshrl.u32 %v1489, 7
      %v1491 = vsub.s32 %v1488, %v1490
      %v1492 = vrot.slane %v1476, %v1491
      %v1494 = vunpack.c.l.s4 1966171168
      %v1495 = vunpack.c.0.s8 %v1494
      %v1496 = vlaneseq
      %v1497 = vshrl.u32 %v1496, 7
      %v1498 = vsub.s32 %v1495, %v1497
      %v1499 = vrot.slane %v1483, %v1498
      %v1501 = vunpack.c.l.s4 1966171168
      %v1502 = vunpack.c.0.s8 %v1501
      %v1503 = vlaneseq
      %v1504 = vshrl.u32 %v1503, 7
      %v1505 = vsub.s32 %v1502, %v1504
      %v1506 = vrot.slane %v1484, %v1505
      %v1508 = vunpack.c.l.s4 1966171168
      %v1509 = vunpack.c.0.s8 %v1508
      %v1510 = vlaneseq
      %v1511 = vshrl.u32 %v1510, 7
      %v1512 = vsub.s32 %v1509, %v1511
      %v1513 = vrot.slane %v1485, %v1512
      %v1514 = vcombine.high %v1492, %v1492
      %v1515 = vcombine.high %v1499, %v1499
      %v1516 = vcombine.high %v1506, %v1506
      %v1517 = vcombine.high %v1513, %v1513
      %v1519 = vunpack.c.l.s4 1966171168
      %v1520 = vunpack.c.0.s8 %v1519
      %v1521 = vlaneseq
      %v1522 = vshrl.u32 %v1521, 7
      %v1523 = vsub.s32 %v1520, %v1522
      %v1524 = vrot.slane %v1051, %v1523
      %v1526 = vunpack.c.l.s4 1966171168
      %v1527 = vunpack.c.0.s8 %v1526
      %v1528 = vlaneseq
      %v1529 = vshrl.u32 %v1528, 7
      %v1530 = vsub.s32 %v1527, %v1529
      %v1531 = vrot.slane %v1524, %v1530
      %v1532 = vcombine.high %v1052, %v1052
      %v1534 = vunpack.c.l.s4 1966171168
      %v1535 = vunpack.c.0.s8 %v1534
      %v1536 = vlaneseq
      %v1537 = vshrl.u32 %v1536, 7
      %v1538 = vsub.s32 %v1535, %v1537
      %v1539 = vrot.slane %v1052, %v1538
      %v1541 = vunpack.c.l.s4 1966171168
      %v1542 = vunpack.c.0.s8 %v1541
      %v1543 = vlaneseq
      %v1544 = vshrl.u32 %v1543, 7
      %v1545 = vsub.s32 %v1542, %v1544
      %v1546 = vrot.slane %v1532, %v1545
      %v1547 = vcombine.high %v1539, %v1539
      %v1548 = vcombine.high %v1546, %v1546
      %v1550 = vunpack.c.l.s4 1966171168
      %v1551 = vunpack.c.0.s8 %v1550
      %v1552 = vlaneseq
      %v1553 = vshrl.u32 %v1552, 7
      %v1554 = vsub.s32 %v1551, %v1553
      %v1555 = vrot.slane %v1539, %v1554
      %v1557 = vunpack.c.l.s4 1966171168
      %v1558 = vunpack.c.0.s8 %v1557
      %v1559 = vlaneseq
      %v1560 = vshrl.u32 %v1559, 7
      %v1561 = vsub.s32 %v1558, %v1560
      %v1562 = vrot.slane %v1546, %v1561
      %v1564 = vunpack.c.l.s4 1966171168
      %v1565 = vunpack.c.0.s8 %v1564
      %v1566 = vlaneseq
      %v1567 = vshrl.u32 %v1566, 7
      %v1568 = vsub.s32 %v1565, %v1567
      %v1569 = vrot.slane %v1547, %v1568
      %v1571 = vunpack.c.l.s4 1966171168
      %v1572 = vunpack.c.0.s8 %v1571
      %v1573 = vlaneseq
      %v1574 = vshrl.u32 %v1573, 7
      %v1575 = vsub.s32 %v1572, %v1574
      %v1576 = vrot.slane %v1548, %v1575
      %v1577 = vcombine.high %v1555, %v1555
      %v1578 = vcombine.high %v1562, %v1562
      %v1579 = vcombine.high %v1569, %v1569
      %v1580 = vcombine.high %v1576, %v1576
      %v1582 = vunpack.c.l.s4 1966171168
      %v1583 = vunpack.c.0.s8 %v1582
      %v1584 = vlaneseq
      %v1585 = vshrl.u32 %v1584, 7
      %v1586 = vsub.s32 %v1583, %v1585
      %v1587 = vrot.slane %v1053, %v1586
      %v1589 = vunpack.c.l.s4 1966171168
      %v1590 = vunpack.c.0.s8 %v1589
      %v1591 = vlaneseq
      %v1592 = vshrl.u32 %v1591, 7
      %v1593 = vsub.s32 %v1590, %v1592
      %v1594 = vrot.slane %v1587, %v1593
      %v1595 = vcombine.high %v1054, %v1054
      %v1597 = vunpack.c.l.s4 1966171168
      %v1598 = vunpack.c.0.s8 %v1597
      %v1599 = vlaneseq
      %v1600 = vshrl.u32 %v1599, 7
      %v1601 = vsub.s32 %v1598, %v1600
      %v1602 = vrot.slane %v1054, %v1601
      %v1604 = vunpack.c.l.s4 1966171168
      %v1605 = vunpack.c.0.s8 %v1604
      %v1606 = vlaneseq
      %v1607 = vshrl.u32 %v1606, 7
      %v1608 = vsub.s32 %v1605, %v1607
      %v1609 = vrot.slane %v1595, %v1608
      %v1610 = vcombine.high %v1602, %v1602
      %v1611 = vcombine.high %v1609, %v1609
      %v1613 = vunpack.c.l.s4 1966171168
      %v1614 = vunpack.c.0.s8 %v1613
      %v1615 = vlaneseq
      %v1616 = vshrl.u32 %v1615, 7
      %v1617 = vsub.s32 %v1614, %v1616
      %v1618 = vrot.slane %v1602, %v1617
      %v1620 = vunpack.c.l.s4 1966171168
      %v1621 = vunpack.c.0.s8 %v1620
      %v1622 = vlaneseq
      %v1623 = vshrl.u32 %v1622, 7
      %v1624 = vsub.s32 %v1621, %v1623
      %v1625 = vrot.slane %v1609, %v1624
      %v1627 = vunpack.c.l.s4 1966171168
      %v1628 = vunpack.c.0.s8 %v1627
      %v1629 = vlaneseq
      %v1630 = vshrl.u32 %v1629, 7
      %v1631 = vsub.s32 %v1628, %v1630
      %v1632 = vrot.slane %v1610, %v1631
      %v1634 = vunpack.c.l.s4 1966171168
      %v1635 = vunpack.c.0.s8 %v1634
      %v1636 = vlaneseq
      %v1637 = vshrl.u32 %v1636, 7
      %v1638 = vsub.s32 %v1635, %v1637
      %v1639 = vrot.slane %v1611, %v1638
      %v1640 = vcombine.high %v1618, %v1618
      %v1641 = vcombine.high %v1625, %v1625
      %v1642 = vcombine.high %v1632, %v1632
      %v1643 = vcombine.high %v1639, %v1639
      %v1645 = vunpack.c.l.s4 1966171168
      %v1646 = vunpack.c.0.s8 %v1645
      %v1647 = vlaneseq
      %v1648 = vshrl.u32 %v1647, 7
      %v1649 = vsub.s32 %v1646, %v1648
      %v1650 = vrot.slane %v1055, %v1649
      %v1652 = vunpack.c.l.s4 1966171168
      %v1653 = vunpack.c.0.s8 %v1652
      %v1654 = vlaneseq
      %v1655 = vshrl.u32 %v1654, 7
      %v1656 = vsub.s32 %v1653, %v1655
      %v1657 = vrot.slane %v1650, %v1656
      %v1658 = vcombine.high %v1056, %v1056
      %v1660 = vunpack.c.l.s4 1966171168
      %v1661 = vunpack.c.0.s8 %v1660
      %v1662 = vlaneseq
      %v1663 = vshrl.u32 %v1662, 7
      %v1664 = vsub.s32 %v1661, %v1663
      %v1665 = vrot.slane %v1056, %v1664
      %v1667 = vunpack.c.l.s4 1966171168
      %v1668 = vunpack.c.0.s8 %v1667
      %v1669 = vlaneseq
      %v1670 = vshrl.u32 %v1669, 7
      %v1671 = vsub.s32 %v1668, %v1670
      %v1672 = vrot.slane %v1658, %v1671
      %v1673 = vcombine.high %v1665, %v1665
      %v1674 = vcombine.high %v1672, %v1672
      %v1676 = vunpack.c.l.s4 1966171168
      %v1677 = vunpack.c.0.s8 %v1676
      %v1678 = vlaneseq
      %v1679 = vshrl.u32 %v1678, 7
      %v1680 = vsub.s32 %v1677, %v1679
      %v1681 = vrot.slane %v1665, %v1680
      %v1683 = vunpack.c.l.s4 1966171168
      %v1684 = vunpack.c.0.s8 %v1683
      %v1685 = vlaneseq
      %v1686 = vshrl.u32 %v1685, 7
      %v1687 = vsub.s32 %v1684, %v1686
      %v1688 = vrot.slane %v1672, %v1687
      %v1690 = vunpack.c.l.s4 1966171168
      %v1691 = vunpack.c.0.s8 %v1690
      %v1692 = vlaneseq
      %v1693 = vshrl.u32 %v1692, 7
      %v1694 = vsub.s32 %v1691, %v1693
      %v1695 = vrot.slane %v1673, %v1694
      %v1697 = vunpack.c.l.s4 1966171168
      %v1698 = vunpack.c.0.s8 %v1697
      %v1699 = vlaneseq
      %v1700 = vshrl.u32 %v1699, 7
      %v1701 = vsub.s32 %v1698, %v1700
      %v1702 = vrot.slane %v1674, %v1701
      %v1703 = vcombine.high %v1681, %v1681
      %v1704 = vcombine.high %v1688, %v1688
      %v1705 = vcombine.high %v1695, %v1695
      %v1706 = vcombine.high %v1702, %v1702
      %v1708 = vunpack.c.l.s4 1966171168
      %v1709 = vunpack.c.0.s8 %v1708
      %v1710 = vlaneseq
      %v1711 = vshrl.u32 %v1710, 7
      %v1712 = vsub.s32 %v1709, %v1711
      %v1713 = vrot.slane %v1057, %v1712
      %v1715 = vunpack.c.l.s4 1966171168
      %v1716 = vunpack.c.0.s8 %v1715
      %v1717 = vlaneseq
      %v1718 = vshrl.u32 %v1717, 7
      %v1719 = vsub.s32 %v1716, %v1718
      %v1720 = vrot.slane %v1713, %v1719
      %v1721 = vcombine.high %v1058, %v1058
      %v1723 = vunpack.c.l.s4 1966171168
      %v1724 = vunpack.c.0.s8 %v1723
      %v1725 = vlaneseq
      %v1726 = vshrl.u32 %v1725, 7
      %v1727 = vsub.s32 %v1724, %v1726
      %v1728 = vrot.slane %v1058, %v1727
      %v1730 = vunpack.c.l.s4 1966171168
      %v1731 = vunpack.c.0.s8 %v1730
      %v1732 = vlaneseq
      %v1733 = vshrl.u32 %v1732, 7
      %v1734 = vsub.s32 %v1731, %v1733
      %v1735 = vrot.slane %v1721, %v1734
      %v1736 = vcombine.high %v1728, %v1728
      %v1737 = vcombine.high %v1735, %v1735
      %v1739 = vunpack.c.l.s4 1966171168
      %v1740 = vunpack.c.0.s8 %v1739
      %v1741 = vlaneseq
      %v1742 = vshrl.u32 %v1741, 7
      %v1743 = vsub.s32 %v1740, %v1742
      %v1744 = vrot.slane %v1728, %v1743
      %v1746 = vunpack.c.l.s4 1966171168
      %v1747 = vunpack.c.0.s8 %v1746
      %v1748 = vlaneseq
      %v1749 = vshrl.u32 %v1748, 7
      %v1750 = vsub.s32 %v1747, %v1749
      %v1751 = vrot.slane %v1735, %v1750
      %v1753 = vunpack.c.l.s4 1966171168
      %v1754 = vunpack.c.0.s8 %v1753
      %v1755 = vlaneseq
      %v1756 = vshrl.u32 %v1755, 7
      %v1757 = vsub.s32 %v1754, %v1756
      %v1758 = vrot.slane %v1736, %v1757
      %v1760 = vunpack.c.l.s4 1966171168
      %v1761 = vunpack.c.0.s8 %v1760
      %v1762 = vlaneseq
      %v1763 = vshrl.u32 %v1762, 7
      %v1764 = vsub.s32 %v1761, %v1763
      %v1765 = vrot.slane %v1737, %v1764
      %v1766 = vcombine.high %v1744, %v1744
      %v1767 = vcombine.high %v1751, %v1751
      %v1768 = vcombine.high %v1758, %v1758
      %v1769 = vcombine.high %v1765, %v1765
      %v1771 = vunpack.c.l.s4 1966171168
      %v1772 = vunpack.c.0.s8 %v1771
      %v1773 = vlaneseq
      %v1774 = vshrl.u32 %v1773, 7
      %v1775 = vsub.s32 %v1772, %v1774
      %v1776 = vrot.slane %v1059, %v1775
      %v1778 = vunpack.c.l.s4 1966171168
      %v1779 = vunpack.c.0.s8 %v1778
      %v1780 = vlaneseq
      %v1781 = vshrl.u32 %v1780, 7
      %v1782 = vsub.s32 %v1779, %v1781
      %v1783 = vrot.slane %v1776, %v1782
      %v1784 = vcombine.high %v1060, %v1060
      %v1786 = vunpack.c.l.s4 1966171168
      %v1787 = vunpack.c.0.s8 %v1786
      %v1788 = vlaneseq
      %v1789 = vshrl.u32 %v1788, 7
      %v1790 = vsub.s32 %v1787, %v1789
      %v1791 = vrot.slane %v1060, %v1790
      %v1793 = vunpack.c.l.s4 1966171168
      %v1794 = vunpack.c.0.s8 %v1793
      %v1795 = vlaneseq
      %v1796 = vshrl.u32 %v1795, 7
      %v1797 = vsub.s32 %v1794, %v1796
      %v1798 = vrot.slane %v1784, %v1797
      %v1799 = vcombine.high %v1791, %v1791
      %v1800 = vcombine.high %v1798, %v1798
      %v1802 = vunpack.c.l.s4 1966171168
      %v1803 = vunpack.c.0.s8 %v1802
      %v1804 = vlaneseq
      %v1805 = vshrl.u32 %v1804, 7
      %v1806 = vsub.s32 %v1803, %v1805
      %v1807 = vrot.slane %v1791, %v1806
      %v1809 = vunpack.c.l.s4 1966171168
      %v1810 = vunpack.c.0.s8 %v1809
      %v1811 = vlaneseq
      %v1812 = vshrl.u32 %v1811, 7
      %v1813 = vsub.s32 %v1810, %v1812
      %v1814 = vrot.slane %v1798, %v1813
      %v1816 = vunpack.c.l.s4 1966171168
      %v1817 = vunpack.c.0.s8 %v1816
      %v1818 = vlaneseq
      %v1819 = vshrl.u32 %v1818, 7
      %v1820 = vsub.s32 %v1817, %v1819
      %v1821 = vrot.slane %v1799, %v1820
      %v1823 = vunpack.c.l.s4 1966171168
      %v1824 = vunpack.c.0.s8 %v1823
      %v1825 = vlaneseq
      %v1826 = vshrl.u32 %v1825, 7
      %v1827 = vsub.s32 %v1824, %v1826
      %v1828 = vrot.slane %v1800, %v1827
      %v1829 = vcombine.high %v1807, %v1807
      %v1830 = vcombine.high %v1814, %v1814
      %v1831 = vcombine.high %v1821, %v1821
      %v1832 = vcombine.high %v1828, %v1828
      %v1834 = vunpack.c.l.s4 1966171168
      %v1835 = vunpack.c.0.s8 %v1834
      %v1836 = vlaneseq
      %v1837 = vshrl.u32 %v1836, 7
      %v1838 = vsub.s32 %v1835, %v1837
      %v1839 = vrot.slane %v1061, %v1838
      %v1841 = vunpack.c.l.s4 1966171168
      %v1842 = vunpack.c.0.s8 %v1841
      %v1843 = vlaneseq
      %v1844 = vshrl.u32 %v1843, 7
      %v1845 = vsub.s32 %v1842, %v1844
      %v1846 = vrot.slane %v1839, %v1845
      %v1847 = vcombine.high %v1062, %v1062
      %v1849 = vunpack.c.l.s4 1966171168
      %v1850 = vunpack.c.0.s8 %v1849
      %v1851 = vlaneseq
      %v1852 = vshrl.u32 %v1851, 7
      %v1853 = vsub.s32 %v1850, %v1852
      %v1854 = vrot.slane %v1062, %v1853
      %v1856 = vunpack.c.l.s4 1966171168
      %v1857 = vunpack.c.0.s8 %v1856
      %v1858 = vlaneseq
      %v1859 = vshrl.u32 %v1858, 7
      %v1860 = vsub.s32 %v1857, %v1859
      %v1861 = vrot.slane %v1847, %v1860
      %v1862 = vcombine.high %v1854, %v1854
      %v1863 = vcombine.high %v1861, %v1861
      %v1865 = vunpack.c.l.s4 1966171168
      %v1866 = vunpack.c.0.s8 %v1865
      %v1867 = vlaneseq
      %v1868 = vshrl.u32 %v1867, 7
      %v1869 = vsub.s32 %v1866, %v1868
      %v1870 = vrot.slane %v1854, %v1869
      %v1872 = vunpack.c.l.s4 1966171168
      %v1873 = vunpack.c.0.s8 %v1872
      %v1874 = vlaneseq
      %v1875 = vshrl.u32 %v1874, 7
      %v1876 = vsub.s32 %v1873, %v1875
      %v1877 = vrot.slane %v1861, %v1876
      %v1879 = vunpack.c.l.s4 1966171168
      %v1880 = vunpack.c.0.s8 %v1879
      %v1881 = vlaneseq
      %v1882 = vshrl.u32 %v1881, 7
      %v1883 = vsub.s32 %v1880, %v1882
      %v1884 = vrot.slane %v1862, %v1883
      %v1886 = vunpack.c.l.s4 1966171168
      %v1887 = vunpack.c.0.s8 %v1886
      %v1888 = vlaneseq
      %v1889 = vshrl.u32 %v1888, 7
      %v1890 = vsub.s32 %v1887, %v1889
      %v1891 = vrot.slane %v1863, %v1890
      %v1892 = vcombine.high %v1870, %v1870
      %v1893 = vcombine.high %v1877, %v1877
      %v1894 = vcombine.high %v1884, %v1884
      %v1895 = vcombine.high %v1891, %v1891
      %v1897 = vunpack.c.l.s4 1966171168
      %v1898 = vunpack.c.0.s8 %v1897
      %v1899 = vlaneseq
      %v1900 = vshrl.u32 %v1899, 7
      %v1901 = vsub.s32 %v1898, %v1900
      %v1902 = vrot.slane %v1063, %v1901
      %v1904 = vunpack.c.l.s4 1966171168
      %v1905 = vunpack.c.0.s8 %v1904
      %v1906 = vlaneseq
      %v1907 = vshrl.u32 %v1906, 7
      %v1908 = vsub.s32 %v1905, %v1907
      %v1909 = vrot.slane %v1902, %v1908
      %v1910 = vcombine.high %v1064, %v1064
      %v1912 = vunpack.c.l.s4 1966171168
      %v1913 = vunpack.c.0.s8 %v1912
      %v1914 = vlaneseq
      %v1915 = vshrl.u32 %v1914, 7
      %v1916 = vsub.s32 %v1913, %v1915
      %v1917 = vrot.slane %v1064, %v1916
      %v1919 = vunpack.c.l.s4 1966171168
      %v1920 = vunpack.c.0.s8 %v1919
      %v1921 = vlaneseq
      %v1922 = vshrl.u32 %v1921, 7
      %v1923 = vsub.s32 %v1920, %v1922
      %v1924 = vrot.slane %v1910, %v1923
      %v1925 = vcombine.high %v1917, %v1917
      %v1926 = vcombine.high %v1924, %v1924
      %v1928 = vunpack.c.l.s4 1966171168
      %v1929 = vunpack.c.0.s8 %v1928
      %v1930 = vlaneseq
      %v1931 = vshrl.u32 %v1930, 7
      %v1932 = vsub.s32 %v1929, %v1931
      %v1933 = vrot.slane %v1917, %v1932
      %v1935 = vunpack.c.l.s4 1966171168
      %v1936 = vunpack.c.0.s8 %v1935
      %v1937 = vlaneseq
      %v1938 = vshrl.u32 %v1937, 7
      %v1939 = vsub.s32 %v1936, %v1938
      %v1940 = vrot.slane %v1924, %v1939
      %v1942 = vunpack.c.l.s4 1966171168
      %v1943 = vunpack.c.0.s8 %v1942
      %v1944 = vlaneseq
      %v1945 = vshrl.u32 %v1944, 7
      %v1946 = vsub.s32 %v1943, %v1945
      %v1947 = vrot.slane %v1925, %v1946
      %v1949 = vunpack.c.l.s4 1966171168
      %v1950 = vunpack.c.0.s8 %v1949
      %v1951 = vlaneseq
      %v1952 = vshrl.u32 %v1951, 7
      %v1953 = vsub.s32 %v1950, %v1952
      %v1954 = vrot.slane %v1926, %v1953
      %v1955 = vcombine.high %v1933, %v1933
      %v1956 = vcombine.high %v1940, %v1940
      %v1957 = vcombine.high %v1947, %v1947
      %v1958 = vcombine.high %v1954, %v1954
      %v1960 = vunpack.c.l.s4 1966171168
      %v1961 = vunpack.c.0.s8 %v1960
      %v1962 = vlaneseq
      %v1963 = vshrl.u32 %v1962, 7
      %v1964 = vsub.s32 %v1961, %v1963
      %v1965 = vrot.slane %v1065, %v1964
      %v1967 = vunpack.c.l.s4 1966171168
      %v1968 = vunpack.c.0.s8 %v1967
      %v1969 = vlaneseq
      %v1970 = vshrl.u32 %v1969, 7
      %v1971 = vsub.s32 %v1968, %v1970
      %v1972 = vrot.slane %v1965, %v1971
      %v1973 = vcombine.high %v1066, %v1066
      %v1975 = vunpack.c.l.s4 1966171168
      %v1976 = vunpack.c.0.s8 %v1975
      %v1977 = vlaneseq
      %v1978 = vshrl.u32 %v1977, 7
      %v1979 = vsub.s32 %v1976, %v1978
      %v1980 = vrot.slane %v1066, %v1979
      %v1982 = vunpack.c.l.s4 1966171168
      %v1983 = vunpack.c.0.s8 %v1982
      %v1984 = vlaneseq
      %v1985 = vshrl.u32 %v1984, 7
      %v1986 = vsub.s32 %v1983, %v1985
      %v1987 = vrot.slane %v1973, %v1986
      %v1988 = vcombine.high %v1980, %v1980
      %v1989 = vcombine.high %v1987, %v1987
      %v1991 = vunpack.c.l.s4 1966171168
      %v1992 = vunpack.c.0.s8 %v1991
      %v1993 = vlaneseq
      %v1994 = vshrl.u32 %v1993, 7
      %v1995 = vsub.s32 %v1992, %v1994
      %v1996 = vrot.slane %v1980, %v1995
      %v1998 = vunpack.c.l.s4 1966171168
      %v1999 = vunpack.c.0.s8 %v1998
      %v2000 = vlaneseq
      %v2001 = vshrl.u32 %v2000, 7
      %v2002 = vsub.s32 %v1999, %v2001
      %v2003 = vrot.slane %v1987, %v2002
      %v2005 = vunpack.c.l.s4 1966171168
      %v2006 = vunpack.c.0.s8 %v2005
      %v2007 = vlaneseq
      %v2008 = vshrl.u32 %v2007, 7
      %v2009 = vsub.s32 %v2006, %v2008
      %v2010 = vrot.slane %v1988, %v2009
      %v2012 = vunpack.c.l.s4 1966171168
      %v2013 = vunpack.c.0.s8 %v2012
      %v2014 = vlaneseq
      %v2015 = vshrl.u32 %v2014, 7
      %v2016 = vsub.s32 %v2013, %v2015
      %v2017 = vrot.slane %v1989, %v2016
      %v2018 = vcombine.high %v1996, %v1996
      %v2019 = vcombine.high %v2003, %v2003
      %v2020 = vcombine.high %v2010, %v2010
      %v2021 = vcombine.high %v2017, %v2017
      %v2023 = vunpack.c.l.s4 1966171168
      %v2024 = vunpack.c.0.s8 %v2023
      %v2025 = vlaneseq
      %v2026 = vshrl.u32 %v2025, 7
      %v2027 = vsub.s32 %v2024, %v2026
      %v2028 = vrot.slane %v1067, %v2027
      %v2030 = vunpack.c.l.s4 1966171168
      %v2031 = vunpack.c.0.s8 %v2030
      %v2032 = vlaneseq
      %v2033 = vshrl.u32 %v2032, 7
      %v2034 = vsub.s32 %v2031, %v2033
      %v2035 = vrot.slane %v2028, %v2034
      %v2036 = vcombine.high %v1068, %v1068
      %v2038 = vunpack.c.l.s4 1966171168
      %v2039 = vunpack.c.0.s8 %v2038
      %v2040 = vlaneseq
      %v2041 = vshrl.u32 %v2040, 7
      %v2042 = vsub.s32 %v2039, %v2041
      %v2043 = vrot.slane %v1068, %v2042
      %v2045 = vunpack.c.l.s4 1966171168
      %v2046 = vunpack.c.0.s8 %v2045
      %v2047 = vlaneseq
      %v2048 = vshrl.u32 %v2047, 7
      %v2049 = vsub.s32 %v2046, %v2048
      %v2050 = vrot.slane %v2036, %v2049
      %v2051 = vcombine.high %v2043, %v2043
      %v2052 = vcombine.high %v2050, %v2050
      %v2054 = vunpack.c.l.s4 1966171168
      %v2055 = vunpack.c.0.s8 %v2054
      %v2056 = vlaneseq
      %v2057 = vshrl.u32 %v2056, 7
      %v2058 = vsub.s32 %v2055, %v2057
      %v2059 = vrot.slane %v2043, %v2058
      %v2061 = vunpack.c.l.s4 1966171168
      %v2062 = vunpack.c.0.s8 %v2061
      %v2063 = vlaneseq
      %v2064 = vshrl.u32 %v2063, 7
      %v2065 = vsub.s32 %v2062, %v2064
      %v2066 = vrot.slane %v2050, %v2065
      %v2068 = vunpack.c.l.s4 1966171168
      %v2069 = vunpack.c.0.s8 %v2068
      %v2070 = vlaneseq
      %v2071 = vshrl.u32 %v2070, 7
      %v2072 = vsub.s32 %v2069, %v2071
      %v2073 = vrot.slane %v2051, %v2072
      %v2075 = vunpack.c.l.s4 1966171168
      %v2076 = vunpack.c.0.s8 %v2075
      %v2077 = vlaneseq
      %v2078 = vshrl.u32 %v2077, 7
      %v2079 = vsub.s32 %v2076, %v2078
      %v2080 = vrot.slane %v2052, %v2079
      %v2081 = vcombine.high %v2059, %v2059
      %v2082 = vcombine.high %v2066, %v2066
      %v2083 = vcombine.high %v2073, %v2073
      %v2084 = vcombine.high %v2080, %v2080
      %v2086 = vunpack.c.l.s4 1966171168
      %v2087 = vunpack.c.0.s8 %v2086
      %v2088 = vlaneseq
      %v2089 = vshrl.u32 %v2088, 7
      %v2090 = vsub.s32 %v2087, %v2089
      %v2091 = vrot.slane %v1069, %v2090
      %v2093 = vunpack.c.l.s4 1966171168
      %v2094 = vunpack.c.0.s8 %v2093
      %v2095 = vlaneseq
      %v2096 = vshrl.u32 %v2095, 7
      %v2097 = vsub.s32 %v2094, %v2096
      %v2098 = vrot.slane %v2091, %v2097
      %v2099 = vcombine.high %v1070, %v1070
      %v2101 = vunpack.c.l.s4 1966171168
      %v2102 = vunpack.c.0.s8 %v2101
      %v2103 = vlaneseq
      %v2104 = vshrl.u32 %v2103, 7
      %v2105 = vsub.s32 %v2102, %v2104
      %v2106 = vrot.slane %v1070, %v2105
      %v2108 = vunpack.c.l.s4 1966171168
      %v2109 = vunpack.c.0.s8 %v2108
      %v2110 = vlaneseq
      %v2111 = vshrl.u32 %v2110, 7
      %v2112 = vsub.s32 %v2109, %v2111
      %v2113 = vrot.slane %v2099, %v2112
      %v2114 = vcombine.high %v2106, %v2106
      %v2115 = vcombine.high %v2113, %v2113
      %v2117 = vunpack.c.l.s4 1966171168
      %v2118 = vunpack.c.0.s8 %v2117
      %v2119 = vlaneseq
      %v2120 = vshrl.u32 %v2119, 7
      %v2121 = vsub.s32 %v2118, %v2120
      %v2122 = vrot.slane %v2106, %v2121
      %v2124 = vunpack.c.l.s4 1966171168
      %v2125 = vunpack.c.0.s8 %v2124
      %v2126 = vlaneseq
      %v2127 = vshrl.u32 %v2126, 7
      %v2128 = vsub.s32 %v2125, %v2127
      %v2129 = vrot.slane %v2113, %v2128
      %v2131 = vunpack.c.l.s4 1966171168
      %v2132 = vunpack.c.0.s8 %v2131
      %v2133 = vlaneseq
      %v2134 = vshrl.u32 %v2133, 7
      %v2135 = vsub.s32 %v2132, %v2134
      %v2136 = vrot.slane %v2114, %v2135
      %v2138 = vunpack.c.l.s4 1966171168
      %v2139 = vunpack.c.0.s8 %v2138
      %v2140 = vlaneseq
      %v2141 = vshrl.u32 %v2140, 7
      %v2142 = vsub.s32 %v2139, %v2141
      %v2143 = vrot.slane %v2115, %v2142
      %v2144 = vcombine.high %v2122, %v2122
      %v2145 = vcombine.high %v2129, %v2129
      %v2146 = vcombine.high %v2136, %v2136
      %v2147 = vcombine.high %v2143, %v2143
      %v2149 = vunpack.c.l.s4 1966171168
      %v2150 = vunpack.c.0.s8 %v2149
      %v2151 = vlaneseq
      %v2152 = vshrl.u32 %v2151, 7
      %v2153 = vsub.s32 %v2150, %v2152
      %v2154 = vrot.slane %v1071, %v2153
      %v2156 = vunpack.c.l.s4 1966171168
      %v2157 = vunpack.c.0.s8 %v2156
      %v2158 = vlaneseq
      %v2159 = vshrl.u32 %v2158, 7
      %v2160 = vsub.s32 %v2157, %v2159
      %v2161 = vrot.slane %v2154, %v2160
      %v2162 = vcombine.high %v1072, %v1072
      %v2164 = vunpack.c.l.s4 1966171168
      %v2165 = vunpack.c.0.s8 %v2164
      %v2166 = vlaneseq
      %v2167 = vshrl.u32 %v2166, 7
      %v2168 = vsub.s32 %v2165, %v2167
      %v2169 = vrot.slane %v1072, %v2168
      %v2171 = vunpack.c.l.s4 1966171168
      %v2172 = vunpack.c.0.s8 %v2171
      %v2173 = vlaneseq
      %v2174 = vshrl.u32 %v2173, 7
      %v2175 = vsub.s32 %v2172, %v2174
      %v2176 = vrot.slane %v2162, %v2175
      %v2177 = vcombine.high %v2169, %v2169
      %v2178 = vcombine.high %v2176, %v2176
      %v2180 = vunpack.c.l.s4 1966171168
      %v2181 = vunpack.c.0.s8 %v2180
      %v2182 = vlaneseq
      %v2183 = vshrl.u32 %v2182, 7
      %v2184 = vsub.s32 %v2181, %v2183
      %v2185 = vrot.slane %v2169, %v2184
      %v2187 = vunpack.c.l.s4 1966171168
      %v2188 = vunpack.c.0.s8 %v2187
      %v2189 = vlaneseq
      %v2190 = vshrl.u32 %v2189, 7
      %v2191 = vsub.s32 %v2188, %v2190
      %v2192 = vrot.slane %v2176, %v2191
      %v2194 = vunpack.c.l.s4 1966171168
      %v2195 = vunpack.c.0.s8 %v2194
      %v2196 = vlaneseq
      %v2197 = vshrl.u32 %v2196, 7
      %v2198 = vsub.s32 %v2195, %v2197
      %v2199 = vrot.slane %v2177, %v2198
      %v2201 = vunpack.c.l.s4 1966171168
      %v2202 = vunpack.c.0.s8 %v2201
      %v2203 = vlaneseq
      %v2204 = vshrl.u32 %v2203, 7
      %v2205 = vsub.s32 %v2202, %v2204
      %v2206 = vrot.slane %v2178, %v2205
      %v2207 = vcombine.high %v2185, %v2185
      %v2208 = vcombine.high %v2192, %v2192
      %v2209 = vcombine.high %v2199, %v2199
      %v2210 = vcombine.high %v2206, %v2206
      %v2212 = vunpack.c.l.s4 1966171168
      %v2213 = vunpack.c.0.s8 %v2212
      %v2214 = vlaneseq
      %v2215 = vshrl.u32 %v2214, 7
      %v2216 = vsub.s32 %v2213, %v2215
      %v2217 = vrot.slane %v1073, %v2216
      %v2219 = vunpack.c.l.s4 1966171168
      %v2220 = vunpack.c.0.s8 %v2219
      %v2221 = vlaneseq
      %v2222 = vshrl.u32 %v2221, 7
      %v2223 = vsub.s32 %v2220, %v2222
      %v2224 = vrot.slane %v2217, %v2223
      %v2225 = vcombine.high %v1113, %v1113
      %v2227 = vunpack.c.l.s4 1966171168
      %v2228 = vunpack.c.0.s8 %v2227
      %v2229 = vlaneseq
      %v2230 = vshrl.u32 %v2229, 7
      %v2231 = vsub.s32 %v2228, %v2230
      %v2232 = vrot.slane %v1113, %v2231
      %v2234 = vunpack.c.l.s4 1966171168
      %v2235 = vunpack.c.0.s8 %v2234
      %v2236 = vlaneseq
      %v2237 = vshrl.u32 %v2236, 7
      %v2238 = vsub.s32 %v2235, %v2237
      %v2239 = vrot.slane %v2225, %v2238
      %v2240 = vcombine.high %v2232, %v2232
      %v2241 = vcombine.high %v2239, %v2239
      %v2243 = vunpack.c.l.s4 1966171168
      %v2244 = vunpack.c.0.s8 %v2243
      %v2245 = vlaneseq
      %v2246 = vshrl.u32 %v2245, 7
      %v2247 = vsub.s32 %v2244, %v2246
      %v2248 = vrot.slane %v2232, %v2247
      %v2250 = vunpack.c.l.s4 1966171168
      %v2251 = vunpack.c.0.s8 %v2250
      %v2252 = vlaneseq
      %v2253 = vshrl.u32 %v2252, 7
      %v2254 = vsub.s32 %v2251, %v2253
      %v2255 = vrot.slane %v2239, %v2254
      %v2257 = vunpack.c.l.s4 1966171168
      %v2258 = vunpack.c.0.s8 %v2257
      %v2259 = vlaneseq
      %v2260 = vshrl.u32 %v2259, 7
      %v2261 = vsub.s32 %v2258, %v2260
      %v2262 = vrot.slane %v2240, %v2261
      %v2264 = vunpack.c.l.s4 1966171168
      %v2265 = vunpack.c.0.s8 %v2264
      %v2266 = vlaneseq
      %v2267 = vshrl.u32 %v2266, 7
      %v2268 = vsub.s32 %v2265, %v2267
      %v2269 = vrot.slane %v2241, %v2268
      %v2270 = vcombine.high %v2248, %v2248
      %v2271 = vcombine.high %v2255, %v2255
      %v2272 = vcombine.high %v2262, %v2262
      %v2273 = vcombine.high %v2269, %v2269
      %v2275 = vunpack.c.l.s4 1966171168
      %v2276 = vunpack.c.0.s8 %v2275
      %v2277 = vlaneseq
      %v2278 = vshrl.u32 %v2277, 7
      %v2279 = vsub.s32 %v2276, %v2278
      %v2280 = vrot.slane %v1114, %v2279
      %v2282 = vunpack.c.l.s4 1966171168
      %v2283 = vunpack.c.0.s8 %v2282
      %v2284 = vlaneseq
      %v2285 = vshrl.u32 %v2284, 7
      %v2286 = vsub.s32 %v2283, %v2285
      %v2287 = vrot.slane %v2280, %v2286
      %v2288 = vcombine.low %v1177, %v1191
      %v2289 = vcombine.low %v1199, %v1201
      %v2290 = vcombine.low %v1184, %v1198
      %v2291 = vcombine.low %v1200, %v1202
      %v2293 = vunpack.c.l.s4 1966171168
      %v2294 = vunpack.c.0.s8 %v2293
      %v2295 = vlaneseq
      %v2296 = vshrl.u32 %v2295, 7
      %v2297 = vsub.s32 %v2294, %v2296
      %v2298 = vrot.slane %v2288, %v2297
      %v2300 = vunpack.c.l.s4 1966171168
      %v2301 = vunpack.c.0.s8 %v2300
      %v2302 = vlaneseq
      %v2303 = vshrl.u32 %v2302, 7
      %v2304 = vsub.s32 %v2301, %v2303
      %v2305 = vrot.slane %v2289, %v2304
      %v2307 = vunpack.c.l.s4 1966171168
      %v2308 = vunpack.c.0.s8 %v2307
      %v2309 = vlaneseq
      %v2310 = vshrl.u32 %v2309, 7
      %v2311 = vsub.s32 %v2308, %v2310
      %v2312 = vrot.slane %v2290, %v2311
      %v2314 = vunpack.c.l.s4 1966171168
      %v2315 = vunpack.c.0.s8 %v2314
      %v2316 = vlaneseq
      %v2317 = vshrl.u32 %v2316, 7
      %v2318 = vsub.s32 %v2315, %v2317
      %v2319 = vrot.slane %v2291, %v2318
      %v2320 = vcombine.low %v2298, %v2305
      %v2321 = vcombine.low %v2312, %v2319
      %v2323 = vunpack.c.l.s4 1966171168
      %v2324 = vunpack.c.0.s8 %v2323
      %v2325 = vlaneseq
      %v2326 = vshrl.u32 %v2325, 7
      %v2327 = vsub.s32 %v2324, %v2326
      %v2328 = vrot.slane %v2320, %v2327
      %v2330 = vunpack.c.l.s4 1966171168
      %v2331 = vunpack.c.0.s8 %v2330
      %v2332 = vlaneseq
      %v2333 = vshrl.u32 %v2332, 7
      %v2334 = vsub.s32 %v2331, %v2333
      %v2335 = vrot.slane %v2321, %v2334
      %v2336 = vcombine.low %v2328, %v2335
      %v2337 = vcombine.low %v1216, %v1240
      %v2338 = vcombine.low %v1254, %v1262
      %v2339 = vcombine.low %v1264, %v1247
      %v2340 = vcombine.low %v1261, %v1263
      %v2342 = vunpack.c.l.s4 1966171168
      %v2343 = vunpack.c.0.s8 %v2342
      %v2344 = vlaneseq
      %v2345 = vshrl.u32 %v2344, 7
      %v2346 = vsub.s32 %v2343, %v2345
      %v2347 = vrot.slane %v2337, %v2346
      %v2349 = vunpack.c.l.s4 1966171168
      %v2350 = vunpack.c.0.s8 %v2349
      %v2351 = vlaneseq
      %v2352 = vshrl.u32 %v2351, 7
      %v2353 = vsub.s32 %v2350, %v2352
      %v2354 = vrot.slane %v2338, %v2353
      %v2356 = vunpack.c.l.s4 1966171168
      %v2357 = vunpack.c.0.s8 %v2356
      %v2358 = vlaneseq
      %v2359 = vshrl.u32 %v2358, 7
      %v2360 = vsub.s32 %v2357, %v2359
      %v2361 = vrot.slane %v2339, %v2360
      %v2363 = vunpack.c.l.s4 1966171168
      %v2364 = vunpack.c.0.s8 %v2363
      %v2365 = vlaneseq
      %v2366 = vshrl.u32 %v2365, 7
      %v2367 = vsub.s32 %v2364, %v2366
      %v2368 = vrot.slane %v2340, %v2367
      %v2369 = vcombine.low %v2347, %v2354
      %v2370 = vcombine.low %v2361, %v2368
      %v2372 = vunpack.c.l.s4 1966171168
      %v2373 = vunpack.c.0.s8 %v2372
      %v2374 = vlaneseq
      %v2375 = vshrl.u32 %v2374, 7
      %v2376 = vsub.s32 %v2373, %v2375
      %v2377 = vrot.slane %v2369, %v2376
      %v2379 = vunpack.c.l.s4 1966171168
      %v2380 = vunpack.c.0.s8 %v2379
      %v2381 = vlaneseq
      %v2382 = vshrl.u32 %v2381, 7
      %v2383 = vsub.s32 %v2380, %v2382
      %v2384 = vrot.slane %v2370, %v2383
      %v2385 = vcombine.low %v2377, %v2384
      %v2386 = vcombine.low %v1265, %v1279
      %v2387 = vcombine.low %v1303, %v1317
      %v2388 = vcombine.low %v1325, %v1327
      %v2389 = vcombine.low %v1310, %v1324
      %v2391 = vunpack.c.l.s4 1966171168
      %v2392 = vunpack.c.0.s8 %v2391
      %v2393 = vlaneseq
      %v2394 = vshrl.u32 %v2393, 7
      %v2395 = vsub.s32 %v2392, %v2394
      %v2396 = vrot.slane %v2386, %v2395
      %v2398 = vunpack.c.l.s4 1966171168
      %v2399 = vunpack.c.0.s8 %v2398
      %v2400 = vlaneseq
      %v2401 = vshrl.u32 %v2400, 7
      %v2402 = vsub.s32 %v2399, %v2401
      %v2403 = vrot.slane %v2387, %v2402
      %v2405 = vunpack.c.l.s4 1966171168
      %v2406 = vunpack.c.0.s8 %v2405
      %v2407 = vlaneseq
      %v2408 = vshrl.u32 %v2407, 7
      %v2409 = vsub.s32 %v2406, %v2408
      %v2410 = vrot.slane %v2388, %v2409
      %v2412 = vunpack.c.l.s4 1966171168
      %v2413 = vunpack.c.0.s8 %v2412
      %v2414 = vlaneseq
      %v2415 = vshrl.u32 %v2414, 7
      %v2416 = vsub.s32 %v2413, %v2415
      %v2417 = vrot.slane %v2389, %v2416
      %v2418 = vcombine.low %v2396, %v2403
      %v2419 = vcombine.low %v2410, %v2417
      %v2421 = vunpack.c.l.s4 1966171168
      %v2422 = vunpack.c.0.s8 %v2421
      %v2423 = vlaneseq
      %v2424 = vshrl.u32 %v2423, 7
      %v2425 = vsub.s32 %v2422, %v2424
      %v2426 = vrot.slane %v2418, %v2425
      %v2428 = vunpack.c.l.s4 1966171168
      %v2429 = vunpack.c.0.s8 %v2428
      %v2430 = vlaneseq
      %v2431 = vshrl.u32 %v2430, 7
      %v2432 = vsub.s32 %v2429, %v2431
      %v2433 = vrot.slane %v2419, %v2432
      %v2434 = vcombine.low %v2426, %v2433
      %v2435 = vcombine.low %v1326, %v1328
      %v2436 = vcombine.low %v1342, %v1366
      %v2437 = vcombine.low %v1380, %v1388
      %v2438 = vcombine.low %v1390, %v1373
      %v2440 = vunpack.c.l.s4 1966171168
      %v2441 = vunpack.c.0.s8 %v2440
      %v2442 = vlaneseq
      %v2443 = vshrl.u32 %v2442, 7
      %v2444 = vsub.s32 %v2441, %v2443
      %v2445 = vrot.slane %v2435, %v2444
      %v2447 = vunpack.c.l.s4 1966171168
      %v2448 = vunpack.c.0.s8 %v2447
      %v2449 = vlaneseq
      %v2450 = vshrl.u32 %v2449, 7
      %v2451 = vsub.s32 %v2448, %v2450
      %v2452 = vrot.slane %v2436, %v2451
      %v2454 = vunpack.c.l.s4 1966171168
      %v2455 = vunpack.c.0.s8 %v2454
      %v2456 = vlaneseq
      %v2457 = vshrl.u32 %v2456, 7
      %v2458 = vsub.s32 %v2455, %v2457
      %v2459 = vrot.slane %v2437, %v2458
      %v2461 = vunpack.c.l.s4 1966171168
      %v2462 = vunpack.c.0.s8 %v2461
      %v2463 = vlaneseq
      %v2464 = vshrl.u32 %v2463, 7
      %v2465 = vsub.s32 %v2462, %v2464
      %v2466 = vrot.slane %v2438, %v2465
      %v2467 = vcombine.low %v2445, %v2452
      %v2468 = vcombine.low %v2459, %v2466
      %v2470 = vunpack.c.l.s4 1966171168
      %v2471 = vunpack.c.0.s8 %v2470
      %v2472 = vlaneseq
      %v2473 = vshrl.u32 %v2472, 7
      %v2474 = vsub.s32 %v2471, %v2473
      %v2475 = vrot.slane %v2467, %v2474
      %v2477 = vunpack.c.l.s4 1966171168
      %v2478 = vunpack.c.0.s8 %v2477
      %v2479 = vlaneseq
      %v2480 = vshrl.u32 %v2479, 7
      %v2481 = vsub.s32 %v2478, %v2480
      %v2482 = vrot.slane %v2468, %v2481
      %v2483 = vcombine.low %v2475, %v2482
      %v2484 = vcombine.low %v1387, %v1389
      %v2485 = vcombine.low %v1391, %v1405
      %v2486 = vcombine.low %v1429, %v1443
      %v2487 = vcombine.low %v1451, %v1453
      %v2489 = vunpack.c.l.s4 1966171168
      %v2490 = vunpack.c.0.s8 %v2489
      %v2491 = vlaneseq
      %v2492 = vshrl.u32 %v2491, 7
      %v2493 = vsub.s32 %v2490, %v2492
      %v2494 = vrot.slane %v2484, %v2493
      %v2496 = vunpack.c.l.s4 1966171168
      %v2497 = vunpack.c.0.s8 %v2496
      %v2498 = vlaneseq
      %v2499 = vshrl.u32 %v2498, 7
      %v2500 = vsub.s32 %v2497, %v2499
      %v2501 = vrot.slane %v2485, %v2500
      %v2503 = vunpack.c.l.s4 1966171168
      %v2504 = vunpack.c.0.s8 %v2503
      %v2505 = vlaneseq
      %v2506 = vshrl.u32 %v2505, 7
      %v2507 = vsub.s32 %v2504, %v2506
      %v2508 = vrot.slane %v2486, %v2507
      %v2510 = vunpack.c.l.s4 1966171168
      %v2511 = vunpack.c.0.s8 %v2510
      %v2512 = vlaneseq
      %v2513 = vshrl.u32 %v2512, 7
      %v2514 = vsub.s32 %v2511, %v2513
      %v2515 = vrot.slane %v2487, %v2514
      %v2516 = vcombine.low %v2494, %v2501
      %v2517 = vcombine.low %v2508, %v2515
      %v2519 = vunpack.c.l.s4 1966171168
      %v2520 = vunpack.c.0.s8 %v2519
      %v2521 = vlaneseq
      %v2522 = vshrl.u32 %v2521, 7
      %v2523 = vsub.s32 %v2520, %v2522
      %v2524 = vrot.slane %v2516, %v2523
      %v2526 = vunpack.c.l.s4 1966171168
      %v2527 = vunpack.c.0.s8 %v2526
      %v2528 = vlaneseq
      %v2529 = vshrl.u32 %v2528, 7
      %v2530 = vsub.s32 %v2527, %v2529
      %v2531 = vrot.slane %v2517, %v2530
      %v2532 = vcombine.low %v2524, %v2531
      %v2533 = vcombine.low %v1436, %v1450
      %v2534 = vcombine.low %v1452, %v1454
      %v2535 = vcombine.low %v1468, %v1492
      %v2536 = vcombine.low %v1506, %v1514
      %v2538 = vunpack.c.l.s4 1966171168
      %v2539 = vunpack.c.0.s8 %v2538
      %v2540 = vlaneseq
      %v2541 = vshrl.u32 %v2540, 7
      %v2542 = vsub.s32 %v2539, %v2541
      %v2543 = vrot.slane %v2533, %v2542
      %v2545 = vunpack.c.l.s4 1966171168
      %v2546 = vunpack.c.0.s8 %v2545
      %v2547 = vlaneseq
      %v2548 = vshrl.u32 %v2547, 7
      %v2549 = vsub.s32 %v2546, %v2548
      %v2550 = vrot.slane %v2534, %v2549
      %v2552 = vunpack.c.l.s4 1966171168
      %v2553 = vunpack.c.0.s8 %v2552
      %v2554 = vlaneseq
      %v2555 = vshrl.u32 %v2554, 7
      %v2556 = vsub.s32 %v2553, %v2555
      %v2557 = vrot.slane %v2535, %v2556
      %v2559 = vunpack.c.l.s4 1966171168
      %v2560 = vunpack.c.0.s8 %v2559
      %v2561 = vlaneseq
      %v2562 = vshrl.u32 %v2561, 7
      %v2563 = vsub.s32 %v2560, %v2562
      %v2564 = vrot.slane %v2536, %v2563
      %v2565 = vcombine.low %v2543, %v2550
      %v2566 = vcombine.low %v2557, %v2564
      %v2568 = vunpack.c.l.s4 1966171168
      %v2569 = vunpack.c.0.s8 %v2568
      %v2570 = vlaneseq
      %v2571 = vshrl.u32 %v2570, 7
      %v2572 = vsub.s32 %v2569, %v2571
      %v2573 = vrot.slane %v2565, %v2572
      %v2575 = vunpack.c.l.s4 1966171168
      %v2576 = vunpack.c.0.s8 %v2575
      %v2577 = vlaneseq
      %v2578 = vshrl.u32 %v2577, 7
      %v2579 = vsub.s32 %v2576, %v2578
      %v2580 = vrot.slane %v2566, %v2579
      %v2581 = vcombine.low %v2573, %v2580
      %v2582 = vcombine.low %v1516, %v1499
      %v2583 = vcombine.low %v1513, %v1515
      %v2584 = vcombine.low %v1517, %v1531
      %v2585 = vcombine.low %v1555, %v1569
      %v2587 = vunpack.c.l.s4 1966171168
      %v2588 = vunpack.c.0.s8 %v2587
      %v2589 = vlaneseq
      %v2590 = vshrl.u32 %v2589, 7
      %v2591 = vsub.s32 %v2588, %v2590
      %v2592 = vrot.slane %v2582, %v2591
      %v2594 = vunpack.c.l.s4 1966171168
      %v2595 = vunpack.c.0.s8 %v2594
      %v2596 = vlaneseq
      %v2597 = vshrl.u32 %v2596, 7
      %v2598 = vsub.s32 %v2595, %v2597
      %v2599 = vrot.slane %v2583, %v2598
      %v2601 = vunpack.c.l.s4 1966171168
      %v2602 = vunpack.c.0.s8 %v2601
      %v2603 = vlaneseq
      %v2604 = vshrl.u32 %v2603, 7
      %v2605 = vsub.s32 %v2602, %v2604
      %v2606 = vrot.slane %v2584, %v2605
      %v2608 = vunpack.c.l.s4 1966171168
      %v2609 = vunpack.c.0.s8 %v2608
      %v2610 = vlaneseq
      %v2611 = vshrl.u32 %v2610, 7
      %v2612 = vsub.s32 %v2609, %v2611
      %v2613 = vrot.slane %v2585, %v2612
      %v2614 = vcombine.low %v2592, %v2599
      %v2615 = vcombine.low %v2606, %v2613
      %v2617 = vunpack.c.l.s4 1966171168
      %v2618 = vunpack.c.0.s8 %v2617
      %v2619 = vlaneseq
      %v2620 = vshrl.u32 %v2619, 7
      %v2621 = vsub.s32 %v2618, %v2620
      %v2622 = vrot.slane %v2614, %v2621
      %v2624 = vunpack.c.l.s4 1966171168
      %v2625 = vunpack.c.0.s8 %v2624
      %v2626 = vlaneseq
      %v2627 = vshrl.u32 %v2626, 7
      %v2628 = vsub.s32 %v2625, %v2627
      %v2629 = vrot.slane %v2615, %v2628
      %v2630 = vcombine.low %v2622, %v2629
      %v2631 = vcombine.low %v1577, %v1579
      %v2632 = vcombine.low %v1562, %v1576
      %v2633 = vcombine.low %v1578, %v1580
      %v2634 = vcombine.low %v1594, %v1618
      %v2636 = vunpack.c.l.s4 1966171168
      %v2637 = vunpack.c.0.s8 %v2636
      %v2638 = vlaneseq
      %v2639 = vshrl.u32 %v2638, 7
      %v2640 = vsub.s32 %v2637, %v2639
      %v2641 = vrot.slane %v2631, %v2640
      %v2643 = vunpack.c.l.s4 1966171168
      %v2644 = vunpack.c.0.s8 %v2643
      %v2645 = vlaneseq
      %v2646 = vshrl.u32 %v2645, 7
      %v2647 = vsub.s32 %v2644, %v2646
      %v2648 = vrot.slane %v2632, %v2647
      %v2650 = vunpack.c.l.s4 1966171168
      %v2651 = vunpack.c.0.s8 %v2650
      %v2652 = vlaneseq
      %v2653 = vshrl.u32 %v2652, 7
      %v2654 = vsub.s32 %v2651, %v2653
      %v2655 = vrot.slane %v2633, %v2654
      %v2657 = vunpack.c.l.s4 1966171168
      %v2658 = vunpack.c.0.s8 %v2657
      %v2659 = vlaneseq
      %v2660 = vshrl.u32 %v2659, 7
      %v2661 = vsub.s32 %v2658, %v2660
      %v2662 = vrot.slane %v2634, %v2661
      %v2663 = vcombine.low %v2641, %v2648
      %v2664 = vcombine.low %v2655, %v2662
      %v2666 = vunpack.c.l.s4 1966171168
      %v2667 = vunpack.c.0.s8 %v2666
      %v2668 = vlaneseq
      %v2669 = vshrl.u32 %v2668, 7
      %v2670 = vsub.s32 %v2667, %v2669
      %v2671 = vrot.slane %v2663, %v2670
      %v2673 = vunpack.c.l.s4 1966171168
      %v2674 = vunpack.c.0.s8 %v2673
      %v2675 = vlaneseq
      %v2676 = vshrl.u32 %v2675, 7
      %v2677 = vsub.s32 %v2674, %v2676
      %v2678 = vrot.slane %v2664, %v2677
      %v2679 = vcombine.low %v2671, %v2678
      %v2680 = vcombine.low %v1632, %v1640
      %v2681 = vcombine.low %v1642, %v1625
      %v2682 = vcombine.low %v1639, %v1641
      %v2683 = vcombine.low %v1643, %v1657
      %v2685 = vunpack.c.l.s4 1966171168
      %v2686 = vunpack.c.0.s8 %v2685
      %v2687 = vlaneseq
      %v2688 = vshrl.u32 %v2687, 7
      %v2689 = vsub.s32 %v2686, %v2688
      %v2690 = vrot.slane %v2680, %v2689
      %v2692 = vunpack.c.l.s4 1966171168
      %v2693 = vunpack.c.0.s8 %v2692
      %v2694 = vlaneseq
      %v2695 = vshrl.u32 %v2694, 7
      %v2696 = vsub.s32 %v2693, %v2695
      %v2697 = vrot.slane %v2681, %v2696
      %v2699 = vunpack.c.l.s4 1966171168
      %v2700 = vunpack.c.0.s8 %v2699
      %v2701 = vlaneseq
      %v2702 = vshrl.u32 %v2701, 7
      %v2703 = vsub.s32 %v2700, %v2702
      %v2704 = vrot.slane %v2682, %v2703
      %v2706 = vunpack.c.l.s4 1966171168
      %v2707 = vunpack.c.0.s8 %v2706
      %v2708 = vlaneseq
      %v2709 = vshrl.u32 %v2708, 7
      %v2710 = vsub.s32 %v2707, %v2709
      %v2711 = vrot.slane %v2683, %v2710
      %v2712 = vcombine.low %v2690, %v2697
      %v2713 = vcombine.low %v2704, %v2711
      %v2715 = vunpack.c.l.s4 1966171168
      %v2716 = vunpack.c.0.s8 %v2715
      %v2717 = vlaneseq
      %v2718 = vshrl.u32 %v2717, 7
      %v2719 = vsub.s32 %v2716, %v2718
      %v2720 = vrot.slane %v2712, %v2719
      %v2722 = vunpack.c.l.s4 1966171168
      %v2723 = vunpack.c.0.s8 %v2722
      %v2724 = vlaneseq
      %v2725 = vshrl.u32 %v2724, 7
      %v2726 = vsub.s32 %v2723, %v2725
      %v2727 = vrot.slane %v2713, %v2726
      %v2728 = vcombine.low %v2720, %v2727
      %v2729 = vcombine.low %v1681, %v1695
      %v2730 = vcombine.low %v1703, %v1705
      %v2731 = vcombine.low %v1688, %v1702
      %v2732 = vcombine.low %v1704, %v1706
      %v2734 = vunpack.c.l.s4 1966171168
      %v2735 = vunpack.c.0.s8 %v2734
      %v2736 = vlaneseq
      %v2737 = vshrl.u32 %v2736, 7
      %v2738 = vsub.s32 %v2735, %v2737
      %v2739 = vrot.slane %v2729, %v2738
      %v2741 = vunpack.c.l.s4 1966171168
      %v2742 = vunpack.c.0.s8 %v2741
      %v2743 = vlaneseq
      %v2744 = vshrl.u32 %v2743, 7
      %v2745 = vsub.s32 %v2742, %v2744
      %v2746 = vrot.slane %v2730, %v2745
      %v2748 = vunpack.c.l.s4 1966171168
      %v2749 = vunpack.c.0.s8 %v2748
      %v2750 = vlaneseq
      %v2751 = vshrl.u32 %v2750, 7
      %v2752 = vsub.s32 %v2749, %v2751
      %v2753 = vrot.slane %v2731, %v2752
      %v2755 = vunpack.c.l.s4 1966171168
      %v2756 = vunpack.c.0.s8 %v2755
      %v2757 = vlaneseq
      %v2758 = vshrl.u32 %v2757, 7
      %v2759 = vsub.s32 %v2756, %v2758
      %v2760 = vrot.slane %v2732, %v2759
      %v2761 = vcombine.low %v2739, %v2746
      %v2762 = vcombine.low %v2753, %v2760
      %v2764 = vunpack.c.l.s4 1966171168
      %v2765 = vunpack.c.0.s8 %v2764
      %v2766 = vlaneseq
      %v2767 = vshrl.u32 %v2766, 7
      %v2768 = vsub.s32 %v2765, %v2767
      %v2769 = vrot.slane %v2761, %v2768
      %v2771 = vunpack.c.l.s4 1966171168
      %v2772 = vunpack.c.0.s8 %v2771
      %v2773 = vlaneseq
      %v2774 = vshrl.u32 %v2773, 7
      %v2775 = vsub.s32 %v2772, %v2774
      %v2776 = vrot.slane %v2762, %v2775
      %v2777 = vcombine.low %v2769, %v2776
      %v2778 = vcombine.low %v1720, %v1744
      %v2779 = vcombine.low %v1758, %v1766
      %v2780 = vcombine.low %v1768, %v1751
      %v2781 = vcombine.low %v1765, %v1767
      %v2783 = vunpack.c.l.s4 1966171168
      %v2784 = vunpack.c.0.s8 %v2783
      %v2785 = vlaneseq
      %v2786 = vshrl.u32 %v2785, 7
      %v2787 = vsub.s32 %v2784, %v2786
      %v2788 = vrot.slane %v2778, %v2787
      %v2790 = vunpack.c.l.s4 1966171168
      %v2791 = vunpack.c.0.s8 %v2790
      %v2792 = vlaneseq
      %v2793 = vshrl.u32 %v2792, 7
      %v2794 = vsub.s32 %v2791, %v2793
      %v2795 = vrot.slane %v2779, %v2794
      %v2797 = vunpack.c.l.s4 1966171168
      %v2798 = vunpack.c.0.s8 %v2797
      %v2799 = vlaneseq
      %v2800 = vshrl.u32 %v2799, 7
      %v2801 = vsub.s32 %v2798, %v2800
      %v2802 = vrot.slane %v2780, %v2801
      %v2804 = vunpack.c.l.s4 1966171168
      %v2805 = vunpack.c.0.s8 %v2804
      %v2806 = vlaneseq
      %v2807 = vshrl.u32 %v2806, 7
      %v2808 = vsub.s32 %v2805, %v2807
      %v2809 = vrot.slane %v2781, %v2808
      %v2810 = vcombine.low %v2788, %v2795
      %v2811 = vcombine.low %v2802, %v2809
      %v2813 = vunpack.c.l.s4 1966171168
      %v2814 = vunpack.c.0.s8 %v2813
      %v2815 = vlaneseq
      %v2816 = vshrl.u32 %v2815, 7
      %v2817 = vsub.s32 %v2814, %v2816
      %v2818 = vrot.slane %v2810, %v2817
      %v2820 = vunpack.c.l.s4 1966171168
      %v2821 = vunpack.c.0.s8 %v2820
      %v2822 = vlaneseq
      %v2823 = vshrl.u32 %v2822, 7
      %v2824 = vsub.s32 %v2821, %v2823
      %v2825 = vrot.slane %v2811, %v2824
      %v2826 = vcombine.low %v2818, %v2825
      %v2827 = vcombine.low %v1769, %v1783
      %v2828 = vcombine.low %v1807, %v1821
      %v2829 = vcombine.low %v1829, %v1831
      %v2830 = vcombine.low %v1814, %v1828
      %v2832 = vunpack.c.l.s4 1966171168
      %v2833 = vunpack.c.0.s8 %v2832
      %v2834 = vlaneseq
      %v2835 = vshrl.u32 %v2834, 7
      %v2836 = vsub.s32 %v2833, %v2835
      %v2837 = vrot.slane %v2827, %v2836
      %v2839 = vunpack.c.l.s4 1966171168
      %v2840 = vunpack.c.0.s8 %v2839
      %v2841 = vlaneseq
      %v2842 = vshrl.u32 %v2841, 7
      %v2843 = vsub.s32 %v2840, %v2842
      %v2844 = vrot.slane %v2828, %v2843
      %v2846 = vunpack.c.l.s4 1966171168
      %v2847 = vunpack.c.0.s8 %v2846
      %v2848 = vlaneseq
      %v2849 = vshrl.u32 %v2848, 7
      %v2850 = vsub.s32 %v2847, %v2849
      %v2851 = vrot.slane %v2829, %v2850
      %v2853 = vunpack.c.l.s4 1966171168
      %v2854 = vunpack.c.0.s8 %v2853
      %v2855 = vlaneseq
      %v2856 = vshrl.u32 %v2855, 7
      %v2857 = vsub.s32 %v2854, %v2856
      %v2858 = vrot.slane %v2830, %v2857
      %v2859 = vcombine.low %v2837, %v2844
      %v2860 = vcombine.low %v2851, %v2858
      %v2862 = vunpack.c.l.s4 1966171168
      %v2863 = vunpack.c.0.s8 %v2862
      %v2864 = vlaneseq
      %v2865 = vshrl.u32 %v2864, 7
      %v2866 = vsub.s32 %v2863, %v2865
      %v2867 = vrot.slane %v2859, %v2866
      %v2869 = vunpack.c.l.s4 1966171168
      %v2870 = vunpack.c.0.s8 %v2869
      %v2871 = vlaneseq
      %v2872 = vshrl.u32 %v2871, 7
      %v2873 = vsub.s32 %v2870, %v2872
      %v2874 = vrot.slane %v2860, %v2873
      %v2875 = vcombine.low %v2867, %v2874
      %v2876 = vcombine.low %v1830, %v1832
      %v2877 = vcombine.low %v1846, %v1870
      %v2878 = vcombine.low %v1884, %v1892
      %v2879 = vcombine.low %v1894, %v1877
      %v2881 = vunpack.c.l.s4 1966171168
      %v2882 = vunpack.c.0.s8 %v2881
      %v2883 = vlaneseq
      %v2884 = vshrl.u32 %v2883, 7
      %v2885 = vsub.s32 %v2882, %v2884
      %v2886 = vrot.slane %v2876, %v2885
      %v2888 = vunpack.c.l.s4 1966171168
      %v2889 = vunpack.c.0.s8 %v2888
      %v2890 = vlaneseq
      %v2891 = vshrl.u32 %v2890, 7
      %v2892 = vsub.s32 %v2889, %v2891
      %v2893 = vrot.slane %v2877, %v2892
      %v2895 = vunpack.c.l.s4 1966171168
      %v2896 = vunpack.c.0.s8 %v2895
      %v2897 = vlaneseq
      %v2898 = vshrl.u32 %v2897, 7
      %v2899 = vsub.s32 %v2896, %v2898
      %v2900 = vrot.slane %v2878, %v2899
      %v2902 = vunpack.c.l.s4 1966171168
      %v2903 = vunpack.c.0.s8 %v2902
      %v2904 = vlaneseq
      %v2905 = vshrl.u32 %v2904, 7
      %v2906 = vsub.s32 %v2903, %v2905
      %v2907 = vrot.slane %v2879, %v2906
      %v2908 = vcombine.low %v2886, %v2893
      %v2909 = vcombine.low %v2900, %v2907
      %v2911 = vunpack.c.l.s4 1966171168
      %v2912 = vunpack.c.0.s8 %v2911
      %v2913 = vlaneseq
      %v2914 = vshrl.u32 %v2913, 7
      %v2915 = vsub.s32 %v2912, %v2914
      %v2916 = vrot.slane %v2908, %v2915
      %v2918 = vunpack.c.l.s4 1966171168
      %v2919 = vunpack.c.0.s8 %v2918
      %v2920 = vlaneseq
      %v2921 = vshrl.u32 %v2920, 7
      %v2922 = vsub.s32 %v2919, %v2921
      %v2923 = vrot.slane %v2909, %v2922
      %v2924 = vcombine.low %v2916, %v2923
      %v2925 = vcombine.low %v1891, %v1893
      %v2926 = vcombine.low %v1895, %v1909
      %v2927 = vcombine.low %v1933, %v1947
      %v2928 = vcombine.low %v1955, %v1957
      %v2930 = vunpack.c.l.s4 1966171168
      %v2931 = vunpack.c.0.s8 %v2930
      %v2932 = vlaneseq
      %v2933 = vshrl.u32 %v2932, 7
      %v2934 = vsub.s32 %v2931, %v2933
      %v2935 = vrot.slane %v2925, %v2934
      %v2937 = vunpack.c.l.s4 1966171168
      %v2938 = vunpack.c.0.s8 %v2937
      %v2939 = vlaneseq
      %v2940 = vshrl.u32 %v2939, 7
      %v2941 = vsub.s32 %v2938, %v2940
      %v2942 = vrot.slane %v2926, %v2941
      %v2944 = vunpack.c.l.s4 1966171168
      %v2945 = vunpack.c.0.s8 %v2944
      %v2946 = vlaneseq
      %v2947 = vshrl.u32 %v2946, 7
      %v2948 = vsub.s32 %v2945, %v2947
      %v2949 = vrot.slane %v2927, %v2948
      %v2951 = vunpack.c.l.s4 1966171168
      %v2952 = vunpack.c.0.s8 %v2951
      %v2953 = vlaneseq
      %v2954 = vshrl.u32 %v2953, 7
      %v2955 = vsub.s32 %v2952, %v2954
      %v2956 = vrot.slane %v2928, %v2955
      %v2957 = vcombine.low %v2935, %v2942
      %v2958 = vcombine.low %v2949, %v2956
      %v2960 = vunpack.c.l.s4 1966171168
      %v2961 = vunpack.c.0.s8 %v2960
      %v2962 = vlaneseq
      %v2963 = vshrl.u32 %v2962, 7
      %v2964 = vsub.s32 %v2961, %v2963
      %v2965 = vrot.slane %v2957, %v2964
      %v2967 = vunpack.c.l.s4 1966171168
      %v2968 = vunpack.c.0.s8 %v2967
      %v2969 = vlaneseq
      %v2970 = vshrl.u32 %v2969, 7
      %v2971 = vsub.s32 %v2968, %v2970
      %v2972 = vrot.slane %v2958, %v2971
      %v2973 = vcombine.low %v2965, %v2972
      %v2974 = vcombine.low %v1940, %v1954
      %v2975 = vcombine.low %v1956, %v1958
      %v2976 = vcombine.low %v1972, %v1996
      %v2977 = vcombine.low %v2010, %v2018
      %v2979 = vunpack.c.l.s4 1966171168
      %v2980 = vunpack.c.0.s8 %v2979
      %v2981 = vlaneseq
      %v2982 = vshrl.u32 %v2981, 7
      %v2983 = vsub.s32 %v2980, %v2982
      %v2984 = vrot.slane %v2974, %v2983
      %v2986 = vunpack.c.l.s4 1966171168
      %v2987 = vunpack.c.0.s8 %v2986
      %v2988 = vlaneseq
      %v2989 = vshrl.u32 %v2988, 7
      %v2990 = vsub.s32 %v2987, %v2989
      %v2991 = vrot.slane %v2975, %v2990
      %v2993 = vunpack.c.l.s4 1966171168
      %v2994 = vunpack.c.0.s8 %v2993
      %v2995 = vlaneseq
      %v2996 = vshrl.u32 %v2995, 7
      %v2997 = vsub.s32 %v2994, %v2996
      %v2998 = vrot.slane %v2976, %v2997
      %v3000 = vunpack.c.l.s4 1966171168
      %v3001 = vunpack.c.0.s8 %v3000
      %v3002 = vlaneseq
      %v3003 = vshrl.u32 %v3002, 7
      %v3004 = vsub.s32 %v3001, %v3003
      %v3005 = vrot.slane %v2977, %v3004
      %v3006 = vcombine.low %v2984, %v2991
      %v3007 = vcombine.low %v2998, %v3005
      %v3009 = vunpack.c.l.s4 1966171168
      %v3010 = vunpack.c.0.s8 %v3009
      %v3011 = vlaneseq
      %v3012 = vshrl.u32 %v3011, 7
      %v3013 = vsub.s32 %v3010, %v3012
      %v3014 = vrot.slane %v3006, %v3013
      %v3016 = vunpack.c.l.s4 1966171168
      %v3017 = vunpack.c.0.s8 %v3016
      %v3018 = vlaneseq
      %v3019 = vshrl.u32 %v3018, 7
      %v3020 = vsub.s32 %v3017, %v3019
      %v3021 = vrot.slane %v3007, %v3020
      %v3022 = vcombine.low %v3014, %v3021
      %v3023 = vcombine.low %v2020, %v2003
      %v3024 = vcombine.low %v2017, %v2019
      %v3025 = vcombine.low %v2021, %v2035
      %v3026 = vcombine.low %v2059, %v2073
      %v3028 = vunpack.c.l.s4 1966171168
      %v3029 = vunpack.c.0.s8 %v3028
      %v3030 = vlaneseq
      %v3031 = vshrl.u32 %v3030, 7
      %v3032 = vsub.s32 %v3029, %v3031
      %v3033 = vrot.slane %v3023, %v3032
      %v3035 = vunpack.c.l.s4 1966171168
      %v3036 = vunpack.c.0.s8 %v3035
      %v3037 = vlaneseq
      %v3038 = vshrl.u32 %v3037, 7
      %v3039 = vsub.s32 %v3036, %v3038
      %v3040 = vrot.slane %v3024, %v3039
      %v3042 = vunpack.c.l.s4 1966171168
      %v3043 = vunpack.c.0.s8 %v3042
      %v3044 = vlaneseq
      %v3045 = vshrl.u32 %v3044, 7
      %v3046 = vsub.s32 %v3043, %v3045
      %v3047 = vrot.slane %v3025, %v3046
      %v3049 = vunpack.c.l.s4 1966171168
      %v3050 = vunpack.c.0.s8 %v3049
      %v3051 = vlaneseq
      %v3052 = vshrl.u32 %v3051, 7
      %v3053 = vsub.s32 %v3050, %v3052
      %v3054 = vrot.slane %v3026, %v3053
      %v3055 = vcombine.low %v3033, %v3040
      %v3056 = vcombine.low %v3047, %v3054
      %v3058 = vunpack.c.l.s4 1966171168
      %v3059 = vunpack.c.0.s8 %v3058
      %v3060 = vlaneseq
      %v3061 = vshrl.u32 %v3060, 7
      %v3062 = vsub.s32 %v3059, %v3061
      %v3063 = vrot.slane %v3055, %v3062
      %v3065 = vunpack.c.l.s4 1966171168
      %v3066 = vunpack.c.0.s8 %v3065
      %v3067 = vlaneseq
      %v3068 = vshrl.u32 %v3067, 7
      %v3069 = vsub.s32 %v3066, %v3068
      %v3070 = vrot.slane %v3056, %v3069
      %v3071 = vcombine.low %v3063, %v3070
      %v3072 = vcombine.low %v2081, %v2083
      %v3073 = vcombine.low %v2066, %v2080
      %v3074 = vcombine.low %v2082, %v2084
      %v3075 = vcombine.low %v2098, %v2122
      %v3077 = vunpack.c.l.s4 1966171168
      %v3078 = vunpack.c.0.s8 %v3077
      %v3079 = vlaneseq
      %v3080 = vshrl.u32 %v3079, 7
      %v3081 = vsub.s32 %v3078, %v3080
      %v3082 = vrot.slane %v3072, %v3081
      %v3084 = vunpack.c.l.s4 1966171168
      %v3085 = vunpack.c.0.s8 %v3084
      %v3086 = vlaneseq
      %v3087 = vshrl.u32 %v3086, 7
      %v3088 = vsub.s32 %v3085, %v3087
      %v3089 = vrot.slane %v3073, %v3088
      %v3091 = vunpack.c.l.s4 1966171168
      %v3092 = vunpack.c.0.s8 %v3091
      %v3093 = vlaneseq
      %v3094 = vshrl.u32 %v3093, 7
      %v3095 = vsub.s32 %v3092, %v3094
      %v3096 = vrot.slane %v3074, %v3095
      %v3098 = vunpack.c.l.s4 1966171168
      %v3099 = vunpack.c.0.s8 %v3098
      %v3100 = vlaneseq
      %v3101 = vshrl.u32 %v3100, 7
      %v3102 = vsub.s32 %v3099, %v3101
      %v3103 = vrot.slane %v3075, %v3102
      %v3104 = vcombine.low %v3082, %v3089
      %v3105 = vcombine.low %v3096, %v3103
      %v3107 = vunpack.c.l.s4 1966171168
      %v3108 = vunpack.c.0.s8 %v3107
      %v3109 = vlaneseq
      %v3110 = vshrl.u32 %v3109, 7
      %v3111 = vsub.s32 %v3108, %v3110
      %v3112 = vrot.slane %v3104, %v3111
      %v3114 = vunpack.c.l.s4 1966171168
      %v3115 = vunpack.c.0.s8 %v3114
      %v3116 = vlaneseq
      %v3117 = vshrl.u32 %v3116, 7
      %v3118 = vsub.s32 %v3115, %v3117
      %v3119 = vrot.slane %v3105, %v3118
      %v3120 = vcombine.low %v3112, %v3119
      %v3121 = vcombine.low %v2136, %v2144
      %v3122 = vcombine.low %v2146, %v2129
      %v3123 = vcombine.low %v2143, %v2145
      %v3124 = vcombine.low %v2147, %v2161
      %v3126 = vunpack.c.l.s4 1966171168
      %v3127 = vunpack.c.0.s8 %v3126
      %v3128 = vlaneseq
      %v3129 = vshrl.u32 %v3128, 7
      %v3130 = vsub.s32 %v3127, %v3129
      %v3131 = vrot.slane %v3121, %v3130
      %v3133 = vunpack.c.l.s4 1966171168
      %v3134 = vunpack.c.0.s8 %v3133
      %v3135 = vlaneseq
      %v3136 = vshrl.u32 %v3135, 7
      %v3137 = vsub.s32 %v3134, %v3136
      %v3138 = vrot.slane %v3122, %v3137
      %v3140 = vunpack.c.l.s4 1966171168
      %v3141 = vunpack.c.0.s8 %v3140
      %v3142 = vlaneseq
      %v3143 = vshrl.u32 %v3142, 7
      %v3144 = vsub.s32 %v3141, %v3143
      %v3145 = vrot.slane %v3123, %v3144
      %v3147 = vunpack.c.l.s4 1966171168
      %v3148 = vunpack.c.0.s8 %v3147
      %v3149 = vlaneseq
      %v3150 = vshrl.u32 %v3149, 7
      %v3151 = vsub.s32 %v3148, %v3150
      %v3152 = vrot.slane %v3124, %v3151
      %v3153 = vcombine.low %v3131, %v3138
      %v3154 = vcombine.low %v3145, %v3152
      %v3156 = vunpack.c.l.s4 1966171168
      %v3157 = vunpack.c.0.s8 %v3156
      %v3158 = vlaneseq
      %v3159 = vshrl.u32 %v3158, 7
      %v3160 = vsub.s32 %v3157, %v3159
      %v3161 = vrot.slane %v3153, %v3160
      %v3163 = vunpack.c.l.s4 1966171168
      %v3164 = vunpack.c.0.s8 %v3163
      %v3165 = vlaneseq
      %v3166 = vshrl.u32 %v3165, 7
      %v3167 = vsub.s32 %v3164, %v3166
      %v3168 = vrot.slane %v3154, %v3167
      %v3169 = vcombine.low %v3161, %v3168
      %v3170 = vcombine.low %v2185, %v2199
      %v3171 = vcombine.low %v2207, %v2209
      %v3172 = vcombine.low %v2192, %v2206
      %v3173 = vcombine.low %v2208, %v2210
      %v3175 = vunpack.c.l.s4 1966171168
      %v3176 = vunpack.c.0.s8 %v3175
      %v3177 = vlaneseq
      %v3178 = vshrl.u32 %v3177, 7
      %v3179 = vsub.s32 %v3176, %v3178
      %v3180 = vrot.slane %v3170, %v3179
      %v3182 = vunpack.c.l.s4 1966171168
      %v3183 = vunpack.c.0.s8 %v3182
      %v3184 = vlaneseq
      %v3185 = vshrl.u32 %v3184, 7
      %v3186 = vsub.s32 %v3183, %v3185
      %v3187 = vrot.slane %v3171, %v3186
      %v3189 = vunpack.c.l.s4 1966171168
      %v3190 = vunpack.c.0.s8 %v3189
      %v3191 = vlaneseq
      %v3192 = vshrl.u32 %v3191, 7
      %v3193 = vsub.s32 %v3190, %v3192
      %v3194 = vrot.slane %v3172, %v3193
      %v3196 = vunpack.c.l.s4 1966171168
      %v3197 = vunpack.c.0.s8 %v3196
      %v3198 = vlaneseq
      %v3199 = vshrl.u32 %v3198, 7
      %v3200 = vsub.s32 %v3197, %v3199
      %v3201 = vrot.slane %v3173, %v3200
      %v3202 = vcombine.low %v3180, %v3187
      %v3203 = vcombine.low %v3194, %v3201
      %v3205 = vunpack.c.l.s4 1966171168
      %v3206 = vunpack.c.0.s8 %v3205
      %v3207 = vlaneseq
      %v3208 = vshrl.u32 %v3207, 7
      %v3209 = vsub.s32 %v3206, %v3208
      %v3210 = vrot.slane %v3202, %v3209
      %v3212 = vunpack.c.l.s4 1966171168
      %v3213 = vunpack.c.0.s8 %v3212
      %v3214 = vlaneseq
      %v3215 = vshrl.u32 %v3214, 7
      %v3216 = vsub.s32 %v3213, %v3215
      %v3217 = vrot.slane %v3203, %v3216
      %v3218 = vcombine.low %v3210, %v3217
      %v3219 = vcombine.low %v2224, %v2248
      %v3220 = vcombine.low %v2262, %v2270
      %v3221 = vcombine.low %v2272, %v2255
      %v3222 = vcombine.low %v2269, %v2271
      %v3224 = vunpack.c.l.s4 1966171168
      %v3225 = vunpack.c.0.s8 %v3224
      %v3226 = vlaneseq
      %v3227 = vshrl.u32 %v3226, 7
      %v3228 = vsub.s32 %v3225, %v3227
      %v3229 = vrot.slane %v3219, %v3228
      %v3231 = vunpack.c.l.s4 1966171168
      %v3232 = vunpack.c.0.s8 %v3231
      %v3233 = vlaneseq
      %v3234 = vshrl.u32 %v3233, 7
      %v3235 = vsub.s32 %v3232, %v3234
      %v3236 = vrot.slane %v3220, %v3235
      %v3238 = vunpack.c.l.s4 1966171168
      %v3239 = vunpack.c.0.s8 %v3238
      %v3240 = vlaneseq
      %v3241 = vshrl.u32 %v3240, 7
      %v3242 = vsub.s32 %v3239, %v3241
      %v3243 = vrot.slane %v3221, %v3242
      %v3245 = vunpack.c.l.s4 1966171168
      %v3246 = vunpack.c.0.s8 %v3245
      %v3247 = vlaneseq
      %v3248 = vshrl.u32 %v3247, 7
      %v3249 = vsub.s32 %v3246, %v3248
      %v3250 = vrot.slane %v3222, %v3249
      %v3251 = vcombine.low %v3229, %v3236
      %v3252 = vcombine.low %v3243, %v3250
      %v3254 = vunpack.c.l.s4 1966171168
      %v3255 = vunpack.c.0.s8 %v3254
      %v3256 = vlaneseq
      %v3257 = vshrl.u32 %v3256, 7
      %v3258 = vsub.s32 %v3255, %v3257
      %v3259 = vrot.slane %v3251, %v3258
      %v3261 = vunpack.c.l.s4 1966171168
      %v3262 = vunpack.c.0.s8 %v3261
      %v3263 = vlaneseq
      %v3264 = vshrl.u32 %v3263, 7
      %v3265 = vsub.s32 %v3262, %v3264
      %v3266 = vrot.slane %v3252, %v3265
      %v3267 = vcombine.low %v3259, %v3266
      %v3268 = vcombine.low %v2273, %v2287
      %v3270 = vunpack.c.l.s4 1966171168
      %v3271 = vunpack.c.0.s8 %v3270
      %v3272 = vlaneseq
      %v3273 = vshrl.u32 %v3272, 7
      %v3274 = vsub.s32 %v3271, %v3273
      %v3275 = vrot.slane %v3268, %v3274
      %v3277 = vunpack.c.l.s4 1966171168
      %v3278 = vunpack.c.0.s8 %v3277
      %v3279 = vlaneseq
      %v3280 = vshrl.u32 %v3279, 7
      %v3281 = vsub.s32 %v3278, %v3280
      %v3282 = vrot.slane %v3275, %v3281
      %v3285 = vunpack.c.l.b16 %v1116
      %v3286 = vunpack.c.l.b16 %v1117
      %v3287 = vpack.c.b16 %v3286, %v3285
      %vm3288 = vcmask 97280
      %v3290 = vsel %vm3288, %v2336, 0
      %v3293 = vsel %vm3288, %v2385, 0
      %v3296 = vsel %vm3288, %v2434, 0
      %v3299 = vsel %vm3288, %v2483, 0
      %v3302 = vsel %vm3288, %v2532, 0
      %v3305 = vsel %vm3288, %v2581, 0
      %v3308 = vsel %vm3288, %v2630, 0
      %v3311 = vsel %vm3288, %v2679, 0
      %v3314 = vsel %vm3288, %v2728, 0
      %v3317 = vsel %vm3288, %v2777, 0
      %v3320 = vsel %vm3288, %v2826, 0
      %v3323 = vsel %vm3288, %v2875, 0
      %v3326 = vsel %vm3288, %v2924, 0
      %v3329 = vsel %vm3288, %v2973, 0
      %v3332 = vsel %vm3288, %v3022, 0
      %v3335 = vsel %vm3288, %v3071, 0
      %v3338 = vsel %vm3288, %v3120, 0
      %v3341 = vsel %vm3288, %v3169, 0
      %v3344 = vsel %vm3288, %v3218, 0
      %v3347 = vsel %vm3288, %v3267, 0
      %v3350 = vsel %vm3288, %v3282, 0
      %v3353 = vsel %vm675, %v3287, 0
      %3355 = vmatprep.subr.bf16.mxu0 0
      %3356 = vmatpush1.bf16.msra.mxu0 %v3353
      %3357 = vmatprep.subr.bf16.mxu0 0
      %3358 = vmatpush1.bf16.msra.mxu0 0
      %3359 = vmatprep.subr.bf16.mxu0 0
      %3360 = vmatpush1.bf16.msra.mxu0 0
      %3361 = vmatprep.subr.bf16.mxu0 0
      %3362 = vmatpush1.bf16.msra.mxu0 0
      %3363 = vmatprep.subr.bf16.mxu0 0
      %3364 = vmatpush1.bf16.msra.mxu0 0
      %3365 = vmatprep.subr.bf16.mxu0 0
      %3366 = vmatpush1.bf16.msra.mxu0 0
      %3367 = vmatprep.subr.bf16.mxu0 0
      %3368 = vmatpush1.bf16.msra.mxu0 0
      %3369 = vmatprep.subr.bf16.mxu0 0
      %3370 = vmatpush1.bf16.msra.mxu0 0
      %3371 = vmatprep.subr.bf16.mxu0 0
      %3372 = vmatpush1.bf16.msra.mxu0 0
      %3373 = vmatprep.subr.bf16.mxu0 0
      %3374 = vmatpush1.bf16.msra.mxu0 0
      %3375 = vmatprep.subr.bf16.mxu0 0
      %3376 = vmatpush1.bf16.msra.mxu0 0
      %3377 = vmatprep.subr.bf16.mxu0 0
      %3378 = vmatpush1.bf16.msra.mxu0 0
      %3379 = vmatprep.subr.bf16.mxu0 0
      %3380 = vmatpush1.bf16.msra.mxu0 0
      %3381 = vmatprep.subr.bf16.mxu0 0
      %3382 = vmatpush1.bf16.msra.mxu0 0
      %3383 = vmatprep.subr.bf16.mxu0 0
      %3384 = vmatpush1.bf16.msra.mxu0 0
      %3385 = vmatprep.subr.bf16.mxu0 0
      %3386 = vmatpush1.bf16.msra.mxu0 0
      %3387 = vmatprep.mubr.bf16.mxu0 0
      %3388 = vmatmul.mubr.bf16.gmra.mrb[0].mxu0 %v3290
      %v3389 = vpop.f32.mrb[0].mxu0
      %v3390 = vadd.f32 0.0, %v3389
      %v3391 = vpop.f32.mrb[0].mxu0
      %v3392 = vpop.f32.mrb[0].mxu0
      %v3393 = vadd.f32 0.0, %v3392
      %v3394 = vpop.f32.mrb[0].mxu0
      %3395 = vmatprep.mubr.bf16.mxu0 0
      %3396 = vmatmul.mubr.bf16.gmra.mrb[0].mxu0 %v3293
      %v3397 = vpop.f32.mrb[0].mxu0
      %v3398 = vadd.f32 0.0, %v3397
      %v3399 = vpop.f32.mrb[0].mxu0
      %v3400 = vpop.f32.mrb[0].mxu0
      %v3401 = vadd.f32 0.0, %v3400
      %v3402 = vpop.f32.mrb[0].mxu0
      %3403 = vmatprep.mubr.bf16.mxu0 0
      %3404 = vmatmul.mubr.bf16.gmra.mrb[0].mxu0 %v3296
      %v3405 = vpop.f32.mrb[0].mxu0
      %v3406 = vadd.f32 0.0, %v3405
      %v3407 = vpop.f32.mrb[0].mxu0
      %v3408 = vpop.f32.mrb[0].mxu0
      %v3409 = vadd.f32 0.0, %v3408
      %v3410 = vpop.f32.mrb[0].mxu0
      %3411 = vmatprep.mubr.bf16.mxu0 0
      %3412 = vmatmul.mubr.bf16.gmra.mrb[0].mxu0 %v3299
      %v3413 = vpop.f32.mrb[0].mxu0
      %v3414 = vadd.f32 0.0, %v3413
      %v3415 = vpop.f32.mrb[0].mxu0
      %v3416 = vpop.f32.mrb[0].mxu0
      %v3417 = vadd.f32 0.0, %v3416
      %v3418 = vpop.f32.mrb[0].mxu0
      %3419 = vmatprep.mubr.bf16.mxu0 0
      %3420 = vmatmul.mubr.bf16.gmra.mrb[0].mxu0 %v3302
      %v3421 = vpop.f32.mrb[0].mxu0
      %v3422 = vadd.f32 0.0, %v3421
      %v3423 = vpop.f32.mrb[0].mxu0
      %v3424 = vpop.f32.mrb[0].mxu0
      %v3425 = vadd.f32 0.0, %v3424
      %v3426 = vpop.f32.mrb[0].mxu0
      %3427 = vmatprep.mubr.bf16.mxu0 0
      %3428 = vmatmul.mubr.bf16.gmra.mrb[0].mxu0 %v3305
      %v3429 = vpop.f32.mrb[0].mxu0
      %v3430 = vadd.f32 0.0, %v3429
      %v3431 = vpop.f32.mrb[0].mxu0
      %v3432 = vpop.f32.mrb[0].mxu0
      %v3433 = vadd.f32 0.0, %v3432
      %v3434 = vpop.f32.mrb[0].mxu0
      %3435 = vmatprep.mubr.bf16.mxu0 0
      %3436 = vmatmul.mubr.bf16.gmra.mrb[0].mxu0 %v3308
      %v3437 = vpop.f32.mrb[0].mxu0
      %v3438 = vadd.f32 0.0, %v3437
      %v3439 = vpop.f32.mrb[0].mxu0
      %v3440 = vpop.f32.mrb[0].mxu0
      %v3441 = vadd.f32 0.0, %v3440
      %v3442 = vpop.f32.mrb[0].mxu0
      %3443 = vmatprep.mubr.bf16.mxu0 0
      %3444 = vmatmul.mubr.bf16.gmra.mrb[0].mxu0 %v3311
      %v3445 = vpop.f32.mrb[0].mxu0
      %v3446 = vadd.f32 0.0, %v3445
      %v3447 = vpop.f32.mrb[0].mxu0
      %v3448 = vpop.f32.mrb[0].mxu0
      %v3449 = vadd.f32 0.0, %v3448
      %v3450 = vpop.f32.mrb[0].mxu0
      %3451 = vmatprep.mubr.bf16.mxu0 0
      %3452 = vmatmul.mubr.bf16.gmra.mrb[0].mxu0 %v3314
      %v3453 = vpop.f32.mrb[0].mxu0
      %v3454 = vadd.f32 0.0, %v3453
      %v3455 = vpop.f32.mrb[0].mxu0
      %v3456 = vpop.f32.mrb[0].mxu0
      %v3457 = vadd.f32 0.0, %v3456
      %v3458 = vpop.f32.mrb[0].mxu0
      %3459 = vmatprep.mubr.bf16.mxu0 0
      %3460 = vmatmul.mubr.bf16.gmra.mrb[0].mxu0 %v3317
      %v3461 = vpop.f32.mrb[0].mxu0
      %v3462 = vadd.f32 0.0, %v3461
      %v3463 = vpop.f32.mrb[0].mxu0
      %v3464 = vpop.f32.mrb[0].mxu0
      %v3465 = vadd.f32 0.0, %v3464
      %v3466 = vpop.f32.mrb[0].mxu0
      %3467 = vmatprep.mubr.bf16.mxu0 0
      %3468 = vmatmul.mubr.bf16.gmra.mrb[0].mxu0 %v3320
      %v3469 = vpop.f32.mrb[0].mxu0
      %v3470 = vadd.f32 0.0, %v3469
      %v3471 = vpop.f32.mrb[0].mxu0
      %v3472 = vpop.f32.mrb[0].mxu0
      %v3473 = vadd.f32 0.0, %v3472
      %v3474 = vpop.f32.mrb[0].mxu0
      %3475 = vmatprep.mubr.bf16.mxu0 0
      %3476 = vmatmul.mubr.bf16.gmra.mrb[0].mxu0 %v3323
      %v3477 = vpop.f32.mrb[0].mxu0
      %v3478 = vadd.f32 0.0, %v3477
      %v3479 = vpop.f32.mrb[0].mxu0
      %v3480 = vpop.f32.mrb[0].mxu0
      %v3481 = vadd.f32 0.0, %v3480
      %v3482 = vpop.f32.mrb[0].mxu0
      %3483 = vmatprep.mubr.bf16.mxu0 0
      %3484 = vmatmul.mubr.bf16.gmra.mrb[0].mxu0 %v3326
      %v3485 = vpop.f32.mrb[0].mxu0
      %v3486 = vadd.f32 0.0, %v3485
      %v3487 = vpop.f32.mrb[0].mxu0
      %v3488 = vpop.f32.mrb[0].mxu0
      %v3489 = vadd.f32 0.0, %v3488
      %v3490 = vpop.f32.mrb[0].mxu0
      %3491 = vmatprep.mubr.bf16.mxu0 0
      %3492 = vmatmul.mubr.bf16.gmra.mrb[0].mxu0 %v3329
      %v3493 = vpop.f32.mrb[0].mxu0
      %v3494 = vadd.f32 0.0, %v3493
      %v3495 = vpop.f32.mrb[0].mxu0
      %v3496 = vpop.f32.mrb[0].mxu0
      %v3497 = vadd.f32 0.0, %v3496
      %v3498 = vpop.f32.mrb[0].mxu0
      %3499 = vmatprep.mubr.bf16.mxu0 0
      %3500 = vmatmul.mubr.bf16.gmra.mrb[0].mxu0 %v3332
      %v3501 = vpop.f32.mrb[0].mxu0
      %v3502 = vadd.f32 0.0, %v3501
      %v3503 = vpop.f32.mrb[0].mxu0
      %v3504 = vpop.f32.mrb[0].mxu0
      %v3505 = vadd.f32 0.0, %v3504
      %v3506 = vpop.f32.mrb[0].mxu0
      %3507 = vmatprep.mubr.bf16.mxu0 0
      %3508 = vmatmul.mubr.bf16.gmra.mrb[0].mxu0 %v3335
      %v3509 = vpop.f32.mrb[0].mxu0
      %v3510 = vadd.f32 0.0, %v3509
      %v3511 = vpop.f32.mrb[0].mxu0
      %v3512 = vpop.f32.mrb[0].mxu0
      %v3513 = vadd.f32 0.0, %v3512
      %v3514 = vpop.f32.mrb[0].mxu0
      %3515 = vmatprep.mubr.bf16.mxu0 0
      %3516 = vmatmul.mubr.bf16.gmra.mrb[0].mxu0 %v3338
      %v3517 = vpop.f32.mrb[0].mxu0
      %v3518 = vadd.f32 0.0, %v3517
      %v3519 = vpop.f32.mrb[0].mxu0
      %v3520 = vpop.f32.mrb[0].mxu0
      %v3521 = vadd.f32 0.0, %v3520
      %v3522 = vpop.f32.mrb[0].mxu0
      %3523 = vmatprep.mubr.bf16.mxu0 0
      %3524 = vmatmul.mubr.bf16.gmra.mrb[0].mxu0 %v3341
      %v3525 = vpop.f32.mrb[0].mxu0
      %v3526 = vadd.f32 0.0, %v3525
      %v3527 = vpop.f32.mrb[0].mxu0
      %v3528 = vpop.f32.mrb[0].mxu0
      %v3529 = vadd.f32 0.0, %v3528
      %v3530 = vpop.f32.mrb[0].mxu0
      %3531 = vmatprep.mubr.bf16.mxu0 0
      %3532 = vmatmul.mubr.bf16.gmra.mrb[0].mxu0 %v3344
      %v3533 = vpop.f32.mrb[0].mxu0
      %v3534 = vadd.f32 0.0, %v3533
      %v3535 = vpop.f32.mrb[0].mxu0
      %v3536 = vpop.f32.mrb[0].mxu0
      %v3537 = vadd.f32 0.0, %v3536
      %v3538 = vpop.f32.mrb[0].mxu0
      %3539 = vmatprep.mubr.bf16.mxu0 0
      %3540 = vmatmul.mubr.bf16.gmra.mrb[0].mxu0 %v3347
      %v3541 = vpop.f32.mrb[0].mxu0
      %v3542 = vadd.f32 0.0, %v3541
      %v3543 = vpop.f32.mrb[0].mxu0
      %v3544 = vpop.f32.mrb[0].mxu0
      %v3545 = vadd.f32 0.0, %v3544
      %v3546 = vpop.f32.mrb[0].mxu0
      %3547 = vmatprep.mubr.bf16.mxu0 0
      %3548 = vmatmul.mubr.bf16.gmra.mrb[0].mxu0 %v3350
      %v3549 = vpop.f32.mrb[0].mxu0
      %v3550 = vadd.f32 0.0, %v3549
      %v3551 = vpop.f32.mrb[0].mxu0
      %v3552 = vpop.f32.mrb[0].mxu0
      %v3553 = vpop.f32.mrb[0].mxu0
      %3554 = vdwg.mxu0
      %v3557 = vcombine.high %v1038, %v1038
      %v3559 = vunpack.c.l.s4 1966171168
      %v3560 = vunpack.c.0.s8 %v3559
      %v3561 = vlaneseq
      %v3562 = vshrl.u32 %v3561, 7
      %v3563 = vsub.s32 %v3560, %v3562
      %v3564 = vrot.slane %v1038, %v3563
      %v3566 = vunpack.c.l.s4 1966171168
      %v3567 = vunpack.c.0.s8 %v3566
      %v3568 = vlaneseq
      %v3569 = vshrl.u32 %v3568, 7
      %v3570 = vsub.s32 %v3567, %v3569
      %v3571 = vrot.slane %v3557, %v3570
      %v3572 = vcombine.high %v3564, %v3564
      %v3573 = vcombine.high %v3571, %v3571
      %v3575 = vunpack.c.l.s4 1966171168
      %v3576 = vunpack.c.0.s8 %v3575
      %v3577 = vlaneseq
      %v3578 = vshrl.u32 %v3577, 7
      %v3579 = vsub.s32 %v3576, %v3578
      %v3580 = vrot.slane %v3564, %v3579
      %v3582 = vunpack.c.l.s4 1966171168
      %v3583 = vunpack.c.0.s8 %v3582
      %v3584 = vlaneseq
      %v3585 = vshrl.u32 %v3584, 7
      %v3586 = vsub.s32 %v3583, %v3585
      %v3587 = vrot.slane %v3571, %v3586
      %v3589 = vunpack.c.l.s4 1966171168
      %v3590 = vunpack.c.0.s8 %v3589
      %v3591 = vlaneseq
      %v3592 = vshrl.u32 %v3591, 7
      %v3593 = vsub.s32 %v3590, %v3592
      %v3594 = vrot.slane %v3572, %v3593
      %v3596 = vunpack.c.l.s4 1966171168
      %v3597 = vunpack.c.0.s8 %v3596
      %v3598 = vlaneseq
      %v3599 = vshrl.u32 %v3598, 7
      %v3600 = vsub.s32 %v3597, %v3599
      %v3601 = vrot.slane %v3573, %v3600
      %v3602 = vcombine.high %v3580, %v3580
      %v3603 = vcombine.high %v3587, %v3587
      %v3604 = vcombine.high %v3594, %v3594
      %v3605 = vcombine.high %v3601, %v3601
      %v3607 = vunpack.c.l.s4 1966171168
      %v3608 = vunpack.c.0.s8 %v3607
      %v3609 = vlaneseq
      %v3610 = vshrl.u32 %v3609, 7
      %v3611 = vsub.s32 %v3608, %v3610
      %v3612 = vrot.slane %v1039, %v3611
      %v3614 = vunpack.c.l.s4 1966171168
      %v3615 = vunpack.c.0.s8 %v3614
      %v3616 = vlaneseq
      %v3617 = vshrl.u32 %v3616, 7
      %v3618 = vsub.s32 %v3615, %v3617
      %v3619 = vrot.slane %v3612, %v3618
      %v3620 = vcombine.low %v3580, %v3594
      %v3621 = vcombine.low %v3602, %v3604
      %v3622 = vcombine.low %v3587, %v3601
      %v3623 = vcombine.low %v3603, %v3605
      %v3625 = vunpack.c.l.s4 1966171168
      %v3626 = vunpack.c.0.s8 %v3625
      %v3627 = vlaneseq
      %v3628 = vshrl.u32 %v3627, 7
      %v3629 = vsub.s32 %v3626, %v3628
      %v3630 = vrot.slane %v3620, %v3629
      %v3632 = vunpack.c.l.s4 1966171168
      %v3633 = vunpack.c.0.s8 %v3632
      %v3634 = vlaneseq
      %v3635 = vshrl.u32 %v3634, 7
      %v3636 = vsub.s32 %v3633, %v3635
      %v3637 = vrot.slane %v3621, %v3636
      %v3639 = vunpack.c.l.s4 1966171168
      %v3640 = vunpack.c.0.s8 %v3639
      %v3641 = vlaneseq
      %v3642 = vshrl.u32 %v3641, 7
      %v3643 = vsub.s32 %v3640, %v3642
      %v3644 = vrot.slane %v3622, %v3643
      %v3646 = vunpack.c.l.s4 1966171168
      %v3647 = vunpack.c.0.s8 %v3646
      %v3648 = vlaneseq
      %v3649 = vshrl.u32 %v3648, 7
      %v3650 = vsub.s32 %v3647, %v3649
      %v3651 = vrot.slane %v3623, %v3650
      %v3652 = vcombine.low %v3630, %v3637
      %v3653 = vcombine.low %v3644, %v3651
      %v3655 = vunpack.c.l.s4 1966171168
      %v3656 = vunpack.c.0.s8 %v3655
      %v3657 = vlaneseq
      %v3658 = vshrl.u32 %v3657, 7
      %v3659 = vsub.s32 %v3656, %v3658
      %v3660 = vrot.slane %v3652, %v3659
      %v3662 = vunpack.c.l.s4 1966171168
      %v3663 = vunpack.c.0.s8 %v3662
      %v3664 = vlaneseq
      %v3665 = vshrl.u32 %v3664, 7
      %v3666 = vsub.s32 %v3663, %v3665
      %v3667 = vrot.slane %v3653, %v3666
      %v3668 = vcombine.low %v3660, %v3667
      %v3669 = vcombine.low %v3619, %v1177
      %v3670 = vcombine.low %v1191, %v1199
      %v3671 = vcombine.low %v1201, %v1184
      %v3672 = vcombine.low %v1198, %v1200
      %v3674 = vunpack.c.l.s4 1966171168
      %v3675 = vunpack.c.0.s8 %v3674
      %v3676 = vlaneseq
      %v3677 = vshrl.u32 %v3676, 7
      %v3678 = vsub.s32 %v3675, %v3677
      %v3679 = vrot.slane %v3669, %v3678
      %v3681 = vunpack.c.l.s4 1966171168
      %v3682 = vunpack.c.0.s8 %v3681
      %v3683 = vlaneseq
      %v3684 = vshrl.u32 %v3683, 7
      %v3685 = vsub.s32 %v3682, %v3684
      %v3686 = vrot.slane %v3670, %v3685
      %v3688 = vunpack.c.l.s4 1966171168
      %v3689 = vunpack.c.0.s8 %v3688
      %v3690 = vlaneseq
      %v3691 = vshrl.u32 %v3690, 7
      %v3692 = vsub.s32 %v3689, %v3691
      %v3693 = vrot.slane %v3671, %v3692
      %v3695 = vunpack.c.l.s4 1966171168
      %v3696 = vunpack.c.0.s8 %v3695
      %v3697 = vlaneseq
      %v3698 = vshrl.u32 %v3697, 7
      %v3699 = vsub.s32 %v3696, %v3698
      %v3700 = vrot.slane %v3672, %v3699
      %v3701 = vcombine.low %v3679, %v3686
      %v3702 = vcombine.low %v3693, %v3700
      %v3704 = vunpack.c.l.s4 1966171168
      %v3705 = vunpack.c.0.s8 %v3704
      %v3706 = vlaneseq
      %v3707 = vshrl.u32 %v3706, 7
      %v3708 = vsub.s32 %v3705, %v3707
      %v3709 = vrot.slane %v3701, %v3708
      %v3711 = vunpack.c.l.s4 1966171168
      %v3712 = vunpack.c.0.s8 %v3711
      %v3713 = vlaneseq
      %v3714 = vshrl.u32 %v3713, 7
      %v3715 = vsub.s32 %v3712, %v3714
      %v3716 = vrot.slane %v3702, %v3715
      %v3717 = vcombine.low %v3709, %v3716
      %v3718 = vcombine.low %v1202, %v1216
      %v3719 = vcombine.low %v1240, %v1254
      %v3720 = vcombine.low %v1262, %v1264
      %v3721 = vcombine.low %v1247, %v1261
      %v3723 = vunpack.c.l.s4 1966171168
      %v3724 = vunpack.c.0.s8 %v3723
      %v3725 = vlaneseq
      %v3726 = vshrl.u32 %v3725, 7
      %v3727 = vsub.s32 %v3724, %v3726
      %v3728 = vrot.slane %v3718, %v3727
      %v3730 = vunpack.c.l.s4 1966171168
      %v3731 = vunpack.c.0.s8 %v3730
      %v3732 = vlaneseq
      %v3733 = vshrl.u32 %v3732, 7
      %v3734 = vsub.s32 %v3731, %v3733
      %v3735 = vrot.slane %v3719, %v3734
      %v3737 = vunpack.c.l.s4 1966171168
      %v3738 = vunpack.c.0.s8 %v3737
      %v3739 = vlaneseq
      %v3740 = vshrl.u32 %v3739, 7
      %v3741 = vsub.s32 %v3738, %v3740
      %v3742 = vrot.slane %v3720, %v3741
      %v3744 = vunpack.c.l.s4 1966171168
      %v3745 = vunpack.c.0.s8 %v3744
      %v3746 = vlaneseq
      %v3747 = vshrl.u32 %v3746, 7
      %v3748 = vsub.s32 %v3745, %v3747
      %v3749 = vrot.slane %v3721, %v3748
      %v3750 = vcombine.low %v3728, %v3735
      %v3751 = vcombine.low %v3742, %v3749
      %v3753 = vunpack.c.l.s4 1966171168
      %v3754 = vunpack.c.0.s8 %v3753
      %v3755 = vlaneseq
      %v3756 = vshrl.u32 %v3755, 7
      %v3757 = vsub.s32 %v3754, %v3756
      %v3758 = vrot.slane %v3750, %v3757
      %v3760 = vunpack.c.l.s4 1966171168
      %v3761 = vunpack.c.0.s8 %v3760
      %v3762 = vlaneseq
      %v3763 = vshrl.u32 %v3762, 7
      %v3764 = vsub.s32 %v3761, %v3763
      %v3765 = vrot.slane %v3751, %v3764
      %v3766 = vcombine.low %v3758, %v3765
      %v3767 = vcombine.low %v1263, %v1265
      %v3768 = vcombine.low %v1279, %v1303
      %v3769 = vcombine.low %v1317, %v1325
      %v3770 = vcombine.low %v1327, %v1310
      %v3772 = vunpack.c.l.s4 1966171168
      %v3773 = vunpack.c.0.s8 %v3772
      %v3774 = vlaneseq
      %v3775 = vshrl.u32 %v3774, 7
      %v3776 = vsub.s32 %v3773, %v3775
      %v3777 = vrot.slane %v3767, %v3776
      %v3779 = vunpack.c.l.s4 1966171168
      %v3780 = vunpack.c.0.s8 %v3779
      %v3781 = vlaneseq
      %v3782 = vshrl.u32 %v3781, 7
      %v3783 = vsub.s32 %v3780, %v3782
      %v3784 = vrot.slane %v3768, %v3783
      %v3786 = vunpack.c.l.s4 1966171168
      %v3787 = vunpack.c.0.s8 %v3786
      %v3788 = vlaneseq
      %v3789 = vshrl.u32 %v3788, 7
      %v3790 = vsub.s32 %v3787, %v3789
      %v3791 = vrot.slane %v3769, %v3790
      %v3793 = vunpack.c.l.s4 1966171168
      %v3794 = vunpack.c.0.s8 %v3793
      %v3795 = vlaneseq
      %v3796 = vshrl.u32 %v3795, 7
      %v3797 = vsub.s32 %v3794, %v3796
      %v3798 = vrot.slane %v3770, %v3797
      %v3799 = vcombine.low %v3777, %v3784
      %v3800 = vcombine.low %v3791, %v3798
      %v3802 = vunpack.c.l.s4 1966171168
      %v3803 = vunpack.c.0.s8 %v3802
      %v3804 = vlaneseq
      %v3805 = vshrl.u32 %v3804, 7
      %v3806 = vsub.s32 %v3803, %v3805
      %v3807 = vrot.slane %v3799, %v3806
      %v3809 = vunpack.c.l.s4 1966171168
      %v3810 = vunpack.c.0.s8 %v3809
      %v3811 = vlaneseq
      %v3812 = vshrl.u32 %v3811, 7
      %v3813 = vsub.s32 %v3810, %v3812
      %v3814 = vrot.slane %v3800, %v3813
      %v3815 = vcombine.low %v3807, %v3814
      %v3816 = vcombine.low %v1324, %v1326
      %v3817 = vcombine.low %v1328, %v1342
      %v3818 = vcombine.low %v1366, %v1380
      %v3819 = vcombine.low %v1388, %v1390
      %v3821 = vunpack.c.l.s4 1966171168
      %v3822 = vunpack.c.0.s8 %v3821
      %v3823 = vlaneseq
      %v3824 = vshrl.u32 %v3823, 7
      %v3825 = vsub.s32 %v3822, %v3824
      %v3826 = vrot.slane %v3816, %v3825
      %v3828 = vunpack.c.l.s4 1966171168
      %v3829 = vunpack.c.0.s8 %v3828
      %v3830 = vlaneseq
      %v3831 = vshrl.u32 %v3830, 7
      %v3832 = vsub.s32 %v3829, %v3831
      %v3833 = vrot.slane %v3817, %v3832
      %v3835 = vunpack.c.l.s4 1966171168
      %v3836 = vunpack.c.0.s8 %v3835
      %v3837 = vlaneseq
      %v3838 = vshrl.u32 %v3837, 7
      %v3839 = vsub.s32 %v3836, %v3838
      %v3840 = vrot.slane %v3818, %v3839
      %v3842 = vunpack.c.l.s4 1966171168
      %v3843 = vunpack.c.0.s8 %v3842
      %v3844 = vlaneseq
      %v3845 = vshrl.u32 %v3844, 7
      %v3846 = vsub.s32 %v3843, %v3845
      %v3847 = vrot.slane %v3819, %v3846
      %v3848 = vcombine.low %v3826, %v3833
      %v3849 = vcombine.low %v3840, %v3847
      %v3851 = vunpack.c.l.s4 1966171168
      %v3852 = vunpack.c.0.s8 %v3851
      %v3853 = vlaneseq
      %v3854 = vshrl.u32 %v3853, 7
      %v3855 = vsub.s32 %v3852, %v3854
      %v3856 = vrot.slane %v3848, %v3855
      %v3858 = vunpack.c.l.s4 1966171168
      %v3859 = vunpack.c.0.s8 %v3858
      %v3860 = vlaneseq
      %v3861 = vshrl.u32 %v3860, 7
      %v3862 = vsub.s32 %v3859, %v3861
      %v3863 = vrot.slane %v3849, %v3862
      %v3864 = vcombine.low %v3856, %v3863
      %v3865 = vcombine.low %v1373, %v1387
      %v3866 = vcombine.low %v1389, %v1391
      %v3867 = vcombine.low %v1405, %v1429
      %v3868 = vcombine.low %v1443, %v1451
      %v3870 = vunpack.c.l.s4 1966171168
      %v3871 = vunpack.c.0.s8 %v3870
      %v3872 = vlaneseq
      %v3873 = vshrl.u32 %v3872, 7
      %v3874 = vsub.s32 %v3871, %v3873
      %v3875 = vrot.slane %v3865, %v3874
      %v3877 = vunpack.c.l.s4 1966171168
      %v3878 = vunpack.c.0.s8 %v3877
      %v3879 = vlaneseq
      %v3880 = vshrl.u32 %v3879, 7
      %v3881 = vsub.s32 %v3878, %v3880
      %v3882 = vrot.slane %v3866, %v3881
      %v3884 = vunpack.c.l.s4 1966171168
      %v3885 = vunpack.c.0.s8 %v3884
      %v3886 = vlaneseq
      %v3887 = vshrl.u32 %v3886, 7
      %v3888 = vsub.s32 %v3885, %v3887
      %v3889 = vrot.slane %v3867, %v3888
      %v3891 = vunpack.c.l.s4 1966171168
      %v3892 = vunpack.c.0.s8 %v3891
      %v3893 = vlaneseq
      %v3894 = vshrl.u32 %v3893, 7
      %v3895 = vsub.s32 %v3892, %v3894
      %v3896 = vrot.slane %v3868, %v3895
      %v3897 = vcombine.low %v3875, %v3882
      %v3898 = vcombine.low %v3889, %v3896
      %v3900 = vunpack.c.l.s4 1966171168
      %v3901 = vunpack.c.0.s8 %v3900
      %v3902 = vlaneseq
      %v3903 = vshrl.u32 %v3902, 7
      %v3904 = vsub.s32 %v3901, %v3903
      %v3905 = vrot.slane %v3897, %v3904
      %v3907 = vunpack.c.l.s4 1966171168
      %v3908 = vunpack.c.0.s8 %v3907
      %v3909 = vlaneseq
      %v3910 = vshrl.u32 %v3909, 7
      %v3911 = vsub.s32 %v3908, %v3910
      %v3912 = vrot.slane %v3898, %v3911
      %v3913 = vcombine.low %v3905, %v3912
      %v3914 = vcombine.low %v1453, %v1436
      %v3915 = vcombine.low %v1450, %v1452
      %v3916 = vcombine.low %v1454, %v1468
      %v3917 = vcombine.low %v1492, %v1506
      %v3919 = vunpack.c.l.s4 1966171168
      %v3920 = vunpack.c.0.s8 %v3919
      %v3921 = vlaneseq
      %v3922 = vshrl.u32 %v3921, 7
      %v3923 = vsub.s32 %v3920, %v3922
      %v3924 = vrot.slane %v3914, %v3923
      %v3926 = vunpack.c.l.s4 1966171168
      %v3927 = vunpack.c.0.s8 %v3926
      %v3928 = vlaneseq
      %v3929 = vshrl.u32 %v3928, 7
      %v3930 = vsub.s32 %v3927, %v3929
      %v3931 = vrot.slane %v3915, %v3930
      %v3933 = vunpack.c.l.s4 1966171168
      %v3934 = vunpack.c.0.s8 %v3933
      %v3935 = vlaneseq
      %v3936 = vshrl.u32 %v3935, 7
      %v3937 = vsub.s32 %v3934, %v3936
      %v3938 = vrot.slane %v3916, %v3937
      %v3940 = vunpack.c.l.s4 1966171168
      %v3941 = vunpack.c.0.s8 %v3940
      %v3942 = vlaneseq
      %v3943 = vshrl.u32 %v3942, 7
      %v3944 = vsub.s32 %v3941, %v3943
      %v3945 = vrot.slane %v3917, %v3944
      %v3946 = vcombine.low %v3924, %v3931
      %v3947 = vcombine.low %v3938, %v3945
      %v3949 = vunpack.c.l.s4 1966171168
      %v3950 = vunpack.c.0.s8 %v3949
      %v3951 = vlaneseq
      %v3952 = vshrl.u32 %v3951, 7
      %v3953 = vsub.s32 %v3950, %v3952
      %v3954 = vrot.slane %v3946, %v3953
      %v3956 = vunpack.c.l.s4 1966171168
      %v3957 = vunpack.c.0.s8 %v3956
      %v3958 = vlaneseq
      %v3959 = vshrl.u32 %v3958, 7
      %v3960 = vsub.s32 %v3957, %v3959
      %v3961 = vrot.slane %v3947, %v3960
      %v3962 = vcombine.low %v3954, %v3961
      %v3963 = vcombine.low %v1514, %v1516
      %v3964 = vcombine.low %v1499, %v1513
      %v3965 = vcombine.low %v1515, %v1517
      %v3966 = vcombine.low %v1531, %v1555
      %v3968 = vunpack.c.l.s4 1966171168
      %v3969 = vunpack.c.0.s8 %v3968
      %v3970 = vlaneseq
      %v3971 = vshrl.u32 %v3970, 7
      %v3972 = vsub.s32 %v3969, %v3971
      %v3973 = vrot.slane %v3963, %v3972
      %v3975 = vunpack.c.l.s4 1966171168
      %v3976 = vunpack.c.0.s8 %v3975
      %v3977 = vlaneseq
      %v3978 = vshrl.u32 %v3977, 7
      %v3979 = vsub.s32 %v3976, %v3978
      %v3980 = vrot.slane %v3964, %v3979
      %v3982 = vunpack.c.l.s4 1966171168
      %v3983 = vunpack.c.0.s8 %v3982
      %v3984 = vlaneseq
      %v3985 = vshrl.u32 %v3984, 7
      %v3986 = vsub.s32 %v3983, %v3985
      %v3987 = vrot.slane %v3965, %v3986
      %v3989 = vunpack.c.l.s4 1966171168
      %v3990 = vunpack.c.0.s8 %v3989
      %v3991 = vlaneseq
      %v3992 = vshrl.u32 %v3991, 7
      %v3993 = vsub.s32 %v3990, %v3992
      %v3994 = vrot.slane %v3966, %v3993
      %v3995 = vcombine.low %v3973, %v3980
      %v3996 = vcombine.low %v3987, %v3994
      %v3998 = vunpack.c.l.s4 1966171168
      %v3999 = vunpack.c.0.s8 %v3998
      %v4000 = vlaneseq
      %v4001 = vshrl.u32 %v4000, 7
      %v4002 = vsub.s32 %v3999, %v4001
      %v4003 = vrot.slane %v3995, %v4002
      %v4005 = vunpack.c.l.s4 1966171168
      %v4006 = vunpack.c.0.s8 %v4005
      %v4007 = vlaneseq
      %v4008 = vshrl.u32 %v4007, 7
      %v4009 = vsub.s32 %v4006, %v4008
      %v4010 = vrot.slane %v3996, %v4009
      %v4011 = vcombine.low %v4003, %v4010
      %v4012 = vcombine.low %v1569, %v1577
      %v4013 = vcombine.low %v1579, %v1562
      %v4014 = vcombine.low %v1576, %v1578
      %v4015 = vcombine.low %v1580, %v1594
      %v4017 = vunpack.c.l.s4 1966171168
      %v4018 = vunpack.c.0.s8 %v4017
      %v4019 = vlaneseq
      %v4020 = vshrl.u32 %v4019, 7
      %v4021 = vsub.s32 %v4018, %v4020
      %v4022 = vrot.slane %v4012, %v4021
      %v4024 = vunpack.c.l.s4 1966171168
      %v4025 = vunpack.c.0.s8 %v4024
      %v4026 = vlaneseq
      %v4027 = vshrl.u32 %v4026, 7
      %v4028 = vsub.s32 %v4025, %v4027
      %v4029 = vrot.slane %v4013, %v4028
      %v4031 = vunpack.c.l.s4 1966171168
      %v4032 = vunpack.c.0.s8 %v4031
      %v4033 = vlaneseq
      %v4034 = vshrl.u32 %v4033, 7
      %v4035 = vsub.s32 %v4032, %v4034
      %v4036 = vrot.slane %v4014, %v4035
      %v4038 = vunpack.c.l.s4 1966171168
      %v4039 = vunpack.c.0.s8 %v4038
      %v4040 = vlaneseq
      %v4041 = vshrl.u32 %v4040, 7
      %v4042 = vsub.s32 %v4039, %v4041
      %v4043 = vrot.slane %v4015, %v4042
      %v4044 = vcombine.low %v4022, %v4029
      %v4045 = vcombine.low %v4036, %v4043
      %v4047 = vunpack.c.l.s4 1966171168
      %v4048 = vunpack.c.0.s8 %v4047
      %v4049 = vlaneseq
      %v4050 = vshrl.u32 %v4049, 7
      %v4051 = vsub.s32 %v4048, %v4050
      %v4052 = vrot.slane %v4044, %v4051
      %v4054 = vunpack.c.l.s4 1966171168
      %v4055 = vunpack.c.0.s8 %v4054
      %v4056 = vlaneseq
      %v4057 = vshrl.u32 %v4056, 7
      %v4058 = vsub.s32 %v4055, %v4057
      %v4059 = vrot.slane %v4045, %v4058
      %v4060 = vcombine.low %v4052, %v4059
      %v4061 = vcombine.low %v1618, %v1632
      %v4062 = vcombine.low %v1640, %v1642
      %v4063 = vcombine.low %v1625, %v1639
      %v4064 = vcombine.low %v1641, %v1643
      %v4066 = vunpack.c.l.s4 1966171168
      %v4067 = vunpack.c.0.s8 %v4066
      %v4068 = vlaneseq
      %v4069 = vshrl.u32 %v4068, 7
      %v4070 = vsub.s32 %v4067, %v4069
      %v4071 = vrot.slane %v4061, %v4070
      %v4073 = vunpack.c.l.s4 1966171168
      %v4074 = vunpack.c.0.s8 %v4073
      %v4075 = vlaneseq
      %v4076 = vshrl.u32 %v4075, 7
      %v4077 = vsub.s32 %v4074, %v4076
      %v4078 = vrot.slane %v4062, %v4077
      %v4080 = vunpack.c.l.s4 1966171168
      %v4081 = vunpack.c.0.s8 %v4080
      %v4082 = vlaneseq
      %v4083 = vshrl.u32 %v4082, 7
      %v4084 = vsub.s32 %v4081, %v4083
      %v4085 = vrot.slane %v4063, %v4084
      %v4087 = vunpack.c.l.s4 1966171168
      %v4088 = vunpack.c.0.s8 %v4087
      %v4089 = vlaneseq
      %v4090 = vshrl.u32 %v4089, 7
      %v4091 = vsub.s32 %v4088, %v4090
      %v4092 = vrot.slane %v4064, %v4091
      %v4093 = vcombine.low %v4071, %v4078
      %v4094 = vcombine.low %v4085, %v4092
      %v4096 = vunpack.c.l.s4 1966171168
      %v4097 = vunpack.c.0.s8 %v4096
      %v4098 = vlaneseq
      %v4099 = vshrl.u32 %v4098, 7
      %v4100 = vsub.s32 %v4097, %v4099
      %v4101 = vrot.slane %v4093, %v4100
      %v4103 = vunpack.c.l.s4 1966171168
      %v4104 = vunpack.c.0.s8 %v4103
      %v4105 = vlaneseq
      %v4106 = vshrl.u32 %v4105, 7
      %v4107 = vsub.s32 %v4104, %v4106
      %v4108 = vrot.slane %v4094, %v4107
      %v4109 = vcombine.low %v4101, %v4108
      %v4110 = vcombine.low %v1657, %v1681
      %v4111 = vcombine.low %v1695, %v1703
      %v4112 = vcombine.low %v1705, %v1688
      %v4113 = vcombine.low %v1702, %v1704
      %v4115 = vunpack.c.l.s4 1966171168
      %v4116 = vunpack.c.0.s8 %v4115
      %v4117 = vlaneseq
      %v4118 = vshrl.u32 %v4117, 7
      %v4119 = vsub.s32 %v4116, %v4118
      %v4120 = vrot.slane %v4110, %v4119
      %v4122 = vunpack.c.l.s4 1966171168
      %v4123 = vunpack.c.0.s8 %v4122
      %v4124 = vlaneseq
      %v4125 = vshrl.u32 %v4124, 7
      %v4126 = vsub.s32 %v4123, %v4125
      %v4127 = vrot.slane %v4111, %v4126
      %v4129 = vunpack.c.l.s4 1966171168
      %v4130 = vunpack.c.0.s8 %v4129
      %v4131 = vlaneseq
      %v4132 = vshrl.u32 %v4131, 7
      %v4133 = vsub.s32 %v4130, %v4132
      %v4134 = vrot.slane %v4112, %v4133
      %v4136 = vunpack.c.l.s4 1966171168
      %v4137 = vunpack.c.0.s8 %v4136
      %v4138 = vlaneseq
      %v4139 = vshrl.u32 %v4138, 7
      %v4140 = vsub.s32 %v4137, %v4139
      %v4141 = vrot.slane %v4113, %v4140
      %v4142 = vcombine.low %v4120, %v4127
      %v4143 = vcombine.low %v4134, %v4141
      %v4145 = vunpack.c.l.s4 1966171168
      %v4146 = vunpack.c.0.s8 %v4145
      %v4147 = vlaneseq
      %v4148 = vshrl.u32 %v4147, 7
      %v4149 = vsub.s32 %v4146, %v4148
      %v4150 = vrot.slane %v4142, %v4149
      %v4152 = vunpack.c.l.s4 1966171168
      %v4153 = vunpack.c.0.s8 %v4152
      %v4154 = vlaneseq
      %v4155 = vshrl.u32 %v4154, 7
      %v4156 = vsub.s32 %v4153, %v4155
      %v4157 = vrot.slane %v4143, %v4156
      %v4158 = vcombine.low %v4150, %v4157
      %v4159 = vcombine.low %v1706, %v1720
      %v4160 = vcombine.low %v1744, %v1758
      %v4161 = vcombine.low %v1766, %v1768
      %v4162 = vcombine.low %v1751, %v1765
      %v4164 = vunpack.c.l.s4 1966171168
      %v4165 = vunpack.c.0.s8 %v4164
      %v4166 = vlaneseq
      %v4167 = vshrl.u32 %v4166, 7
      %v4168 = vsub.s32 %v4165, %v4167
      %v4169 = vrot.slane %v4159, %v4168
      %v4171 = vunpack.c.l.s4 1966171168
      %v4172 = vunpack.c.0.s8 %v4171
      %v4173 = vlaneseq
      %v4174 = vshrl.u32 %v4173, 7
      %v4175 = vsub.s32 %v4172, %v4174
      %v4176 = vrot.slane %v4160, %v4175
      %v4178 = vunpack.c.l.s4 1966171168
      %v4179 = vunpack.c.0.s8 %v4178
      %v4180 = vlaneseq
      %v4181 = vshrl.u32 %v4180, 7
      %v4182 = vsub.s32 %v4179, %v4181
      %v4183 = vrot.slane %v4161, %v4182
      %v4185 = vunpack.c.l.s4 1966171168
      %v4186 = vunpack.c.0.s8 %v4185
      %v4187 = vlaneseq
      %v4188 = vshrl.u32 %v4187, 7
      %v4189 = vsub.s32 %v4186, %v4188
      %v4190 = vrot.slane %v4162, %v4189
      %v4191 = vcombine.low %v4169, %v4176
      %v4192 = vcombine.low %v4183, %v4190
      %v4194 = vunpack.c.l.s4 1966171168
      %v4195 = vunpack.c.0.s8 %v4194
      %v4196 = vlaneseq
      %v4197 = vshrl.u32 %v4196, 7
      %v4198 = vsub.s32 %v4195, %v4197
      %v4199 = vrot.slane %v4191, %v4198
      %v4201 = vunpack.c.l.s4 1966171168
      %v4202 = vunpack.c.0.s8 %v4201
      %v4203 = vlaneseq
      %v4204 = vshrl.u32 %v4203, 7
      %v4205 = vsub.s32 %v4202, %v4204
      %v4206 = vrot.slane %v4192, %v4205
      %v4207 = vcombine.low %v4199, %v4206
      %v4208 = vcombine.low %v1767, %v1769
      %v4209 = vcombine.low %v1783, %v1807
      %v4210 = vcombine.low %v1821, %v1829
      %v4211 = vcombine.low %v1831, %v1814
      %v4213 = vunpack.c.l.s4 1966171168
      %v4214 = vunpack.c.0.s8 %v4213
      %v4215 = vlaneseq
      %v4216 = vshrl.u32 %v4215, 7
      %v4217 = vsub.s32 %v4214, %v4216
      %v4218 = vrot.slane %v4208, %v4217
      %v4220 = vunpack.c.l.s4 1966171168
      %v4221 = vunpack.c.0.s8 %v4220
      %v4222 = vlaneseq
      %v4223 = vshrl.u32 %v4222, 7
      %v4224 = vsub.s32 %v4221, %v4223
      %v4225 = vrot.slane %v4209, %v4224
      %v4227 = vunpack.c.l.s4 1966171168
      %v4228 = vunpack.c.0.s8 %v4227
      %v4229 = vlaneseq
      %v4230 = vshrl.u32 %v4229, 7
      %v4231 = vsub.s32 %v4228, %v4230
      %v4232 = vrot.slane %v4210, %v4231
      %v4234 = vunpack.c.l.s4 1966171168
      %v4235 = vunpack.c.0.s8 %v4234
      %v4236 = vlaneseq
      %v4237 = vshrl.u32 %v4236, 7
      %v4238 = vsub.s32 %v4235, %v4237
      %v4239 = vrot.slane %v4211, %v4238
      %v4240 = vcombine.low %v4218, %v4225
      %v4241 = vcombine.low %v4232, %v4239
      %v4243 = vunpack.c.l.s4 1966171168
      %v4244 = vunpack.c.0.s8 %v4243
      %v4245 = vlaneseq
      %v4246 = vshrl.u32 %v4245, 7
      %v4247 = vsub.s32 %v4244, %v4246
      %v4248 = vrot.slane %v4240, %v4247
      %v4250 = vunpack.c.l.s4 1966171168
      %v4251 = vunpack.c.0.s8 %v4250
      %v4252 = vlaneseq
      %v4253 = vshrl.u32 %v4252, 7
      %v4254 = vsub.s32 %v4251, %v4253
      %v4255 = vrot.slane %v4241, %v4254
      %v4256 = vcombine.low %v4248, %v4255
      %v4257 = vcombine.low %v1828, %v1830
      %v4258 = vcombine.low %v1832, %v1846
      %v4259 = vcombine.low %v1870, %v1884
      %v4260 = vcombine.low %v1892, %v1894
      %v4262 = vunpack.c.l.s4 1966171168
      %v4263 = vunpack.c.0.s8 %v4262
      %v4264 = vlaneseq
      %v4265 = vshrl.u32 %v4264, 7
      %v4266 = vsub.s32 %v4263, %v4265
      %v4267 = vrot.slane %v4257, %v4266
      %v4269 = vunpack.c.l.s4 1966171168
      %v4270 = vunpack.c.0.s8 %v4269
      %v4271 = vlaneseq
      %v4272 = vshrl.u32 %v4271, 7
      %v4273 = vsub.s32 %v4270, %v4272
      %v4274 = vrot.slane %v4258, %v4273
      %v4276 = vunpack.c.l.s4 1966171168
      %v4277 = vunpack.c.0.s8 %v4276
      %v4278 = vlaneseq
      %v4279 = vshrl.u32 %v4278, 7
      %v4280 = vsub.s32 %v4277, %v4279
      %v4281 = vrot.slane %v4259, %v4280
      %v4283 = vunpack.c.l.s4 1966171168
      %v4284 = vunpack.c.0.s8 %v4283
      %v4285 = vlaneseq
      %v4286 = vshrl.u32 %v4285, 7
      %v4287 = vsub.s32 %v4284, %v4286
      %v4288 = vrot.slane %v4260, %v4287
      %v4289 = vcombine.low %v4267, %v4274
      %v4290 = vcombine.low %v4281, %v4288
      %v4292 = vunpack.c.l.s4 1966171168
      %v4293 = vunpack.c.0.s8 %v4292
      %v4294 = vlaneseq
      %v4295 = vshrl.u32 %v4294, 7
      %v4296 = vsub.s32 %v4293, %v4295
      %v4297 = vrot.slane %v4289, %v4296
      %v4299 = vunpack.c.l.s4 1966171168
      %v4300 = vunpack.c.0.s8 %v4299
      %v4301 = vlaneseq
      %v4302 = vshrl.u32 %v4301, 7
      %v4303 = vsub.s32 %v4300, %v4302
      %v4304 = vrot.slane %v4290, %v4303
      %v4305 = vcombine.low %v4297, %v4304
      %v4306 = vcombine.low %v1877, %v1891
      %v4307 = vcombine.low %v1893, %v1895
      %v4308 = vcombine.low %v1909, %v1933
      %v4309 = vcombine.low %v1947, %v1955
      %v4311 = vunpack.c.l.s4 1966171168
      %v4312 = vunpack.c.0.s8 %v4311
      %v4313 = vlaneseq
      %v4314 = vshrl.u32 %v4313, 7
      %v4315 = vsub.s32 %v4312, %v4314
      %v4316 = vrot.slane %v4306, %v4315
      %v4318 = vunpack.c.l.s4 1966171168
      %v4319 = vunpack.c.0.s8 %v4318
      %v4320 = vlaneseq
      %v4321 = vshrl.u32 %v4320, 7
      %v4322 = vsub.s32 %v4319, %v4321
      %v4323 = vrot.slane %v4307, %v4322
      %v4325 = vunpack.c.l.s4 1966171168
      %v4326 = vunpack.c.0.s8 %v4325
      %v4327 = vlaneseq
      %v4328 = vshrl.u32 %v4327, 7
      %v4329 = vsub.s32 %v4326, %v4328
      %v4330 = vrot.slane %v4308, %v4329
      %v4332 = vunpack.c.l.s4 1966171168
      %v4333 = vunpack.c.0.s8 %v4332
      %v4334 = vlaneseq
      %v4335 = vshrl.u32 %v4334, 7
      %v4336 = vsub.s32 %v4333, %v4335
      %v4337 = vrot.slane %v4309, %v4336
      %v4338 = vcombine.low %v4316, %v4323
      %v4339 = vcombine.low %v4330, %v4337
      %v4341 = vunpack.c.l.s4 1966171168
      %v4342 = vunpack.c.0.s8 %v4341
      %v4343 = vlaneseq
      %v4344 = vshrl.u32 %v4343, 7
      %v4345 = vsub.s32 %v4342, %v4344
      %v4346 = vrot.slane %v4338, %v4345
      %v4348 = vunpack.c.l.s4 1966171168
      %v4349 = vunpack.c.0.s8 %v4348
      %v4350 = vlaneseq
      %v4351 = vshrl.u32 %v4350, 7
      %v4352 = vsub.s32 %v4349, %v4351
      %v4353 = vrot.slane %v4339, %v4352
      %v4354 = vcombine.low %v4346, %v4353
      %v4355 = vcombine.low %v1957, %v1940
      %v4356 = vcombine.low %v1954, %v1956
      %v4357 = vcombine.low %v1958, %v1972
      %v4358 = vcombine.low %v1996, %v2010
      %v4360 = vunpack.c.l.s4 1966171168
      %v4361 = vunpack.c.0.s8 %v4360
      %v4362 = vlaneseq
      %v4363 = vshrl.u32 %v4362, 7
      %v4364 = vsub.s32 %v4361, %v4363
      %v4365 = vrot.slane %v4355, %v4364
      %v4367 = vunpack.c.l.s4 1966171168
      %v4368 = vunpack.c.0.s8 %v4367
      %v4369 = vlaneseq
      %v4370 = vshrl.u32 %v4369, 7
      %v4371 = vsub.s32 %v4368, %v4370
      %v4372 = vrot.slane %v4356, %v4371
      %v4374 = vunpack.c.l.s4 1966171168
      %v4375 = vunpack.c.0.s8 %v4374
      %v4376 = vlaneseq
      %v4377 = vshrl.u32 %v4376, 7
      %v4378 = vsub.s32 %v4375, %v4377
      %v4379 = vrot.slane %v4357, %v4378
      %v4381 = vunpack.c.l.s4 1966171168
      %v4382 = vunpack.c.0.s8 %v4381
      %v4383 = vlaneseq
      %v4384 = vshrl.u32 %v4383, 7
      %v4385 = vsub.s32 %v4382, %v4384
      %v4386 = vrot.slane %v4358, %v4385
      %v4387 = vcombine.low %v4365, %v4372
      %v4388 = vcombine.low %v4379, %v4386
      %v4390 = vunpack.c.l.s4 1966171168
      %v4391 = vunpack.c.0.s8 %v4390
      %v4392 = vlaneseq
      %v4393 = vshrl.u32 %v4392, 7
      %v4394 = vsub.s32 %v4391, %v4393
      %v4395 = vrot.slane %v4387, %v4394
      %v4397 = vunpack.c.l.s4 1966171168
      %v4398 = vunpack.c.0.s8 %v4397
      %v4399 = vlaneseq
      %v4400 = vshrl.u32 %v4399, 7
      %v4401 = vsub.s32 %v4398, %v4400
      %v4402 = vrot.slane %v4388, %v4401
      %v4403 = vcombine.low %v4395, %v4402
      %v4404 = vcombine.low %v2018, %v2020
      %v4405 = vcombine.low %v2003, %v2017
      %v4406 = vcombine.low %v2019, %v2021
      %v4407 = vcombine.low %v2035, %v2059
      %v4409 = vunpack.c.l.s4 1966171168
      %v4410 = vunpack.c.0.s8 %v4409
      %v4411 = vlaneseq
      %v4412 = vshrl.u32 %v4411, 7
      %v4413 = vsub.s32 %v4410, %v4412
      %v4414 = vrot.slane %v4404, %v4413
      %v4416 = vunpack.c.l.s4 1966171168
      %v4417 = vunpack.c.0.s8 %v4416
      %v4418 = vlaneseq
      %v4419 = vshrl.u32 %v4418, 7
      %v4420 = vsub.s32 %v4417, %v4419
      %v4421 = vrot.slane %v4405, %v4420
      %v4423 = vunpack.c.l.s4 1966171168
      %v4424 = vunpack.c.0.s8 %v4423
      %v4425 = vlaneseq
      %v4426 = vshrl.u32 %v4425, 7
      %v4427 = vsub.s32 %v4424, %v4426
      %v4428 = vrot.slane %v4406, %v4427
      %v4430 = vunpack.c.l.s4 1966171168
      %v4431 = vunpack.c.0.s8 %v4430
      %v4432 = vlaneseq
      %v4433 = vshrl.u32 %v4432, 7
      %v4434 = vsub.s32 %v4431, %v4433
      %v4435 = vrot.slane %v4407, %v4434
      %v4436 = vcombine.low %v4414, %v4421
      %v4437 = vcombine.low %v4428, %v4435
      %v4439 = vunpack.c.l.s4 1966171168
      %v4440 = vunpack.c.0.s8 %v4439
      %v4441 = vlaneseq
      %v4442 = vshrl.u32 %v4441, 7
      %v4443 = vsub.s32 %v4440, %v4442
      %v4444 = vrot.slane %v4436, %v4443
      %v4446 = vunpack.c.l.s4 1966171168
      %v4447 = vunpack.c.0.s8 %v4446
      %v4448 = vlaneseq
      %v4449 = vshrl.u32 %v4448, 7
      %v4450 = vsub.s32 %v4447, %v4449
      %v4451 = vrot.slane %v4437, %v4450
      %v4452 = vcombine.low %v4444, %v4451
      %v4453 = vcombine.low %v2073, %v2081
      %v4454 = vcombine.low %v2083, %v2066
      %v4455 = vcombine.low %v2080, %v2082
      %v4456 = vcombine.low %v2084, %v2098
      %v4458 = vunpack.c.l.s4 1966171168
      %v4459 = vunpack.c.0.s8 %v4458
      %v4460 = vlaneseq
      %v4461 = vshrl.u32 %v4460, 7
      %v4462 = vsub.s32 %v4459, %v4461
      %v4463 = vrot.slane %v4453, %v4462
      %v4465 = vunpack.c.l.s4 1966171168
      %v4466 = vunpack.c.0.s8 %v4465
      %v4467 = vlaneseq
      %v4468 = vshrl.u32 %v4467, 7
      %v4469 = vsub.s32 %v4466, %v4468
      %v4470 = vrot.slane %v4454, %v4469
      %v4472 = vunpack.c.l.s4 1966171168
      %v4473 = vunpack.c.0.s8 %v4472
      %v4474 = vlaneseq
      %v4475 = vshrl.u32 %v4474, 7
      %v4476 = vsub.s32 %v4473, %v4475
      %v4477 = vrot.slane %v4455, %v4476
      %v4479 = vunpack.c.l.s4 1966171168
      %v4480 = vunpack.c.0.s8 %v4479
      %v4481 = vlaneseq
      %v4482 = vshrl.u32 %v4481, 7
      %v4483 = vsub.s32 %v4480, %v4482
      %v4484 = vrot.slane %v4456, %v4483
      %v4485 = vcombine.low %v4463, %v4470
      %v4486 = vcombine.low %v4477, %v4484
      %v4488 = vunpack.c.l.s4 1966171168
      %v4489 = vunpack.c.0.s8 %v4488
      %v4490 = vlaneseq
      %v4491 = vshrl.u32 %v4490, 7
      %v4492 = vsub.s32 %v4489, %v4491
      %v4493 = vrot.slane %v4485, %v4492
      %v4495 = vunpack.c.l.s4 1966171168
      %v4496 = vunpack.c.0.s8 %v4495
      %v4497 = vlaneseq
      %v4498 = vshrl.u32 %v4497, 7
      %v4499 = vsub.s32 %v4496, %v4498
      %v4500 = vrot.slane %v4486, %v4499
      %v4501 = vcombine.low %v4493, %v4500
      %v4502 = vcombine.low %v2122, %v2136
      %v4503 = vcombine.low %v2144, %v2146
      %v4504 = vcombine.low %v2129, %v2143
      %v4505 = vcombine.low %v2145, %v2147
      %v4507 = vunpack.c.l.s4 1966171168
      %v4508 = vunpack.c.0.s8 %v4507
      %v4509 = vlaneseq
      %v4510 = vshrl.u32 %v4509, 7
      %v4511 = vsub.s32 %v4508, %v4510
      %v4512 = vrot.slane %v4502, %v4511
      %v4514 = vunpack.c.l.s4 1966171168
      %v4515 = vunpack.c.0.s8 %v4514
      %v4516 = vlaneseq
      %v4517 = vshrl.u32 %v4516, 7
      %v4518 = vsub.s32 %v4515, %v4517
      %v4519 = vrot.slane %v4503, %v4518
      %v4521 = vunpack.c.l.s4 1966171168
      %v4522 = vunpack.c.0.s8 %v4521
      %v4523 = vlaneseq
      %v4524 = vshrl.u32 %v4523, 7
      %v4525 = vsub.s32 %v4522, %v4524
      %v4526 = vrot.slane %v4504, %v4525
      %v4528 = vunpack.c.l.s4 1966171168
      %v4529 = vunpack.c.0.s8 %v4528
      %v4530 = vlaneseq
      %v4531 = vshrl.u32 %v4530, 7
      %v4532 = vsub.s32 %v4529, %v4531
      %v4533 = vrot.slane %v4505, %v4532
      %v4534 = vcombine.low %v4512, %v4519
      %v4535 = vcombine.low %v4526, %v4533
      %v4537 = vunpack.c.l.s4 1966171168
      %v4538 = vunpack.c.0.s8 %v4537
      %v4539 = vlaneseq
      %v4540 = vshrl.u32 %v4539, 7
      %v4541 = vsub.s32 %v4538, %v4540
      %v4542 = vrot.slane %v4534, %v4541
      %v4544 = vunpack.c.l.s4 1966171168
      %v4545 = vunpack.c.0.s8 %v4544
      %v4546 = vlaneseq
      %v4547 = vshrl.u32 %v4546, 7
      %v4548 = vsub.s32 %v4545, %v4547
      %v4549 = vrot.slane %v4535, %v4548
      %v4550 = vcombine.low %v4542, %v4549
      %v4551 = vcombine.low %v2161, %v2185
      %v4552 = vcombine.low %v2199, %v2207
      %v4553 = vcombine.low %v2209, %v2192
      %v4554 = vcombine.low %v2206, %v2208
      %v4556 = vunpack.c.l.s4 1966171168
      %v4557 = vunpack.c.0.s8 %v4556
      %v4558 = vlaneseq
      %v4559 = vshrl.u32 %v4558, 7
      %v4560 = vsub.s32 %v4557, %v4559
      %v4561 = vrot.slane %v4551, %v4560
      %v4563 = vunpack.c.l.s4 1966171168
      %v4564 = vunpack.c.0.s8 %v4563
      %v4565 = vlaneseq
      %v4566 = vshrl.u32 %v4565, 7
      %v4567 = vsub.s32 %v4564, %v4566
      %v4568 = vrot.slane %v4552, %v4567
      %v4570 = vunpack.c.l.s4 1966171168
      %v4571 = vunpack.c.0.s8 %v4570
      %v4572 = vlaneseq
      %v4573 = vshrl.u32 %v4572, 7
      %v4574 = vsub.s32 %v4571, %v4573
      %v4575 = vrot.slane %v4553, %v4574
      %v4577 = vunpack.c.l.s4 1966171168
      %v4578 = vunpack.c.0.s8 %v4577
      %v4579 = vlaneseq
      %v4580 = vshrl.u32 %v4579, 7
      %v4581 = vsub.s32 %v4578, %v4580
      %v4582 = vrot.slane %v4554, %v4581
      %v4583 = vcombine.low %v4561, %v4568
      %v4584 = vcombine.low %v4575, %v4582
      %v4586 = vunpack.c.l.s4 1966171168
      %v4587 = vunpack.c.0.s8 %v4586
      %v4588 = vlaneseq
      %v4589 = vshrl.u32 %v4588, 7
      %v4590 = vsub.s32 %v4587, %v4589
      %v4591 = vrot.slane %v4583, %v4590
      %v4593 = vunpack.c.l.s4 1966171168
      %v4594 = vunpack.c.0.s8 %v4593
      %v4595 = vlaneseq
      %v4596 = vshrl.u32 %v4595, 7
      %v4597 = vsub.s32 %v4594, %v4596
      %v4598 = vrot.slane %v4584, %v4597
      %v4599 = vcombine.low %v4591, %v4598
      %v4600 = vcombine.low %v2210, %v2224
      %v4602 = vunpack.c.l.s4 1966171168
      %v4603 = vunpack.c.0.s8 %v4602
      %v4604 = vlaneseq
      %v4605 = vshrl.u32 %v4604, 7
      %v4606 = vsub.s32 %v4603, %v4605
      %v4607 = vrot.slane %v4600, %v4606
      %v4609 = vunpack.c.l.s4 1966171168
      %v4610 = vunpack.c.0.s8 %v4609
      %v4611 = vlaneseq
      %v4612 = vshrl.u32 %v4611, 7
      %v4613 = vsub.s32 %v4610, %v4612
      %v4614 = vrot.slane %v4607, %v4613
      %v4617 = vunpack.c.l.b16 %v1074
      %v4618 = vunpack.c.l.b16 %v1075
      %v4619 = vpack.c.b16 %v4618, %v4617
      %v4621 = vsel %vm3288, %v3668, 0
      %v4624 = vsel %vm3288, %v3717, 0
      %v4627 = vsel %vm3288, %v3766, 0
      %v4630 = vsel %vm3288, %v3815, 0
      %v4633 = vsel %vm3288, %v3864, 0
      %v4636 = vsel %vm3288, %v3913, 0
      %v4639 = vsel %vm3288, %v3962, 0
      %v4642 = vsel %vm3288, %v4011, 0
      %v4645 = vsel %vm3288, %v4060, 0
      %v4648 = vsel %vm3288, %v4109, 0
      %v4651 = vsel %vm3288, %v4158, 0
      %v4654 = vsel %vm3288, %v4207, 0
      %v4657 = vsel %vm3288, %v4256, 0
      %v4660 = vsel %vm3288, %v4305, 0
      %v4663 = vsel %vm3288, %v4354, 0
      %v4666 = vsel %vm3288, %v4403, 0
      %v4669 = vsel %vm3288, %v4452, 0
      %v4672 = vsel %vm3288, %v4501, 0
      %v4675 = vsel %vm3288, %v4550, 0
      %v4678 = vsel %vm3288, %v4599, 0
      %v4681 = vsel %vm3288, %v4614, 0
      %v4684 = vsel %vm675, %v4619, 0
      %4686 = vmatprep.subr.bf16.mxu0 0
      %4687 = vmatpush1.bf16.msra.mxu0 %v4684
      %4688 = vmatprep.subr.bf16.mxu0 0
      %4689 = vmatpush1.bf16.msra.mxu0 0
      %4690 = vmatprep.subr.bf16.mxu0 0
      %4691 = vmatpush1.bf16.msra.mxu0 0
      %4692 = vmatprep.subr.bf16.mxu0 0
      %4693 = vmatpush1.bf16.msra.mxu0 0
      %4694 = vmatprep.subr.bf16.mxu0 0
      %4695 = vmatpush1.bf16.msra.mxu0 0
      %4696 = vmatprep.subr.bf16.mxu0 0
      %4697 = vmatpush1.bf16.msra.mxu0 0
      %4698 = vmatprep.subr.bf16.mxu0 0
      %4699 = vmatpush1.bf16.msra.mxu0 0
      %4700 = vmatprep.subr.bf16.mxu0 0
      %4701 = vmatpush1.bf16.msra.mxu0 0
      %4702 = vmatprep.subr.bf16.mxu0 0
      %4703 = vmatpush1.bf16.msra.mxu0 0
      %4704 = vmatprep.subr.bf16.mxu0 0
      %4705 = vmatpush1.bf16.msra.mxu0 0
      %4706 = vmatprep.subr.bf16.mxu0 0
      %4707 = vmatpush1.bf16.msra.mxu0 0
      %4708 = vmatprep.subr.bf16.mxu0 0
      %4709 = vmatpush1.bf16.msra.mxu0 0
      %4710 = vmatprep.subr.bf16.mxu0 0
      %4711 = vmatpush1.bf16.msra.mxu0 0
      %4712 = vmatprep.subr.bf16.mxu0 0
      %4713 = vmatpush1.bf16.msra.mxu0 0
      %4714 = vmatprep.subr.bf16.mxu0 0
      %4715 = vmatpush1.bf16.msra.mxu0 0
      %4716 = vmatprep.subr.bf16.mxu0 0
      %4717 = vmatpush1.bf16.msra.mxu0 0
      %4718 = vmatprep.mubr.bf16.mxu0 0
      %4719 = vmatmul.mubr.bf16.gmra.mrb[0].mxu0 %v4621
      %v4720 = vpop.f32.mrb[0].mxu0
      %v4721 = vadd.f32 %v3390, %v4720
      %v4722 = vpop.f32.mrb[0].mxu0
      %v4723 = vpop.f32.mrb[0].mxu0
      %v4724 = vadd.f32 %v3393, %v4723
      %v4725 = vpop.f32.mrb[0].mxu0
      %4726 = vmatprep.mubr.bf16.mxu0 0
      %4727 = vmatmul.mubr.bf16.gmra.mrb[0].mxu0 %v4624
      %v4728 = vpop.f32.mrb[0].mxu0
      %v4729 = vadd.f32 %v3398, %v4728
      %v4730 = vpop.f32.mrb[0].mxu0
      %v4731 = vpop.f32.mrb[0].mxu0
      %v4732 = vadd.f32 %v3401, %v4731
      %v4733 = vpop.f32.mrb[0].mxu0
      %4734 = vmatprep.mubr.bf16.mxu0 0
      %4735 = vmatmul.mubr.bf16.gmra.mrb[0].mxu0 %v4627
      %v4736 = vpop.f32.mrb[0].mxu0
      %v4737 = vadd.f32 %v3406, %v4736
      %v4738 = vpop.f32.mrb[0].mxu0
      %v4739 = vpop.f32.mrb[0].mxu0
      %v4740 = vadd.f32 %v3409, %v4739
      %v4741 = vpop.f32.mrb[0].mxu0
      %4742 = vmatprep.mubr.bf16.mxu0 0
      %4743 = vmatmul.mubr.bf16.gmra.mrb[0].mxu0 %v4630
      %v4744 = vpop.f32.mrb[0].mxu0
      %v4745 = vadd.f32 %v3414, %v4744
      %v4746 = vpop.f32.mrb[0].mxu0
      %v4747 = vpop.f32.mrb[0].mxu0
      %v4748 = vadd.f32 %v3417, %v4747
      %v4749 = vpop.f32.mrb[0].mxu0
      %4750 = vmatprep.mubr.bf16.mxu0 0
      %4751 = vmatmul.mubr.bf16.gmra.mrb[0].mxu0 %v4633
      %v4752 = vpop.f32.mrb[0].mxu0
      %v4753 = vadd.f32 %v3422, %v4752
      %v4754 = vpop.f32.mrb[0].mxu0
      %v4755 = vpop.f32.mrb[0].mxu0
      %v4756 = vadd.f32 %v3425, %v4755
      %v4757 = vpop.f32.mrb[0].mxu0
      %4758 = vmatprep.mubr.bf16.mxu0 0
      %4759 = vmatmul.mubr.bf16.gmra.mrb[0].mxu0 %v4636
      %v4760 = vpop.f32.mrb[0].mxu0
      %v4761 = vadd.f32 %v3430, %v4760
      %v4762 = vpop.f32.mrb[0].mxu0
      %v4763 = vpop.f32.mrb[0].mxu0
      %v4764 = vadd.f32 %v3433, %v4763
      %v4765 = vpop.f32.mrb[0].mxu0
      %4766 = vmatprep.mubr.bf16.mxu0 0
      %4767 = vmatmul.mubr.bf16.gmra.mrb[0].mxu0 %v4639
      %v4768 = vpop.f32.mrb[0].mxu0
      %v4769 = vadd.f32 %v3438, %v4768
      %v4770 = vpop.f32.mrb[0].mxu0
      %v4771 = vpop.f32.mrb[0].mxu0
      %v4772 = vadd.f32 %v3441, %v4771
      %v4773 = vpop.f32.mrb[0].mxu0
      %4774 = vmatprep.mubr.bf16.mxu0 0
      %4775 = vmatmul.mubr.bf16.gmra.mrb[0].mxu0 %v4642
      %v4776 = vpop.f32.mrb[0].mxu0
      %v4777 = vadd.f32 %v3446, %v4776
      %v4778 = vpop.f32.mrb[0].mxu0
      %v4779 = vpop.f32.mrb[0].mxu0
      %v4780 = vadd.f32 %v3449, %v4779
      %v4781 = vpop.f32.mrb[0].mxu0
      %4782 = vmatprep.mubr.bf16.mxu0 0
      %4783 = vmatmul.mubr.bf16.gmra.mrb[0].mxu0 %v4645
      %v4784 = vpop.f32.mrb[0].mxu0
      %v4785 = vadd.f32 %v3454, %v4784
      %v4786 = vpop.f32.mrb[0].mxu0
      %v4787 = vpop.f32.mrb[0].mxu0
      %v4788 = vadd.f32 %v3457, %v4787
      %v4789 = vpop.f32.mrb[0].mxu0
      %4790 = vmatprep.mubr.bf16.mxu0 0
      %4791 = vmatmul.mubr.bf16.gmra.mrb[0].mxu0 %v4648
      %v4792 = vpop.f32.mrb[0].mxu0
      %v4793 = vadd.f32 %v3462, %v4792
      %v4794 = vpop.f32.mrb[0].mxu0
      %v4795 = vpop.f32.mrb[0].mxu0
      %v4796 = vadd.f32 %v3465, %v4795
      %v4797 = vpop.f32.mrb[0].mxu0
      %4798 = vmatprep.mubr.bf16.mxu0 0
      %4799 = vmatmul.mubr.bf16.gmra.mrb[0].mxu0 %v4651
      %v4800 = vpop.f32.mrb[0].mxu0
      %v4801 = vadd.f32 %v3470, %v4800
      %v4802 = vpop.f32.mrb[0].mxu0
      %v4803 = vpop.f32.mrb[0].mxu0
      %v4804 = vadd.f32 %v3473, %v4803
      %v4805 = vpop.f32.mrb[0].mxu0
      %4806 = vmatprep.mubr.bf16.mxu0 0
      %4807 = vmatmul.mubr.bf16.gmra.mrb[0].mxu0 %v4654
      %v4808 = vpop.f32.mrb[0].mxu0
      %v4809 = vadd.f32 %v3478, %v4808
      %v4810 = vpop.f32.mrb[0].mxu0
      %v4811 = vpop.f32.mrb[0].mxu0
      %v4812 = vadd.f32 %v3481, %v4811
      %v4813 = vpop.f32.mrb[0].mxu0
      %4814 = vmatprep.mubr.bf16.mxu0 0
      %4815 = vmatmul.mubr.bf16.gmra.mrb[0].mxu0 %v4657
      %v4816 = vpop.f32.mrb[0].mxu0
      %v4817 = vadd.f32 %v3486, %v4816
      %v4818 = vpop.f32.mrb[0].mxu0
      %v4819 = vpop.f32.mrb[0].mxu0
      %v4820 = vadd.f32 %v3489, %v4819
      %v4821 = vpop.f32.mrb[0].mxu0
      %4822 = vmatprep.mubr.bf16.mxu0 0
      %4823 = vmatmul.mubr.bf16.gmra.mrb[0].mxu0 %v4660
      %v4824 = vpop.f32.mrb[0].mxu0
      %v4825 = vadd.f32 %v3494, %v4824
      %v4826 = vpop.f32.mrb[0].mxu0
      %v4827 = vpop.f32.mrb[0].mxu0
      %v4828 = vadd.f32 %v3497, %v4827
      %v4829 = vpop.f32.mrb[0].mxu0
      %4830 = vmatprep.mubr.bf16.mxu0 0
      %4831 = vmatmul.mubr.bf16.gmra.mrb[0].mxu0 %v4663
      %v4832 = vpop.f32.mrb[0].mxu0
      %v4833 = vadd.f32 %v3502, %v4832
      %v4834 = vpop.f32.mrb[0].mxu0
      %v4835 = vpop.f32.mrb[0].mxu0
      %v4836 = vadd.f32 %v3505, %v4835
      %v4837 = vpop.f32.mrb[0].mxu0
      %4838 = vmatprep.mubr.bf16.mxu0 0
      %4839 = vmatmul.mubr.bf16.gmra.mrb[0].mxu0 %v4666
      %v4840 = vpop.f32.mrb[0].mxu0
      %v4841 = vadd.f32 %v3510, %v4840
      %v4842 = vpop.f32.mrb[0].mxu0
      %v4843 = vpop.f32.mrb[0].mxu0
      %v4844 = vadd.f32 %v3513, %v4843
      %v4845 = vpop.f32.mrb[0].mxu0
      %4846 = vmatprep.mubr.bf16.mxu0 0
      %4847 = vmatmul.mubr.bf16.gmra.mrb[0].mxu0 %v4669
      %v4848 = vpop.f32.mrb[0].mxu0
      %v4849 = vadd.f32 %v3518, %v4848
      %v4850 = vpop.f32.mrb[0].mxu0
      %v4851 = vpop.f32.mrb[0].mxu0
      %v4852 = vadd.f32 %v3521, %v4851
      %v4853 = vpop.f32.mrb[0].mxu0
      %4854 = vmatprep.mubr.bf16.mxu0 0
      %4855 = vmatmul.mubr.bf16.gmra.mrb[0].mxu0 %v4672
      %v4856 = vpop.f32.mrb[0].mxu0
      %v4857 = vadd.f32 %v3526, %v4856
      %v4858 = vpop.f32.mrb[0].mxu0
      %v4859 = vpop.f32.mrb[0].mxu0
      %v4860 = vadd.f32 %v3529, %v4859
      %v4861 = vpop.f32.mrb[0].mxu0
      %4862 = vmatprep.mubr.bf16.mxu0 0
      %4863 = vmatmul.mubr.bf16.gmra.mrb[0].mxu0 %v4675
      %v4864 = vpop.f32.mrb[0].mxu0
      %v4865 = vadd.f32 %v3534, %v4864
      %v4866 = vpop.f32.mrb[0].mxu0
      %v4867 = vpop.f32.mrb[0].mxu0
      %v4868 = vadd.f32 %v3537, %v4867
      %v4869 = vpop.f32.mrb[0].mxu0
      %4870 = vmatprep.mubr.bf16.mxu0 0
      %4871 = vmatmul.mubr.bf16.gmra.mrb[0].mxu0 %v4678
      %v4872 = vpop.f32.mrb[0].mxu0
      %v4873 = vadd.f32 %v3542, %v4872
      %v4874 = vpop.f32.mrb[0].mxu0
      %v4875 = vpop.f32.mrb[0].mxu0
      %v4876 = vadd.f32 %v3545, %v4875
      %v4877 = vpop.f32.mrb[0].mxu0
      %4878 = vmatprep.mubr.bf16.mxu0 0
      %4879 = vmatmul.mubr.bf16.gmra.mrb[0].mxu0 %v4681
      %v4880 = vpop.f32.mrb[0].mxu0
      %v4881 = vadd.f32 %v3550, %v4880
      %v4882 = vpop.f32.mrb[0].mxu0
      %v4883 = vpop.f32.mrb[0].mxu0
      %v4884 = vpop.f32.mrb[0].mxu0
      %4885 = vdwg.mxu0
      %v4927 = vcombine.high %v4721, %v4721
      %v4929 = vunpack.c.l.s4 1983009808
      %v4930 = vunpack.c.0.s8 %v4929
      %v4931 = vlaneseq
      %v4932 = vshrl.u32 %v4931, 7
      %v4933 = vsub.s32 %v4930, %v4932
      %v4934 = vrot.slane %v4721, %v4933
      %v4936 = vunpack.c.l.s4 1983009808
      %v4937 = vunpack.c.0.s8 %v4936
      %v4938 = vlaneseq
      %v4939 = vshrl.u32 %v4938, 7
      %v4940 = vsub.s32 %v4937, %v4939
      %v4941 = vrot.slane %v4927, %v4940
      %v4942 = vcombine.high %v4934, %v4934
      %v4943 = vcombine.high %v4941, %v4941
      %v4944 = vcombine.high %v4724, %v4724
      %v4946 = vunpack.c.l.s4 1983009808
      %v4947 = vunpack.c.0.s8 %v4946
      %v4948 = vlaneseq
      %v4949 = vshrl.u32 %v4948, 7
      %v4950 = vsub.s32 %v4947, %v4949
      %v4951 = vrot.slane %v4724, %v4950
      %v4953 = vunpack.c.l.s4 1983009808
      %v4954 = vunpack.c.0.s8 %v4953
      %v4955 = vlaneseq
      %v4956 = vshrl.u32 %v4955, 7
      %v4957 = vsub.s32 %v4954, %v4956
      %v4958 = vrot.slane %v4944, %v4957
      %v4959 = vcombine.high %v4951, %v4951
      %v4960 = vcombine.high %v4958, %v4958
      %v4961 = vcombine.high %v4729, %v4729
      %v4963 = vunpack.c.l.s4 1983009808
      %v4964 = vunpack.c.0.s8 %v4963
      %v4965 = vlaneseq
      %v4966 = vshrl.u32 %v4965, 7
      %v4967 = vsub.s32 %v4964, %v4966
      %v4968 = vrot.slane %v4729, %v4967
      %v4970 = vunpack.c.l.s4 1983009808
      %v4971 = vunpack.c.0.s8 %v4970
      %v4972 = vlaneseq
      %v4973 = vshrl.u32 %v4972, 7
      %v4974 = vsub.s32 %v4971, %v4973
      %v4975 = vrot.slane %v4961, %v4974
      %v4976 = vcombine.high %v4968, %v4968
      %v4977 = vcombine.high %v4975, %v4975
      %v4978 = vcombine.high %v4732, %v4732
      %v4980 = vunpack.c.l.s4 1983009808
      %v4981 = vunpack.c.0.s8 %v4980
      %v4982 = vlaneseq
      %v4983 = vshrl.u32 %v4982, 7
      %v4984 = vsub.s32 %v4981, %v4983
      %v4985 = vrot.slane %v4732, %v4984
      %v4987 = vunpack.c.l.s4 1983009808
      %v4988 = vunpack.c.0.s8 %v4987
      %v4989 = vlaneseq
      %v4990 = vshrl.u32 %v4989, 7
      %v4991 = vsub.s32 %v4988, %v4990
      %v4992 = vrot.slane %v4978, %v4991
      %v4993 = vcombine.high %v4985, %v4985
      %v4994 = vcombine.high %v4992, %v4992
      %v4995 = vcombine.high %v4737, %v4737
      %v4997 = vunpack.c.l.s4 1983009808
      %v4998 = vunpack.c.0.s8 %v4997
      %v4999 = vlaneseq
      %v5000 = vshrl.u32 %v4999, 7
      %v5001 = vsub.s32 %v4998, %v5000
      %v5002 = vrot.slane %v4737, %v5001
      %v5004 = vunpack.c.l.s4 1983009808
      %v5005 = vunpack.c.0.s8 %v5004
      %v5006 = vlaneseq
      %v5007 = vshrl.u32 %v5006, 7
      %v5008 = vsub.s32 %v5005, %v5007
      %v5009 = vrot.slane %v4995, %v5008
      %v5010 = vcombine.high %v5002, %v5002
      %v5011 = vcombine.high %v5009, %v5009
      %v5012 = vcombine.high %v4740, %v4740
      %v5014 = vunpack.c.l.s4 1983009808
      %v5015 = vunpack.c.0.s8 %v5014
      %v5016 = vlaneseq
      %v5017 = vshrl.u32 %v5016, 7
      %v5018 = vsub.s32 %v5015, %v5017
      %v5019 = vrot.slane %v4740, %v5018
      %v5021 = vunpack.c.l.s4 1983009808
      %v5022 = vunpack.c.0.s8 %v5021
      %v5023 = vlaneseq
      %v5024 = vshrl.u32 %v5023, 7
      %v5025 = vsub.s32 %v5022, %v5024
      %v5026 = vrot.slane %v5012, %v5025
      %v5027 = vcombine.high %v5019, %v5019
      %v5028 = vcombine.high %v5026, %v5026
      %v5029 = vcombine.high %v4745, %v4745
      %v5031 = vunpack.c.l.s4 1983009808
      %v5032 = vunpack.c.0.s8 %v5031
      %v5033 = vlaneseq
      %v5034 = vshrl.u32 %v5033, 7
      %v5035 = vsub.s32 %v5032, %v5034
      %v5036 = vrot.slane %v4745, %v5035
      %v5038 = vunpack.c.l.s4 1983009808
      %v5039 = vunpack.c.0.s8 %v5038
      %v5040 = vlaneseq
      %v5041 = vshrl.u32 %v5040, 7
      %v5042 = vsub.s32 %v5039, %v5041
      %v5043 = vrot.slane %v5029, %v5042
      %v5044 = vcombine.high %v5036, %v5036
      %v5045 = vcombine.high %v5043, %v5043
      %v5046 = vcombine.high %v4748, %v4748
      %v5048 = vunpack.c.l.s4 1983009808
      %v5049 = vunpack.c.0.s8 %v5048
      %v5050 = vlaneseq
      %v5051 = vshrl.u32 %v5050, 7
      %v5052 = vsub.s32 %v5049, %v5051
      %v5053 = vrot.slane %v4748, %v5052
      %v5055 = vunpack.c.l.s4 1983009808
      %v5056 = vunpack.c.0.s8 %v5055
      %v5057 = vlaneseq
      %v5058 = vshrl.u32 %v5057, 7
      %v5059 = vsub.s32 %v5056, %v5058
      %v5060 = vrot.slane %v5046, %v5059
      %v5061 = vcombine.high %v5053, %v5053
      %v5062 = vcombine.high %v5060, %v5060
      %v5063 = vcombine.high %v4753, %v4753
      %v5065 = vunpack.c.l.s4 1983009808
      %v5066 = vunpack.c.0.s8 %v5065
      %v5067 = vlaneseq
      %v5068 = vshrl.u32 %v5067, 7
      %v5069 = vsub.s32 %v5066, %v5068
      %v5070 = vrot.slane %v4753, %v5069
      %v5072 = vunpack.c.l.s4 1983009808
      %v5073 = vunpack.c.0.s8 %v5072
      %v5074 = vlaneseq
      %v5075 = vshrl.u32 %v5074, 7
      %v5076 = vsub.s32 %v5073, %v5075
      %v5077 = vrot.slane %v5063, %v5076
      %v5078 = vcombine.high %v5070, %v5070
      %v5079 = vcombine.high %v5077, %v5077
      %v5080 = vcombine.high %v4756, %v4756
      %v5082 = vunpack.c.l.s4 1983009808
      %v5083 = vunpack.c.0.s8 %v5082
      %v5084 = vlaneseq
      %v5085 = vshrl.u32 %v5084, 7
      %v5086 = vsub.s32 %v5083, %v5085
      %v5087 = vrot.slane %v4756, %v5086
      %v5089 = vunpack.c.l.s4 1983009808
      %v5090 = vunpack.c.0.s8 %v5089
      %v5091 = vlaneseq
      %v5092 = vshrl.u32 %v5091, 7
      %v5093 = vsub.s32 %v5090, %v5092
      %v5094 = vrot.slane %v5080, %v5093
      %v5095 = vcombine.high %v5087, %v5087
      %v5096 = vcombine.high %v5094, %v5094
      %v5097 = vcombine.high %v4761, %v4761
      %v5099 = vunpack.c.l.s4 1983009808
      %v5100 = vunpack.c.0.s8 %v5099
      %v5101 = vlaneseq
      %v5102 = vshrl.u32 %v5101, 7
      %v5103 = vsub.s32 %v5100, %v5102
      %v5104 = vrot.slane %v4761, %v5103
      %v5106 = vunpack.c.l.s4 1983009808
      %v5107 = vunpack.c.0.s8 %v5106
      %v5108 = vlaneseq
      %v5109 = vshrl.u32 %v5108, 7
      %v5110 = vsub.s32 %v5107, %v5109
      %v5111 = vrot.slane %v5097, %v5110
      %v5112 = vcombine.high %v5104, %v5104
      %v5113 = vcombine.high %v5111, %v5111
      %v5114 = vcombine.high %v4764, %v4764
      %v5116 = vunpack.c.l.s4 1983009808
      %v5117 = vunpack.c.0.s8 %v5116
      %v5118 = vlaneseq
      %v5119 = vshrl.u32 %v5118, 7
      %v5120 = vsub.s32 %v5117, %v5119
      %v5121 = vrot.slane %v4764, %v5120
      %v5123 = vunpack.c.l.s4 1983009808
      %v5124 = vunpack.c.0.s8 %v5123
      %v5125 = vlaneseq
      %v5126 = vshrl.u32 %v5125, 7
      %v5127 = vsub.s32 %v5124, %v5126
      %v5128 = vrot.slane %v5114, %v5127
      %v5129 = vcombine.high %v5121, %v5121
      %v5130 = vcombine.high %v5128, %v5128
      %v5131 = vcombine.high %v4769, %v4769
      %v5133 = vunpack.c.l.s4 1983009808
      %v5134 = vunpack.c.0.s8 %v5133
      %v5135 = vlaneseq
      %v5136 = vshrl.u32 %v5135, 7
      %v5137 = vsub.s32 %v5134, %v5136
      %v5138 = vrot.slane %v4769, %v5137
      %v5140 = vunpack.c.l.s4 1983009808
      %v5141 = vunpack.c.0.s8 %v5140
      %v5142 = vlaneseq
      %v5143 = vshrl.u32 %v5142, 7
      %v5144 = vsub.s32 %v5141, %v5143
      %v5145 = vrot.slane %v5131, %v5144
      %v5146 = vcombine.high %v5138, %v5138
      %v5147 = vcombine.high %v5145, %v5145
      %v5148 = vcombine.high %v4772, %v4772
      %v5150 = vunpack.c.l.s4 1983009808
      %v5151 = vunpack.c.0.s8 %v5150
      %v5152 = vlaneseq
      %v5153 = vshrl.u32 %v5152, 7
      %v5154 = vsub.s32 %v5151, %v5153
      %v5155 = vrot.slane %v4772, %v5154
      %v5157 = vunpack.c.l.s4 1983009808
      %v5158 = vunpack.c.0.s8 %v5157
      %v5159 = vlaneseq
      %v5160 = vshrl.u32 %v5159, 7
      %v5161 = vsub.s32 %v5158, %v5160
      %v5162 = vrot.slane %v5148, %v5161
      %v5163 = vcombine.high %v5155, %v5155
      %v5164 = vcombine.high %v5162, %v5162
      %v5165 = vcombine.high %v4777, %v4777
      %v5167 = vunpack.c.l.s4 1983009808
      %v5168 = vunpack.c.0.s8 %v5167
      %v5169 = vlaneseq
      %v5170 = vshrl.u32 %v5169, 7
      %v5171 = vsub.s32 %v5168, %v5170
      %v5172 = vrot.slane %v4777, %v5171
      %v5174 = vunpack.c.l.s4 1983009808
      %v5175 = vunpack.c.0.s8 %v5174
      %v5176 = vlaneseq
      %v5177 = vshrl.u32 %v5176, 7
      %v5178 = vsub.s32 %v5175, %v5177
      %v5179 = vrot.slane %v5165, %v5178
      %v5180 = vcombine.high %v5172, %v5172
      %v5181 = vcombine.high %v5179, %v5179
      %v5182 = vcombine.high %v4780, %v4780
      %v5184 = vunpack.c.l.s4 1983009808
      %v5185 = vunpack.c.0.s8 %v5184
      %v5186 = vlaneseq
      %v5187 = vshrl.u32 %v5186, 7
      %v5188 = vsub.s32 %v5185, %v5187
      %v5189 = vrot.slane %v4780, %v5188
      %v5191 = vunpack.c.l.s4 1983009808
      %v5192 = vunpack.c.0.s8 %v5191
      %v5193 = vlaneseq
      %v5194 = vshrl.u32 %v5193, 7
      %v5195 = vsub.s32 %v5192, %v5194
      %v5196 = vrot.slane %v5182, %v5195
      %v5197 = vcombine.high %v5189, %v5189
      %v5198 = vcombine.high %v5196, %v5196
      %v5199 = vcombine.high %v4785, %v4785
      %v5201 = vunpack.c.l.s4 1983009808
      %v5202 = vunpack.c.0.s8 %v5201
      %v5203 = vlaneseq
      %v5204 = vshrl.u32 %v5203, 7
      %v5205 = vsub.s32 %v5202, %v5204
      %v5206 = vrot.slane %v4785, %v5205
      %v5208 = vunpack.c.l.s4 1983009808
      %v5209 = vunpack.c.0.s8 %v5208
      %v5210 = vlaneseq
      %v5211 = vshrl.u32 %v5210, 7
      %v5212 = vsub.s32 %v5209, %v5211
      %v5213 = vrot.slane %v5199, %v5212
      %v5214 = vcombine.high %v5206, %v5206
      %v5215 = vcombine.high %v5213, %v5213
      %v5216 = vcombine.high %v4788, %v4788
      %v5218 = vunpack.c.l.s4 1983009808
      %v5219 = vunpack.c.0.s8 %v5218
      %v5220 = vlaneseq
      %v5221 = vshrl.u32 %v5220, 7
      %v5222 = vsub.s32 %v5219, %v5221
      %v5223 = vrot.slane %v4788, %v5222
      %v5225 = vunpack.c.l.s4 1983009808
      %v5226 = vunpack.c.0.s8 %v5225
      %v5227 = vlaneseq
      %v5228 = vshrl.u32 %v5227, 7
      %v5229 = vsub.s32 %v5226, %v5228
      %v5230 = vrot.slane %v5216, %v5229
      %v5231 = vcombine.high %v5223, %v5223
      %v5232 = vcombine.high %v5230, %v5230
      %v5233 = vcombine.high %v4793, %v4793
      %v5235 = vunpack.c.l.s4 1983009808
      %v5236 = vunpack.c.0.s8 %v5235
      %v5237 = vlaneseq
      %v5238 = vshrl.u32 %v5237, 7
      %v5239 = vsub.s32 %v5236, %v5238
      %v5240 = vrot.slane %v4793, %v5239
      %v5242 = vunpack.c.l.s4 1983009808
      %v5243 = vunpack.c.0.s8 %v5242
      %v5244 = vlaneseq
      %v5245 = vshrl.u32 %v5244, 7
      %v5246 = vsub.s32 %v5243, %v5245
      %v5247 = vrot.slane %v5233, %v5246
      %v5248 = vcombine.high %v5240, %v5240
      %v5249 = vcombine.high %v5247, %v5247
      %v5250 = vcombine.high %v4796, %v4796
      %v5252 = vunpack.c.l.s4 1983009808
      %v5253 = vunpack.c.0.s8 %v5252
      %v5254 = vlaneseq
      %v5255 = vshrl.u32 %v5254, 7
      %v5256 = vsub.s32 %v5253, %v5255
      %v5257 = vrot.slane %v4796, %v5256
      %v5259 = vunpack.c.l.s4 1983009808
      %v5260 = vunpack.c.0.s8 %v5259
      %v5261 = vlaneseq
      %v5262 = vshrl.u32 %v5261, 7
      %v5263 = vsub.s32 %v5260, %v5262
      %v5264 = vrot.slane %v5250, %v5263
      %v5265 = vcombine.high %v5257, %v5257
      %v5266 = vcombine.high %v5264, %v5264
      %v5267 = vcombine.high %v4801, %v4801
      %v5269 = vunpack.c.l.s4 1983009808
      %v5270 = vunpack.c.0.s8 %v5269
      %v5271 = vlaneseq
      %v5272 = vshrl.u32 %v5271, 7
      %v5273 = vsub.s32 %v5270, %v5272
      %v5274 = vrot.slane %v4801, %v5273
      %v5276 = vunpack.c.l.s4 1983009808
      %v5277 = vunpack.c.0.s8 %v5276
      %v5278 = vlaneseq
      %v5279 = vshrl.u32 %v5278, 7
      %v5280 = vsub.s32 %v5277, %v5279
      %v5281 = vrot.slane %v5267, %v5280
      %v5282 = vcombine.high %v5274, %v5274
      %v5283 = vcombine.high %v5281, %v5281
      %v5284 = vcombine.high %v4804, %v4804
      %v5286 = vunpack.c.l.s4 1983009808
      %v5287 = vunpack.c.0.s8 %v5286
      %v5288 = vlaneseq
      %v5289 = vshrl.u32 %v5288, 7
      %v5290 = vsub.s32 %v5287, %v5289
      %v5291 = vrot.slane %v4804, %v5290
      %v5293 = vunpack.c.l.s4 1983009808
      %v5294 = vunpack.c.0.s8 %v5293
      %v5295 = vlaneseq
      %v5296 = vshrl.u32 %v5295, 7
      %v5297 = vsub.s32 %v5294, %v5296
      %v5298 = vrot.slane %v5284, %v5297
      %v5299 = vcombine.high %v5291, %v5291
      %v5300 = vcombine.high %v5298, %v5298
      %v5301 = vcombine.high %v4809, %v4809
      %v5303 = vunpack.c.l.s4 1983009808
      %v5304 = vunpack.c.0.s8 %v5303
      %v5305 = vlaneseq
      %v5306 = vshrl.u32 %v5305, 7
      %v5307 = vsub.s32 %v5304, %v5306
      %v5308 = vrot.slane %v4809, %v5307
      %v5310 = vunpack.c.l.s4 1983009808
      %v5311 = vunpack.c.0.s8 %v5310
      %v5312 = vlaneseq
      %v5313 = vshrl.u32 %v5312, 7
      %v5314 = vsub.s32 %v5311, %v5313
      %v5315 = vrot.slane %v5301, %v5314
      %v5316 = vcombine.high %v5308, %v5308
      %v5317 = vcombine.high %v5315, %v5315
      %v5318 = vcombine.high %v4812, %v4812
      %v5320 = vunpack.c.l.s4 1983009808
      %v5321 = vunpack.c.0.s8 %v5320
      %v5322 = vlaneseq
      %v5323 = vshrl.u32 %v5322, 7
      %v5324 = vsub.s32 %v5321, %v5323
      %v5325 = vrot.slane %v4812, %v5324
      %v5327 = vunpack.c.l.s4 1983009808
      %v5328 = vunpack.c.0.s8 %v5327
      %v5329 = vlaneseq
      %v5330 = vshrl.u32 %v5329, 7
      %v5331 = vsub.s32 %v5328, %v5330
      %v5332 = vrot.slane %v5318, %v5331
      %v5333 = vcombine.high %v5325, %v5325
      %v5334 = vcombine.high %v5332, %v5332
      %v5335 = vcombine.high %v4817, %v4817
      %v5337 = vunpack.c.l.s4 1983009808
      %v5338 = vunpack.c.0.s8 %v5337
      %v5339 = vlaneseq
      %v5340 = vshrl.u32 %v5339, 7
      %v5341 = vsub.s32 %v5338, %v5340
      %v5342 = vrot.slane %v4817, %v5341
      %v5344 = vunpack.c.l.s4 1983009808
      %v5345 = vunpack.c.0.s8 %v5344
      %v5346 = vlaneseq
      %v5347 = vshrl.u32 %v5346, 7
      %v5348 = vsub.s32 %v5345, %v5347
      %v5349 = vrot.slane %v5335, %v5348
      %v5350 = vcombine.high %v5342, %v5342
      %v5351 = vcombine.high %v5349, %v5349
      %v5352 = vcombine.high %v4820, %v4820
      %v5354 = vunpack.c.l.s4 1983009808
      %v5355 = vunpack.c.0.s8 %v5354
      %v5356 = vlaneseq
      %v5357 = vshrl.u32 %v5356, 7
      %v5358 = vsub.s32 %v5355, %v5357
      %v5359 = vrot.slane %v4820, %v5358
      %v5361 = vunpack.c.l.s4 1983009808
      %v5362 = vunpack.c.0.s8 %v5361
      %v5363 = vlaneseq
      %v5364 = vshrl.u32 %v5363, 7
      %v5365 = vsub.s32 %v5362, %v5364
      %v5366 = vrot.slane %v5352, %v5365
      %v5367 = vcombine.high %v5359, %v5359
      %v5368 = vcombine.high %v5366, %v5366
      %v5369 = vcombine.high %v4825, %v4825
      %v5371 = vunpack.c.l.s4 1983009808
      %v5372 = vunpack.c.0.s8 %v5371
      %v5373 = vlaneseq
      %v5374 = vshrl.u32 %v5373, 7
      %v5375 = vsub.s32 %v5372, %v5374
      %v5376 = vrot.slane %v4825, %v5375
      %v5378 = vunpack.c.l.s4 1983009808
      %v5379 = vunpack.c.0.s8 %v5378
      %v5380 = vlaneseq
      %v5381 = vshrl.u32 %v5380, 7
      %v5382 = vsub.s32 %v5379, %v5381
      %v5383 = vrot.slane %v5369, %v5382
      %v5384 = vcombine.high %v5376, %v5376
      %v5385 = vcombine.high %v5383, %v5383
      %v5386 = vcombine.high %v4828, %v4828
      %v5388 = vunpack.c.l.s4 1983009808
      %v5389 = vunpack.c.0.s8 %v5388
      %v5390 = vlaneseq
      %v5391 = vshrl.u32 %v5390, 7
      %v5392 = vsub.s32 %v5389, %v5391
      %v5393 = vrot.slane %v4828, %v5392
      %v5395 = vunpack.c.l.s4 1983009808
      %v5396 = vunpack.c.0.s8 %v5395
      %v5397 = vlaneseq
      %v5398 = vshrl.u32 %v5397, 7
      %v5399 = vsub.s32 %v5396, %v5398
      %v5400 = vrot.slane %v5386, %v5399
      %v5401 = vcombine.high %v5393, %v5393
      %v5402 = vcombine.high %v5400, %v5400
      %v5403 = vcombine.high %v4833, %v4833
      %v5405 = vunpack.c.l.s4 1983009808
      %v5406 = vunpack.c.0.s8 %v5405
      %v5407 = vlaneseq
      %v5408 = vshrl.u32 %v5407, 7
      %v5409 = vsub.s32 %v5406, %v5408
      %v5410 = vrot.slane %v4833, %v5409
      %v5412 = vunpack.c.l.s4 1983009808
      %v5413 = vunpack.c.0.s8 %v5412
      %v5414 = vlaneseq
      %v5415 = vshrl.u32 %v5414, 7
      %v5416 = vsub.s32 %v5413, %v5415
      %v5417 = vrot.slane %v5403, %v5416
      %v5418 = vcombine.high %v5410, %v5410
      %v5419 = vcombine.high %v5417, %v5417
      %v5420 = vcombine.high %v4836, %v4836
      %v5422 = vunpack.c.l.s4 1983009808
      %v5423 = vunpack.c.0.s8 %v5422
      %v5424 = vlaneseq
      %v5425 = vshrl.u32 %v5424, 7
      %v5426 = vsub.s32 %v5423, %v5425
      %v5427 = vrot.slane %v4836, %v5426
      %v5429 = vunpack.c.l.s4 1983009808
      %v5430 = vunpack.c.0.s8 %v5429
      %v5431 = vlaneseq
      %v5432 = vshrl.u32 %v5431, 7
      %v5433 = vsub.s32 %v5430, %v5432
      %v5434 = vrot.slane %v5420, %v5433
      %v5435 = vcombine.high %v5427, %v5427
      %v5436 = vcombine.high %v5434, %v5434
      %v5437 = vcombine.high %v4841, %v4841
      %v5439 = vunpack.c.l.s4 1983009808
      %v5440 = vunpack.c.0.s8 %v5439
      %v5441 = vlaneseq
      %v5442 = vshrl.u32 %v5441, 7
      %v5443 = vsub.s32 %v5440, %v5442
      %v5444 = vrot.slane %v4841, %v5443
      %v5446 = vunpack.c.l.s4 1983009808
      %v5447 = vunpack.c.0.s8 %v5446
      %v5448 = vlaneseq
      %v5449 = vshrl.u32 %v5448, 7
      %v5450 = vsub.s32 %v5447, %v5449
      %v5451 = vrot.slane %v5437, %v5450
      %v5452 = vcombine.high %v5444, %v5444
      %v5453 = vcombine.high %v5451, %v5451
      %v5454 = vcombine.high %v4844, %v4844
      %v5456 = vunpack.c.l.s4 1983009808
      %v5457 = vunpack.c.0.s8 %v5456
      %v5458 = vlaneseq
      %v5459 = vshrl.u32 %v5458, 7
      %v5460 = vsub.s32 %v5457, %v5459
      %v5461 = vrot.slane %v4844, %v5460
      %v5463 = vunpack.c.l.s4 1983009808
      %v5464 = vunpack.c.0.s8 %v5463
      %v5465 = vlaneseq
      %v5466 = vshrl.u32 %v5465, 7
      %v5467 = vsub.s32 %v5464, %v5466
      %v5468 = vrot.slane %v5454, %v5467
      %v5469 = vcombine.high %v5461, %v5461
      %v5470 = vcombine.high %v5468, %v5468
      %v5471 = vcombine.high %v4849, %v4849
      %v5473 = vunpack.c.l.s4 1983009808
      %v5474 = vunpack.c.0.s8 %v5473
      %v5475 = vlaneseq
      %v5476 = vshrl.u32 %v5475, 7
      %v5477 = vsub.s32 %v5474, %v5476
      %v5478 = vrot.slane %v4849, %v5477
      %v5480 = vunpack.c.l.s4 1983009808
      %v5481 = vunpack.c.0.s8 %v5480
      %v5482 = vlaneseq
      %v5483 = vshrl.u32 %v5482, 7
      %v5484 = vsub.s32 %v5481, %v5483
      %v5485 = vrot.slane %v5471, %v5484
      %v5486 = vcombine.high %v5478, %v5478
      %v5487 = vcombine.high %v5485, %v5485
      %v5488 = vcombine.high %v4852, %v4852
      %v5490 = vunpack.c.l.s4 1983009808
      %v5491 = vunpack.c.0.s8 %v5490
      %v5492 = vlaneseq
      %v5493 = vshrl.u32 %v5492, 7
      %v5494 = vsub.s32 %v5491, %v5493
      %v5495 = vrot.slane %v4852, %v5494
      %v5497 = vunpack.c.l.s4 1983009808
      %v5498 = vunpack.c.0.s8 %v5497
      %v5499 = vlaneseq
      %v5500 = vshrl.u32 %v5499, 7
      %v5501 = vsub.s32 %v5498, %v5500
      %v5502 = vrot.slane %v5488, %v5501
      %v5503 = vcombine.high %v5495, %v5495
      %v5504 = vcombine.high %v5502, %v5502
      %v5505 = vcombine.high %v4857, %v4857
      %v5507 = vunpack.c.l.s4 1983009808
      %v5508 = vunpack.c.0.s8 %v5507
      %v5509 = vlaneseq
      %v5510 = vshrl.u32 %v5509, 7
      %v5511 = vsub.s32 %v5508, %v5510
      %v5512 = vrot.slane %v4857, %v5511
      %v5514 = vunpack.c.l.s4 1983009808
      %v5515 = vunpack.c.0.s8 %v5514
      %v5516 = vlaneseq
      %v5517 = vshrl.u32 %v5516, 7
      %v5518 = vsub.s32 %v5515, %v5517
      %v5519 = vrot.slane %v5505, %v5518
      %v5520 = vcombine.high %v5512, %v5512
      %v5521 = vcombine.high %v5519, %v5519
      %v5522 = vcombine.high %v4860, %v4860
      %v5524 = vunpack.c.l.s4 1983009808
      %v5525 = vunpack.c.0.s8 %v5524
      %v5526 = vlaneseq
      %v5527 = vshrl.u32 %v5526, 7
      %v5528 = vsub.s32 %v5525, %v5527
      %v5529 = vrot.slane %v4860, %v5528
      %v5531 = vunpack.c.l.s4 1983009808
      %v5532 = vunpack.c.0.s8 %v5531
      %v5533 = vlaneseq
      %v5534 = vshrl.u32 %v5533, 7
      %v5535 = vsub.s32 %v5532, %v5534
      %v5536 = vrot.slane %v5522, %v5535
      %v5537 = vcombine.high %v5529, %v5529
      %v5538 = vcombine.high %v5536, %v5536
      %v5539 = vcombine.high %v4865, %v4865
      %v5541 = vunpack.c.l.s4 1983009808
      %v5542 = vunpack.c.0.s8 %v5541
      %v5543 = vlaneseq
      %v5544 = vshrl.u32 %v5543, 7
      %v5545 = vsub.s32 %v5542, %v5544
      %v5546 = vrot.slane %v4865, %v5545
      %v5548 = vunpack.c.l.s4 1983009808
      %v5549 = vunpack.c.0.s8 %v5548
      %v5550 = vlaneseq
      %v5551 = vshrl.u32 %v5550, 7
      %v5552 = vsub.s32 %v5549, %v5551
      %v5553 = vrot.slane %v5539, %v5552
      %v5554 = vcombine.high %v5546, %v5546
      %v5555 = vcombine.high %v5553, %v5553
      %v5556 = vcombine.high %v4868, %v4868
      %v5558 = vunpack.c.l.s4 1983009808
      %v5559 = vunpack.c.0.s8 %v5558
      %v5560 = vlaneseq
      %v5561 = vshrl.u32 %v5560, 7
      %v5562 = vsub.s32 %v5559, %v5561
      %v5563 = vrot.slane %v4868, %v5562
      %v5565 = vunpack.c.l.s4 1983009808
      %v5566 = vunpack.c.0.s8 %v5565
      %v5567 = vlaneseq
      %v5568 = vshrl.u32 %v5567, 7
      %v5569 = vsub.s32 %v5566, %v5568
      %v5570 = vrot.slane %v5556, %v5569
      %v5571 = vcombine.high %v5563, %v5563
      %v5572 = vcombine.high %v5570, %v5570
      %v5573 = vcombine.high %v4873, %v4873
      %v5575 = vunpack.c.l.s4 1983009808
      %v5576 = vunpack.c.0.s8 %v5575
      %v5577 = vlaneseq
      %v5578 = vshrl.u32 %v5577, 7
      %v5579 = vsub.s32 %v5576, %v5578
      %v5580 = vrot.slane %v4873, %v5579
      %v5582 = vunpack.c.l.s4 1983009808
      %v5583 = vunpack.c.0.s8 %v5582
      %v5584 = vlaneseq
      %v5585 = vshrl.u32 %v5584, 7
      %v5586 = vsub.s32 %v5583, %v5585
      %v5587 = vrot.slane %v5573, %v5586
      %v5588 = vcombine.high %v5580, %v5580
      %v5589 = vcombine.high %v5587, %v5587
      %v5590 = vcombine.high %v4876, %v4876
      %v5592 = vunpack.c.l.s4 1983009808
      %v5593 = vunpack.c.0.s8 %v5592
      %v5594 = vlaneseq
      %v5595 = vshrl.u32 %v5594, 7
      %v5596 = vsub.s32 %v5593, %v5595
      %v5597 = vrot.slane %v4876, %v5596
      %v5599 = vunpack.c.l.s4 1983009808
      %v5600 = vunpack.c.0.s8 %v5599
      %v5601 = vlaneseq
      %v5602 = vshrl.u32 %v5601, 7
      %v5603 = vsub.s32 %v5600, %v5602
      %v5604 = vrot.slane %v5590, %v5603
      %v5605 = vcombine.high %v5597, %v5597
      %v5606 = vcombine.high %v5604, %v5604
      %v5608 = vunpack.c.l.s4 1983009808
      %v5609 = vunpack.c.0.s8 %v5608
      %v5610 = vlaneseq
      %v5611 = vshrl.u32 %v5610, 7
      %v5612 = vsub.s32 %v5609, %v5611
      %v5613 = vrot.slane %v4881, %v5612
      %v5614 = vcombine.high %v5613, %v5613
      %v5780 = vrot.slane %v365, 1
      %v5781 = vrot.slane %v366, 1
      %v5782 = vsel %vm422, %v5780, %v5781
      %v5783 = vrot.slane %v367, 1
      %v5784 = vsel %vm422, %v5781, %v5783
      %5785 = vrot.lane.b32.xlu0 %v5782, 4
      %v5786 = vpop.permute.xlu0 %5785
      %5787 = vrot.lane.b32.xlu0 %v5784, 4
      %v5788 = vpop.permute.xlu0 %5787
      %5789 = vrot.lane.b32.xlu0 %v5783, 4
      %v5790 = vpop.permute.xlu0 %5789
      %v5794 = vrot.slane %v365, 2
      %v5795 = vrot.slane %v366, 2
      %v5796 = vsel %vm675, %v5794, %v5795
      %v5797 = vrot.slane %v367, 2
      %v5798 = vsel %vm675, %v5795, %v5797
      %5799 = vrot.lane.b32.xlu0 %v5796, 8
      %v5800 = vpop.permute.xlu0 %5799
      %5801 = vrot.lane.b32.xlu0 %v5798, 8
      %v5802 = vpop.permute.xlu0 %5801
      %5803 = vrot.lane.b32.xlu0 %v5797, 8
      %v5804 = vpop.permute.xlu0 %5803
      %v5808 = vsel %vm928, %v365, %v5786
      %v5809 = vsel %vm928, %v366, %v5788
      %v5810 = vsel %vm928, %v367, %v5790
      %v5811 = vsel %vm983, %v5808, %v5800
      %v5812 = vsel %vm983, %v5809, %v5802
      %v5813 = vsel %vm983, %v5810, %v5804
      %v5814 = vpack.c.bf16 %v5812, %v5811
      %v5815 = vpack.c.bf16 %v5813, %v5813
      %s5816 = scalar_lea.vmem %s1, 16
      %v5817 = vld [vmem:[%s5816] sm:$0xf]
      %v5818 = vld [vmem:[%s5816 + $0x4] sm:$0x3]
      %v5821 = vcombine.high %v5814, %v5814
      %v5823 = vunpack.c.l.s4 1966171168
      %v5824 = vunpack.c.0.s8 %v5823
      %v5825 = vlaneseq
      %v5826 = vshrl.u32 %v5825, 7
      %v5827 = vsub.s32 %v5824, %v5826
      %v5828 = vrot.slane %v5814, %v5827
      %v5830 = vunpack.c.l.s4 1966171168
      %v5831 = vunpack.c.0.s8 %v5830
      %v5832 = vlaneseq
      %v5833 = vshrl.u32 %v5832, 7
      %v5834 = vsub.s32 %v5831, %v5833
      %v5835 = vrot.slane %v5821, %v5834
      %v5836 = vcombine.high %v5828, %v5828
      %v5837 = vcombine.high %v5835, %v5835
      %v5839 = vunpack.c.l.s4 1966171168
      %v5840 = vunpack.c.0.s8 %v5839
      %v5841 = vlaneseq
      %v5842 = vshrl.u32 %v5841, 7
      %v5843 = vsub.s32 %v5840, %v5842
      %v5844 = vrot.slane %v5828, %v5843
      %v5846 = vunpack.c.l.s4 1966171168
      %v5847 = vunpack.c.0.s8 %v5846
      %v5848 = vlaneseq
      %v5849 = vshrl.u32 %v5848, 7
      %v5850 = vsub.s32 %v5847, %v5849
      %v5851 = vrot.slane %v5835, %v5850
      %v5853 = vunpack.c.l.s4 1966171168
      %v5854 = vunpack.c.0.s8 %v5853
      %v5855 = vlaneseq
      %v5856 = vshrl.u32 %v5855, 7
      %v5857 = vsub.s32 %v5854, %v5856
      %v5858 = vrot.slane %v5836, %v5857
      %v5860 = vunpack.c.l.s4 1966171168
      %v5861 = vunpack.c.0.s8 %v5860
      %v5862 = vlaneseq
      %v5863 = vshrl.u32 %v5862, 7
      %v5864 = vsub.s32 %v5861, %v5863
      %v5865 = vrot.slane %v5837, %v5864
      %v5866 = vcombine.high %v5844, %v5844
      %v5867 = vcombine.high %v5851, %v5851
      %v5868 = vcombine.high %v5858, %v5858
      %v5869 = vcombine.high %v5865, %v5865
      %v5871 = vunpack.c.l.s4 1966171168
      %v5872 = vunpack.c.0.s8 %v5871
      %v5873 = vlaneseq
      %v5874 = vshrl.u32 %v5873, 7
      %v5875 = vsub.s32 %v5872, %v5874
      %v5876 = vrot.slane %v5815, %v5875
      %v5878 = vunpack.c.l.s4 1966171168
      %v5879 = vunpack.c.0.s8 %v5878
      %v5880 = vlaneseq
      %v5881 = vshrl.u32 %v5880, 7
      %v5882 = vsub.s32 %v5879, %v5881
      %v5883 = vrot.slane %v5876, %v5882
      %v5884 = vcombine.low %v3735, %v3742
      %v5885 = vcombine.low %v3749, %v3777
      %v5887 = vunpack.c.l.s4 1966171168
      %v5888 = vunpack.c.0.s8 %v5887
      %v5889 = vlaneseq
      %v5890 = vshrl.u32 %v5889, 7
      %v5891 = vsub.s32 %v5888, %v5890
      %v5892 = vrot.slane %v5884, %v5891
      %v5894 = vunpack.c.l.s4 1966171168
      %v5895 = vunpack.c.0.s8 %v5894
      %v5896 = vlaneseq
      %v5897 = vshrl.u32 %v5896, 7
      %v5898 = vsub.s32 %v5895, %v5897
      %v5899 = vrot.slane %v5885, %v5898
      %v5900 = vcombine.low %v5892, %v5899
      %v5901 = vcombine.low %v3784, %v3791
      %v5902 = vcombine.low %v3798, %v3826
      %v5904 = vunpack.c.l.s4 1966171168
      %v5905 = vunpack.c.0.s8 %v5904
      %v5906 = vlaneseq
      %v5907 = vshrl.u32 %v5906, 7
      %v5908 = vsub.s32 %v5905, %v5907
      %v5909 = vrot.slane %v5901, %v5908
      %v5911 = vunpack.c.l.s4 1966171168
      %v5912 = vunpack.c.0.s8 %v5911
      %v5913 = vlaneseq
      %v5914 = vshrl.u32 %v5913, 7
      %v5915 = vsub.s32 %v5912, %v5914
      %v5916 = vrot.slane %v5902, %v5915
      %v5917 = vcombine.low %v5909, %v5916
      %v5918 = vcombine.low %v3833, %v3840
      %v5919 = vcombine.low %v3847, %v3875
      %v5921 = vunpack.c.l.s4 1966171168
      %v5922 = vunpack.c.0.s8 %v5921
      %v5923 = vlaneseq
      %v5924 = vshrl.u32 %v5923, 7
      %v5925 = vsub.s32 %v5922, %v5924
      %v5926 = vrot.slane %v5918, %v5925
      %v5928 = vunpack.c.l.s4 1966171168
      %v5929 = vunpack.c.0.s8 %v5928
      %v5930 = vlaneseq
      %v5931 = vshrl.u32 %v5930, 7
      %v5932 = vsub.s32 %v5929, %v5931
      %v5933 = vrot.slane %v5919, %v5932
      %v5934 = vcombine.low %v5926, %v5933
      %v5935 = vcombine.low %v3882, %v3889
      %v5936 = vcombine.low %v3896, %v3924
      %v5938 = vunpack.c.l.s4 1966171168
      %v5939 = vunpack.c.0.s8 %v5938
      %v5940 = vlaneseq
      %v5941 = vshrl.u32 %v5940, 7
      %v5942 = vsub.s32 %v5939, %v5941
      %v5943 = vrot.slane %v5935, %v5942
      %v5945 = vunpack.c.l.s4 1966171168
      %v5946 = vunpack.c.0.s8 %v5945
      %v5947 = vlaneseq
      %v5948 = vshrl.u32 %v5947, 7
      %v5949 = vsub.s32 %v5946, %v5948
      %v5950 = vrot.slane %v5936, %v5949
      %v5951 = vcombine.low %v5943, %v5950
      %v5952 = vcombine.low %v3931, %v3938
      %v5953 = vcombine.low %v3945, %v3973
      %v5955 = vunpack.c.l.s4 1966171168
      %v5956 = vunpack.c.0.s8 %v5955
      %v5957 = vlaneseq
      %v5958 = vshrl.u32 %v5957, 7
      %v5959 = vsub.s32 %v5956, %v5958
      %v5960 = vrot.slane %v5952, %v5959
      %v5962 = vunpack.c.l.s4 1966171168
      %v5963 = vunpack.c.0.s8 %v5962
      %v5964 = vlaneseq
      %v5965 = vshrl.u32 %v5964, 7
      %v5966 = vsub.s32 %v5963, %v5965
      %v5967 = vrot.slane %v5953, %v5966
      %v5968 = vcombine.low %v5960, %v5967
      %v5969 = vcombine.low %v3980, %v3987
      %v5970 = vcombine.low %v3994, %v4022
      %v5972 = vunpack.c.l.s4 1966171168
      %v5973 = vunpack.c.0.s8 %v5972
      %v5974 = vlaneseq
      %v5975 = vshrl.u32 %v5974, 7
      %v5976 = vsub.s32 %v5973, %v5975
      %v5977 = vrot.slane %v5969, %v5976
      %v5979 = vunpack.c.l.s4 1966171168
      %v5980 = vunpack.c.0.s8 %v5979
      %v5981 = vlaneseq
      %v5982 = vshrl.u32 %v5981, 7
      %v5983 = vsub.s32 %v5980, %v5982
      %v5984 = vrot.slane %v5970, %v5983
      %v5985 = vcombine.low %v5977, %v5984
      %v5986 = vcombine.low %v4029, %v4036
      %v5987 = vcombine.low %v4043, %v4071
      %v5989 = vunpack.c.l.s4 1966171168
      %v5990 = vunpack.c.0.s8 %v5989
      %v5991 = vlaneseq
      %v5992 = vshrl.u32 %v5991, 7
      %v5993 = vsub.s32 %v5990, %v5992
      %v5994 = vrot.slane %v5986, %v5993
      %v5996 = vunpack.c.l.s4 1966171168
      %v5997 = vunpack.c.0.s8 %v5996
      %v5998 = vlaneseq
      %v5999 = vshrl.u32 %v5998, 7
      %v6000 = vsub.s32 %v5997, %v5999
      %v6001 = vrot.slane %v5987, %v6000
      %v6002 = vcombine.low %v5994, %v6001
      %v6003 = vcombine.low %v4078, %v4085
      %v6004 = vcombine.low %v4092, %v4120
      %v6006 = vunpack.c.l.s4 1966171168
      %v6007 = vunpack.c.0.s8 %v6006
      %v6008 = vlaneseq
      %v6009 = vshrl.u32 %v6008, 7
      %v6010 = vsub.s32 %v6007, %v6009
      %v6011 = vrot.slane %v6003, %v6010
      %v6013 = vunpack.c.l.s4 1966171168
      %v6014 = vunpack.c.0.s8 %v6013
      %v6015 = vlaneseq
      %v6016 = vshrl.u32 %v6015, 7
      %v6017 = vsub.s32 %v6014, %v6016
      %v6018 = vrot.slane %v6004, %v6017
      %v6019 = vcombine.low %v6011, %v6018
      %v6020 = vcombine.low %v4127, %v4134
      %v6021 = vcombine.low %v4141, %v4169
      %v6023 = vunpack.c.l.s4 1966171168
      %v6024 = vunpack.c.0.s8 %v6023
      %v6025 = vlaneseq
      %v6026 = vshrl.u32 %v6025, 7
      %v6027 = vsub.s32 %v6024, %v6026
      %v6028 = vrot.slane %v6020, %v6027
      %v6030 = vunpack.c.l.s4 1966171168
      %v6031 = vunpack.c.0.s8 %v6030
      %v6032 = vlaneseq
      %v6033 = vshrl.u32 %v6032, 7
      %v6034 = vsub.s32 %v6031, %v6033
      %v6035 = vrot.slane %v6021, %v6034
      %v6036 = vcombine.low %v6028, %v6035
      %v6037 = vcombine.low %v4176, %v4183
      %v6038 = vcombine.low %v4190, %v4218
      %v6040 = vunpack.c.l.s4 1966171168
      %v6041 = vunpack.c.0.s8 %v6040
      %v6042 = vlaneseq
      %v6043 = vshrl.u32 %v6042, 7
      %v6044 = vsub.s32 %v6041, %v6043
      %v6045 = vrot.slane %v6037, %v6044
      %v6047 = vunpack.c.l.s4 1966171168
      %v6048 = vunpack.c.0.s8 %v6047
      %v6049 = vlaneseq
      %v6050 = vshrl.u32 %v6049, 7
      %v6051 = vsub.s32 %v6048, %v6050
      %v6052 = vrot.slane %v6038, %v6051
      %v6053 = vcombine.low %v6045, %v6052
      %v6054 = vcombine.low %v4225, %v4232
      %v6055 = vcombine.low %v4239, %v4267
      %v6057 = vunpack.c.l.s4 1966171168
      %v6058 = vunpack.c.0.s8 %v6057
      %v6059 = vlaneseq
      %v6060 = vshrl.u32 %v6059, 7
      %v6061 = vsub.s32 %v6058, %v6060
      %v6062 = vrot.slane %v6054, %v6061
      %v6064 = vunpack.c.l.s4 1966171168
      %v6065 = vunpack.c.0.s8 %v6064
      %v6066 = vlaneseq
      %v6067 = vshrl.u32 %v6066, 7
      %v6068 = vsub.s32 %v6065, %v6067
      %v6069 = vrot.slane %v6055, %v6068
      %v6070 = vcombine.low %v6062, %v6069
      %v6071 = vcombine.low %v4274, %v4281
      %v6072 = vcombine.low %v4288, %v4316
      %v6074 = vunpack.c.l.s4 1966171168
      %v6075 = vunpack.c.0.s8 %v6074
      %v6076 = vlaneseq
      %v6077 = vshrl.u32 %v6076, 7
      %v6078 = vsub.s32 %v6075, %v6077
      %v6079 = vrot.slane %v6071, %v6078
      %v6081 = vunpack.c.l.s4 1966171168
      %v6082 = vunpack.c.0.s8 %v6081
      %v6083 = vlaneseq
      %v6084 = vshrl.u32 %v6083, 7
      %v6085 = vsub.s32 %v6082, %v6084
      %v6086 = vrot.slane %v6072, %v6085
      %v6087 = vcombine.low %v6079, %v6086
      %v6088 = vcombine.low %v4323, %v4330
      %v6089 = vcombine.low %v4337, %v4365
      %v6091 = vunpack.c.l.s4 1966171168
      %v6092 = vunpack.c.0.s8 %v6091
      %v6093 = vlaneseq
      %v6094 = vshrl.u32 %v6093, 7
      %v6095 = vsub.s32 %v6092, %v6094
      %v6096 = vrot.slane %v6088, %v6095
      %v6098 = vunpack.c.l.s4 1966171168
      %v6099 = vunpack.c.0.s8 %v6098
      %v6100 = vlaneseq
      %v6101 = vshrl.u32 %v6100, 7
      %v6102 = vsub.s32 %v6099, %v6101
      %v6103 = vrot.slane %v6089, %v6102
      %v6104 = vcombine.low %v6096, %v6103
      %v6105 = vcombine.low %v4372, %v4379
      %v6106 = vcombine.low %v4386, %v4414
      %v6108 = vunpack.c.l.s4 1966171168
      %v6109 = vunpack.c.0.s8 %v6108
      %v6110 = vlaneseq
      %v6111 = vshrl.u32 %v6110, 7
      %v6112 = vsub.s32 %v6109, %v6111
      %v6113 = vrot.slane %v6105, %v6112
      %v6115 = vunpack.c.l.s4 1966171168
      %v6116 = vunpack.c.0.s8 %v6115
      %v6117 = vlaneseq
      %v6118 = vshrl.u32 %v6117, 7
      %v6119 = vsub.s32 %v6116, %v6118
      %v6120 = vrot.slane %v6106, %v6119
      %v6121 = vcombine.low %v6113, %v6120
      %v6122 = vcombine.low %v4421, %v4428
      %v6123 = vcombine.low %v4435, %v4463
      %v6125 = vunpack.c.l.s4 1966171168
      %v6126 = vunpack.c.0.s8 %v6125
      %v6127 = vlaneseq
      %v6128 = vshrl.u32 %v6127, 7
      %v6129 = vsub.s32 %v6126, %v6128
      %v6130 = vrot.slane %v6122, %v6129
      %v6132 = vunpack.c.l.s4 1966171168
      %v6133 = vunpack.c.0.s8 %v6132
      %v6134 = vlaneseq
      %v6135 = vshrl.u32 %v6134, 7
      %v6136 = vsub.s32 %v6133, %v6135
      %v6137 = vrot.slane %v6123, %v6136
      %v6138 = vcombine.low %v6130, %v6137
      %v6139 = vcombine.low %v4470, %v4477
      %v6140 = vcombine.low %v4484, %v4512
      %v6142 = vunpack.c.l.s4 1966171168
      %v6143 = vunpack.c.0.s8 %v6142
      %v6144 = vlaneseq
      %v6145 = vshrl.u32 %v6144, 7
      %v6146 = vsub.s32 %v6143, %v6145
      %v6147 = vrot.slane %v6139, %v6146
      %v6149 = vunpack.c.l.s4 1966171168
      %v6150 = vunpack.c.0.s8 %v6149
      %v6151 = vlaneseq
      %v6152 = vshrl.u32 %v6151, 7
      %v6153 = vsub.s32 %v6150, %v6152
      %v6154 = vrot.slane %v6140, %v6153
      %v6155 = vcombine.low %v6147, %v6154
      %v6156 = vcombine.low %v4519, %v4526
      %v6157 = vcombine.low %v4533, %v4561
      %v6159 = vunpack.c.l.s4 1966171168
      %v6160 = vunpack.c.0.s8 %v6159
      %v6161 = vlaneseq
      %v6162 = vshrl.u32 %v6161, 7
      %v6163 = vsub.s32 %v6160, %v6162
      %v6164 = vrot.slane %v6156, %v6163
      %v6166 = vunpack.c.l.s4 1966171168
      %v6167 = vunpack.c.0.s8 %v6166
      %v6168 = vlaneseq
      %v6169 = vshrl.u32 %v6168, 7
      %v6170 = vsub.s32 %v6167, %v6169
      %v6171 = vrot.slane %v6157, %v6170
      %v6172 = vcombine.low %v6164, %v6171
      %v6173 = vcombine.low %v4568, %v4575
      %v6174 = vcombine.low %v4582, %v4607
      %v6176 = vunpack.c.l.s4 1966171168
      %v6177 = vunpack.c.0.s8 %v6176
      %v6178 = vlaneseq
      %v6179 = vshrl.u32 %v6178, 7
      %v6180 = vsub.s32 %v6177, %v6179
      %v6181 = vrot.slane %v6173, %v6180
      %v6183 = vunpack.c.l.s4 1966171168
      %v6184 = vunpack.c.0.s8 %v6183
      %v6185 = vlaneseq
      %v6186 = vshrl.u32 %v6185, 7
      %v6187 = vsub.s32 %v6184, %v6186
      %v6188 = vrot.slane %v6174, %v6187
      %v6189 = vcombine.low %v6181, %v6188
      %v6190 = vcombine.low %v2248, %v2262
      %v6191 = vcombine.low %v2270, %v2272
      %v6192 = vcombine.low %v2255, %v2269
      %v6193 = vcombine.low %v2271, %v2273
      %v6195 = vunpack.c.l.s4 1966171168
      %v6196 = vunpack.c.0.s8 %v6195
      %v6197 = vlaneseq
      %v6198 = vshrl.u32 %v6197, 7
      %v6199 = vsub.s32 %v6196, %v6198
      %v6200 = vrot.slane %v6190, %v6199
      %v6202 = vunpack.c.l.s4 1966171168
      %v6203 = vunpack.c.0.s8 %v6202
      %v6204 = vlaneseq
      %v6205 = vshrl.u32 %v6204, 7
      %v6206 = vsub.s32 %v6203, %v6205
      %v6207 = vrot.slane %v6191, %v6206
      %v6209 = vunpack.c.l.s4 1966171168
      %v6210 = vunpack.c.0.s8 %v6209
      %v6211 = vlaneseq
      %v6212 = vshrl.u32 %v6211, 7
      %v6213 = vsub.s32 %v6210, %v6212
      %v6214 = vrot.slane %v6192, %v6213
      %v6216 = vunpack.c.l.s4 1966171168
      %v6217 = vunpack.c.0.s8 %v6216
      %v6218 = vlaneseq
      %v6219 = vshrl.u32 %v6218, 7
      %v6220 = vsub.s32 %v6217, %v6219
      %v6221 = vrot.slane %v6193, %v6220
      %v6222 = vcombine.low %v6200, %v6207
      %v6223 = vcombine.low %v6214, %v6221
      %v6225 = vunpack.c.l.s4 1966171168
      %v6226 = vunpack.c.0.s8 %v6225
      %v6227 = vlaneseq
      %v6228 = vshrl.u32 %v6227, 7
      %v6229 = vsub.s32 %v6226, %v6228
      %v6230 = vrot.slane %v6222, %v6229
      %v6232 = vunpack.c.l.s4 1966171168
      %v6233 = vunpack.c.0.s8 %v6232
      %v6234 = vlaneseq
      %v6235 = vshrl.u32 %v6234, 7
      %v6236 = vsub.s32 %v6233, %v6235
      %v6237 = vrot.slane %v6223, %v6236
      %v6238 = vcombine.low %v6230, %v6237
      %v6239 = vcombine.low %v2287, %v5844
      %v6240 = vcombine.low %v5858, %v5866
      %v6241 = vcombine.low %v5868, %v5851
      %v6242 = vcombine.low %v5865, %v5867
      %v6244 = vunpack.c.l.s4 1966171168
      %v6245 = vunpack.c.0.s8 %v6244
      %v6246 = vlaneseq
      %v6247 = vshrl.u32 %v6246, 7
      %v6248 = vsub.s32 %v6245, %v6247
      %v6249 = vrot.slane %v6239, %v6248
      %v6251 = vunpack.c.l.s4 1966171168
      %v6252 = vunpack.c.0.s8 %v6251
      %v6253 = vlaneseq
      %v6254 = vshrl.u32 %v6253, 7
      %v6255 = vsub.s32 %v6252, %v6254
      %v6256 = vrot.slane %v6240, %v6255
      %v6258 = vunpack.c.l.s4 1966171168
      %v6259 = vunpack.c.0.s8 %v6258
      %v6260 = vlaneseq
      %v6261 = vshrl.u32 %v6260, 7
      %v6262 = vsub.s32 %v6259, %v6261
      %v6263 = vrot.slane %v6241, %v6262
      %v6265 = vunpack.c.l.s4 1966171168
      %v6266 = vunpack.c.0.s8 %v6265
      %v6267 = vlaneseq
      %v6268 = vshrl.u32 %v6267, 7
      %v6269 = vsub.s32 %v6266, %v6268
      %v6270 = vrot.slane %v6242, %v6269
      %v6271 = vcombine.low %v6249, %v6256
      %v6272 = vcombine.low %v6263, %v6270
      %v6274 = vunpack.c.l.s4 1966171168
      %v6275 = vunpack.c.0.s8 %v6274
      %v6276 = vlaneseq
      %v6277 = vshrl.u32 %v6276, 7
      %v6278 = vsub.s32 %v6275, %v6277
      %v6279 = vrot.slane %v6271, %v6278
      %v6281 = vunpack.c.l.s4 1966171168
      %v6282 = vunpack.c.0.s8 %v6281
      %v6283 = vlaneseq
      %v6284 = vshrl.u32 %v6283, 7
      %v6285 = vsub.s32 %v6282, %v6284
      %v6286 = vrot.slane %v6272, %v6285
      %v6287 = vcombine.low %v6279, %v6286
      %v6288 = vcombine.low %v5869, %v5883
      %v6290 = vunpack.c.l.s4 1966171168
      %v6291 = vunpack.c.0.s8 %v6290
      %v6292 = vlaneseq
      %v6293 = vshrl.u32 %v6292, 7
      %v6294 = vsub.s32 %v6291, %v6293
      %v6295 = vrot.slane %v6288, %v6294
      %v6297 = vunpack.c.l.s4 1966171168
      %v6298 = vunpack.c.0.s8 %v6297
      %v6299 = vlaneseq
      %v6300 = vshrl.u32 %v6299, 7
      %v6301 = vsub.s32 %v6298, %v6300
      %v6302 = vrot.slane %v6295, %v6301
      %v6305 = vunpack.c.l.b16 %v5817
      %v6306 = vunpack.c.l.b16 %v5818
      %v6307 = vpack.c.b16 %v6306, %v6305
      %v6309 = vsel %vm3288, %v5900, 0
      %v6312 = vsel %vm3288, %v5917, 0
      %v6315 = vsel %vm3288, %v5934, 0
      %v6318 = vsel %vm3288, %v5951, 0
      %v6321 = vsel %vm3288, %v5968, 0
      %v6324 = vsel %vm3288, %v5985, 0
      %v6327 = vsel %vm3288, %v6002, 0
      %v6330 = vsel %vm3288, %v6019, 0
      %v6333 = vsel %vm3288, %v6036, 0
      %v6336 = vsel %vm3288, %v6053, 0
      %v6339 = vsel %vm3288, %v6070, 0
      %v6342 = vsel %vm3288, %v6087, 0
      %v6345 = vsel %vm3288, %v6104, 0
      %v6348 = vsel %vm3288, %v6121, 0
      %v6351 = vsel %vm3288, %v6138, 0
      %v6354 = vsel %vm3288, %v6155, 0
      %v6357 = vsel %vm3288, %v6172, 0
      %v6360 = vsel %vm3288, %v6189, 0
      %v6363 = vsel %vm3288, %v6238, 0
      %v6366 = vsel %vm3288, %v6287, 0
      %v6369 = vsel %vm3288, %v6302, 0
      %v6372 = vsel %vm675, %v6307, 0
      %6374 = vmatprep.subr.bf16.mxu0 0
      %6375 = vmatpush1.bf16.msra.mxu0 %v6372
      %6376 = vmatprep.subr.bf16.mxu0 0
      %6377 = vmatpush1.bf16.msra.mxu0 0
      %6378 = vmatprep.subr.bf16.mxu0 0
      %6379 = vmatpush1.bf16.msra.mxu0 0
      %6380 = vmatprep.subr.bf16.mxu0 0
      %6381 = vmatpush1.bf16.msra.mxu0 0
      %6382 = vmatprep.subr.bf16.mxu0 0
      %6383 = vmatpush1.bf16.msra.mxu0 0
      %6384 = vmatprep.subr.bf16.mxu0 0
      %6385 = vmatpush1.bf16.msra.mxu0 0
      %6386 = vmatprep.subr.bf16.mxu0 0
      %6387 = vmatpush1.bf16.msra.mxu0 0
      %6388 = vmatprep.subr.bf16.mxu0 0
      %6389 = vmatpush1.bf16.msra.mxu0 0
      %6390 = vmatprep.subr.bf16.mxu0 0
      %6391 = vmatpush1.bf16.msra.mxu0 0
      %6392 = vmatprep.subr.bf16.mxu0 0
      %6393 = vmatpush1.bf16.msra.mxu0 0
      %6394 = vmatprep.subr.bf16.mxu0 0
      %6395 = vmatpush1.bf16.msra.mxu0 0
      %6396 = vmatprep.subr.bf16.mxu0 0
      %6397 = vmatpush1.bf16.msra.mxu0 0
      %6398 = vmatprep.subr.bf16.mxu0 0
      %6399 = vmatpush1.bf16.msra.mxu0 0
      %6400 = vmatprep.subr.bf16.mxu0 0
      %6401 = vmatpush1.bf16.msra.mxu0 0
      %6402 = vmatprep.subr.bf16.mxu0 0
      %6403 = vmatpush1.bf16.msra.mxu0 0
      %6404 = vmatprep.subr.bf16.mxu0 0
      %6405 = vmatpush1.bf16.msra.mxu0 0
      %6406 = vmatprep.mubr.bf16.mxu0 0
      %6407 = vmatmul.mubr.bf16.gmra.mrb[0].mxu0 %v6309
      %v6408 = vpop.f32.mrb[0].mxu0
      %v6409 = vadd.f32 0.0, %v6408
      %v6410 = vpop.f32.mrb[0].mxu0
      %v6411 = vpop.f32.mrb[0].mxu0
      %v6412 = vadd.f32 0.0, %v6411
      %v6413 = vpop.f32.mrb[0].mxu0
      %6414 = vmatprep.mubr.bf16.mxu0 0
      %6415 = vmatmul.mubr.bf16.gmra.mrb[0].mxu0 %v6312
      %v6416 = vpop.f32.mrb[0].mxu0
      %v6417 = vadd.f32 0.0, %v6416
      %v6418 = vpop.f32.mrb[0].mxu0
      %v6419 = vpop.f32.mrb[0].mxu0
      %v6420 = vadd.f32 0.0, %v6419
      %v6421 = vpop.f32.mrb[0].mxu0
      %6422 = vmatprep.mubr.bf16.mxu0 0
      %6423 = vmatmul.mubr.bf16.gmra.mrb[0].mxu0 %v6315
      %v6424 = vpop.f32.mrb[0].mxu0
      %v6425 = vadd.f32 0.0, %v6424
      %v6426 = vpop.f32.mrb[0].mxu0
      %v6427 = vpop.f32.mrb[0].mxu0
      %v6428 = vadd.f32 0.0, %v6427
      %v6429 = vpop.f32.mrb[0].mxu0
      %6430 = vmatprep.mubr.bf16.mxu0 0
      %6431 = vmatmul.mubr.bf16.gmra.mrb[0].mxu0 %v6318
      %v6432 = vpop.f32.mrb[0].mxu0
      %v6433 = vadd.f32 0.0, %v6432
      %v6434 = vpop.f32.mrb[0].mxu0
      %v6435 = vpop.f32.mrb[0].mxu0
      %v6436 = vadd.f32 0.0, %v6435
      %v6437 = vpop.f32.mrb[0].mxu0
      %6438 = vmatprep.mubr.bf16.mxu0 0
      %6439 = vmatmul.mubr.bf16.gmra.mrb[0].mxu0 %v6321
      %v6440 = vpop.f32.mrb[0].mxu0
      %v6441 = vadd.f32 0.0, %v6440
      %v6442 = vpop.f32.mrb[0].mxu0
      %v6443 = vpop.f32.mrb[0].mxu0
      %v6444 = vadd.f32 0.0, %v6443
      %v6445 = vpop.f32.mrb[0].mxu0
      %6446 = vmatprep.mubr.bf16.mxu0 0
      %6447 = vmatmul.mubr.bf16.gmra.mrb[0].mxu0 %v6324
      %v6448 = vpop.f32.mrb[0].mxu0
      %v6449 = vadd.f32 0.0, %v6448
      %v6450 = vpop.f32.mrb[0].mxu0
      %v6451 = vpop.f32.mrb[0].mxu0
      %v6452 = vadd.f32 0.0, %v6451
      %v6453 = vpop.f32.mrb[0].mxu0
      %6454 = vmatprep.mubr.bf16.mxu0 0
      %6455 = vmatmul.mubr.bf16.gmra.mrb[0].mxu0 %v6327
      %v6456 = vpop.f32.mrb[0].mxu0
      %v6457 = vadd.f32 0.0, %v6456
      %v6458 = vpop.f32.mrb[0].mxu0
      %v6459 = vpop.f32.mrb[0].mxu0
      %v6460 = vadd.f32 0.0, %v6459
      %v6461 = vpop.f32.mrb[0].mxu0
      %6462 = vmatprep.mubr.bf16.mxu0 0
      %6463 = vmatmul.mubr.bf16.gmra.mrb[0].mxu0 %v6330
      %v6464 = vpop.f32.mrb[0].mxu0
      %v6465 = vadd.f32 0.0, %v6464
      %v6466 = vpop.f32.mrb[0].mxu0
      %v6467 = vpop.f32.mrb[0].mxu0
      %v6468 = vadd.f32 0.0, %v6467
      %v6469 = vpop.f32.mrb[0].mxu0
      %6470 = vmatprep.mubr.bf16.mxu0 0
      %6471 = vmatmul.mubr.bf16.gmra.mrb[0].mxu0 %v6333
      %v6472 = vpop.f32.mrb[0].mxu0
      %v6473 = vadd.f32 0.0, %v6472
      %v6474 = vpop.f32.mrb[0].mxu0
      %v6475 = vpop.f32.mrb[0].mxu0
      %v6476 = vadd.f32 0.0, %v6475
      %v6477 = vpop.f32.mrb[0].mxu0
      %6478 = vmatprep.mubr.bf16.mxu0 0
      %6479 = vmatmul.mubr.bf16.gmra.mrb[0].mxu0 %v6336
      %v6480 = vpop.f32.mrb[0].mxu0
      %v6481 = vadd.f32 0.0, %v6480
      %v6482 = vpop.f32.mrb[0].mxu0
      %v6483 = vpop.f32.mrb[0].mxu0
      %v6484 = vadd.f32 0.0, %v6483
      %v6485 = vpop.f32.mrb[0].mxu0
      %6486 = vmatprep.mubr.bf16.mxu0 0
      %6487 = vmatmul.mubr.bf16.gmra.mrb[0].mxu0 %v6339
      %v6488 = vpop.f32.mrb[0].mxu0
      %v6489 = vadd.f32 0.0, %v6488
      %v6490 = vpop.f32.mrb[0].mxu0
      %v6491 = vpop.f32.mrb[0].mxu0
      %v6492 = vadd.f32 0.0, %v6491
      %v6493 = vpop.f32.mrb[0].mxu0
      %6494 = vmatprep.mubr.bf16.mxu0 0
      %6495 = vmatmul.mubr.bf16.gmra.mrb[0].mxu0 %v6342
      %v6496 = vpop.f32.mrb[0].mxu0
      %v6497 = vadd.f32 0.0, %v6496
      %v6498 = vpop.f32.mrb[0].mxu0
      %v6499 = vpop.f32.mrb[0].mxu0
      %v6500 = vadd.f32 0.0, %v6499
      %v6501 = vpop.f32.mrb[0].mxu0
      %6502 = vmatprep.mubr.bf16.mxu0 0
      %6503 = vmatmul.mubr.bf16.gmra.mrb[0].mxu0 %v6345
      %v6504 = vpop.f32.mrb[0].mxu0
      %v6505 = vadd.f32 0.0, %v6504
      %v6506 = vpop.f32.mrb[0].mxu0
      %v6507 = vpop.f32.mrb[0].mxu0
      %v6508 = vadd.f32 0.0, %v6507
      %v6509 = vpop.f32.mrb[0].mxu0
      %6510 = vmatprep.mubr.bf16.mxu0 0
      %6511 = vmatmul.mubr.bf16.gmra.mrb[0].mxu0 %v6348
      %v6512 = vpop.f32.mrb[0].mxu0
      %v6513 = vadd.f32 0.0, %v6512
      %v6514 = vpop.f32.mrb[0].mxu0
      %v6515 = vpop.f32.mrb[0].mxu0
      %v6516 = vadd.f32 0.0, %v6515
      %v6517 = vpop.f32.mrb[0].mxu0
      %6518 = vmatprep.mubr.bf16.mxu0 0
      %6519 = vmatmul.mubr.bf16.gmra.mrb[0].mxu0 %v6351
      %v6520 = vpop.f32.mrb[0].mxu0
      %v6521 = vadd.f32 0.0, %v6520
      %v6522 = vpop.f32.mrb[0].mxu0
      %v6523 = vpop.f32.mrb[0].mxu0
      %v6524 = vadd.f32 0.0, %v6523
      %v6525 = vpop.f32.mrb[0].mxu0
      %6526 = vmatprep.mubr.bf16.mxu0 0
      %6527 = vmatmul.mubr.bf16.gmra.mrb[0].mxu0 %v6354
      %v6528 = vpop.f32.mrb[0].mxu0
      %v6529 = vadd.f32 0.0, %v6528
      %v6530 = vpop.f32.mrb[0].mxu0
      %v6531 = vpop.f32.mrb[0].mxu0
      %v6532 = vadd.f32 0.0, %v6531
      %v6533 = vpop.f32.mrb[0].mxu0
      %6534 = vmatprep.mubr.bf16.mxu0 0
      %6535 = vmatmul.mubr.bf16.gmra.mrb[0].mxu0 %v6357
      %v6536 = vpop.f32.mrb[0].mxu0
      %v6537 = vadd.f32 0.0, %v6536
      %v6538 = vpop.f32.mrb[0].mxu0
      %v6539 = vpop.f32.mrb[0].mxu0
      %v6540 = vadd.f32 0.0, %v6539
      %v6541 = vpop.f32.mrb[0].mxu0
      %6542 = vmatprep.mubr.bf16.mxu0 0
      %6543 = vmatmul.mubr.bf16.gmra.mrb[0].mxu0 %v6360
      %v6544 = vpop.f32.mrb[0].mxu0
      %v6545 = vadd.f32 0.0, %v6544
      %v6546 = vpop.f32.mrb[0].mxu0
      %v6547 = vpop.f32.mrb[0].mxu0
      %v6548 = vadd.f32 0.0, %v6547
      %v6549 = vpop.f32.mrb[0].mxu0
      %6550 = vmatprep.mubr.bf16.mxu0 0
      %6551 = vmatmul.mubr.bf16.gmra.mrb[0].mxu0 %v6363
      %v6552 = vpop.f32.mrb[0].mxu0
      %v6553 = vadd.f32 0.0, %v6552
      %v6554 = vpop.f32.mrb[0].mxu0
      %v6555 = vpop.f32.mrb[0].mxu0
      %v6556 = vadd.f32 0.0, %v6555
      %v6557 = vpop.f32.mrb[0].mxu0
      %6558 = vmatprep.mubr.bf16.mxu0 0
      %6559 = vmatmul.mubr.bf16.gmra.mrb[0].mxu0 %v6366
      %v6560 = vpop.f32.mrb[0].mxu0
      %v6561 = vadd.f32 0.0, %v6560
      %v6562 = vpop.f32.mrb[0].mxu0
      %v6563 = vpop.f32.mrb[0].mxu0
      %v6564 = vadd.f32 0.0, %v6563
      %v6565 = vpop.f32.mrb[0].mxu0
      %6566 = vmatprep.mubr.bf16.mxu0 0
      %6567 = vmatmul.mubr.bf16.gmra.mrb[0].mxu0 %v6369
      %v6568 = vpop.f32.mrb[0].mxu0
      %v6569 = vadd.f32 0.0, %v6568
      %v6570 = vpop.f32.mrb[0].mxu0
      %v6571 = vpop.f32.mrb[0].mxu0
      %v6572 = vpop.f32.mrb[0].mxu0
      %6573 = vdwg.mxu0
      %v6615 = vcombine.high %v6409, %v6409
      %v6617 = vunpack.c.l.s4 1983009808
      %v6618 = vunpack.c.0.s8 %v6617
      %v6619 = vlaneseq
      %v6620 = vshrl.u32 %v6619, 7
      %v6621 = vsub.s32 %v6618, %v6620
      %v6622 = vrot.slane %v6409, %v6621
      %v6624 = vunpack.c.l.s4 1983009808
      %v6625 = vunpack.c.0.s8 %v6624
      %v6626 = vlaneseq
      %v6627 = vshrl.u32 %v6626, 7
      %v6628 = vsub.s32 %v6625, %v6627
      %v6629 = vrot.slane %v6615, %v6628
      %v6630 = vcombine.high %v6622, %v6622
      %v6631 = vcombine.high %v6629, %v6629
      %v6632 = vcombine.high %v6412, %v6412
      %v6634 = vunpack.c.l.s4 1983009808
      %v6635 = vunpack.c.0.s8 %v6634
      %v6636 = vlaneseq
      %v6637 = vshrl.u32 %v6636, 7
      %v6638 = vsub.s32 %v6635, %v6637
      %v6639 = vrot.slane %v6412, %v6638
      %v6641 = vunpack.c.l.s4 1983009808
      %v6642 = vunpack.c.0.s8 %v6641
      %v6643 = vlaneseq
      %v6644 = vshrl.u32 %v6643, 7
      %v6645 = vsub.s32 %v6642, %v6644
      %v6646 = vrot.slane %v6632, %v6645
      %v6647 = vcombine.high %v6639, %v6639
      %v6648 = vcombine.high %v6646, %v6646
      %v6649 = vcombine.high %v6417, %v6417
      %v6651 = vunpack.c.l.s4 1983009808
      %v6652 = vunpack.c.0.s8 %v6651
      %v6653 = vlaneseq
      %v6654 = vshrl.u32 %v6653, 7
      %v6655 = vsub.s32 %v6652, %v6654
      %v6656 = vrot.slane %v6417, %v6655
      %v6658 = vunpack.c.l.s4 1983009808
      %v6659 = vunpack.c.0.s8 %v6658
      %v6660 = vlaneseq
      %v6661 = vshrl.u32 %v6660, 7
      %v6662 = vsub.s32 %v6659, %v6661
      %v6663 = vrot.slane %v6649, %v6662
      %v6664 = vcombine.high %v6656, %v6656
      %v6665 = vcombine.high %v6663, %v6663
      %v6666 = vcombine.high %v6420, %v6420
      %v6668 = vunpack.c.l.s4 1983009808
      %v6669 = vunpack.c.0.s8 %v6668
      %v6670 = vlaneseq
      %v6671 = vshrl.u32 %v6670, 7
      %v6672 = vsub.s32 %v6669, %v6671
      %v6673 = vrot.slane %v6420, %v6672
      %v6675 = vunpack.c.l.s4 1983009808
      %v6676 = vunpack.c.0.s8 %v6675
      %v6677 = vlaneseq
      %v6678 = vshrl.u32 %v6677, 7
      %v6679 = vsub.s32 %v6676, %v6678
      %v6680 = vrot.slane %v6666, %v6679
      %v6681 = vcombine.high %v6673, %v6673
      %v6682 = vcombine.high %v6680, %v6680
      %v6683 = vcombine.high %v6425, %v6425
      %v6685 = vunpack.c.l.s4 1983009808
      %v6686 = vunpack.c.0.s8 %v6685
      %v6687 = vlaneseq
      %v6688 = vshrl.u32 %v6687, 7
      %v6689 = vsub.s32 %v6686, %v6688
      %v6690 = vrot.slane %v6425, %v6689
      %v6692 = vunpack.c.l.s4 1983009808
      %v6693 = vunpack.c.0.s8 %v6692
      %v6694 = vlaneseq
      %v6695 = vshrl.u32 %v6694, 7
      %v6696 = vsub.s32 %v6693, %v6695
      %v6697 = vrot.slane %v6683, %v6696
      %v6698 = vcombine.high %v6690, %v6690
      %v6699 = vcombine.high %v6697, %v6697
      %v6700 = vcombine.high %v6428, %v6428
      %v6702 = vunpack.c.l.s4 1983009808
      %v6703 = vunpack.c.0.s8 %v6702
      %v6704 = vlaneseq
      %v6705 = vshrl.u32 %v6704, 7
      %v6706 = vsub.s32 %v6703, %v6705
      %v6707 = vrot.slane %v6428, %v6706
      %v6709 = vunpack.c.l.s4 1983009808
      %v6710 = vunpack.c.0.s8 %v6709
      %v6711 = vlaneseq
      %v6712 = vshrl.u32 %v6711, 7
      %v6713 = vsub.s32 %v6710, %v6712
      %v6714 = vrot.slane %v6700, %v6713
      %v6715 = vcombine.high %v6707, %v6707
      %v6716 = vcombine.high %v6714, %v6714
      %v6717 = vcombine.high %v6433, %v6433
      %v6719 = vunpack.c.l.s4 1983009808
      %v6720 = vunpack.c.0.s8 %v6719
      %v6721 = vlaneseq
      %v6722 = vshrl.u32 %v6721, 7
      %v6723 = vsub.s32 %v6720, %v6722
      %v6724 = vrot.slane %v6433, %v6723
      %v6726 = vunpack.c.l.s4 1983009808
      %v6727 = vunpack.c.0.s8 %v6726
      %v6728 = vlaneseq
      %v6729 = vshrl.u32 %v6728, 7
      %v6730 = vsub.s32 %v6727, %v6729
      %v6731 = vrot.slane %v6717, %v6730
      %v6732 = vcombine.high %v6724, %v6724
      %v6733 = vcombine.high %v6731, %v6731
      %v6734 = vcombine.high %v6436, %v6436
      %v6736 = vunpack.c.l.s4 1983009808
      %v6737 = vunpack.c.0.s8 %v6736
      %v6738 = vlaneseq
      %v6739 = vshrl.u32 %v6738, 7
      %v6740 = vsub.s32 %v6737, %v6739
      %v6741 = vrot.slane %v6436, %v6740
      %v6743 = vunpack.c.l.s4 1983009808
      %v6744 = vunpack.c.0.s8 %v6743
      %v6745 = vlaneseq
      %v6746 = vshrl.u32 %v6745, 7
      %v6747 = vsub.s32 %v6744, %v6746
      %v6748 = vrot.slane %v6734, %v6747
      %v6749 = vcombine.high %v6741, %v6741
      %v6750 = vcombine.high %v6748, %v6748
      %v6751 = vcombine.high %v6441, %v6441
      %v6753 = vunpack.c.l.s4 1983009808
      %v6754 = vunpack.c.0.s8 %v6753
      %v6755 = vlaneseq
      %v6756 = vshrl.u32 %v6755, 7
      %v6757 = vsub.s32 %v6754, %v6756
      %v6758 = vrot.slane %v6441, %v6757
      %v6760 = vunpack.c.l.s4 1983009808
      %v6761 = vunpack.c.0.s8 %v6760
      %v6762 = vlaneseq
      %v6763 = vshrl.u32 %v6762, 7
      %v6764 = vsub.s32 %v6761, %v6763
      %v6765 = vrot.slane %v6751, %v6764
      %v6766 = vcombine.high %v6758, %v6758
      %v6767 = vcombine.high %v6765, %v6765
      %v6768 = vcombine.high %v6444, %v6444
      %v6770 = vunpack.c.l.s4 1983009808
      %v6771 = vunpack.c.0.s8 %v6770
      %v6772 = vlaneseq
      %v6773 = vshrl.u32 %v6772, 7
      %v6774 = vsub.s32 %v6771, %v6773
      %v6775 = vrot.slane %v6444, %v6774
      %v6777 = vunpack.c.l.s4 1983009808
      %v6778 = vunpack.c.0.s8 %v6777
      %v6779 = vlaneseq
      %v6780 = vshrl.u32 %v6779, 7
      %v6781 = vsub.s32 %v6778, %v6780
      %v6782 = vrot.slane %v6768, %v6781
      %v6783 = vcombine.high %v6775, %v6775
      %v6784 = vcombine.high %v6782, %v6782
      %v6785 = vcombine.high %v6449, %v6449
      %v6787 = vunpack.c.l.s4 1983009808
      %v6788 = vunpack.c.0.s8 %v6787
      %v6789 = vlaneseq
      %v6790 = vshrl.u32 %v6789, 7
      %v6791 = vsub.s32 %v6788, %v6790
      %v6792 = vrot.slane %v6449, %v6791
      %v6794 = vunpack.c.l.s4 1983009808
      %v6795 = vunpack.c.0.s8 %v6794
      %v6796 = vlaneseq
      %v6797 = vshrl.u32 %v6796, 7
      %v6798 = vsub.s32 %v6795, %v6797
      %v6799 = vrot.slane %v6785, %v6798
      %v6800 = vcombine.high %v6792, %v6792
      %v6801 = vcombine.high %v6799, %v6799
      %v6802 = vcombine.high %v6452, %v6452
      %v6804 = vunpack.c.l.s4 1983009808
      %v6805 = vunpack.c.0.s8 %v6804
      %v6806 = vlaneseq
      %v6807 = vshrl.u32 %v6806, 7
      %v6808 = vsub.s32 %v6805, %v6807
      %v6809 = vrot.slane %v6452, %v6808
      %v6811 = vunpack.c.l.s4 1983009808
      %v6812 = vunpack.c.0.s8 %v6811
      %v6813 = vlaneseq
      %v6814 = vshrl.u32 %v6813, 7
      %v6815 = vsub.s32 %v6812, %v6814
      %v6816 = vrot.slane %v6802, %v6815
      %v6817 = vcombine.high %v6809, %v6809
      %v6818 = vcombine.high %v6816, %v6816
      %v6819 = vcombine.high %v6457, %v6457
      %v6821 = vunpack.c.l.s4 1983009808
      %v6822 = vunpack.c.0.s8 %v6821
      %v6823 = vlaneseq
      %v6824 = vshrl.u32 %v6823, 7
      %v6825 = vsub.s32 %v6822, %v6824
      %v6826 = vrot.slane %v6457, %v6825
      %v6828 = vunpack.c.l.s4 1983009808
      %v6829 = vunpack.c.0.s8 %v6828
      %v6830 = vlaneseq
      %v6831 = vshrl.u32 %v6830, 7
      %v6832 = vsub.s32 %v6829, %v6831
      %v6833 = vrot.slane %v6819, %v6832
      %v6834 = vcombine.high %v6826, %v6826
      %v6835 = vcombine.high %v6833, %v6833
      %v6836 = vcombine.high %v6460, %v6460
      %v6838 = vunpack.c.l.s4 1983009808
      %v6839 = vunpack.c.0.s8 %v6838
      %v6840 = vlaneseq
      %v6841 = vshrl.u32 %v6840, 7
      %v6842 = vsub.s32 %v6839, %v6841
      %v6843 = vrot.slane %v6460, %v6842
      %v6845 = vunpack.c.l.s4 1983009808
      %v6846 = vunpack.c.0.s8 %v6845
      %v6847 = vlaneseq
      %v6848 = vshrl.u32 %v6847, 7
      %v6849 = vsub.s32 %v6846, %v6848
      %v6850 = vrot.slane %v6836, %v6849
      %v6851 = vcombine.high %v6843, %v6843
      %v6852 = vcombine.high %v6850, %v6850
      %v6853 = vcombine.high %v6465, %v6465
      %v6855 = vunpack.c.l.s4 1983009808
      %v6856 = vunpack.c.0.s8 %v6855
      %v6857 = vlaneseq
      %v6858 = vshrl.u32 %v6857, 7
      %v6859 = vsub.s32 %v6856, %v6858
      %v6860 = vrot.slane %v6465, %v6859
      %v6862 = vunpack.c.l.s4 1983009808
      %v6863 = vunpack.c.0.s8 %v6862
      %v6864 = vlaneseq
      %v6865 = vshrl.u32 %v6864, 7
      %v6866 = vsub.s32 %v6863, %v6865
      %v6867 = vrot.slane %v6853, %v6866
      %v6868 = vcombine.high %v6860, %v6860
      %v6869 = vcombine.high %v6867, %v6867
      %v6870 = vcombine.high %v6468, %v6468
      %v6872 = vunpack.c.l.s4 1983009808
      %v6873 = vunpack.c.0.s8 %v6872
      %v6874 = vlaneseq
      %v6875 = vshrl.u32 %v6874, 7
      %v6876 = vsub.s32 %v6873, %v6875
      %v6877 = vrot.slane %v6468, %v6876
      %v6879 = vunpack.c.l.s4 1983009808
      %v6880 = vunpack.c.0.s8 %v6879
      %v6881 = vlaneseq
      %v6882 = vshrl.u32 %v6881, 7
      %v6883 = vsub.s32 %v6880, %v6882
      %v6884 = vrot.slane %v6870, %v6883
      %v6885 = vcombine.high %v6877, %v6877
      %v6886 = vcombine.high %v6884, %v6884
      %v6887 = vcombine.high %v6473, %v6473
      %v6889 = vunpack.c.l.s4 1983009808
      %v6890 = vunpack.c.0.s8 %v6889
      %v6891 = vlaneseq
      %v6892 = vshrl.u32 %v6891, 7
      %v6893 = vsub.s32 %v6890, %v6892
      %v6894 = vrot.slane %v6473, %v6893
      %v6896 = vunpack.c.l.s4 1983009808
      %v6897 = vunpack.c.0.s8 %v6896
      %v6898 = vlaneseq
      %v6899 = vshrl.u32 %v6898, 7
      %v6900 = vsub.s32 %v6897, %v6899
      %v6901 = vrot.slane %v6887, %v6900
      %v6902 = vcombine.high %v6894, %v6894
      %v6903 = vcombine.high %v6901, %v6901
      %v6904 = vcombine.high %v6476, %v6476
      %v6906 = vunpack.c.l.s4 1983009808
      %v6907 = vunpack.c.0.s8 %v6906
      %v6908 = vlaneseq
      %v6909 = vshrl.u32 %v6908, 7
      %v6910 = vsub.s32 %v6907, %v6909
      %v6911 = vrot.slane %v6476, %v6910
      %v6913 = vunpack.c.l.s4 1983009808
      %v6914 = vunpack.c.0.s8 %v6913
      %v6915 = vlaneseq
      %v6916 = vshrl.u32 %v6915, 7
      %v6917 = vsub.s32 %v6914, %v6916
      %v6918 = vrot.slane %v6904, %v6917
      %v6919 = vcombine.high %v6911, %v6911
      %v6920 = vcombine.high %v6918, %v6918
      %v6921 = vcombine.high %v6481, %v6481
      %v6923 = vunpack.c.l.s4 1983009808
      %v6924 = vunpack.c.0.s8 %v6923
      %v6925 = vlaneseq
      %v6926 = vshrl.u32 %v6925, 7
      %v6927 = vsub.s32 %v6924, %v6926
      %v6928 = vrot.slane %v6481, %v6927
      %v6930 = vunpack.c.l.s4 1983009808
      %v6931 = vunpack.c.0.s8 %v6930
      %v6932 = vlaneseq
      %v6933 = vshrl.u32 %v6932, 7
      %v6934 = vsub.s32 %v6931, %v6933
      %v6935 = vrot.slane %v6921, %v6934
      %v6936 = vcombine.high %v6928, %v6928
      %v6937 = vcombine.high %v6935, %v6935
      %v6938 = vcombine.high %v6484, %v6484
      %v6940 = vunpack.c.l.s4 1983009808
      %v6941 = vunpack.c.0.s8 %v6940
      %v6942 = vlaneseq
      %v6943 = vshrl.u32 %v6942, 7
      %v6944 = vsub.s32 %v6941, %v6943
      %v6945 = vrot.slane %v6484, %v6944
      %v6947 = vunpack.c.l.s4 1983009808
      %v6948 = vunpack.c.0.s8 %v6947
      %v6949 = vlaneseq
      %v6950 = vshrl.u32 %v6949, 7
      %v6951 = vsub.s32 %v6948, %v6950
      %v6952 = vrot.slane %v6938, %v6951
      %v6953 = vcombine.high %v6945, %v6945
      %v6954 = vcombine.high %v6952, %v6952
      %v6955 = vcombine.high %v6489, %v6489
      %v6957 = vunpack.c.l.s4 1983009808
      %v6958 = vunpack.c.0.s8 %v6957
      %v6959 = vlaneseq
      %v6960 = vshrl.u32 %v6959, 7
      %v6961 = vsub.s32 %v6958, %v6960
      %v6962 = vrot.slane %v6489, %v6961
      %v6964 = vunpack.c.l.s4 1983009808
      %v6965 = vunpack.c.0.s8 %v6964
      %v6966 = vlaneseq
      %v6967 = vshrl.u32 %v6966, 7
      %v6968 = vsub.s32 %v6965, %v6967
      %v6969 = vrot.slane %v6955, %v6968
      %v6970 = vcombine.high %v6962, %v6962
      %v6971 = vcombine.high %v6969, %v6969
      %v6972 = vcombine.high %v6492, %v6492
      %v6974 = vunpack.c.l.s4 1983009808
      %v6975 = vunpack.c.0.s8 %v6974
      %v6976 = vlaneseq
      %v6977 = vshrl.u32 %v6976, 7
      %v6978 = vsub.s32 %v6975, %v6977
      %v6979 = vrot.slane %v6492, %v6978
      %v6981 = vunpack.c.l.s4 1983009808
      %v6982 = vunpack.c.0.s8 %v6981
      %v6983 = vlaneseq
      %v6984 = vshrl.u32 %v6983, 7
      %v6985 = vsub.s32 %v6982, %v6984
      %v6986 = vrot.slane %v6972, %v6985
      %v6987 = vcombine.high %v6979, %v6979
      %v6988 = vcombine.high %v6986, %v6986
      %v6989 = vcombine.high %v6497, %v6497
      %v6991 = vunpack.c.l.s4 1983009808
      %v6992 = vunpack.c.0.s8 %v6991
      %v6993 = vlaneseq
      %v6994 = vshrl.u32 %v6993, 7
      %v6995 = vsub.s32 %v6992, %v6994
      %v6996 = vrot.slane %v6497, %v6995
      %v6998 = vunpack.c.l.s4 1983009808
      %v6999 = vunpack.c.0.s8 %v6998
      %v7000 = vlaneseq
      %v7001 = vshrl.u32 %v7000, 7
      %v7002 = vsub.s32 %v6999, %v7001
      %v7003 = vrot.slane %v6989, %v7002
      %v7004 = vcombine.high %v6996, %v6996
      %v7005 = vcombine.high %v7003, %v7003
      %v7006 = vcombine.high %v6500, %v6500
      %v7008 = vunpack.c.l.s4 1983009808
      %v7009 = vunpack.c.0.s8 %v7008
      %v7010 = vlaneseq
      %v7011 = vshrl.u32 %v7010, 7
      %v7012 = vsub.s32 %v7009, %v7011
      %v7013 = vrot.slane %v6500, %v7012
      %v7015 = vunpack.c.l.s4 1983009808
      %v7016 = vunpack.c.0.s8 %v7015
      %v7017 = vlaneseq
      %v7018 = vshrl.u32 %v7017, 7
      %v7019 = vsub.s32 %v7016, %v7018
      %v7020 = vrot.slane %v7006, %v7019
      %v7021 = vcombine.high %v7013, %v7013
      %v7022 = vcombine.high %v7020, %v7020
      %v7023 = vcombine.high %v6505, %v6505
      %v7025 = vunpack.c.l.s4 1983009808
      %v7026 = vunpack.c.0.s8 %v7025
      %v7027 = vlaneseq
      %v7028 = vshrl.u32 %v7027, 7
      %v7029 = vsub.s32 %v7026, %v7028
      %v7030 = vrot.slane %v6505, %v7029
      %v7032 = vunpack.c.l.s4 1983009808
      %v7033 = vunpack.c.0.s8 %v7032
      %v7034 = vlaneseq
      %v7035 = vshrl.u32 %v7034, 7
      %v7036 = vsub.s32 %v7033, %v7035
      %v7037 = vrot.slane %v7023, %v7036
      %v7038 = vcombine.high %v7030, %v7030
      %v7039 = vcombine.high %v7037, %v7037
      %v7040 = vcombine.high %v6508, %v6508
      %v7042 = vunpack.c.l.s4 1983009808
      %v7043 = vunpack.c.0.s8 %v7042
      %v7044 = vlaneseq
      %v7045 = vshrl.u32 %v7044, 7
      %v7046 = vsub.s32 %v7043, %v7045
      %v7047 = vrot.slane %v6508, %v7046
      %v7049 = vunpack.c.l.s4 1983009808
      %v7050 = vunpack.c.0.s8 %v7049
      %v7051 = vlaneseq
      %v7052 = vshrl.u32 %v7051, 7
      %v7053 = vsub.s32 %v7050, %v7052
      %v7054 = vrot.slane %v7040, %v7053
      %v7055 = vcombine.high %v7047, %v7047
      %v7056 = vcombine.high %v7054, %v7054
      %v7057 = vcombine.high %v6513, %v6513
      %v7059 = vunpack.c.l.s4 1983009808
      %v7060 = vunpack.c.0.s8 %v7059
      %v7061 = vlaneseq
      %v7062 = vshrl.u32 %v7061, 7
      %v7063 = vsub.s32 %v7060, %v7062
      %v7064 = vrot.slane %v6513, %v7063
      %v7066 = vunpack.c.l.s4 1983009808
      %v7067 = vunpack.c.0.s8 %v7066
      %v7068 = vlaneseq
      %v7069 = vshrl.u32 %v7068, 7
      %v7070 = vsub.s32 %v7067, %v7069
      %v7071 = vrot.slane %v7057, %v7070
      %v7072 = vcombine.high %v7064, %v7064
      %v7073 = vcombine.high %v7071, %v7071
      %v7074 = vcombine.high %v6516, %v6516
      %v7076 = vunpack.c.l.s4 1983009808
      %v7077 = vunpack.c.0.s8 %v7076
      %v7078 = vlaneseq
      %v7079 = vshrl.u32 %v7078, 7
      %v7080 = vsub.s32 %v7077, %v7079
      %v7081 = vrot.slane %v6516, %v7080
      %v7083 = vunpack.c.l.s4 1983009808
      %v7084 = vunpack.c.0.s8 %v7083
      %v7085 = vlaneseq
      %v7086 = vshrl.u32 %v7085, 7
      %v7087 = vsub.s32 %v7084, %v7086
      %v7088 = vrot.slane %v7074, %v7087
      %v7089 = vcombine.high %v7081, %v7081
      %v7090 = vcombine.high %v7088, %v7088
      %v7091 = vcombine.high %v6521, %v6521
      %v7093 = vunpack.c.l.s4 1983009808
      %v7094 = vunpack.c.0.s8 %v7093
      %v7095 = vlaneseq
      %v7096 = vshrl.u32 %v7095, 7
      %v7097 = vsub.s32 %v7094, %v7096
      %v7098 = vrot.slane %v6521, %v7097
      %v7100 = vunpack.c.l.s4 1983009808
      %v7101 = vunpack.c.0.s8 %v7100
      %v7102 = vlaneseq
      %v7103 = vshrl.u32 %v7102, 7
      %v7104 = vsub.s32 %v7101, %v7103
      %v7105 = vrot.slane %v7091, %v7104
      %v7106 = vcombine.high %v7098, %v7098
      %v7107 = vcombine.high %v7105, %v7105
      %v7108 = vcombine.high %v6524, %v6524
      %v7110 = vunpack.c.l.s4 1983009808
      %v7111 = vunpack.c.0.s8 %v7110
      %v7112 = vlaneseq
      %v7113 = vshrl.u32 %v7112, 7
      %v7114 = vsub.s32 %v7111, %v7113
      %v7115 = vrot.slane %v6524, %v7114
      %v7117 = vunpack.c.l.s4 1983009808
      %v7118 = vunpack.c.0.s8 %v7117
      %v7119 = vlaneseq
      %v7120 = vshrl.u32 %v7119, 7
      %v7121 = vsub.s32 %v7118, %v7120
      %v7122 = vrot.slane %v7108, %v7121
      %v7123 = vcombine.high %v7115, %v7115
      %v7124 = vcombine.high %v7122, %v7122
      %v7125 = vcombine.high %v6529, %v6529
      %v7127 = vunpack.c.l.s4 1983009808
      %v7128 = vunpack.c.0.s8 %v7127
      %v7129 = vlaneseq
      %v7130 = vshrl.u32 %v7129, 7
      %v7131 = vsub.s32 %v7128, %v7130
      %v7132 = vrot.slane %v6529, %v7131
      %v7134 = vunpack.c.l.s4 1983009808
      %v7135 = vunpack.c.0.s8 %v7134
      %v7136 = vlaneseq
      %v7137 = vshrl.u32 %v7136, 7
      %v7138 = vsub.s32 %v7135, %v7137
      %v7139 = vrot.slane %v7125, %v7138
      %v7140 = vcombine.high %v7132, %v7132
      %v7141 = vcombine.high %v7139, %v7139
      %v7142 = vcombine.high %v6532, %v6532
      %v7144 = vunpack.c.l.s4 1983009808
      %v7145 = vunpack.c.0.s8 %v7144
      %v7146 = vlaneseq
      %v7147 = vshrl.u32 %v7146, 7
      %v7148 = vsub.s32 %v7145, %v7147
      %v7149 = vrot.slane %v6532, %v7148
      %v7151 = vunpack.c.l.s4 1983009808
      %v7152 = vunpack.c.0.s8 %v7151
      %v7153 = vlaneseq
      %v7154 = vshrl.u32 %v7153, 7
      %v7155 = vsub.s32 %v7152, %v7154
      %v7156 = vrot.slane %v7142, %v7155
      %v7157 = vcombine.high %v7149, %v7149
      %v7158 = vcombine.high %v7156, %v7156
      %v7159 = vcombine.high %v6537, %v6537
      %v7161 = vunpack.c.l.s4 1983009808
      %v7162 = vunpack.c.0.s8 %v7161
      %v7163 = vlaneseq
      %v7164 = vshrl.u32 %v7163, 7
      %v7165 = vsub.s32 %v7162, %v7164
      %v7166 = vrot.slane %v6537, %v7165
      %v7168 = vunpack.c.l.s4 1983009808
      %v7169 = vunpack.c.0.s8 %v7168
      %v7170 = vlaneseq
      %v7171 = vshrl.u32 %v7170, 7
      %v7172 = vsub.s32 %v7169, %v7171
      %v7173 = vrot.slane %v7159, %v7172
      %v7174 = vcombine.high %v7166, %v7166
      %v7175 = vcombine.high %v7173, %v7173
      %v7176 = vcombine.high %v6540, %v6540
      %v7178 = vunpack.c.l.s4 1983009808
      %v7179 = vunpack.c.0.s8 %v7178
      %v7180 = vlaneseq
      %v7181 = vshrl.u32 %v7180, 7
      %v7182 = vsub.s32 %v7179, %v7181
      %v7183 = vrot.slane %v6540, %v7182
      %v7185 = vunpack.c.l.s4 1983009808
      %v7186 = vunpack.c.0.s8 %v7185
      %v7187 = vlaneseq
      %v7188 = vshrl.u32 %v7187, 7
      %v7189 = vsub.s32 %v7186, %v7188
      %v7190 = vrot.slane %v7176, %v7189
      %v7191 = vcombine.high %v7183, %v7183
      %v7192 = vcombine.high %v7190, %v7190
      %v7193 = vcombine.high %v6545, %v6545
      %v7195 = vunpack.c.l.s4 1983009808
      %v7196 = vunpack.c.0.s8 %v7195
      %v7197 = vlaneseq
      %v7198 = vshrl.u32 %v7197, 7
      %v7199 = vsub.s32 %v7196, %v7198
      %v7200 = vrot.slane %v6545, %v7199
      %v7202 = vunpack.c.l.s4 1983009808
      %v7203 = vunpack.c.0.s8 %v7202
      %v7204 = vlaneseq
      %v7205 = vshrl.u32 %v7204, 7
      %v7206 = vsub.s32 %v7203, %v7205
      %v7207 = vrot.slane %v7193, %v7206
      %v7208 = vcombine.high %v7200, %v7200
      %v7209 = vcombine.high %v7207, %v7207
      %v7210 = vcombine.high %v6548, %v6548
      %v7212 = vunpack.c.l.s4 1983009808
      %v7213 = vunpack.c.0.s8 %v7212
      %v7214 = vlaneseq
      %v7215 = vshrl.u32 %v7214, 7
      %v7216 = vsub.s32 %v7213, %v7215
      %v7217 = vrot.slane %v6548, %v7216
      %v7219 = vunpack.c.l.s4 1983009808
      %v7220 = vunpack.c.0.s8 %v7219
      %v7221 = vlaneseq
      %v7222 = vshrl.u32 %v7221, 7
      %v7223 = vsub.s32 %v7220, %v7222
      %v7224 = vrot.slane %v7210, %v7223
      %v7225 = vcombine.high %v7217, %v7217
      %v7226 = vcombine.high %v7224, %v7224
      %v7227 = vcombine.high %v6553, %v6553
      %v7229 = vunpack.c.l.s4 1983009808
      %v7230 = vunpack.c.0.s8 %v7229
      %v7231 = vlaneseq
      %v7232 = vshrl.u32 %v7231, 7
      %v7233 = vsub.s32 %v7230, %v7232
      %v7234 = vrot.slane %v6553, %v7233
      %v7236 = vunpack.c.l.s4 1983009808
      %v7237 = vunpack.c.0.s8 %v7236
      %v7238 = vlaneseq
      %v7239 = vshrl.u32 %v7238, 7
      %v7240 = vsub.s32 %v7237, %v7239
      %v7241 = vrot.slane %v7227, %v7240
      %v7242 = vcombine.high %v7234, %v7234
      %v7243 = vcombine.high %v7241, %v7241
      %v7244 = vcombine.high %v6556, %v6556
      %v7246 = vunpack.c.l.s4 1983009808
      %v7247 = vunpack.c.0.s8 %v7246
      %v7248 = vlaneseq
      %v7249 = vshrl.u32 %v7248, 7
      %v7250 = vsub.s32 %v7247, %v7249
      %v7251 = vrot.slane %v6556, %v7250
      %v7253 = vunpack.c.l.s4 1983009808
      %v7254 = vunpack.c.0.s8 %v7253
      %v7255 = vlaneseq
      %v7256 = vshrl.u32 %v7255, 7
      %v7257 = vsub.s32 %v7254, %v7256
      %v7258 = vrot.slane %v7244, %v7257
      %v7259 = vcombine.high %v7251, %v7251
      %v7260 = vcombine.high %v7258, %v7258
      %v7261 = vcombine.high %v6561, %v6561
      %v7263 = vunpack.c.l.s4 1983009808
      %v7264 = vunpack.c.0.s8 %v7263
      %v7265 = vlaneseq
      %v7266 = vshrl.u32 %v7265, 7
      %v7267 = vsub.s32 %v7264, %v7266
      %v7268 = vrot.slane %v6561, %v7267
      %v7270 = vunpack.c.l.s4 1983009808
      %v7271 = vunpack.c.0.s8 %v7270
      %v7272 = vlaneseq
      %v7273 = vshrl.u32 %v7272, 7
      %v7274 = vsub.s32 %v7271, %v7273
      %v7275 = vrot.slane %v7261, %v7274
      %v7276 = vcombine.high %v7268, %v7268
      %v7277 = vcombine.high %v7275, %v7275
      %v7278 = vcombine.high %v6564, %v6564
      %v7280 = vunpack.c.l.s4 1983009808
      %v7281 = vunpack.c.0.s8 %v7280
      %v7282 = vlaneseq
      %v7283 = vshrl.u32 %v7282, 7
      %v7284 = vsub.s32 %v7281, %v7283
      %v7285 = vrot.slane %v6564, %v7284
      %v7287 = vunpack.c.l.s4 1983009808
      %v7288 = vunpack.c.0.s8 %v7287
      %v7289 = vlaneseq
      %v7290 = vshrl.u32 %v7289, 7
      %v7291 = vsub.s32 %v7288, %v7290
      %v7292 = vrot.slane %v7278, %v7291
      %v7293 = vcombine.high %v7285, %v7285
      %v7294 = vcombine.high %v7292, %v7292
      %v7296 = vunpack.c.l.s4 1983009808
      %v7297 = vunpack.c.0.s8 %v7296
      %v7298 = vlaneseq
      %v7299 = vshrl.u32 %v7298, 7
      %v7300 = vsub.s32 %v7297, %v7299
      %v7301 = vrot.slane %v6569, %v7300
      %v7302 = vcombine.high %v7301, %v7301
      %v7465 = vadd.f32 %v4934, %v6622
      %v7466 = vadd.f32 %v4942, %v6630
      %v7467 = vadd.f32 %v4941, %v6629
      %v7468 = vadd.f32 %v4943, %v6631
      %v7469 = vadd.f32 %v4951, %v6639
      %v7470 = vadd.f32 %v4959, %v6647
      %v7471 = vadd.f32 %v4958, %v6646
      %v7472 = vadd.f32 %v4960, %v6648
      %v7473 = vadd.f32 %v4968, %v6656
      %v7474 = vadd.f32 %v4976, %v6664
      %v7475 = vadd.f32 %v4975, %v6663
      %v7476 = vadd.f32 %v4977, %v6665
      %v7477 = vadd.f32 %v4985, %v6673
      %v7478 = vadd.f32 %v4993, %v6681
      %v7479 = vadd.f32 %v4992, %v6680
      %v7480 = vadd.f32 %v4994, %v6682
      %v7481 = vadd.f32 %v5002, %v6690
      %v7482 = vadd.f32 %v5010, %v6698
      %v7483 = vadd.f32 %v5009, %v6697
      %v7484 = vadd.f32 %v5011, %v6699
      %v7485 = vadd.f32 %v5019, %v6707
      %v7486 = vadd.f32 %v5027, %v6715
      %v7487 = vadd.f32 %v5026, %v6714
      %v7488 = vadd.f32 %v5028, %v6716
      %v7489 = vadd.f32 %v5036, %v6724
      %v7490 = vadd.f32 %v5044, %v6732
      %v7491 = vadd.f32 %v5043, %v6731
      %v7492 = vadd.f32 %v5045, %v6733
      %v7493 = vadd.f32 %v5053, %v6741
      %v7494 = vadd.f32 %v5061, %v6749
      %v7495 = vadd.f32 %v5060, %v6748
      %v7496 = vadd.f32 %v5062, %v6750
      %v7497 = vadd.f32 %v5070, %v6758
      %v7498 = vadd.f32 %v5078, %v6766
      %v7499 = vadd.f32 %v5077, %v6765
      %v7500 = vadd.f32 %v5079, %v6767
      %v7501 = vadd.f32 %v5087, %v6775
      %v7502 = vadd.f32 %v5095, %v6783
      %v7503 = vadd.f32 %v5094, %v6782
      %v7504 = vadd.f32 %v5096, %v6784
      %v7505 = vadd.f32 %v5104, %v6792
      %v7506 = vadd.f32 %v5112, %v6800
      %v7507 = vadd.f32 %v5111, %v6799
      %v7508 = vadd.f32 %v5113, %v6801
      %v7509 = vadd.f32 %v5121, %v6809
      %v7510 = vadd.f32 %v5129, %v6817
      %v7511 = vadd.f32 %v5128, %v6816
      %v7512 = vadd.f32 %v5130, %v6818
      %v7513 = vadd.f32 %v5138, %v6826
      %v7514 = vadd.f32 %v5146, %v6834
      %v7515 = vadd.f32 %v5145, %v6833
      %v7516 = vadd.f32 %v5147, %v6835
      %v7517 = vadd.f32 %v5155, %v6843
      %v7518 = vadd.f32 %v5163, %v6851
      %v7519 = vadd.f32 %v5162, %v6850
      %v7520 = vadd.f32 %v5164, %v6852
      %v7521 = vadd.f32 %v5172, %v6860
      %v7522 = vadd.f32 %v5180, %v6868
      %v7523 = vadd.f32 %v5179, %v6867
      %v7524 = vadd.f32 %v5181, %v6869
      %v7525 = vadd.f32 %v5189, %v6877
      %v7526 = vadd.f32 %v5197, %v6885
      %v7527 = vadd.f32 %v5196, %v6884
      %v7528 = vadd.f32 %v5198, %v6886
      %v7529 = vadd.f32 %v5206, %v6894
      %v7530 = vadd.f32 %v5214, %v6902
      %v7531 = vadd.f32 %v5213, %v6901
      %v7532 = vadd.f32 %v5215, %v6903
      %v7533 = vadd.f32 %v5223, %v6911
      %v7534 = vadd.f32 %v5231, %v6919
      %v7535 = vadd.f32 %v5230, %v6918
      %v7536 = vadd.f32 %v5232, %v6920
      %v7537 = vadd.f32 %v5240, %v6928
      %v7538 = vadd.f32 %v5248, %v6936
      %v7539 = vadd.f32 %v5247, %v6935
      %v7540 = vadd.f32 %v5249, %v6937
      %v7541 = vadd.f32 %v5257, %v6945
      %v7542 = vadd.f32 %v5265, %v6953
      %v7543 = vadd.f32 %v5264, %v6952
      %v7544 = vadd.f32 %v5266, %v6954
      %v7545 = vadd.f32 %v5274, %v6962
      %v7546 = vadd.f32 %v5282, %v6970
      %v7547 = vadd.f32 %v5281, %v6969
      %v7548 = vadd.f32 %v5283, %v6971
      %v7549 = vadd.f32 %v5291, %v6979
      %v7550 = vadd.f32 %v5299, %v6987
      %v7551 = vadd.f32 %v5298, %v6986
      %v7552 = vadd.f32 %v5300, %v6988
      %v7553 = vadd.f32 %v5308, %v6996
      %v7554 = vadd.f32 %v5316, %v7004
      %v7555 = vadd.f32 %v5315, %v7003
      %v7556 = vadd.f32 %v5317, %v7005
      %v7557 = vadd.f32 %v5325, %v7013
      %v7558 = vadd.f32 %v5333, %v7021
      %v7559 = vadd.f32 %v5332, %v7020
      %v7560 = vadd.f32 %v5334, %v7022
      %v7561 = vadd.f32 %v5342, %v7030
      %v7562 = vadd.f32 %v5350, %v7038
      %v7563 = vadd.f32 %v5349, %v7037
      %v7564 = vadd.f32 %v5351, %v7039
      %v7565 = vadd.f32 %v5359, %v7047
      %v7566 = vadd.f32 %v5367, %v7055
      %v7567 = vadd.f32 %v5366, %v7054
      %v7568 = vadd.f32 %v5368, %v7056
      %v7569 = vadd.f32 %v5376, %v7064
      %v7570 = vadd.f32 %v5384, %v7072
      %v7571 = vadd.f32 %v5383, %v7071
      %v7572 = vadd.f32 %v5385, %v7073
      %v7573 = vadd.f32 %v5393, %v7081
      %v7574 = vadd.f32 %v5401, %v7089
      %v7575 = vadd.f32 %v5400, %v7088
      %v7576 = vadd.f32 %v5402, %v7090
      %v7577 = vadd.f32 %v5410, %v7098
      %v7578 = vadd.f32 %v5418, %v7106
      %v7579 = vadd.f32 %v5417, %v7105
      %v7580 = vadd.f32 %v5419, %v7107
      %v7581 = vadd.f32 %v5427, %v7115
      %v7582 = vadd.f32 %v5435, %v7123
      %v7583 = vadd.f32 %v5434, %v7122
      %v7584 = vadd.f32 %v5436, %v7124
      %v7585 = vadd.f32 %v5444, %v7132
      %v7586 = vadd.f32 %v5452, %v7140
      %v7587 = vadd.f32 %v5451, %v7139
      %v7588 = vadd.f32 %v5453, %v7141
      %v7589 = vadd.f32 %v5461, %v7149
      %v7590 = vadd.f32 %v5469, %v7157
      %v7591 = vadd.f32 %v5468, %v7156
      %v7592 = vadd.f32 %v5470, %v7158
      %v7593 = vadd.f32 %v5478, %v7166
      %v7594 = vadd.f32 %v5486, %v7174
      %v7595 = vadd.f32 %v5485, %v7173
      %v7596 = vadd.f32 %v5487, %v7175
      %v7597 = vadd.f32 %v5495, %v7183
      %v7598 = vadd.f32 %v5503, %v7191
      %v7599 = vadd.f32 %v5502, %v7190
      %v7600 = vadd.f32 %v5504, %v7192
      %v7601 = vadd.f32 %v5512, %v7200
      %v7602 = vadd.f32 %v5520, %v7208
      %v7603 = vadd.f32 %v5519, %v7207
      %v7604 = vadd.f32 %v5521, %v7209
      %v7605 = vadd.f32 %v5529, %v7217
      %v7606 = vadd.f32 %v5537, %v7225
      %v7607 = vadd.f32 %v5536, %v7224
      %v7608 = vadd.f32 %v5538, %v7226
      %v7609 = vadd.f32 %v5546, %v7234
      %v7610 = vadd.f32 %v5554, %v7242
      %v7611 = vadd.f32 %v5553, %v7241
      %v7612 = vadd.f32 %v5555, %v7243
      %v7613 = vadd.f32 %v5563, %v7251
      %v7614 = vadd.f32 %v5571, %v7259
      %v7615 = vadd.f32 %v5570, %v7258
      %v7616 = vadd.f32 %v5572, %v7260
      %v7617 = vadd.f32 %v5580, %v7268
      %v7618 = vadd.f32 %v5588, %v7276
      %v7619 = vadd.f32 %v5587, %v7275
      %v7620 = vadd.f32 %v5589, %v7277
      %v7621 = vadd.f32 %v5597, %v7285
      %v7622 = vadd.f32 %v5605, %v7293
      %v7623 = vadd.f32 %v5604, %v7292
      %v7624 = vadd.f32 %v5606, %v7294
      %v7625 = vadd.f32 %v5613, %v7301
      %v7626 = vadd.f32 %v5614, %v7302
      %v7627 = vld [vmem:[%s2] sm:$0x1]
      %v7629 = vlaneseq
      %v7630 = vshrl.u32 %v7629, 7
      %v7631 = vsub.s32 0, %v7630
      %v7632 = vrot.slane %v7627, %v7631
      %v7633 = vcombine.high %v7632, %v7632
      %v7635 = vunpack.c.l.s4 1983009808
      %v7636 = vunpack.c.0.s8 %v7635
      %v7637 = vlaneseq
      %v7638 = vshrl.u32 %v7637, 7
      %v7639 = vsub.s32 %v7636, %v7638
      %v7640 = vrot.slane %v7632, %v7639
      %v7642 = vunpack.c.l.s4 1983009808
      %v7643 = vunpack.c.0.s8 %v7642
      %v7644 = vlaneseq
      %v7645 = vshrl.u32 %v7644, 7
      %v7646 = vsub.s32 %v7643, %v7645
      %v7647 = vrot.slane %v7633, %v7646
      %v7648 = vcombine.high %v7640, %v7640
      %v7649 = vcombine.high %v7647, %v7647
      %v7654 = vmul.f32 %v7465, %v7640
      %v7655 = vmul.f32 %v7466, %v7648
      %v7656 = vmul.f32 %v7467, %v7647
      %v7657 = vmul.f32 %v7468, %v7649
      %v7658 = vmul.f32 %v7469, %v7640
      %v7659 = vmul.f32 %v7470, %v7648
      %v7660 = vmul.f32 %v7471, %v7647
      %v7661 = vmul.f32 %v7472, %v7649
      %v7662 = vmul.f32 %v7473, %v7640
      %v7663 = vmul.f32 %v7474, %v7640
      %v7664 = vmul.f32 %v7475, %v7648
      %v7665 = vmul.f32 %v7476, %v7647
      %v7666 = vmul.f32 %v7477, %v7649
      %v7667 = vmul.f32 %v7478, %v7640
      %v7668 = vmul.f32 %v7479, %v7648
      %v7669 = vmul.f32 %v7480, %v7647
      %v7670 = vmul.f32 %v7481, %v7649
      %v7671 = vmul.f32 %v7482, %v7640
      %v7672 = vmul.f32 %v7483, %v7640
      %v7673 = vmul.f32 %v7484, %v7648
      %v7674 = vmul.f32 %v7485, %v7647
      %v7675 = vmul.f32 %v7486, %v7649
      %v7676 = vmul.f32 %v7487, %v7640
      %v7677 = vmul.f32 %v7488, %v7648
      %v7678 = vmul.f32 %v7489, %v7647
      %v7679 = vmul.f32 %v7490, %v7649
      %v7680 = vmul.f32 %v7491, %v7640
      %v7681 = vmul.f32 %v7492, %v7640
      %v7682 = vmul.f32 %v7493, %v7648
      %v7683 = vmul.f32 %v7494, %v7647
      %v7684 = vmul.f32 %v7495, %v7649
      %v7685 = vmul.f32 %v7496, %v7640
      %v7686 = vmul.f32 %v7497, %v7648
      %v7687 = vmul.f32 %v7498, %v7647
      %v7688 = vmul.f32 %v7499, %v7649
      %v7689 = vmul.f32 %v7500, %v7640
      %v7690 = vmul.f32 %v7501, %v7640
      %v7691 = vmul.f32 %v7502, %v7648
      %v7692 = vmul.f32 %v7503, %v7647
      %v7693 = vmul.f32 %v7504, %v7649
      %v7694 = vmul.f32 %v7505, %v7640
      %v7695 = vmul.f32 %v7506, %v7648
      %v7696 = vmul.f32 %v7507, %v7647
      %v7697 = vmul.f32 %v7508, %v7649
      %v7698 = vmul.f32 %v7509, %v7640
      %v7699 = vmul.f32 %v7510, %v7640
      %v7700 = vmul.f32 %v7511, %v7648
      %v7701 = vmul.f32 %v7512, %v7647
      %v7702 = vmul.f32 %v7513, %v7649
      %v7703 = vmul.f32 %v7514, %v7640
      %v7704 = vmul.f32 %v7515, %v7648
      %v7705 = vmul.f32 %v7516, %v7647
      %v7706 = vmul.f32 %v7517, %v7649
      %v7707 = vmul.f32 %v7518, %v7640
      %v7708 = vmul.f32 %v7519, %v7640
      %v7709 = vmul.f32 %v7520, %v7648
      %v7710 = vmul.f32 %v7521, %v7647
      %v7711 = vmul.f32 %v7522, %v7649
      %v7712 = vmul.f32 %v7523, %v7640
      %v7713 = vmul.f32 %v7524, %v7648
      %v7714 = vmul.f32 %v7525, %v7647
      %v7715 = vmul.f32 %v7526, %v7649
      %v7716 = vmul.f32 %v7527, %v7640
      %v7717 = vmul.f32 %v7528, %v7640
      %v7718 = vmul.f32 %v7529, %v7648
      %v7719 = vmul.f32 %v7530, %v7647
      %v7720 = vmul.f32 %v7531, %v7649
      %v7721 = vmul.f32 %v7532, %v7640
      %v7722 = vmul.f32 %v7533, %v7648
      %v7723 = vmul.f32 %v7534, %v7647
      %v7724 = vmul.f32 %v7535, %v7649
      %v7725 = vmul.f32 %v7536, %v7640
      %v7726 = vmul.f32 %v7537, %v7640
      %v7727 = vmul.f32 %v7538, %v7648
      %v7728 = vmul.f32 %v7539, %v7647
      %v7729 = vmul.f32 %v7540, %v7649
      %v7730 = vmul.f32 %v7541, %v7640
      %v7731 = vmul.f32 %v7542, %v7648
      %v7732 = vmul.f32 %v7543, %v7647
      %v7733 = vmul.f32 %v7544, %v7649
      %v7734 = vmul.f32 %v7545, %v7640
      %v7735 = vmul.f32 %v7546, %v7640
      %v7736 = vmul.f32 %v7547, %v7648
      %v7737 = vmul.f32 %v7548, %v7647
      %v7738 = vmul.f32 %v7549, %v7649
      %v7739 = vmul.f32 %v7550, %v7640
      %v7740 = vmul.f32 %v7551, %v7648
      %v7741 = vmul.f32 %v7552, %v7647
      %v7742 = vmul.f32 %v7553, %v7649
      %v7743 = vmul.f32 %v7554, %v7640
      %v7744 = vmul.f32 %v7555, %v7640
      %v7745 = vmul.f32 %v7556, %v7648
      %v7746 = vmul.f32 %v7557, %v7647
      %v7747 = vmul.f32 %v7558, %v7649
      %v7748 = vmul.f32 %v7559, %v7640
      %v7749 = vmul.f32 %v7560, %v7648
      %v7750 = vmul.f32 %v7561, %v7647
      %v7751 = vmul.f32 %v7562, %v7649
      %v7752 = vmul.f32 %v7563, %v7640
      %v7753 = vmul.f32 %v7564, %v7640
      %v7754 = vmul.f32 %v7565, %v7648
      %v7755 = vmul.f32 %v7566, %v7647
      %v7756 = vmul.f32 %v7567, %v7649
      %v7757 = vmul.f32 %v7568, %v7640
      %v7758 = vmul.f32 %v7569, %v7648
      %v7759 = vmul.f32 %v7570, %v7647
      %v7760 = vmul.f32 %v7571, %v7649
      %v7761 = vmul.f32 %v7572, %v7640
      %v7762 = vmul.f32 %v7573, %v7640
      %v7763 = vmul.f32 %v7574, %v7648
      %v7764 = vmul.f32 %v7575, %v7647
      %v7765 = vmul.f32 %v7576, %v7649
      %v7766 = vmul.f32 %v7577, %v7640
      %v7767 = vmul.f32 %v7578, %v7648
      %v7768 = vmul.f32 %v7579, %v7647
      %v7769 = vmul.f32 %v7580, %v7649
      %v7770 = vmul.f32 %v7581, %v7640
      %v7771 = vmul.f32 %v7582, %v7640
      %v7772 = vmul.f32 %v7583, %v7648
      %v7773 = vmul.f32 %v7584, %v7647
      %v7774 = vmul.f32 %v7585, %v7649
      %v7775 = vmul.f32 %v7586, %v7640
      %v7776 = vmul.f32 %v7587, %v7648
      %v7777 = vmul.f32 %v7588, %v7647
      %v7778 = vmul.f32 %v7589, %v7649
      %v7779 = vmul.f32 %v7590, %v7640
      %v7780 = vmul.f32 %v7591, %v7640
      %v7781 = vmul.f32 %v7592, %v7648
      %v7782 = vmul.f32 %v7593, %v7647
      %v7783 = vmul.f32 %v7594, %v7649
      %v7784 = vmul.f32 %v7595, %v7640
      %v7785 = vmul.f32 %v7596, %v7648
      %v7786 = vmul.f32 %v7597, %v7647
      %v7787 = vmul.f32 %v7598, %v7649
      %v7788 = vmul.f32 %v7599, %v7640
      %v7789 = vmul.f32 %v7600, %v7640
      %v7790 = vmul.f32 %v7601, %v7648
      %v7791 = vmul.f32 %v7602, %v7647
      %v7792 = vmul.f32 %v7603, %v7649
      %v7793 = vmul.f32 %v7604, %v7640
      %v7794 = vmul.f32 %v7605, %v7648
      %v7795 = vmul.f32 %v7606, %v7647
      %v7796 = vmul.f32 %v7607, %v7649
      %v7797 = vmul.f32 %v7608, %v7640
      %v7798 = vmul.f32 %v7609, %v7640
      %v7799 = vmul.f32 %v7610, %v7648
      %v7800 = vmul.f32 %v7611, %v7647
      %v7801 = vmul.f32 %v7612, %v7649
      %v7802 = vmul.f32 %v7613, %v7640
      %v7803 = vmul.f32 %v7614, %v7648
      %v7804 = vmul.f32 %v7615, %v7647
      %v7805 = vmul.f32 %v7616, %v7649
      %v7806 = vmul.f32 %v7617, %v7640
      %v7807 = vmul.f32 %v7618, %v7640
      %v7808 = vmul.f32 %v7619, %v7648
      %v7809 = vmul.f32 %v7620, %v7647
      %v7810 = vmul.f32 %v7621, %v7649
      %v7811 = vmul.f32 %v7622, %v7640
      %v7812 = vmul.f32 %v7623, %v7648
      %v7813 = vmul.f32 %v7624, %v7647
      %v7814 = vmul.f32 %v7625, %v7649
      %v7815 = vmul.f32 %v7626, %v7640
      %v7816 = vld [vmem:[%s3] sm:$0x1]
      %v7818 = vlaneseq
      %v7819 = vshrl.u32 %v7818, 7
      %v7820 = vsub.s32 0, %v7819
      %v7821 = vrot.slane %v7816, %v7820
      %v7822 = vcombine.high %v7821, %v7821
      %v7824 = vunpack.c.l.s4 1983009808
      %v7825 = vunpack.c.0.s8 %v7824
      %v7826 = vlaneseq
      %v7827 = vshrl.u32 %v7826, 7
      %v7828 = vsub.s32 %v7825, %v7827
      %v7829 = vrot.slane %v7821, %v7828
      %v7831 = vunpack.c.l.s4 1983009808
      %v7832 = vunpack.c.0.s8 %v7831
      %v7833 = vlaneseq
      %v7834 = vshrl.u32 %v7833, 7
      %v7835 = vsub.s32 %v7832, %v7834
      %v7836 = vrot.slane %v7822, %v7835
      %v7837 = vcombine.high %v7829, %v7829
      %v7838 = vcombine.high %v7836, %v7836
      %v7843 = vadd.f32 %v7654, %v7829
      %v7844 = vadd.f32 %v7655, %v7837
      %v7845 = vadd.f32 %v7656, %v7836
      %v7846 = vadd.f32 %v7657, %v7838
      %v7847 = vadd.f32 %v7658, %v7829
      %v7848 = vadd.f32 %v7659, %v7837
      %v7849 = vadd.f32 %v7660, %v7836
      %v7850 = vadd.f32 %v7661, %v7838
      %v7851 = vadd.f32 %v7662, %v7829
      %v7852 = vadd.f32 %v7663, %v7829
      %v7853 = vadd.f32 %v7664, %v7837
      %v7854 = vadd.f32 %v7665, %v7836
      %v7855 = vadd.f32 %v7666, %v7838
      %v7856 = vadd.f32 %v7667, %v7829
      %v7857 = vadd.f32 %v7668, %v7837
      %v7858 = vadd.f32 %v7669, %v7836
      %v7859 = vadd.f32 %v7670, %v7838
      %v7860 = vadd.f32 %v7671, %v7829
      %v7861 = vadd.f32 %v7672, %v7829
      %v7862 = vadd.f32 %v7673, %v7837
      %v7863 = vadd.f32 %v7674, %v7836
      %v7864 = vadd.f32 %v7675, %v7838
      %v7865 = vadd.f32 %v7676, %v7829
      %v7866 = vadd.f32 %v7677, %v7837
      %v7867 = vadd.f32 %v7678, %v7836
      %v7868 = vadd.f32 %v7679, %v7838
      %v7869 = vadd.f32 %v7680, %v7829
      %v7870 = vadd.f32 %v7681, %v7829
      %v7871 = vadd.f32 %v7682, %v7837
      %v7872 = vadd.f32 %v7683, %v7836
      %v7873 = vadd.f32 %v7684, %v7838
      %v7874 = vadd.f32 %v7685, %v7829
      %v7875 = vadd.f32 %v7686, %v7837
      %v7876 = vadd.f32 %v7687, %v7836
      %v7877 = vadd.f32 %v7688, %v7838
      %v7878 = vadd.f32 %v7689, %v7829
      %v7879 = vadd.f32 %v7690, %v7829
      %v7880 = vadd.f32 %v7691, %v7837
      %v7881 = vadd.f32 %v7692, %v7836
      %v7882 = vadd.f32 %v7693, %v7838
      %v7883 = vadd.f32 %v7694, %v7829
      %v7884 = vadd.f32 %v7695, %v7837
      %v7885 = vadd.f32 %v7696, %v7836
      %v7886 = vadd.f32 %v7697, %v7838
      %v7887 = vadd.f32 %v7698, %v7829
      %v7888 = vadd.f32 %v7699, %v7829
      %v7889 = vadd.f32 %v7700, %v7837
      %v7890 = vadd.f32 %v7701, %v7836
      %v7891 = vadd.f32 %v7702, %v7838
      %v7892 = vadd.f32 %v7703, %v7829
      %v7893 = vadd.f32 %v7704, %v7837
      %v7894 = vadd.f32 %v7705, %v7836
      %v7895 = vadd.f32 %v7706, %v7838
      %v7896 = vadd.f32 %v7707, %v7829
      %v7897 = vadd.f32 %v7708, %v7829
      %v7898 = vadd.f32 %v7709, %v7837
      %v7899 = vadd.f32 %v7710, %v7836
      %v7900 = vadd.f32 %v7711, %v7838
      %v7901 = vadd.f32 %v7712, %v7829
      %v7902 = vadd.f32 %v7713, %v7837
      %v7903 = vadd.f32 %v7714, %v7836
      %v7904 = vadd.f32 %v7715, %v7838
      %v7905 = vadd.f32 %v7716, %v7829
      %v7906 = vadd.f32 %v7717, %v7829
      %v7907 = vadd.f32 %v7718, %v7837
      %v7908 = vadd.f32 %v7719, %v7836
      %v7909 = vadd.f32 %v7720, %v7838
      %v7910 = vadd.f32 %v7721, %v7829
      %v7911 = vadd.f32 %v7722, %v7837
      %v7912 = vadd.f32 %v7723, %v7836
      %v7913 = vadd.f32 %v7724, %v7838
      %v7914 = vadd.f32 %v7725, %v7829
      %v7915 = vadd.f32 %v7726, %v7829
      %v7916 = vadd.f32 %v7727, %v7837
      %v7917 = vadd.f32 %v7728, %v7836
      %v7918 = vadd.f32 %v7729, %v7838
      %v7919 = vadd.f32 %v7730, %v7829
      %v7920 = vadd.f32 %v7731, %v7837
      %v7921 = vadd.f32 %v7732, %v7836
      %v7922 = vadd.f32 %v7733, %v7838
      %v7923 = vadd.f32 %v7734, %v7829
      %v7924 = vadd.f32 %v7735, %v7829
      %v7925 = vadd.f32 %v7736, %v7837
      %v7926 = vadd.f32 %v7737, %v7836
      %v7927 = vadd.f32 %v7738, %v7838
      %v7928 = vadd.f32 %v7739, %v7829
      %v7929 = vadd.f32 %v7740, %v7837
      %v7930 = vadd.f32 %v7741, %v7836
      %v7931 = vadd.f32 %v7742, %v7838
      %v7932 = vadd.f32 %v7743, %v7829
      %v7933 = vadd.f32 %v7744, %v7829
      %v7934 = vadd.f32 %v7745, %v7837
      %v7935 = vadd.f32 %v7746, %v7836
      %v7936 = vadd.f32 %v7747, %v7838
      %v7937 = vadd.f32 %v7748, %v7829
      %v7938 = vadd.f32 %v7749, %v7837
      %v7939 = vadd.f32 %v7750, %v7836
      %v7940 = vadd.f32 %v7751, %v7838
      %v7941 = vadd.f32 %v7752, %v7829
      %v7942 = vadd.f32 %v7753, %v7829
      %v7943 = vadd.f32 %v7754, %v7837
      %v7944 = vadd.f32 %v7755, %v7836
      %v7945 = vadd.f32 %v7756, %v7838
      %v7946 = vadd.f32 %v7757, %v7829
      %v7947 = vadd.f32 %v7758, %v7837
      %v7948 = vadd.f32 %v7759, %v7836
      %v7949 = vadd.f32 %v7760, %v7838
      %v7950 = vadd.f32 %v7761, %v7829
      %v7951 = vadd.f32 %v7762, %v7829
      %v7952 = vadd.f32 %v7763, %v7837
      %v7953 = vadd.f32 %v7764, %v7836
      %v7954 = vadd.f32 %v7765, %v7838
      %v7955 = vadd.f32 %v7766, %v7829
      %v7956 = vadd.f32 %v7767, %v7837
      %v7957 = vadd.f32 %v7768, %v7836
      %v7958 = vadd.f32 %v7769, %v7838
      %v7959 = vadd.f32 %v7770, %v7829
      %v7960 = vadd.f32 %v7771, %v7829
      %v7961 = vadd.f32 %v7772, %v7837
      %v7962 = vadd.f32 %v7773, %v7836
      %v7963 = vadd.f32 %v7774, %v7838
      %v7964 = vadd.f32 %v7775, %v7829
      %v7965 = vadd.f32 %v7776, %v7837
      %v7966 = vadd.f32 %v7777, %v7836
      %v7967 = vadd.f32 %v7778, %v7838
      %v7968 = vadd.f32 %v7779, %v7829
      %v7969 = vadd.f32 %v7780, %v7829
      %v7970 = vadd.f32 %v7781, %v7837
      %v7971 = vadd.f32 %v7782, %v7836
      %v7972 = vadd.f32 %v7783, %v7838
      %v7973 = vadd.f32 %v7784, %v7829
      %v7974 = vadd.f32 %v7785, %v7837
      %v7975 = vadd.f32 %v7786, %v7836
      %v7976 = vadd.f32 %v7787, %v7838
      %v7977 = vadd.f32 %v7788, %v7829
      %v7978 = vadd.f32 %v7789, %v7829
      %v7979 = vadd.f32 %v7790, %v7837
      %v7980 = vadd.f32 %v7791, %v7836
      %v7981 = vadd.f32 %v7792, %v7838
      %v7982 = vadd.f32 %v7793, %v7829
      %v7983 = vadd.f32 %v7794, %v7837
      %v7984 = vadd.f32 %v7795, %v7836
      %v7985 = vadd.f32 %v7796, %v7838
      %v7986 = vadd.f32 %v7797, %v7829
      %v7987 = vadd.f32 %v7798, %v7829
      %v7988 = vadd.f32 %v7799, %v7837
      %v7989 = vadd.f32 %v7800, %v7836
      %v7990 = vadd.f32 %v7801, %v7838
      %v7991 = vadd.f32 %v7802, %v7829
      %v7992 = vadd.f32 %v7803, %v7837
      %v7993 = vadd.f32 %v7804, %v7836
      %v7994 = vadd.f32 %v7805, %v7838
      %v7995 = vadd.f32 %v7806, %v7829
      %v7996 = vadd.f32 %v7807, %v7829
      %v7997 = vadd.f32 %v7808, %v7837
      %v7998 = vadd.f32 %v7809, %v7836
      %v7999 = vadd.f32 %v7810, %v7838
      %v8000 = vadd.f32 %v7811, %v7829
      %v8001 = vadd.f32 %v7812, %v7837
      %v8002 = vadd.f32 %v7813, %v7836
      %v8003 = vadd.f32 %v7814, %v7838
      %v8004 = vadd.f32 %v7815, %v7829
      %v8005 = vmax.f32 %v7843, 0.0
      %v8006 = vmax.f32 %v7844, 0.0
      %v8007 = vmax.f32 %v7845, 0.0
      %v8008 = vmax.f32 %v7846, 0.0
      %v8009 = vmax.f32 %v7847, 0.0
      %v8010 = vmax.f32 %v7848, 0.0
      %v8011 = vmax.f32 %v7849, 0.0
      %v8012 = vmax.f32 %v7850, 0.0
      %v8013 = vmax.f32 %v7851, 0.0
      %v8014 = vmax.f32 %v7852, 0.0
      %v8015 = vmax.f32 %v7853, 0.0
      %v8016 = vmax.f32 %v7854, 0.0
      %v8017 = vmax.f32 %v7855, 0.0
      %v8018 = vmax.f32 %v7856, 0.0
      %v8019 = vmax.f32 %v7857, 0.0
      %v8020 = vmax.f32 %v7858, 0.0
      %v8021 = vmax.f32 %v7859, 0.0
      %v8022 = vmax.f32 %v7860, 0.0
      %v8023 = vmax.f32 %v7861, 0.0
      %v8024 = vmax.f32 %v7862, 0.0
      %v8025 = vmax.f32 %v7863, 0.0
      %v8026 = vmax.f32 %v7864, 0.0
      %v8027 = vmax.f32 %v7865, 0.0
      %v8028 = vmax.f32 %v7866, 0.0
      %v8029 = vmax.f32 %v7867, 0.0
      %v8030 = vmax.f32 %v7868, 0.0
      %v8031 = vmax.f32 %v7869, 0.0
      %v8032 = vmax.f32 %v7870, 0.0
      %v8033 = vmax.f32 %v7871, 0.0
      %v8034 = vmax.f32 %v7872, 0.0
      %v8035 = vmax.f32 %v7873, 0.0
      %v8036 = vmax.f32 %v7874, 0.0
      %v8037 = vmax.f32 %v7875, 0.0
      %v8038 = vmax.f32 %v7876, 0.0
      %v8039 = vmax.f32 %v7877, 0.0
      %v8040 = vmax.f32 %v7878, 0.0
      %v8041 = vmax.f32 %v7879, 0.0
      %v8042 = vmax.f32 %v7880, 0.0
      %v8043 = vmax.f32 %v7881, 0.0
      %v8044 = vmax.f32 %v7882, 0.0
      %v8045 = vmax.f32 %v7883, 0.0
      %v8046 = vmax.f32 %v7884, 0.0
      %v8047 = vmax.f32 %v7885, 0.0
      %v8048 = vmax.f32 %v7886, 0.0
      %v8049 = vmax.f32 %v7887, 0.0
      %v8050 = vmax.f32 %v7888, 0.0
      %v8051 = vmax.f32 %v7889, 0.0
      %v8052 = vmax.f32 %v7890, 0.0
      %v8053 = vmax.f32 %v7891, 0.0
      %v8054 = vmax.f32 %v7892, 0.0
      %v8055 = vmax.f32 %v7893, 0.0
      %v8056 = vmax.f32 %v7894, 0.0
      %v8057 = vmax.f32 %v7895, 0.0
      %v8058 = vmax.f32 %v7896, 0.0
      %v8059 = vmax.f32 %v7897, 0.0
      %v8060 = vmax.f32 %v7898, 0.0
      %v8061 = vmax.f32 %v7899, 0.0
      %v8062 = vmax.f32 %v7900, 0.0
      %v8063 = vmax.f32 %v7901, 0.0
      %v8064 = vmax.f32 %v7902, 0.0
      %v8065 = vmax.f32 %v7903, 0.0
      %v8066 = vmax.f32 %v7904, 0.0
      %v8067 = vmax.f32 %v7905, 0.0
      %v8068 = vmax.f32 %v7906, 0.0
      %v8069 = vmax.f32 %v7907, 0.0
      %v8070 = vmax.f32 %v7908, 0.0
      %v8071 = vmax.f32 %v7909, 0.0
      %v8072 = vmax.f32 %v7910, 0.0
      %v8073 = vmax.f32 %v7911, 0.0
      %v8074 = vmax.f32 %v7912, 0.0
      %v8075 = vmax.f32 %v7913, 0.0
      %v8076 = vmax.f32 %v7914, 0.0
      %v8077 = vmax.f32 %v7915, 0.0
      %v8078 = vmax.f32 %v7916, 0.0
      %v8079 = vmax.f32 %v7917, 0.0
      %v8080 = vmax.f32 %v7918, 0.0
      %v8081 = vmax.f32 %v7919, 0.0
      %v8082 = vmax.f32 %v7920, 0.0
      %v8083 = vmax.f32 %v7921, 0.0
      %v8084 = vmax.f32 %v7922, 0.0
      %v8085 = vmax.f32 %v7923, 0.0
      %v8086 = vmax.f32 %v7924, 0.0
      %v8087 = vmax.f32 %v7925, 0.0
      %v8088 = vmax.f32 %v7926, 0.0
      %v8089 = vmax.f32 %v7927, 0.0
      %v8090 = vmax.f32 %v7928, 0.0
      %v8091 = vmax.f32 %v7929, 0.0
      %v8092 = vmax.f32 %v7930, 0.0
      %v8093 = vmax.f32 %v7931, 0.0
      %v8094 = vmax.f32 %v7932, 0.0
      %v8095 = vmax.f32 %v7933, 0.0
      %v8096 = vmax.f32 %v7934, 0.0
      %v8097 = vmax.f32 %v7935, 0.0
      %v8098 = vmax.f32 %v7936, 0.0
      %v8099 = vmax.f32 %v7937, 0.0
      %v8100 = vmax.f32 %v7938, 0.0
      %v8101 = vmax.f32 %v7939, 0.0
      %v8102 = vmax.f32 %v7940, 0.0
      %v8103 = vmax.f32 %v7941, 0.0
      %v8104 = vmax.f32 %v7942, 0.0
      %v8105 = vmax.f32 %v7943, 0.0
      %v8106 = vmax.f32 %v7944, 0.0
      %v8107 = vmax.f32 %v7945, 0.0
      %v8108 = vmax.f32 %v7946, 0.0
      %v8109 = vmax.f32 %v7947, 0.0
      %v8110 = vmax.f32 %v7948, 0.0
      %v8111 = vmax.f32 %v7949, 0.0
      %v8112 = vmax.f32 %v7950, 0.0
      %v8113 = vmax.f32 %v7951, 0.0
      %v8114 = vmax.f32 %v7952, 0.0
      %v8115 = vmax.f32 %v7953, 0.0
      %v8116 = vmax.f32 %v7954, 0.0
      %v8117 = vmax.f32 %v7955, 0.0
      %v8118 = vmax.f32 %v7956, 0.0
      %v8119 = vmax.f32 %v7957, 0.0
      %v8120 = vmax.f32 %v7958, 0.0
      %v8121 = vmax.f32 %v7959, 0.0
      %v8122 = vmax.f32 %v7960, 0.0
      %v8123 = vmax.f32 %v7961, 0.0
      %v8124 = vmax.f32 %v7962, 0.0
      %v8125 = vmax.f32 %v7963, 0.0
      %v8126 = vmax.f32 %v7964, 0.0
      %v8127 = vmax.f32 %v7965, 0.0
      %v8128 = vmax.f32 %v7966, 0.0
      %v8129 = vmax.f32 %v7967, 0.0
      %v8130 = vmax.f32 %v7968, 0.0
      %v8131 = vmax.f32 %v7969, 0.0
      %v8132 = vmax.f32 %v7970, 0.0
      %v8133 = vmax.f32 %v7971, 0.0
      %v8134 = vmax.f32 %v7972, 0.0
      %v8135 = vmax.f32 %v7973, 0.0
      %v8136 = vmax.f32 %v7974, 0.0
      %v8137 = vmax.f32 %v7975, 0.0
      %v8138 = vmax.f32 %v7976, 0.0
      %v8139 = vmax.f32 %v7977, 0.0
      %v8140 = vmax.f32 %v7978, 0.0
      %v8141 = vmax.f32 %v7979, 0.0
      %v8142 = vmax.f32 %v7980, 0.0
      %v8143 = vmax.f32 %v7981, 0.0
      %v8144 = vmax.f32 %v7982, 0.0
      %v8145 = vmax.f32 %v7983, 0.0
      %v8146 = vmax.f32 %v7984, 0.0
      %v8147 = vmax.f32 %v7985, 0.0
      %v8148 = vmax.f32 %v7986, 0.0
      %v8149 = vmax.f32 %v7987, 0.0
      %v8150 = vmax.f32 %v7988, 0.0
      %v8151 = vmax.f32 %v7989, 0.0
      %v8152 = vmax.f32 %v7990, 0.0
      %v8153 = vmax.f32 %v7991, 0.0
      %v8154 = vmax.f32 %v7992, 0.0
      %v8155 = vmax.f32 %v7993, 0.0
      %v8156 = vmax.f32 %v7994, 0.0
      %v8157 = vmax.f32 %v7995, 0.0
      %v8158 = vmax.f32 %v7996, 0.0
      %v8159 = vmax.f32 %v7997, 0.0
      %v8160 = vmax.f32 %v7998, 0.0
      %v8161 = vmax.f32 %v7999, 0.0
      %v8162 = vmax.f32 %v8000, 0.0
      %v8163 = vmax.f32 %v8001, 0.0
      %v8164 = vmax.f32 %v8002, 0.0
      %v8165 = vmax.f32 %v8003, 0.0
      %v8166 = vmax.f32 %v8004, 0.0
      %v8167 = vlaneseq
      %v8168 = vshrl.u32 %v8167, 7
      %v8169 = vadd.s32 %v8168, 8
      %v8170 = vadd.s32 %v8168, 16
      %s8171 = ssub.s32 %s305, 1
      %v8172 = vstv %s8171
      %v8173 = vadd.s32 %v8172, 1
      %v8174 = vadd.s32 %v8172, 2
      %v8175 = vadd.s32 %v8172, 3
      %v8176 = vadd.s32 %v8172, 4
      %v8177 = vadd.s32 %v8172, 5
      %v8178 = vadd.s32 %v8172, 6
      %v8179 = vadd.s32 %v8172, 7
      %v8180 = vadd.s32 %v8172, 8
      %v8181 = vadd.s32 %v8172, 9
      %v8182 = vadd.s32 %v8172, 10
      %v8183 = vadd.s32 %v8172, 11
      %v8184 = vadd.s32 %v8172, 12
      %v8185 = vadd.s32 %v8172, 13
      %v8186 = vadd.s32 %v8172, 14
      %v8187 = vadd.s32 %v8172, 15
      %v8188 = vadd.s32 %v8172, 16
      %v8189 = vadd.s32 %v8172, 17
      %vm8190 = vcmp.ge.s32.totalorder %v8172, 0
      %vm8191 = vcmp.ge.s32.totalorder %v8173, 0
      %vm8192 = vcmp.ge.s32.totalorder %v8174, 0
      %vm8193 = vcmp.ge.s32.totalorder %v8175, 0
      %vm8194 = vcmp.ge.s32.totalorder %v8176, 0
      %vm8195 = vcmp.ge.s32.totalorder %v8177, 0
      %vm8196 = vcmp.ge.s32.totalorder %v8178, 0
      %vm8197 = vcmp.ge.s32.totalorder %v8179, 0
      %vm8198 = vcmp.ge.s32.totalorder %v8180, 0
      %vm8199 = vcmp.ge.s32.totalorder %v8181, 0
      %vm8200 = vcmp.ge.s32.totalorder %v8182, 0
      %vm8201 = vcmp.ge.s32.totalorder %v8183, 0
      %vm8202 = vcmp.ge.s32.totalorder %v8184, 0
      %vm8203 = vcmp.ge.s32.totalorder %v8185, 0
      %vm8204 = vcmp.ge.s32.totalorder %v8186, 0
      %vm8205 = vcmp.ge.s32.totalorder %v8187, 0
      %vm8206 = vcmp.ge.s32.totalorder %v8188, 0
      %vm8207 = vcmp.ge.s32.totalorder %v8189, 0
      %vm8208 = vcmp.lt.s32.totalorder %v8172, 16
      %vm8209 = vcmp.lt.s32.totalorder %v8173, 16
      %vm8210 = vcmp.lt.s32.totalorder %v8174, 16
      %vm8211 = vcmp.lt.s32.totalorder %v8175, 16
      %vm8212 = vcmp.lt.s32.totalorder %v8176, 16
      %vm8213 = vcmp.lt.s32.totalorder %v8177, 16
      %vm8214 = vcmp.lt.s32.totalorder %v8178, 16
      %vm8215 = vcmp.lt.s32.totalorder %v8179, 16
      %vm8216 = vcmp.lt.s32.totalorder %v8180, 16
      %vm8217 = vcmp.lt.s32.totalorder %v8181, 16
      %vm8218 = vcmp.lt.s32.totalorder %v8182, 16
      %vm8219 = vcmp.lt.s32.totalorder %v8183, 16
      %vm8220 = vcmp.lt.s32.totalorder %v8184, 16
      %vm8221 = vcmp.lt.s32.totalorder %v8185, 16
      %vm8222 = vcmp.lt.s32.totalorder %v8186, 16
      %vm8223 = vcmp.lt.s32.totalorder %v8187, 16
      %vm8224 = vcmp.lt.s32.totalorder %v8188, 16
      %vm8225 = vcmp.lt.s32.totalorder %v8189, 16
      %vm8226 = vmand %vm8190, %vm8208
      %vm8227 = vmand %vm8191, %vm8209
      %vm8228 = vmand %vm8192, %vm8210
      %vm8229 = vmand %vm8193, %vm8211
      %vm8230 = vmand %vm8194, %vm8212
      %vm8231 = vmand %vm8195, %vm8213
      %vm8232 = vmand %vm8196, %vm8214
      %vm8233 = vmand %vm8197, %vm8215
      %vm8234 = vmand %vm8198, %vm8216
      %vm8235 = vmand %vm8199, %vm8217
      %vm8236 = vmand %vm8200, %vm8218
      %vm8237 = vmand %vm8201, %vm8219
      %vm8238 = vmand %vm8202, %vm8220
      %vm8239 = vmand %vm8203, %vm8221
      %vm8240 = vmand %vm8204, %vm8222
      %vm8241 = vmand %vm8205, %vm8223
      %vm8242 = vmand %vm8206, %vm8224
      %vm8243 = vmand %vm8207, %vm8225
      %vm8244 = vcmp.ge.s32.totalorder %v8168, 1
      %vm8245 = vcmp.ge.s32.totalorder %v8169, 1
      %vm8246 = vcmp.ge.s32.totalorder %v8170, 1
      %vm8247 = vmand %vm8226, %vm8244
      %vm8248 = vmand %vm8226, %vm8245
      %vm8249 = vmand %vm8226, %vm8246
      %vm8250 = vmand %vm8227, %vm8244
      %vm8251 = vmand %vm8227, %vm8245
      %vm8252 = vmand %vm8227, %vm8246
      %vm8253 = vmand %vm8228, %vm8244
      %vm8254 = vmand %vm8228, %vm8245
      %vm8255 = vmand %vm8228, %vm8246
      %vm8256 = vmand %vm8229, %vm8244
      %vm8257 = vmand %vm8229, %vm8245
      %vm8258 = vmand %vm8229, %vm8246
      %vm8259 = vmand %vm8230, %vm8244
      %vm8260 = vmand %vm8230, %vm8245
      %vm8261 = vmand %vm8230, %vm8246
      %vm8262 = vmand %vm8231, %vm8244
      %vm8263 = vmand %vm8231, %vm8245
      %vm8264 = vmand %vm8231, %vm8246
      %vm8265 = vmand %vm8232, %vm8244
      %vm8266 = vmand %vm8232, %vm8245
      %vm8267 = vmand %vm8232, %vm8246
      %vm8268 = vmand %vm8233, %vm8244
      %vm8269 = vmand %vm8233, %vm8245
      %vm8270 = vmand %vm8233, %vm8246
      %vm8271 = vmand %vm8234, %vm8244
      %vm8272 = vmand %vm8234, %vm8245
      %vm8273 = vmand %vm8234, %vm8246
      %vm8274 = vmand %vm8235, %vm8244
      %vm8275 = vmand %vm8235, %vm8245
      %vm8276 = vmand %vm8235, %vm8246
      %vm8277 = vmand %vm8236, %vm8244
      %vm8278 = vmand %vm8236, %vm8245
      %vm8279 = vmand %vm8236, %vm8246
      %vm8280 = vmand %vm8237, %vm8244
      %vm8281 = vmand %vm8237, %vm8245
      %vm8282 = vmand %vm8237, %vm8246
      %vm8283 = vmand %vm8238, %vm8244
      %vm8284 = vmand %vm8238, %vm8245
      %vm8285 = vmand %vm8238, %vm8246
      %vm8286 = vmand %vm8239, %vm8244
      %vm8287 = vmand %vm8239, %vm8245
      %vm8288 = vmand %vm8239, %vm8246
      %vm8289 = vmand %vm8240, %vm8244
      %vm8290 = vmand %vm8240, %vm8245
      %vm8291 = vmand %vm8240, %vm8246
      %vm8292 = vmand %vm8241, %vm8244
      %vm8293 = vmand %vm8241, %vm8245
      %vm8294 = vmand %vm8241, %vm8246
      %vm8295 = vmand %vm8242, %vm8244
      %vm8296 = vmand %vm8242, %vm8245
      %vm8297 = vmand %vm8242, %vm8246
      %vm8298 = vmand %vm8243, %vm8244
      %vm8299 = vmand %vm8243, %vm8245
      %vm8300 = vmand %vm8243, %vm8246
      %vm8301 = vcmp.le.s32.totalorder %v8168, 16
      %vm8302 = vcmp.le.s32.totalorder %v8169, 16
      %vm8303 = vcmp.le.s32.totalorder %v8170, 16
      %vm8304 = vmand %vm8247, %vm8301
      %vm8305 = vmand %vm8248, %vm8302
      %vm8306 = vmand %vm8249, %vm8303
      %vm8307 = vmand %vm8250, %vm8301
      %vm8308 = vmand %vm8251, %vm8302
      %vm8309 = vmand %vm8252, %vm8303
      %vm8310 = vmand %vm8253, %vm8301
      %vm8311 = vmand %vm8254, %vm8302
      %vm8312 = vmand %vm8255, %vm8303
      %vm8313 = vmand %vm8256, %vm8301
      %vm8314 = vmand %vm8257, %vm8302
      %vm8315 = vmand %vm8258, %vm8303
      %vm8316 = vmand %vm8259, %vm8301
      %vm8317 = vmand %vm8260, %vm8302
      %vm8318 = vmand %vm8261, %vm8303
      %vm8319 = vmand %vm8262, %vm8301
      %vm8320 = vmand %vm8263, %vm8302
      %vm8321 = vmand %vm8264, %vm8303
      %vm8322 = vmand %vm8265, %vm8301
      %vm8323 = vmand %vm8266, %vm8302
      %vm8324 = vmand %vm8267, %vm8303
      %vm8325 = vmand %vm8268, %vm8301
      %vm8326 = vmand %vm8269, %vm8302
      %vm8327 = vmand %vm8270, %vm8303
      %vm8328 = vmand %vm8271, %vm8301
      %vm8329 = vmand %vm8272, %vm8302
      %vm8330 = vmand %vm8273, %vm8303
      %vm8331 = vmand %vm8274, %vm8301
      %vm8332 = vmand %vm8275, %vm8302
      %vm8333 = vmand %vm8276, %vm8303
      %vm8334 = vmand %vm8277, %vm8301
      %vm8335 = vmand %vm8278, %vm8302
      %vm8336 = vmand %vm8279, %vm8303
      %vm8337 = vmand %vm8280, %vm8301
      %vm8338 = vmand %vm8281, %vm8302
      %vm8339 = vmand %vm8282, %vm8303
      %vm8340 = vmand %vm8283, %vm8301
      %vm8341 = vmand %vm8284, %vm8302
      %vm8342 = vmand %vm8285, %vm8303
      %vm8343 = vmand %vm8286, %vm8301
      %vm8344 = vmand %vm8287, %vm8302
      %vm8345 = vmand %vm8288, %vm8303
      %vm8346 = vmand %vm8289, %vm8301
      %vm8347 = vmand %vm8290, %vm8302
      %vm8348 = vmand %vm8291, %vm8303
      %vm8349 = vmand %vm8292, %vm8301
      %vm8350 = vmand %vm8293, %vm8302
      %vm8351 = vmand %vm8294, %vm8303
      %vm8352 = vmand %vm8295, %vm8301
      %vm8353 = vmand %vm8296, %vm8302
      %vm8354 = vmand %vm8297, %vm8303
      %vm8355 = vmand %vm8298, %vm8301
      %vm8356 = vmand %vm8299, %vm8302
      %vm8357 = vmand %vm8300, %vm8303
      %v8358 = vsel %vm8304, 1, 0
      %v8359 = vsel %vm8305, 1, 0
      %v8360 = vsel %vm8306, 1, 0
      %v8361 = vsel %vm8307, 1, 0
      %v8362 = vsel %vm8308, 1, 0
      %v8363 = vsel %vm8309, 1, 0
      %v8364 = vsel %vm8310, 1, 0
      %v8365 = vsel %vm8311, 1, 0
      %v8366 = vsel %vm8312, 1, 0
      %v8367 = vsel %vm8313, 1, 0
      %v8368 = vsel %vm8314, 1, 0
      %v8369 = vsel %vm8315, 1, 0
      %v8370 = vsel %vm8316, 1, 0
      %v8371 = vsel %vm8317, 1, 0
      %v8372 = vsel %vm8318, 1, 0
      %v8373 = vsel %vm8319, 1, 0
      %v8374 = vsel %vm8320, 1, 0
      %v8375 = vsel %vm8321, 1, 0
      %v8376 = vsel %vm8322, 1, 0
      %v8377 = vsel %vm8323, 1, 0
      %v8378 = vsel %vm8324, 1, 0
      %v8379 = vsel %vm8325, 1, 0
      %v8380 = vsel %vm8326, 1, 0
      %v8381 = vsel %vm8327, 1, 0
      %v8382 = vsel %vm8328, 1, 0
      %v8383 = vsel %vm8329, 1, 0
      %v8384 = vsel %vm8330, 1, 0
      %v8385 = vsel %vm8331, 1, 0
      %v8386 = vsel %vm8332, 1, 0
      %v8387 = vsel %vm8333, 1, 0
      %v8388 = vsel %vm8334, 1, 0
      %v8389 = vsel %vm8335, 1, 0
      %v8390 = vsel %vm8336, 1, 0
      %v8391 = vsel %vm8337, 1, 0
      %v8392 = vsel %vm8338, 1, 0
      %v8393 = vsel %vm8339, 1, 0
      %v8394 = vsel %vm8340, 1, 0
      %v8395 = vsel %vm8341, 1, 0
      %v8396 = vsel %vm8342, 1, 0
      %v8397 = vsel %vm8343, 1, 0
      %v8398 = vsel %vm8344, 1, 0
      %v8399 = vsel %vm8345, 1, 0
      %v8400 = vsel %vm8346, 1, 0
      %v8401 = vsel %vm8347, 1, 0
      %v8402 = vsel %vm8348, 1, 0
      %v8403 = vsel %vm8349, 1, 0
      %v8404 = vsel %vm8350, 1, 0
      %v8405 = vsel %vm8351, 1, 0
      %v8406 = vsel %vm8352, 1, 0
      %v8407 = vsel %vm8353, 1, 0
      %v8408 = vsel %vm8354, 1, 0
      %v8409 = vsel %vm8355, 1, 0
      %v8410 = vsel %vm8356, 1, 0
      %v8411 = vsel %vm8357, 1, 0
      %vm8412 = vcmp.eq.s32.totalorder %v8358, 1
      %vm8413 = vcmp.eq.s32.totalorder %v8359, 1
      %vm8414 = vcmp.eq.s32.totalorder %v8360, 1
      %vm8415 = vcmp.eq.s32.totalorder %v8361, 1
      %vm8416 = vcmp.eq.s32.totalorder %v8362, 1
      %vm8417 = vcmp.eq.s32.totalorder %v8363, 1
      %vm8418 = vcmp.eq.s32.totalorder %v8364, 1
      %vm8419 = vcmp.eq.s32.totalorder %v8365, 1
      %vm8420 = vcmp.eq.s32.totalorder %v8366, 1
      %vm8421 = vcmp.eq.s32.totalorder %v8367, 1
      %vm8422 = vcmp.eq.s32.totalorder %v8368, 1
      %vm8423 = vcmp.eq.s32.totalorder %v8369, 1
      %vm8424 = vcmp.eq.s32.totalorder %v8370, 1
      %vm8425 = vcmp.eq.s32.totalorder %v8371, 1
      %vm8426 = vcmp.eq.s32.totalorder %v8372, 1
      %vm8427 = vcmp.eq.s32.totalorder %v8373, 1
      %vm8428 = vcmp.eq.s32.totalorder %v8374, 1
      %vm8429 = vcmp.eq.s32.totalorder %v8375, 1
      %vm8430 = vcmp.eq.s32.totalorder %v8376, 1
      %vm8431 = vcmp.eq.s32.totalorder %v8377, 1
      %vm8432 = vcmp.eq.s32.totalorder %v8378, 1
      %vm8433 = vcmp.eq.s32.totalorder %v8379, 1
      %vm8434 = vcmp.eq.s32.totalorder %v8380, 1
      %vm8435 = vcmp.eq.s32.totalorder %v8381, 1
      %vm8436 = vcmp.eq.s32.totalorder %v8382, 1
      %vm8437 = vcmp.eq.s32.totalorder %v8383, 1
      %vm8438 = vcmp.eq.s32.totalorder %v8384, 1
      %vm8439 = vcmp.eq.s32.totalorder %v8385, 1
      %vm8440 = vcmp.eq.s32.totalorder %v8386, 1
      %vm8441 = vcmp.eq.s32.totalorder %v8387, 1
      %vm8442 = vcmp.eq.s32.totalorder %v8388, 1
      %vm8443 = vcmp.eq.s32.totalorder %v8389, 1
      %vm8444 = vcmp.eq.s32.totalorder %v8390, 1
      %vm8445 = vcmp.eq.s32.totalorder %v8391, 1
      %vm8446 = vcmp.eq.s32.totalorder %v8392, 1
      %vm8447 = vcmp.eq.s32.totalorder %v8393, 1
      %vm8448 = vcmp.eq.s32.totalorder %v8394, 1
      %vm8449 = vcmp.eq.s32.totalorder %v8395, 1
      %vm8450 = vcmp.eq.s32.totalorder %v8396, 1
      %vm8451 = vcmp.eq.s32.totalorder %v8397, 1
      %vm8452 = vcmp.eq.s32.totalorder %v8398, 1
      %vm8453 = vcmp.eq.s32.totalorder %v8399, 1
      %vm8454 = vcmp.eq.s32.totalorder %v8400, 1
      %vm8455 = vcmp.eq.s32.totalorder %v8401, 1
      %vm8456 = vcmp.eq.s32.totalorder %v8402, 1
      %vm8457 = vcmp.eq.s32.totalorder %v8403, 1
      %vm8458 = vcmp.eq.s32.totalorder %v8404, 1
      %vm8459 = vcmp.eq.s32.totalorder %v8405, 1
      %vm8460 = vcmp.eq.s32.totalorder %v8406, 1
      %vm8461 = vcmp.eq.s32.totalorder %v8407, 1
      %vm8462 = vcmp.eq.s32.totalorder %v8408, 1
      %vm8463 = vcmp.eq.s32.totalorder %v8409, 1
      %vm8464 = vcmp.eq.s32.totalorder %v8410, 1
      %vm8465 = vcmp.eq.s32.totalorder %v8411, 1
      %v8628 = vcombine.low %v8005, %v8006
      %v8629 = vcombine.low %v8007, %v8008
      %v8631 = vunpack.c.l.s4 1983009808
      %v8632 = vunpack.c.0.s8 %v8631
      %v8633 = vlaneseq
      %v8634 = vshrl.u32 %v8633, 7
      %v8635 = vsub.s32 %v8632, %v8634
      %v8636 = vrot.slane %v8628, %v8635
      %v8638 = vunpack.c.l.s4 1983009808
      %v8639 = vunpack.c.0.s8 %v8638
      %v8640 = vlaneseq
      %v8641 = vshrl.u32 %v8640, 7
      %v8642 = vsub.s32 %v8639, %v8641
      %v8643 = vrot.slane %v8629, %v8642
      %v8644 = vcombine.low %v8636, %v8643
      %v8645 = vcombine.low %v8009, %v8010
      %v8646 = vcombine.low %v8011, %v8012
      %v8648 = vunpack.c.l.s4 1983009808
      %v8649 = vunpack.c.0.s8 %v8648
      %v8650 = vlaneseq
      %v8651 = vshrl.u32 %v8650, 7
      %v8652 = vsub.s32 %v8649, %v8651
      %v8653 = vrot.slane %v8645, %v8652
      %v8655 = vunpack.c.l.s4 1983009808
      %v8656 = vunpack.c.0.s8 %v8655
      %v8657 = vlaneseq
      %v8658 = vshrl.u32 %v8657, 7
      %v8659 = vsub.s32 %v8656, %v8658
      %v8660 = vrot.slane %v8646, %v8659
      %v8661 = vcombine.low %v8653, %v8660
      %v8663 = vunpack.c.l.s4 1983009808
      %v8664 = vunpack.c.0.s8 %v8663
      %v8665 = vlaneseq
      %v8666 = vshrl.u32 %v8665, 7
      %v8667 = vsub.s32 %v8664, %v8666
      %v8668 = vrot.slane %v8013, %v8667
      %v8669 = vcombine.low %v8014, %v8015
      %v8670 = vcombine.low %v8016, %v8017
      %v8672 = vunpack.c.l.s4 1983009808
      %v8673 = vunpack.c.0.s8 %v8672
      %v8674 = vlaneseq
      %v8675 = vshrl.u32 %v8674, 7
      %v8676 = vsub.s32 %v8673, %v8675
      %v8677 = vrot.slane %v8669, %v8676
      %v8679 = vunpack.c.l.s4 1983009808
      %v8680 = vunpack.c.0.s8 %v8679
      %v8681 = vlaneseq
      %v8682 = vshrl.u32 %v8681, 7
      %v8683 = vsub.s32 %v8680, %v8682
      %v8684 = vrot.slane %v8670, %v8683
      %v8685 = vcombine.low %v8677, %v8684
      %v8686 = vcombine.low %v8018, %v8019
      %v8687 = vcombine.low %v8020, %v8021
      %v8689 = vunpack.c.l.s4 1983009808
      %v8690 = vunpack.c.0.s8 %v8689
      %v8691 = vlaneseq
      %v8692 = vshrl.u32 %v8691, 7
      %v8693 = vsub.s32 %v8690, %v8692
      %v8694 = vrot.slane %v8686, %v8693
      %v8696 = vunpack.c.l.s4 1983009808
      %v8697 = vunpack.c.0.s8 %v8696
      %v8698 = vlaneseq
      %v8699 = vshrl.u32 %v8698, 7
      %v8700 = vsub.s32 %v8697, %v8699
      %v8701 = vrot.slane %v8687, %v8700
      %v8702 = vcombine.low %v8694, %v8701
      %v8704 = vunpack.c.l.s4 1983009808
      %v8705 = vunpack.c.0.s8 %v8704
      %v8706 = vlaneseq
      %v8707 = vshrl.u32 %v8706, 7
      %v8708 = vsub.s32 %v8705, %v8707
      %v8709 = vrot.slane %v8022, %v8708
      %v8710 = vcombine.low %v8023, %v8024
      %v8711 = vcombine.low %v8025, %v8026
      %v8713 = vunpack.c.l.s4 1983009808
      %v8714 = vunpack.c.0.s8 %v8713
      %v8715 = vlaneseq
      %v8716 = vshrl.u32 %v8715, 7
      %v8717 = vsub.s32 %v8714, %v8716
      %v8718 = vrot.slane %v8710, %v8717
      %v8720 = vunpack.c.l.s4 1983009808
      %v8721 = vunpack.c.0.s8 %v8720
      %v8722 = vlaneseq
      %v8723 = vshrl.u32 %v8722, 7
      %v8724 = vsub.s32 %v8721, %v8723
      %v8725 = vrot.slane %v8711, %v8724
      %v8726 = vcombine.low %v8718, %v8725
      %v8727 = vcombine.low %v8027, %v8028
      %v8728 = vcombine.low %v8029, %v8030
      %v8730 = vunpack.c.l.s4 1983009808
      %v8731 = vunpack.c.0.s8 %v8730
      %v8732 = vlaneseq
      %v8733 = vshrl.u32 %v8732, 7
      %v8734 = vsub.s32 %v8731, %v8733
      %v8735 = vrot.slane %v8727, %v8734
      %v8737 = vunpack.c.l.s4 1983009808
      %v8738 = vunpack.c.0.s8 %v8737
      %v8739 = vlaneseq
      %v8740 = vshrl.u32 %v8739, 7
      %v8741 = vsub.s32 %v8738, %v8740
      %v8742 = vrot.slane %v8728, %v8741
      %v8743 = vcombine.low %v8735, %v8742
      %v8745 = vunpack.c.l.s4 1983009808
      %v8746 = vunpack.c.0.s8 %v8745
      %v8747 = vlaneseq
      %v8748 = vshrl.u32 %v8747, 7
      %v8749 = vsub.s32 %v8746, %v8748
      %v8750 = vrot.slane %v8031, %v8749
      %v8751 = vcombine.low %v8032, %v8033
      %v8752 = vcombine.low %v8034, %v8035
      %v8754 = vunpack.c.l.s4 1983009808
      %v8755 = vunpack.c.0.s8 %v8754
      %v8756 = vlaneseq
      %v8757 = vshrl.u32 %v8756, 7
      %v8758 = vsub.s32 %v8755, %v8757
      %v8759 = vrot.slane %v8751, %v8758
      %v8761 = vunpack.c.l.s4 1983009808
      %v8762 = vunpack.c.0.s8 %v8761
      %v8763 = vlaneseq
      %v8764 = vshrl.u32 %v8763, 7
      %v8765 = vsub.s32 %v8762, %v8764
      %v8766 = vrot.slane %v8752, %v8765
      %v8767 = vcombine.low %v8759, %v8766
      %v8768 = vcombine.low %v8036, %v8037
      %v8769 = vcombine.low %v8038, %v8039
      %v8771 = vunpack.c.l.s4 1983009808
      %v8772 = vunpack.c.0.s8 %v8771
      %v8773 = vlaneseq
      %v8774 = vshrl.u32 %v8773, 7
      %v8775 = vsub.s32 %v8772, %v8774
      %v8776 = vrot.slane %v8768, %v8775
      %v8778 = vunpack.c.l.s4 1983009808
      %v8779 = vunpack.c.0.s8 %v8778
      %v8780 = vlaneseq
      %v8781 = vshrl.u32 %v8780, 7
      %v8782 = vsub.s32 %v8779, %v8781
      %v8783 = vrot.slane %v8769, %v8782
      %v8784 = vcombine.low %v8776, %v8783
      %v8786 = vunpack.c.l.s4 1983009808
      %v8787 = vunpack.c.0.s8 %v8786
      %v8788 = vlaneseq
      %v8789 = vshrl.u32 %v8788, 7
      %v8790 = vsub.s32 %v8787, %v8789
      %v8791 = vrot.slane %v8040, %v8790
      %v8792 = vcombine.low %v8041, %v8042
      %v8793 = vcombine.low %v8043, %v8044
      %v8795 = vunpack.c.l.s4 1983009808
      %v8796 = vunpack.c.0.s8 %v8795
      %v8797 = vlaneseq
      %v8798 = vshrl.u32 %v8797, 7
      %v8799 = vsub.s32 %v8796, %v8798
      %v8800 = vrot.slane %v8792, %v8799
      %v8802 = vunpack.c.l.s4 1983009808
      %v8803 = vunpack.c.0.s8 %v8802
      %v8804 = vlaneseq
      %v8805 = vshrl.u32 %v8804, 7
      %v8806 = vsub.s32 %v8803, %v8805
      %v8807 = vrot.slane %v8793, %v8806
      %v8808 = vcombine.low %v8800, %v8807
      %v8809 = vcombine.low %v8045, %v8046
      %v8810 = vcombine.low %v8047, %v8048
      %v8812 = vunpack.c.l.s4 1983009808
      %v8813 = vunpack.c.0.s8 %v8812
      %v8814 = vlaneseq
      %v8815 = vshrl.u32 %v8814, 7
      %v8816 = vsub.s32 %v8813, %v8815
      %v8817 = vrot.slane %v8809, %v8816
      %v8819 = vunpack.c.l.s4 1983009808
      %v8820 = vunpack.c.0.s8 %v8819
      %v8821 = vlaneseq
      %v8822 = vshrl.u32 %v8821, 7
      %v8823 = vsub.s32 %v8820, %v8822
      %v8824 = vrot.slane %v8810, %v8823
      %v8825 = vcombine.low %v8817, %v8824
      %v8827 = vunpack.c.l.s4 1983009808
      %v8828 = vunpack.c.0.s8 %v8827
      %v8829 = vlaneseq
      %v8830 = vshrl.u32 %v8829, 7
      %v8831 = vsub.s32 %v8828, %v8830
      %v8832 = vrot.slane %v8049, %v8831
      %v8833 = vcombine.low %v8050, %v8051
      %v8834 = vcombine.low %v8052, %v8053
      %v8836 = vunpack.c.l.s4 1983009808
      %v8837 = vunpack.c.0.s8 %v8836
      %v8838 = vlaneseq
      %v8839 = vshrl.u32 %v8838, 7
      %v8840 = vsub.s32 %v8837, %v8839
      %v8841 = vrot.slane %v8833, %v8840
      %v8843 = vunpack.c.l.s4 1983009808
      %v8844 = vunpack.c.0.s8 %v8843
      %v8845 = vlaneseq
      %v8846 = vshrl.u32 %v8845, 7
      %v8847 = vsub.s32 %v8844, %v8846
      %v8848 = vrot.slane %v8834, %v8847
      %v8849 = vcombine.low %v8841, %v8848
      %v8850 = vcombine.low %v8054, %v8055
      %v8851 = vcombine.low %v8056, %v8057
      %v8853 = vunpack.c.l.s4 1983009808
      %v8854 = vunpack.c.0.s8 %v8853
      %v8855 = vlaneseq
      %v8856 = vshrl.u32 %v8855, 7
      %v8857 = vsub.s32 %v8854, %v8856
      %v8858 = vrot.slane %v8850, %v8857
      %v8860 = vunpack.c.l.s4 1983009808
      %v8861 = vunpack.c.0.s8 %v8860
      %v8862 = vlaneseq
      %v8863 = vshrl.u32 %v8862, 7
      %v8864 = vsub.s32 %v8861, %v8863
      %v8865 = vrot.slane %v8851, %v8864
      %v8866 = vcombine.low %v8858, %v8865
      %v8868 = vunpack.c.l.s4 1983009808
      %v8869 = vunpack.c.0.s8 %v8868
      %v8870 = vlaneseq
      %v8871 = vshrl.u32 %v8870, 7
      %v8872 = vsub.s32 %v8869, %v8871
      %v8873 = vrot.slane %v8058, %v8872
      %v8874 = vcombine.low %v8059, %v8060
      %v8875 = vcombine.low %v8061, %v8062
      %v8877 = vunpack.c.l.s4 1983009808
      %v8878 = vunpack.c.0.s8 %v8877
      %v8879 = vlaneseq
      %v8880 = vshrl.u32 %v8879, 7
      %v8881 = vsub.s32 %v8878, %v8880
      %v8882 = vrot.slane %v8874, %v8881
      %v8884 = vunpack.c.l.s4 1983009808
      %v8885 = vunpack.c.0.s8 %v8884
      %v8886 = vlaneseq
      %v8887 = vshrl.u32 %v8886, 7
      %v8888 = vsub.s32 %v8885, %v8887
      %v8889 = vrot.slane %v8875, %v8888
      %v8890 = vcombine.low %v8882, %v8889
      %v8891 = vcombine.low %v8063, %v8064
      %v8892 = vcombine.low %v8065, %v8066
      %v8894 = vunpack.c.l.s4 1983009808
      %v8895 = vunpack.c.0.s8 %v8894
      %v8896 = vlaneseq
      %v8897 = vshrl.u32 %v8896, 7
      %v8898 = vsub.s32 %v8895, %v8897
      %v8899 = vrot.slane %v8891, %v8898
      %v8901 = vunpack.c.l.s4 1983009808
      %v8902 = vunpack.c.0.s8 %v8901
      %v8903 = vlaneseq
      %v8904 = vshrl.u32 %v8903, 7
      %v8905 = vsub.s32 %v8902, %v8904
      %v8906 = vrot.slane %v8892, %v8905
      %v8907 = vcombine.low %v8899, %v8906
      %v8909 = vunpack.c.l.s4 1983009808
      %v8910 = vunpack.c.0.s8 %v8909
      %v8911 = vlaneseq
      %v8912 = vshrl.u32 %v8911, 7
      %v8913 = vsub.s32 %v8910, %v8912
      %v8914 = vrot.slane %v8067, %v8913
      %v8915 = vcombine.low %v8068, %v8069
      %v8916 = vcombine.low %v8070, %v8071
      %v8918 = vunpack.c.l.s4 1983009808
      %v8919 = vunpack.c.0.s8 %v8918
      %v8920 = vlaneseq
      %v8921 = vshrl.u32 %v8920, 7
      %v8922 = vsub.s32 %v8919, %v8921
      %v8923 = vrot.slane %v8915, %v8922
      %v8925 = vunpack.c.l.s4 1983009808
      %v8926 = vunpack.c.0.s8 %v8925
      %v8927 = vlaneseq
      %v8928 = vshrl.u32 %v8927, 7
      %v8929 = vsub.s32 %v8926, %v8928
      %v8930 = vrot.slane %v8916, %v8929
      %v8931 = vcombine.low %v8923, %v8930
      %v8932 = vcombine.low %v8072, %v8073
      %v8933 = vcombine.low %v8074, %v8075
      %v8935 = vunpack.c.l.s4 1983009808
      %v8936 = vunpack.c.0.s8 %v8935
      %v8937 = vlaneseq
      %v8938 = vshrl.u32 %v8937, 7
      %v8939 = vsub.s32 %v8936, %v8938
      %v8940 = vrot.slane %v8932, %v8939
      %v8942 = vunpack.c.l.s4 1983009808
      %v8943 = vunpack.c.0.s8 %v8942
      %v8944 = vlaneseq
      %v8945 = vshrl.u32 %v8944, 7
      %v8946 = vsub.s32 %v8943, %v8945
      %v8947 = vrot.slane %v8933, %v8946
      %v8948 = vcombine.low %v8940, %v8947
      %v8950 = vunpack.c.l.s4 1983009808
      %v8951 = vunpack.c.0.s8 %v8950
      %v8952 = vlaneseq
      %v8953 = vshrl.u32 %v8952, 7
      %v8954 = vsub.s32 %v8951, %v8953
      %v8955 = vrot.slane %v8076, %v8954
      %v8956 = vcombine.low %v8077, %v8078
      %v8957 = vcombine.low %v8079, %v8080
      %v8959 = vunpack.c.l.s4 1983009808
      %v8960 = vunpack.c.0.s8 %v8959
      %v8961 = vlaneseq
      %v8962 = vshrl.u32 %v8961, 7
      %v8963 = vsub.s32 %v8960, %v8962
      %v8964 = vrot.slane %v8956, %v8963
      %v8966 = vunpack.c.l.s4 1983009808
      %v8967 = vunpack.c.0.s8 %v8966
      %v8968 = vlaneseq
      %v8969 = vshrl.u32 %v8968, 7
      %v8970 = vsub.s32 %v8967, %v8969
      %v8971 = vrot.slane %v8957, %v8970
      %v8972 = vcombine.low %v8964, %v8971
      %v8973 = vcombine.low %v8081, %v8082
      %v8974 = vcombine.low %v8083, %v8084
      %v8976 = vunpack.c.l.s4 1983009808
      %v8977 = vunpack.c.0.s8 %v8976
      %v8978 = vlaneseq
      %v8979 = vshrl.u32 %v8978, 7
      %v8980 = vsub.s32 %v8977, %v8979
      %v8981 = vrot.slane %v8973, %v8980
      %v8983 = vunpack.c.l.s4 1983009808
      %v8984 = vunpack.c.0.s8 %v8983
      %v8985 = vlaneseq
      %v8986 = vshrl.u32 %v8985, 7
      %v8987 = vsub.s32 %v8984, %v8986
      %v8988 = vrot.slane %v8974, %v8987
      %v8989 = vcombine.low %v8981, %v8988
      %v8991 = vunpack.c.l.s4 1983009808
      %v8992 = vunpack.c.0.s8 %v8991
      %v8993 = vlaneseq
      %v8994 = vshrl.u32 %v8993, 7
      %v8995 = vsub.s32 %v8992, %v8994
      %v8996 = vrot.slane %v8085, %v8995
      %v8997 = vcombine.low %v8086, %v8087
      %v8998 = vcombine.low %v8088, %v8089
      %v9000 = vunpack.c.l.s4 1983009808
      %v9001 = vunpack.c.0.s8 %v9000
      %v9002 = vlaneseq
      %v9003 = vshrl.u32 %v9002, 7
      %v9004 = vsub.s32 %v9001, %v9003
      %v9005 = vrot.slane %v8997, %v9004
      %v9007 = vunpack.c.l.s4 1983009808
      %v9008 = vunpack.c.0.s8 %v9007
      %v9009 = vlaneseq
      %v9010 = vshrl.u32 %v9009, 7
      %v9011 = vsub.s32 %v9008, %v9010
      %v9012 = vrot.slane %v8998, %v9011
      %v9013 = vcombine.low %v9005, %v9012
      %v9014 = vcombine.low %v8090, %v8091
      %v9015 = vcombine.low %v8092, %v8093
      %v9017 = vunpack.c.l.s4 1983009808
      %v9018 = vunpack.c.0.s8 %v9017
      %v9019 = vlaneseq
      %v9020 = vshrl.u32 %v9019, 7
      %v9021 = vsub.s32 %v9018, %v9020
      %v9022 = vrot.slane %v9014, %v9021
      %v9024 = vunpack.c.l.s4 1983009808
      %v9025 = vunpack.c.0.s8 %v9024
      %v9026 = vlaneseq
      %v9027 = vshrl.u32 %v9026, 7
      %v9028 = vsub.s32 %v9025, %v9027
      %v9029 = vrot.slane %v9015, %v9028
      %v9030 = vcombine.low %v9022, %v9029
      %v9032 = vunpack.c.l.s4 1983009808
      %v9033 = vunpack.c.0.s8 %v9032
      %v9034 = vlaneseq
      %v9035 = vshrl.u32 %v9034, 7
      %v9036 = vsub.s32 %v9033, %v9035
      %v9037 = vrot.slane %v8094, %v9036
      %v9038 = vcombine.low %v8095, %v8096
      %v9039 = vcombine.low %v8097, %v8098
      %v9041 = vunpack.c.l.s4 1983009808
      %v9042 = vunpack.c.0.s8 %v9041
      %v9043 = vlaneseq
      %v9044 = vshrl.u32 %v9043, 7
      %v9045 = vsub.s32 %v9042, %v9044
      %v9046 = vrot.slane %v9038, %v9045
      %v9048 = vunpack.c.l.s4 1983009808
      %v9049 = vunpack.c.0.s8 %v9048
      %v9050 = vlaneseq
      %v9051 = vshrl.u32 %v9050, 7
      %v9052 = vsub.s32 %v9049, %v9051
      %v9053 = vrot.slane %v9039, %v9052
      %v9054 = vcombine.low %v9046, %v9053
      %v9055 = vcombine.low %v8099, %v8100
      %v9056 = vcombine.low %v8101, %v8102
      %v9058 = vunpack.c.l.s4 1983009808
      %v9059 = vunpack.c.0.s8 %v9058
      %v9060 = vlaneseq
      %v9061 = vshrl.u32 %v9060, 7
      %v9062 = vsub.s32 %v9059, %v9061
      %v9063 = vrot.slane %v9055, %v9062
      %v9065 = vunpack.c.l.s4 1983009808
      %v9066 = vunpack.c.0.s8 %v9065
      %v9067 = vlaneseq
      %v9068 = vshrl.u32 %v9067, 7
      %v9069 = vsub.s32 %v9066, %v9068
      %v9070 = vrot.slane %v9056, %v9069
      %v9071 = vcombine.low %v9063, %v9070
      %v9073 = vunpack.c.l.s4 1983009808
      %v9074 = vunpack.c.0.s8 %v9073
      %v9075 = vlaneseq
      %v9076 = vshrl.u32 %v9075, 7
      %v9077 = vsub.s32 %v9074, %v9076
      %v9078 = vrot.slane %v8103, %v9077
      %v9079 = vcombine.low %v8104, %v8105
      %v9080 = vcombine.low %v8106, %v8107
      %v9082 = vunpack.c.l.s4 1983009808
      %v9083 = vunpack.c.0.s8 %v9082
      %v9084 = vlaneseq
      %v9085 = vshrl.u32 %v9084, 7
      %v9086 = vsub.s32 %v9083, %v9085
      %v9087 = vrot.slane %v9079, %v9086
      %v9089 = vunpack.c.l.s4 1983009808
      %v9090 = vunpack.c.0.s8 %v9089
      %v9091 = vlaneseq
      %v9092 = vshrl.u32 %v9091, 7
      %v9093 = vsub.s32 %v9090, %v9092
      %v9094 = vrot.slane %v9080, %v9093
      %v9095 = vcombine.low %v9087, %v9094
      %v9096 = vcombine.low %v8108, %v8109
      %v9097 = vcombine.low %v8110, %v8111
      %v9099 = vunpack.c.l.s4 1983009808
      %v9100 = vunpack.c.0.s8 %v9099
      %v9101 = vlaneseq
      %v9102 = vshrl.u32 %v9101, 7
      %v9103 = vsub.s32 %v9100, %v9102
      %v9104 = vrot.slane %v9096, %v9103
      %v9106 = vunpack.c.l.s4 1983009808
      %v9107 = vunpack.c.0.s8 %v9106
      %v9108 = vlaneseq
      %v9109 = vshrl.u32 %v9108, 7
      %v9110 = vsub.s32 %v9107, %v9109
      %v9111 = vrot.slane %v9097, %v9110
      %v9112 = vcombine.low %v9104, %v9111
      %v9114 = vunpack.c.l.s4 1983009808
      %v9115 = vunpack.c.0.s8 %v9114
      %v9116 = vlaneseq
      %v9117 = vshrl.u32 %v9116, 7
      %v9118 = vsub.s32 %v9115, %v9117
      %v9119 = vrot.slane %v8112, %v9118
      %v9120 = vcombine.low %v8113, %v8114
      %v9121 = vcombine.low %v8115, %v8116
      %v9123 = vunpack.c.l.s4 1983009808
      %v9124 = vunpack.c.0.s8 %v9123
      %v9125 = vlaneseq
      %v9126 = vshrl.u32 %v9125, 7
      %v9127 = vsub.s32 %v9124, %v9126
      %v9128 = vrot.slane %v9120, %v9127
      %v9130 = vunpack.c.l.s4 1983009808
      %v9131 = vunpack.c.0.s8 %v9130
      %v9132 = vlaneseq
      %v9133 = vshrl.u32 %v9132, 7
      %v9134 = vsub.s32 %v9131, %v9133
      %v9135 = vrot.slane %v9121, %v9134
      %v9136 = vcombine.low %v9128, %v9135
      %v9137 = vcombine.low %v8117, %v8118
      %v9138 = vcombine.low %v8119, %v8120
      %v9140 = vunpack.c.l.s4 1983009808
      %v9141 = vunpack.c.0.s8 %v9140
      %v9142 = vlaneseq
      %v9143 = vshrl.u32 %v9142, 7
      %v9144 = vsub.s32 %v9141, %v9143
      %v9145 = vrot.slane %v9137, %v9144
      %v9147 = vunpack.c.l.s4 1983009808
      %v9148 = vunpack.c.0.s8 %v9147
      %v9149 = vlaneseq
      %v9150 = vshrl.u32 %v9149, 7
      %v9151 = vsub.s32 %v9148, %v9150
      %v9152 = vrot.slane %v9138, %v9151
      %v9153 = vcombine.low %v9145, %v9152
      %v9155 = vunpack.c.l.s4 1983009808
      %v9156 = vunpack.c.0.s8 %v9155
      %v9157 = vlaneseq
      %v9158 = vshrl.u32 %v9157, 7
      %v9159 = vsub.s32 %v9156, %v9158
      %v9160 = vrot.slane %v8121, %v9159
      %v9161 = vcombine.low %v8122, %v8123
      %v9162 = vcombine.low %v8124, %v8125
      %v9164 = vunpack.c.l.s4 1983009808
      %v9165 = vunpack.c.0.s8 %v9164
      %v9166 = vlaneseq
      %v9167 = vshrl.u32 %v9166, 7
      %v9168 = vsub.s32 %v9165, %v9167
      %v9169 = vrot.slane %v9161, %v9168
      %v9171 = vunpack.c.l.s4 1983009808
      %v9172 = vunpack.c.0.s8 %v9171
      %v9173 = vlaneseq
      %v9174 = vshrl.u32 %v9173, 7
      %v9175 = vsub.s32 %v9172, %v9174
      %v9176 = vrot.slane %v9162, %v9175
      %v9177 = vcombine.low %v9169, %v9176
      %v9178 = vcombine.low %v8126, %v8127
      %v9179 = vcombine.low %v8128, %v8129
      %v9181 = vunpack.c.l.s4 1983009808
      %v9182 = vunpack.c.0.s8 %v9181
      %v9183 = vlaneseq
      %v9184 = vshrl.u32 %v9183, 7
      %v9185 = vsub.s32 %v9182, %v9184
      %v9186 = vrot.slane %v9178, %v9185
      %v9188 = vunpack.c.l.s4 1983009808
      %v9189 = vunpack.c.0.s8 %v9188
      %v9190 = vlaneseq
      %v9191 = vshrl.u32 %v9190, 7
      %v9192 = vsub.s32 %v9189, %v9191
      %v9193 = vrot.slane %v9179, %v9192
      %v9194 = vcombine.low %v9186, %v9193
      %v9196 = vunpack.c.l.s4 1983009808
      %v9197 = vunpack.c.0.s8 %v9196
      %v9198 = vlaneseq
      %v9199 = vshrl.u32 %v9198, 7
      %v9200 = vsub.s32 %v9197, %v9199
      %v9201 = vrot.slane %v8130, %v9200
      %v9202 = vcombine.low %v8131, %v8132
      %v9203 = vcombine.low %v8133, %v8134
      %v9205 = vunpack.c.l.s4 1983009808
      %v9206 = vunpack.c.0.s8 %v9205
      %v9207 = vlaneseq
      %v9208 = vshrl.u32 %v9207, 7
      %v9209 = vsub.s32 %v9206, %v9208
      %v9210 = vrot.slane %v9202, %v9209
      %v9212 = vunpack.c.l.s4 1983009808
      %v9213 = vunpack.c.0.s8 %v9212
      %v9214 = vlaneseq
      %v9215 = vshrl.u32 %v9214, 7
      %v9216 = vsub.s32 %v9213, %v9215
      %v9217 = vrot.slane %v9203, %v9216
      %v9218 = vcombine.low %v9210, %v9217
      %v9219 = vcombine.low %v8135, %v8136
      %v9220 = vcombine.low %v8137, %v8138
      %v9222 = vunpack.c.l.s4 1983009808
      %v9223 = vunpack.c.0.s8 %v9222
      %v9224 = vlaneseq
      %v9225 = vshrl.u32 %v9224, 7
      %v9226 = vsub.s32 %v9223, %v9225
      %v9227 = vrot.slane %v9219, %v9226
      %v9229 = vunpack.c.l.s4 1983009808
      %v9230 = vunpack.c.0.s8 %v9229
      %v9231 = vlaneseq
      %v9232 = vshrl.u32 %v9231, 7
      %v9233 = vsub.s32 %v9230, %v9232
      %v9234 = vrot.slane %v9220, %v9233
      %v9235 = vcombine.low %v9227, %v9234
      %v9237 = vunpack.c.l.s4 1983009808
      %v9238 = vunpack.c.0.s8 %v9237
      %v9239 = vlaneseq
      %v9240 = vshrl.u32 %v9239, 7
      %v9241 = vsub.s32 %v9238, %v9240
      %v9242 = vrot.slane %v8139, %v9241
      %v9243 = vcombine.low %v8140, %v8141
      %v9244 = vcombine.low %v8142, %v8143
      %v9246 = vunpack.c.l.s4 1983009808
      %v9247 = vunpack.c.0.s8 %v9246
      %v9248 = vlaneseq
      %v9249 = vshrl.u32 %v9248, 7
      %v9250 = vsub.s32 %v9247, %v9249
      %v9251 = vrot.slane %v9243, %v9250
      %v9253 = vunpack.c.l.s4 1983009808
      %v9254 = vunpack.c.0.s8 %v9253
      %v9255 = vlaneseq
      %v9256 = vshrl.u32 %v9255, 7
      %v9257 = vsub.s32 %v9254, %v9256
      %v9258 = vrot.slane %v9244, %v9257
      %v9259 = vcombine.low %v9251, %v9258
      %v9260 = vcombine.low %v8144, %v8145
      %v9261 = vcombine.low %v8146, %v8147
      %v9263 = vunpack.c.l.s4 1983009808
      %v9264 = vunpack.c.0.s8 %v9263
      %v9265 = vlaneseq
      %v9266 = vshrl.u32 %v9265, 7
      %v9267 = vsub.s32 %v9264, %v9266
      %v9268 = vrot.slane %v9260, %v9267
      %v9270 = vunpack.c.l.s4 1983009808
      %v9271 = vunpack.c.0.s8 %v9270
      %v9272 = vlaneseq
      %v9273 = vshrl.u32 %v9272, 7
      %v9274 = vsub.s32 %v9271, %v9273
      %v9275 = vrot.slane %v9261, %v9274
      %v9276 = vcombine.low %v9268, %v9275
      %v9278 = vunpack.c.l.s4 1983009808
      %v9279 = vunpack.c.0.s8 %v9278
      %v9280 = vlaneseq
      %v9281 = vshrl.u32 %v9280, 7
      %v9282 = vsub.s32 %v9279, %v9281
      %v9283 = vrot.slane %v8148, %v9282
      %v9284 = vcombine.low %v8149, %v8150
      %v9285 = vcombine.low %v8151, %v8152
      %v9287 = vunpack.c.l.s4 1983009808
      %v9288 = vunpack.c.0.s8 %v9287
      %v9289 = vlaneseq
      %v9290 = vshrl.u32 %v9289, 7
      %v9291 = vsub.s32 %v9288, %v9290
      %v9292 = vrot.slane %v9284, %v9291
      %v9294 = vunpack.c.l.s4 1983009808
      %v9295 = vunpack.c.0.s8 %v9294
      %v9296 = vlaneseq
      %v9297 = vshrl.u32 %v9296, 7
      %v9298 = vsub.s32 %v9295, %v9297
      %v9299 = vrot.slane %v9285, %v9298
      %v9300 = vcombine.low %v9292, %v9299
      %v9301 = vcombine.low %v8153, %v8154
      %v9302 = vcombine.low %v8155, %v8156
      %v9304 = vunpack.c.l.s4 1983009808
      %v9305 = vunpack.c.0.s8 %v9304
      %v9306 = vlaneseq
      %v9307 = vshrl.u32 %v9306, 7
      %v9308 = vsub.s32 %v9305, %v9307
      %v9309 = vrot.slane %v9301, %v9308
      %v9311 = vunpack.c.l.s4 1983009808
      %v9312 = vunpack.c.0.s8 %v9311
      %v9313 = vlaneseq
      %v9314 = vshrl.u32 %v9313, 7
      %v9315 = vsub.s32 %v9312, %v9314
      %v9316 = vrot.slane %v9302, %v9315
      %v9317 = vcombine.low %v9309, %v9316
      %v9319 = vunpack.c.l.s4 1983009808
      %v9320 = vunpack.c.0.s8 %v9319
      %v9321 = vlaneseq
      %v9322 = vshrl.u32 %v9321, 7
      %v9323 = vsub.s32 %v9320, %v9322
      %v9324 = vrot.slane %v8157, %v9323
      %v9325 = vcombine.low %v8158, %v8159
      %v9326 = vcombine.low %v8160, %v8161
      %v9328 = vunpack.c.l.s4 1983009808
      %v9329 = vunpack.c.0.s8 %v9328
      %v9330 = vlaneseq
      %v9331 = vshrl.u32 %v9330, 7
      %v9332 = vsub.s32 %v9329, %v9331
      %v9333 = vrot.slane %v9325, %v9332
      %v9335 = vunpack.c.l.s4 1983009808
      %v9336 = vunpack.c.0.s8 %v9335
      %v9337 = vlaneseq
      %v9338 = vshrl.u32 %v9337, 7
      %v9339 = vsub.s32 %v9336, %v9338
      %v9340 = vrot.slane %v9326, %v9339
      %v9341 = vcombine.low %v9333, %v9340
      %v9342 = vcombine.low %v8162, %v8163
      %v9343 = vcombine.low %v8164, %v8165
      %v9345 = vunpack.c.l.s4 1983009808
      %v9346 = vunpack.c.0.s8 %v9345
      %v9347 = vlaneseq
      %v9348 = vshrl.u32 %v9347, 7
      %v9349 = vsub.s32 %v9346, %v9348
      %v9350 = vrot.slane %v9342, %v9349
      %v9352 = vunpack.c.l.s4 1983009808
      %v9353 = vunpack.c.0.s8 %v9352
      %v9354 = vlaneseq
      %v9355 = vshrl.u32 %v9354, 7
      %v9356 = vsub.s32 %v9353, %v9355
      %v9357 = vrot.slane %v9343, %v9356
      %v9358 = vcombine.low %v9350, %v9357
      %v9360 = vunpack.c.l.s4 1983009808
      %v9361 = vunpack.c.0.s8 %v9360
      %v9362 = vlaneseq
      %v9363 = vshrl.u32 %v9362, 7
      %v9364 = vsub.s32 %v9361, %v9363
      %v9365 = vrot.slane %v8166, %v9364
      %v9420 = vsel %vm8412, %v8644, 0.0
      %v9421 = vsel %vm8413, %v8661, 0.0
      %v9422 = vsel %vm8414, %v8668, 0.0
      %v9423 = vsel %vm8415, %v8685, 0.0
      %v9424 = vsel %vm8416, %v8702, 0.0
      %v9425 = vsel %vm8417, %v8709, 0.0
      %v9426 = vsel %vm8418, %v8726, 0.0
      %v9427 = vsel %vm8419, %v8743, 0.0
      %v9428 = vsel %vm8420, %v8750, 0.0
      %v9429 = vsel %vm8421, %v8767, 0.0
      %v9430 = vsel %vm8422, %v8784, 0.0
      %v9431 = vsel %vm8423, %v8791, 0.0
      %v9432 = vsel %vm8424, %v8808, 0.0
      %v9433 = vsel %vm8425, %v8825, 0.0
      %v9434 = vsel %vm8426, %v8832, 0.0
      %v9435 = vsel %vm8427, %v8849, 0.0
      %v9436 = vsel %vm8428, %v8866, 0.0
      %v9437 = vsel %vm8429, %v8873, 0.0
      %v9438 = vsel %vm8430, %v8890, 0.0
      %v9439 = vsel %vm8431, %v8907, 0.0
      %v9440 = vsel %vm8432, %v8914, 0.0
      %v9441 = vsel %vm8433, %v8931, 0.0
      %v9442 = vsel %vm8434, %v8948, 0.0
      %v9443 = vsel %vm8435, %v8955, 0.0
      %v9444 = vsel %vm8436, %v8972, 0.0
      %v9445 = vsel %vm8437, %v8989, 0.0
      %v9446 = vsel %vm8438, %v8996, 0.0
      %v9447 = vsel %vm8439, %v9013, 0.0
      %v9448 = vsel %vm8440, %v9030, 0.0
      %v9449 = vsel %vm8441, %v9037, 0.0
      %v9450 = vsel %vm8442, %v9054, 0.0
      %v9451 = vsel %vm8443, %v9071, 0.0
      %v9452 = vsel %vm8444, %v9078, 0.0
      %v9453 = vsel %vm8445, %v9095, 0.0
      %v9454 = vsel %vm8446, %v9112, 0.0
      %v9455 = vsel %vm8447, %v9119, 0.0
      %v9456 = vsel %vm8448, %v9136, 0.0
      %v9457 = vsel %vm8449, %v9153, 0.0
      %v9458 = vsel %vm8450, %v9160, 0.0
      %v9459 = vsel %vm8451, %v9177, 0.0
      %v9460 = vsel %vm8452, %v9194, 0.0
      %v9461 = vsel %vm8453, %v9201, 0.0
      %v9462 = vsel %vm8454, %v9218, 0.0
      %v9463 = vsel %vm8455, %v9235, 0.0
      %v9464 = vsel %vm8456, %v9242, 0.0
      %v9465 = vsel %vm8457, %v9259, 0.0
      %v9466 = vsel %vm8458, %v9276, 0.0
      %v9467 = vsel %vm8459, %v9283, 0.0
      %v9468 = vsel %vm8460, %v9300, 0.0
      %v9469 = vsel %vm8461, %v9317, 0.0
      %v9470 = vsel %vm8462, %v9324, 0.0
      %v9471 = vsel %vm8463, %v9341, 0.0
      %v9472 = vsel %vm8464, %v9358, 0.0
      %v9473 = vsel %vm8465, %v9365, 0.0
      %v9474 = vpack.c.bf16 %v9421, %v9420
      %v9475 = vpack.c.bf16 %v9422, %v9422
      %v9476 = vpack.c.bf16 %v9424, %v9423
      %v9477 = vpack.c.bf16 %v9425, %v9425
      %v9478 = vpack.c.bf16 %v9427, %v9426
      %v9479 = vpack.c.bf16 %v9428, %v9428
      %v9480 = vpack.c.bf16 %v9430, %v9429
      %v9481 = vpack.c.bf16 %v9431, %v9431
      %v9482 = vpack.c.bf16 %v9433, %v9432
      %v9483 = vpack.c.bf16 %v9434, %v9434
      %v9484 = vpack.c.bf16 %v9436, %v9435
      %v9485 = vpack.c.bf16 %v9437, %v9437
      %v9486 = vpack.c.bf16 %v9439, %v9438
      %v9487 = vpack.c.bf16 %v9440, %v9440
      %v9488 = vpack.c.bf16 %v9442, %v9441
      %v9489 = vpack.c.bf16 %v9443, %v9443
      %v9490 = vpack.c.bf16 %v9445, %v9444
      %v9491 = vpack.c.bf16 %v9446, %v9446
      %v9492 = vpack.c.bf16 %v9448, %v9447
      %v9493 = vpack.c.bf16 %v9449, %v9449
      %v9494 = vpack.c.bf16 %v9451, %v9450
      %v9495 = vpack.c.bf16 %v9452, %v9452
      %v9496 = vpack.c.bf16 %v9454, %v9453
      %v9497 = vpack.c.bf16 %v9455, %v9455
      %v9498 = vpack.c.bf16 %v9457, %v9456
      %v9499 = vpack.c.bf16 %v9458, %v9458
      %v9500 = vpack.c.bf16 %v9460, %v9459
      %v9501 = vpack.c.bf16 %v9461, %v9461
      %v9502 = vpack.c.bf16 %v9463, %v9462
      %v9503 = vpack.c.bf16 %v9464, %v9464
      %v9504 = vpack.c.bf16 %v9466, %v9465
      %v9505 = vpack.c.bf16 %v9467, %v9467
      %v9506 = vpack.c.bf16 %v9469, %v9468
      %v9507 = vpack.c.bf16 %v9470, %v9470
      %v9508 = vpack.c.bf16 %v9472, %v9471
      %v9509 = vpack.c.bf16 %v9473, %v9473
      %vm9510 = vsmask.f32 7424
      %v9512 = vshrl.u32 %v9474, 16
      %v9514 = vshll.u32 %v9474, 16
      %v9516 = vrot.slane %v9514, 1
      %v9517 = vor.u32 %v9512, %v9516
      %v9519 = vshll.u32 %v9475, 16
      %v9521 = vrot.slane %v9519, 1
      %v9522 = vsel %vm9510, %v9517, %v9521
      %v9524 = vshrl.u32 %v9476, 16
      %v9526 = vshll.u32 %v9476, 16
      %v9528 = vrot.slane %v9526, 1
      %v9529 = vor.u32 %v9524, %v9528
      %v9531 = vshll.u32 %v9477, 16
      %v9533 = vrot.slane %v9531, 1
      %v9534 = vsel %vm9510, %v9529, %v9533
      %v9536 = vshrl.u32 %v9478, 16
      %v9538 = vshll.u32 %v9478, 16
      %v9540 = vrot.slane %v9538, 1
      %v9541 = vor.u32 %v9536, %v9540
      %v9543 = vshll.u32 %v9479, 16
      %v9545 = vrot.slane %v9543, 1
      %v9546 = vsel %vm9510, %v9541, %v9545
      %v9548 = vshrl.u32 %v9480, 16
      %v9550 = vshll.u32 %v9480, 16
      %v9552 = vrot.slane %v9550, 1
      %v9553 = vor.u32 %v9548, %v9552
      %v9555 = vshll.u32 %v9481, 16
      %v9557 = vrot.slane %v9555, 1
      %v9558 = vsel %vm9510, %v9553, %v9557
      %v9560 = vshrl.u32 %v9482, 16
      %v9562 = vshll.u32 %v9482, 16
      %v9564 = vrot.slane %v9562, 1
      %v9565 = vor.u32 %v9560, %v9564
      %v9567 = vshll.u32 %v9483, 16
      %v9569 = vrot.slane %v9567, 1
      %v9570 = vsel %vm9510, %v9565, %v9569
      %v9572 = vshrl.u32 %v9484, 16
      %v9574 = vshll.u32 %v9484, 16
      %v9576 = vrot.slane %v9574, 1
      %v9577 = vor.u32 %v9572, %v9576
      %v9579 = vshll.u32 %v9485, 16
      %v9581 = vrot.slane %v9579, 1
      %v9582 = vsel %vm9510, %v9577, %v9581
      %v9584 = vshrl.u32 %v9486, 16
      %v9586 = vshll.u32 %v9486, 16
      %v9588 = vrot.slane %v9586, 1
      %v9589 = vor.u32 %v9584, %v9588
      %v9591 = vshll.u32 %v9487, 16
      %v9593 = vrot.slane %v9591, 1
      %v9594 = vsel %vm9510, %v9589, %v9593
      %v9596 = vshrl.u32 %v9488, 16
      %v9598 = vshll.u32 %v9488, 16
      %v9600 = vrot.slane %v9598, 1
      %v9601 = vor.u32 %v9596, %v9600
      %v9603 = vshll.u32 %v9489, 16
      %v9605 = vrot.slane %v9603, 1
      %v9606 = vsel %vm9510, %v9601, %v9605
      %v9608 = vshrl.u32 %v9490, 16
      %v9610 = vshll.u32 %v9490, 16
      %v9612 = vrot.slane %v9610, 1
      %v9613 = vor.u32 %v9608, %v9612
      %v9615 = vshll.u32 %v9491, 16
      %v9617 = vrot.slane %v9615, 1
      %v9618 = vsel %vm9510, %v9613, %v9617
      %v9620 = vshrl.u32 %v9492, 16
      %v9622 = vshll.u32 %v9492, 16
      %v9624 = vrot.slane %v9622, 1
      %v9625 = vor.u32 %v9620, %v9624
      %v9627 = vshll.u32 %v9493, 16
      %v9629 = vrot.slane %v9627, 1
      %v9630 = vsel %vm9510, %v9625, %v9629
      %v9632 = vshrl.u32 %v9494, 16
      %v9634 = vshll.u32 %v9494, 16
      %v9636 = vrot.slane %v9634, 1
      %v9637 = vor.u32 %v9632, %v9636
      %v9639 = vshll.u32 %v9495, 16
      %v9641 = vrot.slane %v9639, 1
      %v9642 = vsel %vm9510, %v9637, %v9641
      %v9644 = vshrl.u32 %v9496, 16
      %v9646 = vshll.u32 %v9496, 16
      %v9648 = vrot.slane %v9646, 1
      %v9649 = vor.u32 %v9644, %v9648
      %v9651 = vshll.u32 %v9497, 16
      %v9653 = vrot.slane %v9651, 1
      %v9654 = vsel %vm9510, %v9649, %v9653
      %v9656 = vshrl.u32 %v9498, 16
      %v9658 = vshll.u32 %v9498, 16
      %v9660 = vrot.slane %v9658, 1
      %v9661 = vor.u32 %v9656, %v9660
      %v9663 = vshll.u32 %v9499, 16
      %v9665 = vrot.slane %v9663, 1
      %v9666 = vsel %vm9510, %v9661, %v9665
      %v9668 = vshrl.u32 %v9500, 16
      %v9670 = vshll.u32 %v9500, 16
      %v9672 = vrot.slane %v9670, 1
      %v9673 = vor.u32 %v9668, %v9672
      %v9675 = vshll.u32 %v9501, 16
      %v9677 = vrot.slane %v9675, 1
      %v9678 = vsel %vm9510, %v9673, %v9677
      %v9680 = vshrl.u32 %v9502, 16
      %v9682 = vshll.u32 %v9502, 16
      %v9684 = vrot.slane %v9682, 1
      %v9685 = vor.u32 %v9680, %v9684
      %v9687 = vshll.u32 %v9503, 16
      %v9689 = vrot.slane %v9687, 1
      %v9690 = vsel %vm9510, %v9685, %v9689
      %v9692 = vshrl.u32 %v9504, 16
      %v9694 = vshll.u32 %v9504, 16
      %v9696 = vrot.slane %v9694, 1
      %v9697 = vor.u32 %v9692, %v9696
      %v9699 = vshll.u32 %v9505, 16
      %v9701 = vrot.slane %v9699, 1
      %v9702 = vsel %vm9510, %v9697, %v9701
      %9703 = vrot.lane.b32.xlu0 %v9522, 4
      %v9704 = vpop.permute.xlu0 %9703
      %9705 = vrot.lane.b32.xlu0 %v9534, 4
      %v9706 = vpop.permute.xlu0 %9705
      %9707 = vrot.lane.b32.xlu0 %v9546, 4
      %v9708 = vpop.permute.xlu0 %9707
      %9709 = vrot.lane.b32.xlu0 %v9558, 4
      %v9710 = vpop.permute.xlu0 %9709
      %9711 = vrot.lane.b32.xlu0 %v9570, 4
      %v9712 = vpop.permute.xlu0 %9711
      %9713 = vrot.lane.b32.xlu0 %v9582, 4
      %v9714 = vpop.permute.xlu0 %9713
      %9715 = vrot.lane.b32.xlu0 %v9594, 4
      %v9716 = vpop.permute.xlu0 %9715
      %9717 = vrot.lane.b32.xlu0 %v9606, 4
      %v9718 = vpop.permute.xlu0 %9717
      %9719 = vrot.lane.b32.xlu0 %v9618, 4
      %v9720 = vpop.permute.xlu0 %9719
      %9721 = vrot.lane.b32.xlu0 %v9630, 4
      %v9722 = vpop.permute.xlu0 %9721
      %9723 = vrot.lane.b32.xlu0 %v9642, 4
      %v9724 = vpop.permute.xlu0 %9723
      %9725 = vrot.lane.b32.xlu0 %v9654, 4
      %v9726 = vpop.permute.xlu0 %9725
      %9727 = vrot.lane.b32.xlu0 %v9666, 4
      %v9728 = vpop.permute.xlu0 %9727
      %9729 = vrot.lane.b32.xlu0 %v9678, 4
      %v9730 = vpop.permute.xlu0 %9729
      %9731 = vrot.lane.b32.xlu0 %v9690, 4
      %v9732 = vpop.permute.xlu0 %9731
      %9733 = vrot.lane.b32.xlu0 %v9702, 4
      %v9734 = vpop.permute.xlu0 %9733
      %vm9767 = vcmask 1046528
      %v9768 = vrot.slane %v9474, 1
      %v9769 = vrot.slane %v9475, 1
      %v9770 = vsel %vm9767, %v9768, %v9769
      %v9771 = vrot.slane %v9476, 1
      %v9772 = vrot.slane %v9477, 1
      %v9773 = vsel %vm9767, %v9771, %v9772
      %v9774 = vrot.slane %v9478, 1
      %v9775 = vrot.slane %v9479, 1
      %v9776 = vsel %vm9767, %v9774, %v9775
      %v9777 = vrot.slane %v9480, 1
      %v9778 = vrot.slane %v9481, 1
      %v9779 = vsel %vm9767, %v9777, %v9778
      %v9780 = vrot.slane %v9482, 1
      %v9781 = vrot.slane %v9483, 1
      %v9782 = vsel %vm9767, %v9780, %v9781
      %v9783 = vrot.slane %v9484, 1
      %v9784 = vrot.slane %v9485, 1
      %v9785 = vsel %vm9767, %v9783, %v9784
      %v9786 = vrot.slane %v9486, 1
      %v9787 = vrot.slane %v9487, 1
      %v9788 = vsel %vm9767, %v9786, %v9787
      %v9789 = vrot.slane %v9488, 1
      %v9790 = vrot.slane %v9489, 1
      %v9791 = vsel %vm9767, %v9789, %v9790
      %v9792 = vrot.slane %v9490, 1
      %v9793 = vrot.slane %v9491, 1
      %v9794 = vsel %vm9767, %v9792, %v9793
      %v9795 = vrot.slane %v9492, 1
      %v9796 = vrot.slane %v9493, 1
      %v9797 = vsel %vm9767, %v9795, %v9796
      %v9798 = vrot.slane %v9494, 1
      %v9799 = vrot.slane %v9495, 1
      %v9800 = vsel %vm9767, %v9798, %v9799
      %v9801 = vrot.slane %v9496, 1
      %v9802 = vrot.slane %v9497, 1
      %v9803 = vsel %vm9767, %v9801, %v9802
      %v9804 = vrot.slane %v9498, 1
      %v9805 = vrot.slane %v9499, 1
      %v9806 = vsel %vm9767, %v9804, %v9805
      %v9807 = vrot.slane %v9500, 1
      %v9808 = vrot.slane %v9501, 1
      %v9809 = vsel %vm9767, %v9807, %v9808
      %v9810 = vrot.slane %v9502, 1
      %v9811 = vrot.slane %v9503, 1
      %v9812 = vsel %vm9767, %v9810, %v9811
      %v9813 = vrot.slane %v9504, 1
      %v9814 = vrot.slane %v9505, 1
      %v9815 = vsel %vm9767, %v9813, %v9814
      %9816 = vrot.lane.b32.xlu0 %v9770, 8
      %v9817 = vpop.permute.xlu0 %9816
      %9818 = vrot.lane.b32.xlu0 %v9773, 8
      %v9819 = vpop.permute.xlu0 %9818
      %9820 = vrot.lane.b32.xlu0 %v9776, 8
      %v9821 = vpop.permute.xlu0 %9820
      %9822 = vrot.lane.b32.xlu0 %v9779, 8
      %v9823 = vpop.permute.xlu0 %9822
      %9824 = vrot.lane.b32.xlu0 %v9782, 8
      %v9825 = vpop.permute.xlu0 %9824
      %9826 = vrot.lane.b32.xlu0 %v9785, 8
      %v9827 = vpop.permute.xlu0 %9826
      %9828 = vrot.lane.b32.xlu0 %v9788, 8
      %v9829 = vpop.permute.xlu0 %9828
      %9830 = vrot.lane.b32.xlu0 %v9791, 8
      %v9831 = vpop.permute.xlu0 %9830
      %9832 = vrot.lane.b32.xlu0 %v9794, 8
      %v9833 = vpop.permute.xlu0 %9832
      %9834 = vrot.lane.b32.xlu0 %v9797, 8
      %v9835 = vpop.permute.xlu0 %9834
      %9836 = vrot.lane.b32.xlu0 %v9800, 8
      %v9837 = vpop.permute.xlu0 %9836
      %9838 = vrot.lane.b32.xlu0 %v9803, 8
      %v9839 = vpop.permute.xlu0 %9838
      %9840 = vrot.lane.b32.xlu0 %v9806, 8
      %v9841 = vpop.permute.xlu0 %9840
      %9842 = vrot.lane.b32.xlu0 %v9809, 8
      %v9843 = vpop.permute.xlu0 %9842
      %9844 = vrot.lane.b32.xlu0 %v9812, 8
      %v9845 = vpop.permute.xlu0 %9844
      %9846 = vrot.lane.b32.xlu0 %v9815, 8
      %v9847 = vpop.permute.xlu0 %9846
      %v9849 = vsel %vm928, %v9474, %v9704
      %v9851 = vsel %vm928, %v9476, %v9706
      %v9853 = vsel %vm928, %v9478, %v9708
      %v9855 = vsel %vm928, %v9480, %v9710
      %v9857 = vsel %vm928, %v9482, %v9712
      %v9859 = vsel %vm928, %v9484, %v9714
      %v9861 = vsel %vm928, %v9486, %v9716
      %v9863 = vsel %vm928, %v9488, %v9718
      %v9865 = vsel %vm928, %v9490, %v9720
      %v9867 = vsel %vm928, %v9492, %v9722
      %v9869 = vsel %vm928, %v9494, %v9724
      %v9871 = vsel %vm928, %v9496, %v9726
      %v9873 = vsel %vm928, %v9498, %v9728
      %v9875 = vsel %vm928, %v9500, %v9730
      %v9877 = vsel %vm928, %v9502, %v9732
      %v9879 = vsel %vm928, %v9504, %v9734
      %v9881 = vsel %vm983, %v9849, %v9817
      %v9883 = vsel %vm983, %v9851, %v9819
      %v9885 = vsel %vm983, %v9853, %v9821
      %v9887 = vsel %vm983, %v9855, %v9823
      %v9889 = vsel %vm983, %v9857, %v9825
      %v9891 = vsel %vm983, %v9859, %v9827
      %v9893 = vsel %vm983, %v9861, %v9829
      %v9895 = vsel %vm983, %v9863, %v9831
      %v9897 = vsel %vm983, %v9865, %v9833
      %v9899 = vsel %vm983, %v9867, %v9835
      %v9901 = vsel %vm983, %v9869, %v9837
      %v9903 = vsel %vm983, %v9871, %v9839
      %v9905 = vsel %vm983, %v9873, %v9841
      %v9907 = vsel %vm983, %v9875, %v9843
      %v9909 = vsel %vm983, %v9877, %v9845
      %v9911 = vsel %vm983, %v9879, %v9847
      %v9912 = vld [vmem:[%s4] sm:$0xf]
      %v9913 = vld [vmem:[%s4 + $0x4] sm:$0x3]
      %v9915 = vshrl.u32 %v9506, 16
      %v9917 = vshll.u32 %v9506, 16
      %v9919 = vrot.slane %v9917, 1
      %v9920 = vor.u32 %v9915, %v9919
      %v9922 = vshll.u32 %v9507, 16
      %v9924 = vrot.slane %v9922, 1
      %v9925 = vsel %vm9510, %v9920, %v9924
      %9926 = vrot.lane.b32.xlu0 %v9925, 4
      %v9927 = vpop.permute.xlu0 %9926
      %v9930 = vrot.slane %v9506, 1
      %v9931 = vrot.slane %v9507, 1
      %v9932 = vsel %vm9767, %v9930, %v9931
      %9933 = vrot.lane.b32.xlu0 %v9932, 8
      %v9934 = vpop.permute.xlu0 %9933
      %v9936 = vsel %vm928, %v9506, %v9927
      %v9938 = vsel %vm983, %v9936, %v9934
      %s9939 = scalar_lea.vmem %s4, 8
      %v9940 = vld [vmem:[%s9939] sm:$0xf]
      %v9941 = vld [vmem:[%s9939 + $0x4] sm:$0x3]
      %v9944 = vunpack.c.l.b16 %v9940
      %v9945 = vunpack.c.l.b16 %v9941
      %v9946 = vpack.c.b16 %v9945, %v9944
      %v9947 = vsel %vm3288, %v9883, 0
      %v9949 = vsel %vm3288, %v9885, 0
      %v9951 = vsel %vm3288, %v9887, 0
      %v9953 = vsel %vm3288, %v9889, 0
      %v9955 = vsel %vm3288, %v9891, 0
      %v9957 = vsel %vm3288, %v9893, 0
      %v9959 = vsel %vm3288, %v9895, 0
      %v9961 = vsel %vm3288, %v9897, 0
      %v9963 = vsel %vm3288, %v9899, 0
      %v9965 = vsel %vm3288, %v9901, 0
      %v9967 = vsel %vm3288, %v9903, 0
      %v9969 = vsel %vm3288, %v9905, 0
      %v9971 = vsel %vm3288, %v9907, 0
      %v9973 = vsel %vm3288, %v9909, 0
      %v9975 = vsel %vm3288, %v9911, 0
      %v9977 = vsel %vm3288, %v9938, 0
      %v9980 = vsel %vm675, %v9946, 0
      %9982 = vmatprep.subr.bf16.mxu0 0
      %9983 = vmatpush1.bf16.msra.mxu0 %v9980
      %9984 = vmatprep.subr.bf16.mxu0 0
      %9985 = vmatpush1.bf16.msra.mxu0 0
      %9986 = vmatprep.subr.bf16.mxu0 0
      %9987 = vmatpush1.bf16.msra.mxu0 0
      %9988 = vmatprep.subr.bf16.mxu0 0
      %9989 = vmatpush1.bf16.msra.mxu0 0
      %9990 = vmatprep.subr.bf16.mxu0 0
      %9991 = vmatpush1.bf16.msra.mxu0 0
      %9992 = vmatprep.subr.bf16.mxu0 0
      %9993 = vmatpush1.bf16.msra.mxu0 0
      %9994 = vmatprep.subr.bf16.mxu0 0
      %9995 = vmatpush1.bf16.msra.mxu0 0
      %9996 = vmatprep.subr.bf16.mxu0 0
      %9997 = vmatpush1.bf16.msra.mxu0 0
      %9998 = vmatprep.subr.bf16.mxu0 0
      %9999 = vmatpush1.bf16.msra.mxu0 0
      %10000 = vmatprep.subr.bf16.mxu0 0
      %10001 = vmatpush1.bf16.msra.mxu0 0
      %10002 = vmatprep.subr.bf16.mxu0 0
      %10003 = vmatpush1.bf16.msra.mxu0 0
      %10004 = vmatprep.subr.bf16.mxu0 0
      %10005 = vmatpush1.bf16.msra.mxu0 0
      %10006 = vmatprep.subr.bf16.mxu0 0
      %10007 = vmatpush1.bf16.msra.mxu0 0
      %10008 = vmatprep.subr.bf16.mxu0 0
      %10009 = vmatpush1.bf16.msra.mxu0 0
      %10010 = vmatprep.subr.bf16.mxu0 0
      %10011 = vmatpush1.bf16.msra.mxu0 0
      %10012 = vmatprep.subr.bf16.mxu0 0
      %10013 = vmatpush1.bf16.msra.mxu0 0
      %10014 = vmatprep.mubr.bf16.mxu0 0
      %10015 = vmatmul.mubr.bf16.gmra.mrb[0].mxu0 %v9947
      %v10016 = vpop.f32.mrb[0].mxu0
      %v10017 = vadd.f32 0.0, %v10016
      %v10018 = vpop.f32.mrb[0].mxu0
      %v10019 = vpop.f32.mrb[0].mxu0
      %v10020 = vadd.f32 0.0, %v10019
      %v10021 = vpop.f32.mrb[0].mxu0
      %10022 = vmatprep.mubr.bf16.mxu0 0
      %10023 = vmatmul.mubr.bf16.gmra.mrb[0].mxu0 %v9949
      %v10024 = vpop.f32.mrb[0].mxu0
      %v10025 = vadd.f32 0.0, %v10024
      %v10026 = vpop.f32.mrb[0].mxu0
      %v10027 = vpop.f32.mrb[0].mxu0
      %v10028 = vadd.f32 0.0, %v10027
      %v10029 = vpop.f32.mrb[0].mxu0
      %10030 = vmatprep.mubr.bf16.mxu0 0
      %10031 = vmatmul.mubr.bf16.gmra.mrb[0].mxu0 %v9951
      %v10032 = vpop.f32.mrb[0].mxu0
      %v10033 = vadd.f32 0.0, %v10032
      %v10034 = vpop.f32.mrb[0].mxu0
      %v10035 = vpop.f32.mrb[0].mxu0
      %v10036 = vadd.f32 0.0, %v10035
      %v10037 = vpop.f32.mrb[0].mxu0
      %10038 = vmatprep.mubr.bf16.mxu0 0
      %10039 = vmatmul.mubr.bf16.gmra.mrb[0].mxu0 %v9953
      %v10040 = vpop.f32.mrb[0].mxu0
      %v10041 = vadd.f32 0.0, %v10040
      %v10042 = vpop.f32.mrb[0].mxu0
      %v10043 = vpop.f32.mrb[0].mxu0
      %v10044 = vadd.f32 0.0, %v10043
      %v10045 = vpop.f32.mrb[0].mxu0
      %10046 = vmatprep.mubr.bf16.mxu0 0
      %10047 = vmatmul.mubr.bf16.gmra.mrb[0].mxu0 %v9955
      %v10048 = vpop.f32.mrb[0].mxu0
      %v10049 = vadd.f32 0.0, %v10048
      %v10050 = vpop.f32.mrb[0].mxu0
      %v10051 = vpop.f32.mrb[0].mxu0
      %v10052 = vadd.f32 0.0, %v10051
      %v10053 = vpop.f32.mrb[0].mxu0
      %10054 = vmatprep.mubr.bf16.mxu0 0
      %10055 = vmatmul.mubr.bf16.gmra.mrb[0].mxu0 %v9957
      %v10056 = vpop.f32.mrb[0].mxu0
      %v10057 = vadd.f32 0.0, %v10056
      %v10058 = vpop.f32.mrb[0].mxu0
      %v10059 = vpop.f32.mrb[0].mxu0
      %v10060 = vadd.f32 0.0, %v10059
      %v10061 = vpop.f32.mrb[0].mxu0
      %10062 = vmatprep.mubr.bf16.mxu0 0
      %10063 = vmatmul.mubr.bf16.gmra.mrb[0].mxu0 %v9959
      %v10064 = vpop.f32.mrb[0].mxu0
      %v10065 = vadd.f32 0.0, %v10064
      %v10066 = vpop.f32.mrb[0].mxu0
      %v10067 = vpop.f32.mrb[0].mxu0
      %v10068 = vadd.f32 0.0, %v10067
      %v10069 = vpop.f32.mrb[0].mxu0
      %10070 = vmatprep.mubr.bf16.mxu0 0
      %10071 = vmatmul.mubr.bf16.gmra.mrb[0].mxu0 %v9961
      %v10072 = vpop.f32.mrb[0].mxu0
      %v10073 = vadd.f32 0.0, %v10072
      %v10074 = vpop.f32.mrb[0].mxu0
      %v10075 = vpop.f32.mrb[0].mxu0
      %v10076 = vadd.f32 0.0, %v10075
      %v10077 = vpop.f32.mrb[0].mxu0
      %10078 = vmatprep.mubr.bf16.mxu0 0
      %10079 = vmatmul.mubr.bf16.gmra.mrb[0].mxu0 %v9963
      %v10080 = vpop.f32.mrb[0].mxu0
      %v10081 = vadd.f32 0.0, %v10080
      %v10082 = vpop.f32.mrb[0].mxu0
      %v10083 = vpop.f32.mrb[0].mxu0
      %v10084 = vadd.f32 0.0, %v10083
      %v10085 = vpop.f32.mrb[0].mxu0
      %10086 = vmatprep.mubr.bf16.mxu0 0
      %10087 = vmatmul.mubr.bf16.gmra.mrb[0].mxu0 %v9965
      %v10088 = vpop.f32.mrb[0].mxu0
      %v10089 = vadd.f32 0.0, %v10088
      %v10090 = vpop.f32.mrb[0].mxu0
      %v10091 = vpop.f32.mrb[0].mxu0
      %v10092 = vadd.f32 0.0, %v10091
      %v10093 = vpop.f32.mrb[0].mxu0
      %10094 = vmatprep.mubr.bf16.mxu0 0
      %10095 = vmatmul.mubr.bf16.gmra.mrb[0].mxu0 %v9967
      %v10096 = vpop.f32.mrb[0].mxu0
      %v10097 = vadd.f32 0.0, %v10096
      %v10098 = vpop.f32.mrb[0].mxu0
      %v10099 = vpop.f32.mrb[0].mxu0
      %v10100 = vadd.f32 0.0, %v10099
      %v10101 = vpop.f32.mrb[0].mxu0
      %10102 = vmatprep.mubr.bf16.mxu0 0
      %10103 = vmatmul.mubr.bf16.gmra.mrb[0].mxu0 %v9969
      %v10104 = vpop.f32.mrb[0].mxu0
      %v10105 = vadd.f32 0.0, %v10104
      %v10106 = vpop.f32.mrb[0].mxu0
      %v10107 = vpop.f32.mrb[0].mxu0
      %v10108 = vadd.f32 0.0, %v10107
      %v10109 = vpop.f32.mrb[0].mxu0
      %10110 = vmatprep.mubr.bf16.mxu0 0
      %10111 = vmatmul.mubr.bf16.gmra.mrb[0].mxu0 %v9971
      %v10112 = vpop.f32.mrb[0].mxu0
      %v10113 = vadd.f32 0.0, %v10112
      %v10114 = vpop.f32.mrb[0].mxu0
      %v10115 = vpop.f32.mrb[0].mxu0
      %v10116 = vadd.f32 0.0, %v10115
      %v10117 = vpop.f32.mrb[0].mxu0
      %10118 = vmatprep.mubr.bf16.mxu0 0
      %10119 = vmatmul.mubr.bf16.gmra.mrb[0].mxu0 %v9973
      %v10120 = vpop.f32.mrb[0].mxu0
      %v10121 = vadd.f32 0.0, %v10120
      %v10122 = vpop.f32.mrb[0].mxu0
      %v10123 = vpop.f32.mrb[0].mxu0
      %v10124 = vadd.f32 0.0, %v10123
      %v10125 = vpop.f32.mrb[0].mxu0
      %10126 = vmatprep.mubr.bf16.mxu0 0
      %10127 = vmatmul.mubr.bf16.gmra.mrb[0].mxu0 %v9975
      %v10128 = vpop.f32.mrb[0].mxu0
      %v10129 = vadd.f32 0.0, %v10128
      %v10130 = vpop.f32.mrb[0].mxu0
      %v10131 = vpop.f32.mrb[0].mxu0
      %v10132 = vadd.f32 0.0, %v10131
      %v10133 = vpop.f32.mrb[0].mxu0
      %10134 = vmatprep.mubr.bf16.mxu0 0
      %10135 = vmatmul.mubr.bf16.gmra.mrb[0].mxu0 %v9977
      %v10136 = vpop.f32.mrb[0].mxu0
      %v10137 = vadd.f32 0.0, %v10136
      %v10138 = vpop.f32.mrb[0].mxu0
      %v10139 = vpop.f32.mrb[0].mxu0
      %v10140 = vadd.f32 0.0, %v10139
      %v10141 = vpop.f32.mrb[0].mxu0
      %10142 = vdwg.mxu0
      %v10145 = vunpack.c.l.b16 %v9912
      %v10146 = vunpack.c.l.b16 %v9913
      %v10147 = vpack.c.b16 %v10146, %v10145
      %v10148 = vsel %vm3288, %v9881, 0
      %v10151 = vsel %vm675, %v10147, 0
      %10153 = vmatprep.subr.bf16.mxu0 0
      %10154 = vmatpush1.bf16.msra.mxu0 %v10151
      %10155 = vmatprep.subr.bf16.mxu0 0
      %10156 = vmatpush1.bf16.msra.mxu0 0
      %10157 = vmatprep.subr.bf16.mxu0 0
      %10158 = vmatpush1.bf16.msra.mxu0 0
      %10159 = vmatprep.subr.bf16.mxu0 0
      %10160 = vmatpush1.bf16.msra.mxu0 0
      %10161 = vmatprep.subr.bf16.mxu0 0
      %10162 = vmatpush1.bf16.msra.mxu0 0
      %10163 = vmatprep.subr.bf16.mxu0 0
      %10164 = vmatpush1.bf16.msra.mxu0 0
      %10165 = vmatprep.subr.bf16.mxu0 0
      %10166 = vmatpush1.bf16.msra.mxu0 0
      %10167 = vmatprep.subr.bf16.mxu0 0
      %10168 = vmatpush1.bf16.msra.mxu0 0
      %10169 = vmatprep.subr.bf16.mxu0 0
      %10170 = vmatpush1.bf16.msra.mxu0 0
      %10171 = vmatprep.subr.bf16.mxu0 0
      %10172 = vmatpush1.bf16.msra.mxu0 0
      %10173 = vmatprep.subr.bf16.mxu0 0
      %10174 = vmatpush1.bf16.msra.mxu0 0
      %10175 = vmatprep.subr.bf16.mxu0 0
      %10176 = vmatpush1.bf16.msra.mxu0 0
      %10177 = vmatprep.subr.bf16.mxu0 0
      %10178 = vmatpush1.bf16.msra.mxu0 0
      %10179 = vmatprep.subr.bf16.mxu0 0
      %10180 = vmatpush1.bf16.msra.mxu0 0
      %10181 = vmatprep.subr.bf16.mxu0 0
      %10182 = vmatpush1.bf16.msra.mxu0 0
      %10183 = vmatprep.subr.bf16.mxu0 0
      %10184 = vmatpush1.bf16.msra.mxu0 0
      %10185 = vmatprep.mubr.bf16.mxu0 0
      %10186 = vmatmul.mubr.bf16.gmra.mrb[0].mxu0 %v10148
      %v10187 = vpop.f32.mrb[0].mxu0
      %v10188 = vadd.f32 %v10017, %v10187
      %v10189 = vpop.f32.mrb[0].mxu0
      %v10190 = vpop.f32.mrb[0].mxu0
      %v10191 = vadd.f32 %v10020, %v10190
      %v10192 = vpop.f32.mrb[0].mxu0
      %10193 = vmatprep.mubr.bf16.mxu0 0
      %10194 = vmatmul.mubr.bf16.gmra.mrb[0].mxu0 %v9947
      %v10195 = vpop.f32.mrb[0].mxu0
      %v10196 = vadd.f32 %v10025, %v10195
      %v10197 = vpop.f32.mrb[0].mxu0
      %v10198 = vpop.f32.mrb[0].mxu0
      %v10199 = vadd.f32 %v10028, %v10198
      %v10200 = vpop.f32.mrb[0].mxu0
      %10201 = vmatprep.mubr.bf16.mxu0 0
      %10202 = vmatmul.mubr.bf16.gmra.mrb[0].mxu0 %v9949
      %v10203 = vpop.f32.mrb[0].mxu0
      %v10204 = vadd.f32 %v10033, %v10203
      %v10205 = vpop.f32.mrb[0].mxu0
      %v10206 = vpop.f32.mrb[0].mxu0
      %v10207 = vadd.f32 %v10036, %v10206
      %v10208 = vpop.f32.mrb[0].mxu0
      %10209 = vmatprep.mubr.bf16.mxu0 0
      %10210 = vmatmul.mubr.bf16.gmra.mrb[0].mxu0 %v9951
      %v10211 = vpop.f32.mrb[0].mxu0
      %v10212 = vadd.f32 %v10041, %v10211
      %v10213 = vpop.f32.mrb[0].mxu0
      %v10214 = vpop.f32.mrb[0].mxu0
      %v10215 = vadd.f32 %v10044, %v10214
      %v10216 = vpop.f32.mrb[0].mxu0
      %10217 = vmatprep.mubr.bf16.mxu0 0
      %10218 = vmatmul.mubr.bf16.gmra.mrb[0].mxu0 %v9953
      %v10219 = vpop.f32.mrb[0].mxu0
      %v10220 = vadd.f32 %v10049, %v10219
      %v10221 = vpop.f32.mrb[0].mxu0
      %v10222 = vpop.f32.mrb[0].mxu0
      %v10223 = vadd.f32 %v10052, %v10222
      %v10224 = vpop.f32.mrb[0].mxu0
      %10225 = vmatprep.mubr.bf16.mxu0 0
      %10226 = vmatmul.mubr.bf16.gmra.mrb[0].mxu0 %v9955
      %v10227 = vpop.f32.mrb[0].mxu0
      %v10228 = vadd.f32 %v10057, %v10227
      %v10229 = vpop.f32.mrb[0].mxu0
      %v10230 = vpop.f32.mrb[0].mxu0
      %v10231 = vadd.f32 %v10060, %v10230
      %v10232 = vpop.f32.mrb[0].mxu0
      %10233 = vmatprep.mubr.bf16.mxu0 0
      %10234 = vmatmul.mubr.bf16.gmra.mrb[0].mxu0 %v9957
      %v10235 = vpop.f32.mrb[0].mxu0
      %v10236 = vadd.f32 %v10065, %v10235
      %v10237 = vpop.f32.mrb[0].mxu0
      %v10238 = vpop.f32.mrb[0].mxu0
      %v10239 = vadd.f32 %v10068, %v10238
      %v10240 = vpop.f32.mrb[0].mxu0
      %10241 = vmatprep.mubr.bf16.mxu0 0
      %10242 = vmatmul.mubr.bf16.gmra.mrb[0].mxu0 %v9959
      %v10243 = vpop.f32.mrb[0].mxu0
      %v10244 = vadd.f32 %v10073, %v10243
      %v10245 = vpop.f32.mrb[0].mxu0
      %v10246 = vpop.f32.mrb[0].mxu0
      %v10247 = vadd.f32 %v10076, %v10246
      %v10248 = vpop.f32.mrb[0].mxu0
      %10249 = vmatprep.mubr.bf16.mxu0 0
      %10250 = vmatmul.mubr.bf16.gmra.mrb[0].mxu0 %v9961
      %v10251 = vpop.f32.mrb[0].mxu0
      %v10252 = vadd.f32 %v10081, %v10251
      %v10253 = vpop.f32.mrb[0].mxu0
      %v10254 = vpop.f32.mrb[0].mxu0
      %v10255 = vadd.f32 %v10084, %v10254
      %v10256 = vpop.f32.mrb[0].mxu0
      %10257 = vmatprep.mubr.bf16.mxu0 0
      %10258 = vmatmul.mubr.bf16.gmra.mrb[0].mxu0 %v9963
      %v10259 = vpop.f32.mrb[0].mxu0
      %v10260 = vadd.f32 %v10089, %v10259
      %v10261 = vpop.f32.mrb[0].mxu0
      %v10262 = vpop.f32.mrb[0].mxu0
      %v10263 = vadd.f32 %v10092, %v10262
      %v10264 = vpop.f32.mrb[0].mxu0
      %10265 = vmatprep.mubr.bf16.mxu0 0
      %10266 = vmatmul.mubr.bf16.gmra.mrb[0].mxu0 %v9965
      %v10267 = vpop.f32.mrb[0].mxu0
      %v10268 = vadd.f32 %v10097, %v10267
      %v10269 = vpop.f32.mrb[0].mxu0
      %v10270 = vpop.f32.mrb[0].mxu0
      %v10271 = vadd.f32 %v10100, %v10270
      %v10272 = vpop.f32.mrb[0].mxu0
      %10273 = vmatprep.mubr.bf16.mxu0 0
      %10274 = vmatmul.mubr.bf16.gmra.mrb[0].mxu0 %v9967
      %v10275 = vpop.f32.mrb[0].mxu0
      %v10276 = vadd.f32 %v10105, %v10275
      %v10277 = vpop.f32.mrb[0].mxu0
      %v10278 = vpop.f32.mrb[0].mxu0
      %v10279 = vadd.f32 %v10108, %v10278
      %v10280 = vpop.f32.mrb[0].mxu0
      %10281 = vmatprep.mubr.bf16.mxu0 0
      %10282 = vmatmul.mubr.bf16.gmra.mrb[0].mxu0 %v9969
      %v10283 = vpop.f32.mrb[0].mxu0
      %v10284 = vadd.f32 %v10113, %v10283
      %v10285 = vpop.f32.mrb[0].mxu0
      %v10286 = vpop.f32.mrb[0].mxu0
      %v10287 = vadd.f32 %v10116, %v10286
      %v10288 = vpop.f32.mrb[0].mxu0
      %10289 = vmatprep.mubr.bf16.mxu0 0
      %10290 = vmatmul.mubr.bf16.gmra.mrb[0].mxu0 %v9971
      %v10291 = vpop.f32.mrb[0].mxu0
      %v10292 = vadd.f32 %v10121, %v10291
      %v10293 = vpop.f32.mrb[0].mxu0
      %v10294 = vpop.f32.mrb[0].mxu0
      %v10295 = vadd.f32 %v10124, %v10294
      %v10296 = vpop.f32.mrb[0].mxu0
      %10297 = vmatprep.mubr.bf16.mxu0 0
      %10298 = vmatmul.mubr.bf16.gmra.mrb[0].mxu0 %v9973
      %v10299 = vpop.f32.mrb[0].mxu0
      %v10300 = vadd.f32 %v10129, %v10299
      %v10301 = vpop.f32.mrb[0].mxu0
      %v10302 = vpop.f32.mrb[0].mxu0
      %v10303 = vadd.f32 %v10132, %v10302
      %v10304 = vpop.f32.mrb[0].mxu0
      %10305 = vmatprep.mubr.bf16.mxu0 0
      %10306 = vmatmul.mubr.bf16.gmra.mrb[0].mxu0 %v9975
      %v10307 = vpop.f32.mrb[0].mxu0
      %v10308 = vadd.f32 %v10137, %v10307
      %v10309 = vpop.f32.mrb[0].mxu0
      %v10310 = vpop.f32.mrb[0].mxu0
      %v10311 = vadd.f32 %v10140, %v10310
      %v10312 = vpop.f32.mrb[0].mxu0
      %10313 = vdwg.mxu0
      %v10315 = vshrl.u32 %v9508, 16
      %v10317 = vshll.u32 %v9508, 16
      %v10319 = vrot.slane %v10317, 1
      %v10320 = vor.u32 %v10315, %v10319
      %v10322 = vshll.u32 %v9509, 16
      %v10324 = vrot.slane %v10322, 1
      %v10325 = vsel %vm9510, %v10320, %v10324
      %10326 = vrot.lane.b32.xlu0 %v10325, 4
      %v10327 = vpop.permute.xlu0 %10326
      %v10330 = vrot.slane %v9508, 1
      %v10331 = vrot.slane %v9509, 1
      %v10332 = vsel %vm9767, %v10330, %v10331
      %10333 = vrot.lane.b32.xlu0 %v10332, 8
      %v10334 = vpop.permute.xlu0 %10333
      %v10336 = vsel %vm928, %v9508, %v10327
      %v10338 = vsel %vm983, %v10336, %v10334
      %s10339 = scalar_lea.vmem %s4, 16
      %v10340 = vld [vmem:[%s10339] sm:$0xf]
      %v10341 = vld [vmem:[%s10339 + $0x4] sm:$0x3]
      %v10344 = vunpack.c.l.b16 %v10340
      %v10345 = vunpack.c.l.b16 %v10341
      %v10346 = vpack.c.b16 %v10345, %v10344
      %v10347 = vsel %vm3288, %v10338, 0
      %v10350 = vsel %vm675, %v10346, 0
      %10352 = vmatprep.subr.bf16.mxu0 0
      %10353 = vmatpush1.bf16.msra.mxu0 %v10350
      %10354 = vmatprep.subr.bf16.mxu0 0
      %10355 = vmatpush1.bf16.msra.mxu0 0
      %10356 = vmatprep.subr.bf16.mxu0 0
      %10357 = vmatpush1.bf16.msra.mxu0 0
      %10358 = vmatprep.subr.bf16.mxu0 0
      %10359 = vmatpush1.bf16.msra.mxu0 0
      %10360 = vmatprep.subr.bf16.mxu0 0
      %10361 = vmatpush1.bf16.msra.mxu0 0
      %10362 = vmatprep.subr.bf16.mxu0 0
      %10363 = vmatpush1.bf16.msra.mxu0 0
      %10364 = vmatprep.subr.bf16.mxu0 0
      %10365 = vmatpush1.bf16.msra.mxu0 0
      %10366 = vmatprep.subr.bf16.mxu0 0
      %10367 = vmatpush1.bf16.msra.mxu0 0
      %10368 = vmatprep.subr.bf16.mxu0 0
      %10369 = vmatpush1.bf16.msra.mxu0 0
      %10370 = vmatprep.subr.bf16.mxu0 0
      %10371 = vmatpush1.bf16.msra.mxu0 0
      %10372 = vmatprep.subr.bf16.mxu0 0
      %10373 = vmatpush1.bf16.msra.mxu0 0
      %10374 = vmatprep.subr.bf16.mxu0 0
      %10375 = vmatpush1.bf16.msra.mxu0 0
      %10376 = vmatprep.subr.bf16.mxu0 0
      %10377 = vmatpush1.bf16.msra.mxu0 0
      %10378 = vmatprep.subr.bf16.mxu0 0
      %10379 = vmatpush1.bf16.msra.mxu0 0
      %10380 = vmatprep.subr.bf16.mxu0 0
      %10381 = vmatpush1.bf16.msra.mxu0 0
      %10382 = vmatprep.subr.bf16.mxu0 0
      %10383 = vmatpush1.bf16.msra.mxu0 0
      %10384 = vmatprep.mubr.bf16.mxu0 0
      %10385 = vmatmul.mubr.bf16.gmra.mrb[0].mxu0 %v9949
      %v10386 = vpop.f32.mrb[0].mxu0
      %v10387 = vadd.f32 0.0, %v10386
      %v10388 = vpop.f32.mrb[0].mxu0
      %v10389 = vpop.f32.mrb[0].mxu0
      %v10390 = vadd.f32 0.0, %v10389
      %v10391 = vpop.f32.mrb[0].mxu0
      %10392 = vmatprep.mubr.bf16.mxu0 0
      %10393 = vmatmul.mubr.bf16.gmra.mrb[0].mxu0 %v9951
      %v10394 = vpop.f32.mrb[0].mxu0
      %v10395 = vadd.f32 0.0, %v10394
      %v10396 = vpop.f32.mrb[0].mxu0
      %v10397 = vpop.f32.mrb[0].mxu0
      %v10398 = vadd.f32 0.0, %v10397
      %v10399 = vpop.f32.mrb[0].mxu0
      %10400 = vmatprep.mubr.bf16.mxu0 0
      %10401 = vmatmul.mubr.bf16.gmra.mrb[0].mxu0 %v9953
      %v10402 = vpop.f32.mrb[0].mxu0
      %v10403 = vadd.f32 0.0, %v10402
      %v10404 = vpop.f32.mrb[0].mxu0
      %v10405 = vpop.f32.mrb[0].mxu0
      %v10406 = vadd.f32 0.0, %v10405
      %v10407 = vpop.f32.mrb[0].mxu0
      %10408 = vmatprep.mubr.bf16.mxu0 0
      %10409 = vmatmul.mubr.bf16.gmra.mrb[0].mxu0 %v9955
      %v10410 = vpop.f32.mrb[0].mxu0
      %v10411 = vadd.f32 0.0, %v10410
      %v10412 = vpop.f32.mrb[0].mxu0
      %v10413 = vpop.f32.mrb[0].mxu0
      %v10414 = vadd.f32 0.0, %v10413
      %v10415 = vpop.f32.mrb[0].mxu0
      %10416 = vmatprep.mubr.bf16.mxu0 0
      %10417 = vmatmul.mubr.bf16.gmra.mrb[0].mxu0 %v9957
      %v10418 = vpop.f32.mrb[0].mxu0
      %v10419 = vadd.f32 0.0, %v10418
      %v10420 = vpop.f32.mrb[0].mxu0
      %v10421 = vpop.f32.mrb[0].mxu0
      %v10422 = vadd.f32 0.0, %v10421
      %v10423 = vpop.f32.mrb[0].mxu0
      %10424 = vmatprep.mubr.bf16.mxu0 0
      %10425 = vmatmul.mubr.bf16.gmra.mrb[0].mxu0 %v9959
      %v10426 = vpop.f32.mrb[0].mxu0
      %v10427 = vadd.f32 0.0, %v10426
      %v10428 = vpop.f32.mrb[0].mxu0
      %v10429 = vpop.f32.mrb[0].mxu0
      %v10430 = vadd.f32 0.0, %v10429
      %v10431 = vpop.f32.mrb[0].mxu0
      %10432 = vmatprep.mubr.bf16.mxu0 0
      %10433 = vmatmul.mubr.bf16.gmra.mrb[0].mxu0 %v9961
      %v10434 = vpop.f32.mrb[0].mxu0
      %v10435 = vadd.f32 0.0, %v10434
      %v10436 = vpop.f32.mrb[0].mxu0
      %v10437 = vpop.f32.mrb[0].mxu0
      %v10438 = vadd.f32 0.0, %v10437
      %v10439 = vpop.f32.mrb[0].mxu0
      %10440 = vmatprep.mubr.bf16.mxu0 0
      %10441 = vmatmul.mubr.bf16.gmra.mrb[0].mxu0 %v9963
      %v10442 = vpop.f32.mrb[0].mxu0
      %v10443 = vadd.f32 0.0, %v10442
      %v10444 = vpop.f32.mrb[0].mxu0
      %v10445 = vpop.f32.mrb[0].mxu0
      %v10446 = vadd.f32 0.0, %v10445
      %v10447 = vpop.f32.mrb[0].mxu0
      %10448 = vmatprep.mubr.bf16.mxu0 0
      %10449 = vmatmul.mubr.bf16.gmra.mrb[0].mxu0 %v9965
      %v10450 = vpop.f32.mrb[0].mxu0
      %v10451 = vadd.f32 0.0, %v10450
      %v10452 = vpop.f32.mrb[0].mxu0
      %v10453 = vpop.f32.mrb[0].mxu0
      %v10454 = vadd.f32 0.0, %v10453
      %v10455 = vpop.f32.mrb[0].mxu0
      %10456 = vmatprep.mubr.bf16.mxu0 0
      %10457 = vmatmul.mubr.bf16.gmra.mrb[0].mxu0 %v9967
      %v10458 = vpop.f32.mrb[0].mxu0
      %v10459 = vadd.f32 0.0, %v10458
      %v10460 = vpop.f32.mrb[0].mxu0
      %v10461 = vpop.f32.mrb[0].mxu0
      %v10462 = vadd.f32 0.0, %v10461
      %v10463 = vpop.f32.mrb[0].mxu0
      %10464 = vmatprep.mubr.bf16.mxu0 0
      %10465 = vmatmul.mubr.bf16.gmra.mrb[0].mxu0 %v9969
      %v10466 = vpop.f32.mrb[0].mxu0
      %v10467 = vadd.f32 0.0, %v10466
      %v10468 = vpop.f32.mrb[0].mxu0
      %v10469 = vpop.f32.mrb[0].mxu0
      %v10470 = vadd.f32 0.0, %v10469
      %v10471 = vpop.f32.mrb[0].mxu0
      %10472 = vmatprep.mubr.bf16.mxu0 0
      %10473 = vmatmul.mubr.bf16.gmra.mrb[0].mxu0 %v9971
      %v10474 = vpop.f32.mrb[0].mxu0
      %v10475 = vadd.f32 0.0, %v10474
      %v10476 = vpop.f32.mrb[0].mxu0
      %v10477 = vpop.f32.mrb[0].mxu0
      %v10478 = vadd.f32 0.0, %v10477
      %v10479 = vpop.f32.mrb[0].mxu0
      %10480 = vmatprep.mubr.bf16.mxu0 0
      %10481 = vmatmul.mubr.bf16.gmra.mrb[0].mxu0 %v9973
      %v10482 = vpop.f32.mrb[0].mxu0
      %v10483 = vadd.f32 0.0, %v10482
      %v10484 = vpop.f32.mrb[0].mxu0
      %v10485 = vpop.f32.mrb[0].mxu0
      %v10486 = vadd.f32 0.0, %v10485
      %v10487 = vpop.f32.mrb[0].mxu0
      %10488 = vmatprep.mubr.bf16.mxu0 0
      %10489 = vmatmul.mubr.bf16.gmra.mrb[0].mxu0 %v9975
      %v10490 = vpop.f32.mrb[0].mxu0
      %v10491 = vadd.f32 0.0, %v10490
      %v10492 = vpop.f32.mrb[0].mxu0
      %v10493 = vpop.f32.mrb[0].mxu0
      %v10494 = vadd.f32 0.0, %v10493
      %v10495 = vpop.f32.mrb[0].mxu0
      %10496 = vmatprep.mubr.bf16.mxu0 0
      %10497 = vmatmul.mubr.bf16.gmra.mrb[0].mxu0 %v9977
      %v10498 = vpop.f32.mrb[0].mxu0
      %v10499 = vadd.f32 0.0, %v10498
      %v10500 = vpop.f32.mrb[0].mxu0
      %v10501 = vpop.f32.mrb[0].mxu0
      %v10502 = vadd.f32 0.0, %v10501
      %v10503 = vpop.f32.mrb[0].mxu0
      %10504 = vmatprep.mubr.bf16.mxu0 0
      %10505 = vmatmul.mubr.bf16.gmra.mrb[0].mxu0 %v10347
      %v10506 = vpop.f32.mrb[0].mxu0
      %v10507 = vadd.f32 0.0, %v10506
      %v10508 = vpop.f32.mrb[0].mxu0
      %v10509 = vpop.f32.mrb[0].mxu0
      %v10510 = vadd.f32 0.0, %v10509
      %v10511 = vpop.f32.mrb[0].mxu0
      %10512 = vdwg.mxu0
      %v10513 = vadd.f32 %v10188, %v10387
      %v10514 = vadd.f32 %v10191, %v10390
      %v10515 = vadd.f32 %v10196, %v10395
      %v10516 = vadd.f32 %v10199, %v10398
      %v10517 = vadd.f32 %v10204, %v10403
      %v10518 = vadd.f32 %v10207, %v10406
      %v10519 = vadd.f32 %v10212, %v10411
      %v10520 = vadd.f32 %v10215, %v10414
      %v10521 = vadd.f32 %v10220, %v10419
      %v10522 = vadd.f32 %v10223, %v10422
      %v10523 = vadd.f32 %v10228, %v10427
      %v10524 = vadd.f32 %v10231, %v10430
      %v10525 = vadd.f32 %v10236, %v10435
      %v10526 = vadd.f32 %v10239, %v10438
      %v10527 = vadd.f32 %v10244, %v10443
      %v10528 = vadd.f32 %v10247, %v10446
      %v10529 = vadd.f32 %v10252, %v10451
      %v10530 = vadd.f32 %v10255, %v10454
      %v10531 = vadd.f32 %v10260, %v10459
      %v10532 = vadd.f32 %v10263, %v10462
      %v10533 = vadd.f32 %v10268, %v10467
      %v10534 = vadd.f32 %v10271, %v10470
      %v10535 = vadd.f32 %v10276, %v10475
      %v10536 = vadd.f32 %v10279, %v10478
      %v10537 = vadd.f32 %v10284, %v10483
      %v10538 = vadd.f32 %v10287, %v10486
      %v10539 = vadd.f32 %v10292, %v10491
      %v10540 = vadd.f32 %v10295, %v10494
      %v10541 = vadd.f32 %v10300, %v10499
      %v10542 = vadd.f32 %v10303, %v10502
      %v10543 = vadd.f32 %v10308, %v10507
      %v10544 = vadd.f32 %v10311, %v10510
      %v10545 = vld [vmem:[%s5] sm:$0x1]
      %v10547 = vlaneseq
      %v10548 = vshrl.u32 %v10547, 7
      %v10549 = vsub.s32 0, %v10548
      %v10550 = vrot.slane %v10545, %v10549
      %v10552 = vmul.f32 %v10513, %v10550
      %v10553 = vmul.f32 %v10514, %v10550
      %v10554 = vmul.f32 %v10515, %v10550
      %v10555 = vmul.f32 %v10516, %v10550
      %v10556 = vmul.f32 %v10517, %v10550
      %v10557 = vmul.f32 %v10518, %v10550
      %v10558 = vmul.f32 %v10519, %v10550
      %v10559 = vmul.f32 %v10520, %v10550
      %v10560 = vmul.f32 %v10521, %v10550
      %v10561 = vmul.f32 %v10522, %v10550
      %v10562 = vmul.f32 %v10523, %v10550
      %v10563 = vmul.f32 %v10524, %v10550
      %v10564 = vmul.f32 %v10525, %v10550
      %v10565 = vmul.f32 %v10526, %v10550
      %v10566 = vmul.f32 %v10527, %v10550
      %v10567 = vmul.f32 %v10528, %v10550
      %v10568 = vmul.f32 %v10529, %v10550
      %v10569 = vmul.f32 %v10530, %v10550
      %v10570 = vmul.f32 %v10531, %v10550
      %v10571 = vmul.f32 %v10532, %v10550
      %v10572 = vmul.f32 %v10533, %v10550
      %v10573 = vmul.f32 %v10534, %v10550
      %v10574 = vmul.f32 %v10535, %v10550
      %v10575 = vmul.f32 %v10536, %v10550
      %v10576 = vmul.f32 %v10537, %v10550
      %v10577 = vmul.f32 %v10538, %v10550
      %v10578 = vmul.f32 %v10539, %v10550
      %v10579 = vmul.f32 %v10540, %v10550
      %v10580 = vmul.f32 %v10541, %v10550
      %v10581 = vmul.f32 %v10542, %v10550
      %v10582 = vmul.f32 %v10543, %v10550
      %v10583 = vmul.f32 %v10544, %v10550
      %v10584 = vld [vmem:[%s6] sm:$0x1]
      %v10586 = vlaneseq
      %v10587 = vshrl.u32 %v10586, 7
      %v10588 = vsub.s32 0, %v10587
      %v10589 = vrot.slane %v10584, %v10588
      %v10591 = vadd.f32 %v10552, %v10589
      %v10592 = vadd.f32 %v10553, %v10589
      %v10593 = vadd.f32 %v10554, %v10589
      %v10594 = vadd.f32 %v10555, %v10589
      %v10595 = vadd.f32 %v10556, %v10589
      %v10596 = vadd.f32 %v10557, %v10589
      %v10597 = vadd.f32 %v10558, %v10589
      %v10598 = vadd.f32 %v10559, %v10589
      %v10599 = vadd.f32 %v10560, %v10589
      %v10600 = vadd.f32 %v10561, %v10589
      %v10601 = vadd.f32 %v10562, %v10589
      %v10602 = vadd.f32 %v10563, %v10589
      %v10603 = vadd.f32 %v10564, %v10589
      %v10604 = vadd.f32 %v10565, %v10589
      %v10605 = vadd.f32 %v10566, %v10589
      %v10606 = vadd.f32 %v10567, %v10589
      %v10607 = vadd.f32 %v10568, %v10589
      %v10608 = vadd.f32 %v10569, %v10589
      %v10609 = vadd.f32 %v10570, %v10589
      %v10610 = vadd.f32 %v10571, %v10589
      %v10611 = vadd.f32 %v10572, %v10589
      %v10612 = vadd.f32 %v10573, %v10589
      %v10613 = vadd.f32 %v10574, %v10589
      %v10614 = vadd.f32 %v10575, %v10589
      %v10615 = vadd.f32 %v10576, %v10589
      %v10616 = vadd.f32 %v10577, %v10589
      %v10617 = vadd.f32 %v10578, %v10589
      %v10618 = vadd.f32 %v10579, %v10589
      %v10619 = vadd.f32 %v10580, %v10589
      %v10620 = vadd.f32 %v10581, %v10589
      %v10621 = vadd.f32 %v10582, %v10589
      %v10622 = vadd.f32 %v10583, %v10589
      %v10655 = vadd.f32 %v10591, %v688
      %v10656 = vadd.f32 %v10592, %v690
      %v10657 = vadd.f32 %v10593, %v693
      %v10658 = vadd.f32 %v10594, %v695
      %v10659 = vadd.f32 %v10595, %v698
      %v10660 = vadd.f32 %v10596, %v700
      %v10661 = vadd.f32 %v10597, %v703
      %v10662 = vadd.f32 %v10598, %v705
      %v10663 = vadd.f32 %v10599, %v708
      %v10664 = vadd.f32 %v10600, %v710
      %v10665 = vadd.f32 %v10601, %v713
      %v10666 = vadd.f32 %v10602, %v715
      %v10667 = vadd.f32 %v10603, %v718
      %v10668 = vadd.f32 %v10604, %v720
      %v10669 = vadd.f32 %v10605, %v723
      %v10670 = vadd.f32 %v10606, %v725
      %v10671 = vadd.f32 %v10607, %v728
      %v10672 = vadd.f32 %v10608, %v730
      %v10673 = vadd.f32 %v10609, %v733
      %v10674 = vadd.f32 %v10610, %v735
      %v10675 = vadd.f32 %v10611, %v738
      %v10676 = vadd.f32 %v10612, %v740
      %v10677 = vadd.f32 %v10613, %v743
      %v10678 = vadd.f32 %v10614, %v745
      %v10679 = vadd.f32 %v10615, %v748
      %v10680 = vadd.f32 %v10616, %v750
      %v10681 = vadd.f32 %v10617, %v753
      %v10682 = vadd.f32 %v10618, %v755
      %v10683 = vadd.f32 %v10619, %v758
      %v10684 = vadd.f32 %v10620, %v760
      %v10685 = vadd.f32 %v10621, %v763
      %v10686 = vadd.f32 %v10622, %v765
      %v10687 = vmax.f32 %v10655, 0.0
      %v10688 = vmax.f32 %v10656, 0.0
      %v10689 = vmax.f32 %v10657, 0.0
      %v10690 = vmax.f32 %v10658, 0.0
      %v10691 = vmax.f32 %v10659, 0.0
      %v10692 = vmax.f32 %v10660, 0.0
      %v10693 = vmax.f32 %v10661, 0.0
      %v10694 = vmax.f32 %v10662, 0.0
      %v10695 = vmax.f32 %v10663, 0.0
      %v10696 = vmax.f32 %v10664, 0.0
      %v10697 = vmax.f32 %v10665, 0.0
      %v10698 = vmax.f32 %v10666, 0.0
      %v10699 = vmax.f32 %v10667, 0.0
      %v10700 = vmax.f32 %v10668, 0.0
      %v10701 = vmax.f32 %v10669, 0.0
      %v10702 = vmax.f32 %v10670, 0.0
      %v10703 = vmax.f32 %v10671, 0.0
      %v10704 = vmax.f32 %v10672, 0.0
      %v10705 = vmax.f32 %v10673, 0.0
      %v10706 = vmax.f32 %v10674, 0.0
      %v10707 = vmax.f32 %v10675, 0.0
      %v10708 = vmax.f32 %v10676, 0.0
      %v10709 = vmax.f32 %v10677, 0.0
      %v10710 = vmax.f32 %v10678, 0.0
      %v10711 = vmax.f32 %v10679, 0.0
      %v10712 = vmax.f32 %v10680, 0.0
      %v10713 = vmax.f32 %v10681, 0.0
      %v10714 = vmax.f32 %v10682, 0.0
      %v10715 = vmax.f32 %v10683, 0.0
      %v10716 = vmax.f32 %v10684, 0.0
      %v10717 = vmax.f32 %v10685, 0.0
      %v10718 = vmax.f32 %v10686, 0.0
      %10719 = vst.msk [vmem:[%s302] sm:$0xff] %vm928, %v10687
      %10720 = vst.msk [vmem:[%s302 + $0x8] sm:$0xff] %vm928, %v10688
      %10721 = vst.msk [vmem:[%s302 + $0x10] sm:$0xff] %vm928, %v10689
      %10722 = vst.msk [vmem:[%s302 + $0x18] sm:$0xff] %vm928, %v10690
      %10723 = vst.msk [vmem:[%s302 + $0x20] sm:$0xff] %vm928, %v10691
      %10724 = vst.msk [vmem:[%s302 + $0x28] sm:$0xff] %vm928, %v10692
      %10725 = vst.msk [vmem:[%s302 + $0x30] sm:$0xff] %vm928, %v10693
      %10726 = vst.msk [vmem:[%s302 + $0x38] sm:$0xff] %vm928, %v10694
      %10727 = vst.msk [vmem:[%s302 + $0x40] sm:$0xff] %vm928, %v10695
      %10728 = vst.msk [vmem:[%s302 + $0x48] sm:$0xff] %vm928, %v10696
      %10729 = vst.msk [vmem:[%s302 + $0x50] sm:$0xff] %vm928, %v10697
      %10730 = vst.msk [vmem:[%s302 + $0x58] sm:$0xff] %vm928, %v10698
      %10731 = vst.msk [vmem:[%s302 + $0x60] sm:$0xff] %vm928, %v10699
      %10732 = vst.msk [vmem:[%s302 + $0x68] sm:$0xff] %vm928, %v10700
      %10733 = vst.msk [vmem:[%s302 + $0x70] sm:$0xff] %vm928, %v10701
      %10734 = vst.msk [vmem:[%s302 + $0x78] sm:$0xff] %vm928, %v10702
      %10735 = vst.msk [vmem:[%s302 + $0x80] sm:$0xff] %vm928, %v10703
      %10736 = vst.msk [vmem:[%s302 + $0x88] sm:$0xff] %vm928, %v10704
      %10737 = vst.msk [vmem:[%s302 + $0x90] sm:$0xff] %vm928, %v10705
      %10738 = vst.msk [vmem:[%s302 + $0x98] sm:$0xff] %vm928, %v10706
      %10739 = vst.msk [vmem:[%s302 + $0xa0] sm:$0xff] %vm928, %v10707
      %10740 = vst.msk [vmem:[%s302 + $0xa8] sm:$0xff] %vm928, %v10708
      %10741 = vst.msk [vmem:[%s302 + $0xb0] sm:$0xff] %vm928, %v10709
      %10742 = vst.msk [vmem:[%s302 + $0xb8] sm:$0xff] %vm928, %v10710
      %10743 = vst.msk [vmem:[%s302 + $0xc0] sm:$0xff] %vm928, %v10711
      %10744 = vst.msk [vmem:[%s302 + $0xc8] sm:$0xff] %vm928, %v10712
      %10745 = vst.msk [vmem:[%s302 + $0xd0] sm:$0xff] %vm928, %v10713
      %10746 = vst.msk [vmem:[%s302 + $0xd8] sm:$0xff] %vm928, %v10714
      %10747 = vst.msk [vmem:[%s302 + $0xe0] sm:$0xff] %vm928, %v10715
      %10748 = vst.msk [vmem:[%s302 + $0xe8] sm:$0xff] %vm928, %v10716
      %10749 = vst.msk [vmem:[%s302 + $0xf0] sm:$0xff] %vm928, %v10717
      %10750 = vst.msk [vmem:[%s302 + $0xf8] sm:$0xff] %vm928, %v10718
      %s10751 = smul.u32 16, %s23
      %p10752 = scmp.lt.s32.totalorder %s22, 1
      %s10753 = scalar_select %p10752, %s22, 1
      %p10754 = scmp.lt.s32.totalorder %s10751, 15
      %s10755 = scalar_select %p10754, %s10751, 15
      %s10756 = smul.addr %s10755, 2
      %s10757 = smul.addr %s10753, 32
      %s10758 = sadd.s32 %s10756, %s10757
      %s10759 = smul.addr %s10758, 8
      %s10760 = scalar_lea.vmem %s7, %s10759
      // Predicated region
      $region49: #{li_block_forward.1} parent=47 // pred_check
        %p10761 = pneg %p202
      $region50: #{li_block_forward.1} parent=47 // pred_check_branch
        %10763 = sbr.rel (%p10761) target = $region52
      $region51: #{li_block_forward.1} parent=47 // pred_region
        %s10764 = smul.u32 16, %s23
      $region52: #{li_block_forward.1} parent=47 // pred_fallthru
        _
    $region48: #{li_block_forward.1} parent=5 // pred_fallthru
      _
    %p10765 = scmp.le.s32.totalorder 2, %s13
    // Predicated region
    $region53: #{li_block_forward.1} parent=5 // pred_check
      %p10766 = pneg %p10765
    $region54: #{li_block_forward.1} parent=5 // pred_check_branch
      %10768 = sbr.rel (%p10766) target = $region56
    $region55: #{li_block_forward.1} parent=5 // pred_region
      %s10769 = ssub.s32 %s13, 2
      // Predicated region
      $region57: #{li_block_forward.1} parent=55 // pred_check
        %p10770 = pneg %p208
      $region58: #{li_block_forward.1} parent=55 // pred_check_branch
        %10772 = sbr.rel (%p10770) target = $region60
      $region59: #{li_block_forward.1} parent=55 // pred_region
        %s10773 = smul.u32 16, %s25
        %p10774 = scmp.lt.s32.totalorder %s24, 1
        %s10775 = scalar_select %p10774, %s24, 1
        %p10776 = scmp.lt.s32.totalorder %s10773, 15
        %s10777 = scalar_select %p10776, %s10773, 15
        %s10778 = smul.addr %s10777, 2
        %s10779 = smul.addr %s10775, 32
        %s10780 = sadd.s32 %s10778, %s10779
        %s10781 = smul.addr %s10780, 8
        %s10782 = scalar_lea.vmem %s7, %s10781
      $region60: #{li_block_forward.1} parent=55 // pred_fallthru
        _
    $region56: #{li_block_forward.1} parent=5 // pred_fallthru
      _
  $region6: #{li_block_forward.1} parent=0 // loop_footer
    %s17 = sadd.s32 1, %s13
  $region7: #{li_block_forward.1} parent=0 // loop_footer_branch
    %12 = sbr.rel target = $region3
  $region8: #{li_block_forward.1} parent=0 // loop_exit
    _

</llo_original>
